<compile_context>
chip_gen: v7x
topology: tpu7x:2x2x1
jax: 0.10.0
libtpu: 0.0.40
codegen_flags: <defaults>
</compile_context>

<pallas_src>
import functools

import jax
import jax.numpy as jnp
from jax.experimental import pallas as pl
from jax.experimental.pallas import tpu as pltpu


# torch-view TDNN config: (in_dim, out_dim, context_size, dilation)
TDNN_CFG = [
    (80, 512, 5, 1),
    (512, 512, 3, 1),
    (512, 512, 2, 2),
    (512, 512, 1, 1),
    (512, 512, 1, 3),
]


# ------------------------------ fused kernel ---------------------------------

def fused_lid_kernel(x_ref, *refs, kcfg, t_valid):
    n = len(kcfg)
    tdnn_refs = refs[:2 * n]
    (w6m_ref, w6v_ref, b6_ref, w7_ref, b7_ref,
     w8_ref, b8_ref) = refs[2 * n:2 * n + 7]
    o_ref = refs[2 * n + 7]
    acts = (refs[2 * n + 8], refs[2 * n + 9])          # bf16 VMEM ping-pong scratch

    # ---- TDNN stack (layer 1 pre-unfolded: cs=1, K=400) ----
    src = x_ref                      # (T-4, 400) bf16
    rows = x_ref.shape[0]
    for li, (din, dout, cs, dil) in enumerate(kcfg):
        w_ref = tdnn_refs[2 * li]
        b_ref = tdnn_refs[2 * li + 1]
        dst = acts[li % 2]
        rows -= (cs - 1) * dil       # static Python int
        acc = None
        for c in range(cs):
            # TODO(synk): offsets 1/2 are sublane-misaligned slices; if the Mosaic
            # bundle dump shows relayout copies here, realign with pltpu.roll instead.
            xs = src[c * dil:c * dil + rows, :]                     # bf16
            wk = w_ref[c * din:(c + 1) * din, :]                    # bf16
            p = jnp.dot(xs, wk, preferred_element_type=jnp.float32)
            acc = p if acc is None else acc + p
        dst[:rows, :] = jnp.maximum(acc + b_ref[...], 0.0).astype(jnp.bfloat16)
        src = dst

    # ---- stat pooling for this program's utterance: mean + unbiased variance,
    #      two-pass in f32 (cancellation-safe, matches torch.var) ----
    h = src[:t_valid, :].astype(jnp.float32)                        # (t_valid, 512)
    mean = jnp.sum(h, axis=0, keepdims=True) * (1.0 / t_valid)      # (1, 512)
    cen = h - mean
    var = jnp.sum(cen * cen, axis=0, keepdims=True) * (1.0 / (t_valid - 1))

    # ---- segment6 (stat @ w6 == mean @ w6m + var @ w6v), segment7, output ----
    h6 = (jnp.dot(mean.astype(jnp.bfloat16), w6m_ref[...],
                  preferred_element_type=jnp.float32)
          + jnp.dot(var.astype(jnp.bfloat16), w6v_ref[...],
                    preferred_element_type=jnp.float32)
          + b6_ref[...])
    h7 = jnp.dot(h6.astype(jnp.bfloat16), w7_ref[...],
                 preferred_element_type=jnp.float32) + b7_ref[...]
    logits = jnp.dot(h7.astype(jnp.bfloat16), w8_ref[...],
                     preferred_element_type=jnp.float32) + b8_ref[...]   # (1, 128)
    # (8, 128) sublane-padded, lane-dense store; wrapper slices row 0 / num_classes.
    o_ref[...] = jnp.broadcast_to(logits, o_ref.shape)


# ------------------------------- wrapper --------------------------------------

def lid_model_forward(x, params):
    """x: (B, T, feat_dim) float32 -> (B, num_classes) logits (predictions)."""
    B, T, D = x.shape
    cfg = params["cfg"]
    num_classes = params["num_classes"]
    assert cfg[0][0] == D, (cfg[0][0], D)

    ctx_total = sum((cs - 1) * dil for (_, _, cs, dil) in cfg)      # 8
    t_valid = T - ctx_total
    if t_valid < 2:
        raise ValueError(
            f"T={T} leaves only {t_valid} pooled frame(s); the unbiased variance "
            "needs at least 2 (T must be > 9).")

    # Layer-1 unfold in the wrapper: bf16 (B, T-4, 5*80). One K=400 MXU dot in-kernel.
    cs1, dil1 = cfg[0][2], cfg[0][3]
    t1 = T - (cs1 - 1) * dil1
    taps = [x[:, c * dil1:c * dil1 + t1, :] for c in range(cs1)]
    x_unf = jnp.concatenate(taps, axis=-1).astype(jnp.bfloat16)     # (B, t1, cs1*D)

    # Kernel-view cfg: layer 1 becomes a cs=1 layer over the unfolded 400-dim input.
    kcfg = ((cs1 * D, cfg[0][1], 1, 1),) + tuple(cfg[1:])
    rows = t1
    for (_, _, cs, dil) in kcfg:
        rows -= (cs - 1) * dil
    assert rows == t_valid, (rows, t_valid)

    inputs = [x_unf]
    for layer in params["tdnn"]:
        inputs += [layer["w"], layer["b"]]
    inputs += [params["w6m"], params["w6v"], params["b6"],
               params["w7"], params["b7"], params["w8p"], params["b8p"]]

    in_specs = [pl.BlockSpec((None, t1, cs1 * D), lambda b: (b, 0, 0))]
    # Weights/biases: full-array blocks with a constant block index -> DMA'd once,
    # resident across all grid steps (per core).
    in_specs += [pl.BlockSpec(a.shape, lambda b: (0, 0)) for a in inputs[1:]]
    out_specs = pl.BlockSpec((None, 8, 128), lambda b: (b, 0, 0))

    grid_spec = pltpu.PrefetchScalarGridSpec(
        num_scalar_prefetch=0,
        grid=(B,),
        in_specs=in_specs,
        out_specs=out_specs,
        scratch_shapes=[pltpu.VMEM((t1, 512), jnp.bfloat16),
                        pltpu.VMEM((t1, 512), jnp.bfloat16)],
    )

    # VMEM budget derived from actual shapes (double-buffered blocks + scratch + margin).
    weight_bytes = sum(int(a.size) * a.dtype.itemsize for a in inputs[1:])
    x_block_bytes = t1 * cs1 * D * 2
    out_block_bytes = 8 * 128 * 4
    scratch_bytes = 2 * t1 * 512 * 2
    vmem_limit = int(2 * (weight_bytes + x_block_bytes + out_block_bytes)
                     + scratch_bytes + (4 << 20))
    vmem_limit = min(vmem_limit, 64 << 20)

    # Advisory cost estimate for the XLA scheduler.
    flops = 0
    r = t1
    for (din, dout, cs, dil) in kcfg:
        r -= (cs - 1) * dil
        flops += 2 * r * cs * din * dout
    flops += 2 * (3 * 512 * 512 + 512 * 128)                        # segment6/7/output
    flops *= B
    bytes_accessed = (sum(int(a.size) * a.dtype.itemsize for a in inputs)
                      + B * 8 * 128 * 4)
    cost = pl.CostEstimate(flops=int(flops), transcendentals=0,
                           bytes_accessed=int(bytes_accessed))

    out = pl.pallas_call(
        functools.partial(fused_lid_kernel, kcfg=kcfg, t_valid=t_valid),
        out_shape=jax.ShapeDtypeStruct((B, 8, 128), jnp.float32),
        grid_spec=grid_spec,
        compiler_params=pltpu.CompilerParams(
            dimension_semantics=("parallel",),
            vmem_limit_bytes=vmem_limit),
        cost_estimate=cost,
    )(*inputs)
    return out[:, 0, :num_classes]


# ------------------------------ parameters ------------------------------------

def init_params(key, feat_dim=80, num_classes=3):
    cfg = [(feat_dim, 512, 5, 1)] + TDNN_CFG[1:]
    keys = jax.random.split(key, 2 * len(cfg) + 6)
    ki = 0
    params = {"cfg": tuple(cfg), "num_classes": num_classes, "tdnn": []}
    for (din, dout, cs, dil) in cfg:
        w = (jax.random.normal(keys[ki], (cs * din, dout), jnp.float32)
             / jnp.sqrt(jnp.float32(cs * din))).astype(jnp.bfloat16)
        ki += 1
        b = 0.01 * jax.random.normal(keys[ki], (1, dout), jnp.float32)
        ki += 1
        params["tdnn"].append({"w": w, "b": b, "cs": cs, "dil": dil})

    def lin(kw, kb, din, dout):
        w = jax.random.normal(kw, (din, dout), jnp.float32) / jnp.sqrt(jnp.float32(din))
        b = 0.01 * jax.random.normal(kb, (1, dout), jnp.float32)
        return w, b

    w6, b6 = lin(keys[ki], keys[ki + 1], 1024, 512); ki += 2
    params["w6m"] = w6[:512].astype(jnp.bfloat16)    # multiplies the mean half of stat
    params["w6v"] = w6[512:].astype(jnp.bfloat16)    # multiplies the var half of stat
    params["b6"] = b6
    w7, b7 = lin(keys[ki], keys[ki + 1], 512, 512); ki += 2
    params["w7"] = w7.astype(jnp.bfloat16)
    params["b7"] = b7
    w8, b8 = lin(keys[ki], keys[ki + 1], 512, num_classes); ki += 2
    params["w8p"] = jnp.pad(w8, ((0, 0), (0, 128 - num_classes))).astype(jnp.bfloat16)
    params["b8p"] = jnp.pad(b8, ((0, 0), (0, 128 - num_classes)))
    return params


# --------------------------- pure-JAX reference --------------------------------
# Mirrors the PyTorch math (unfold + Linear + ReLU per TDNN, mean + unbiased two-pass
# variance, segment6/7/output). Uses the same bf16 weights / bf16-stored activations /
# f32 accumulation as the kernel so the comparison isolates kernel correctness.

def _reference(x, params):
    h = x
    for layer in params["tdnn"]:
        cs, dil = layer["cs"], layer["dil"]
        _, T_in, _ = h.shape
        t_out = T_in - dil * (cs - 1)
        taps = [h[:, c * dil:c * dil + t_out, :] for c in range(cs)]
        xu = jnp.concatenate(taps, axis=-1) if cs > 1 else taps[0]
        y = jnp.einsum("btk,ko->bto", xu.astype(jnp.bfloat16), layer["w"],
                       preferred_element_type=jnp.float32)
        h = jnp.maximum(y + layer["b"][None], 0.0).astype(jnp.bfloat16)
    hf = h.astype(jnp.float32)
    T_f = hf.shape[1]
    mean = jnp.mean(hf, axis=1)
    var = jnp.sum((hf - mean[:, None, :]) ** 2, axis=1) / (T_f - 1)  # unbiased
    h6 = (jnp.dot(mean.astype(jnp.bfloat16), params["w6m"],
                  preferred_element_type=jnp.float32)
          + jnp.dot(var.astype(jnp.bfloat16), params["w6v"],
                    preferred_element_type=jnp.float32)
          + params["b6"])
    h7 = jnp.dot(h6.astype(jnp.bfloat16), params["w7"],
                 preferred_element_type=jnp.float32) + params["b7"]
    logits = jnp.dot(h7.astype(jnp.bfloat16), params["w8p"],
                     preferred_element_type=jnp.float32) + params["b8p"]
    return logits[:, :params["num_classes"]]


# ----------------------------------- main --------------------------------------

if __name__ == "__main__":
    # TODO(synk): DataProcessor (torchaudio resampling) is a no-op at sr=16000 and has
    # no compute in this forward path; it is not implemented.
    B, T, D, NUM_CLASSES = 2, 24, 80, 3   # T must be > 9 (context shrinks T by 8)

    root = jax.random.PRNGKey(0)
    kx, kp = jax.random.split(root)
    x = jax.random.normal(kx, (B, T, D), jnp.float32)
    params = init_params(kp, feat_dim=D, num_classes=NUM_CLASSES)

    out = jax.block_until_ready(lid_model_forward(x, params))

    ref = _reference(x, params)
    assert out.shape == (B, NUM_CLASSES), out.shape
    assert jnp.allclose(out, ref, atol=1e-2, rtol=1e-2), (out, ref)

    print("KERNEL_OK")
</pallas_src>

<mosaic_0001>
module attributes {stable_mosaic.version = 11 : i64} {
  func.func @fused_lid_kernel(%arg0: i32, %arg1: memref<1x20x400xbf16, #tpu.memory_space<vmem>>, %arg2: memref<400x512xbf16, #tpu.memory_space<vmem>>, %arg3: memref<1x512xf32, #tpu.memory_space<vmem>>, %arg4: memref<1536x512xbf16, #tpu.memory_space<vmem>>, %arg5: memref<1x512xf32, #tpu.memory_space<vmem>>, %arg6: memref<1024x512xbf16, #tpu.memory_space<vmem>>, %arg7: memref<1x512xf32, #tpu.memory_space<vmem>>, %arg8: memref<512x512xbf16, #tpu.memory_space<vmem>>, %arg9: memref<1x512xf32, #tpu.memory_space<vmem>>, %arg10: memref<512x512xbf16, #tpu.memory_space<vmem>>, %arg11: memref<1x512xf32, #tpu.memory_space<vmem>>, %arg12: memref<512x512xbf16, #tpu.memory_space<vmem>>, %arg13: memref<512x512xbf16, #tpu.memory_space<vmem>>, %arg14: memref<1x512xf32, #tpu.memory_space<vmem>>, %arg15: memref<512x512xbf16, #tpu.memory_space<vmem>>, %arg16: memref<1x512xf32, #tpu.memory_space<vmem>>, %arg17: memref<512x128xbf16, #tpu.memory_space<vmem>>, %arg18: memref<1x128xf32, #tpu.memory_space<vmem>>, %arg19: memref<1x8x128xf32, #tpu.memory_space<vmem>>, %arg20: memref<20x512xbf16, #tpu.memory_space<vmem>>, %arg21: memref<20x512xbf16, #tpu.memory_space<vmem>>) attributes {dimension_semantics = [#tpu.dimension_semantics<parallel>], iteration_bounds = array<i64: 2>, scalar_prefetch = 0 : i64, scratch_operands = 2 : i64, tpu.core_type = #tpu.core_type<tc>, window_params = [{transform_indices = @transform_0, window_bounds = array<i64: 1, 20, 400>}, {pipeline_mode = #tpu.pipeline_mode<synchronous>, transform_indices = @transform_1, window_bounds = array<i64: 400, 512>}, {pipeline_mode = #tpu.pipeline_mode<synchronous>, transform_indices = @transform_2, window_bounds = array<i64: 1, 512>}, {pipeline_mode = #tpu.pipeline_mode<synchronous>, transform_indices = @transform_3, window_bounds = array<i64: 1536, 512>}, {pipeline_mode = #tpu.pipeline_mode<synchronous>, transform_indices = @transform_4, window_bounds = array<i64: 1, 512>}, {pipeline_mode = #tpu.pipeline_mode<synchronous>, transform_indices = @transform_5, window_bounds = array<i64: 1024, 512>}, {pipeline_mode = #tpu.pipeline_mode<synchronous>, transform_indices = @transform_6, window_bounds = array<i64: 1, 512>}, {pipeline_mode = #tpu.pipeline_mode<synchronous>, transform_indices = @transform_7, window_bounds = array<i64: 512, 512>}, {pipeline_mode = #tpu.pipeline_mode<synchronous>, transform_indices = @transform_8, window_bounds = array<i64: 1, 512>}, {pipeline_mode = #tpu.pipeline_mode<synchronous>, transform_indices = @transform_9, window_bounds = array<i64: 512, 512>}, {pipeline_mode = #tpu.pipeline_mode<synchronous>, transform_indices = @transform_10, window_bounds = array<i64: 1, 512>}, {pipeline_mode = #tpu.pipeline_mode<synchronous>, transform_indices = @transform_11, window_bounds = array<i64: 512, 512>}, {pipeline_mode = #tpu.pipeline_mode<synchronous>, transform_indices = @transform_12, window_bounds = array<i64: 512, 512>}, {pipeline_mode = #tpu.pipeline_mode<synchronous>, transform_indices = @transform_13, window_bounds = array<i64: 1, 512>}, {pipeline_mode = #tpu.pipeline_mode<synchronous>, transform_indices = @transform_14, window_bounds = array<i64: 512, 512>}, {pipeline_mode = #tpu.pipeline_mode<synchronous>, transform_indices = @transform_15, window_bounds = array<i64: 1, 512>}, {pipeline_mode = #tpu.pipeline_mode<synchronous>, transform_indices = @transform_16, window_bounds = array<i64: 512, 128>}, {pipeline_mode = #tpu.pipeline_mode<synchronous>, transform_indices = @transform_17, window_bounds = array<i64: 1, 128>}, {transform_indices = @transform_18, window_bounds = array<i64: 1, 8, 128>}]} {
    %c0 = arith.constant 0 : index
    %c0_0 = arith.constant 0 : index
    %c0_1 = arith.constant 0 : index
    %0 = vector.load %arg1[%c0, %c0_0, %c0_1] : memref<1x20x400xbf16, #tpu.memory_space<vmem>>, vector<1x20x400xbf16>
    %1 = vector.shape_cast %0 : vector<1x20x400xbf16> to vector<20x400xbf16>
    %c0_2 = arith.constant 0 : index
    %c0_3 = arith.constant 0 : index
    %2 = vector.load %arg2[%c0_2, %c0_3] : memref<400x512xbf16, #tpu.memory_space<vmem>>, vector<400x512xbf16>
    %cst = arith.constant dense<0.000000e+00> : vector<20x512xf32>
    %3 = tpu.matmul %1, %2, %cst {dimension_numbers = #tpu.dot_dimension_numbers<[1], [0], [0], [1], [0, 0, 1, 1], [], []>} : vector<20x400xbf16>, vector<400x512xbf16>, vector<20x512xf32> -> vector<20x512xf32>
    %c0_4 = arith.constant 0 : index
    %c0_5 = arith.constant 0 : index
    %4 = vector.load %arg3[%c0_4, %c0_5] : memref<1x512xf32, #tpu.memory_space<vmem>>, vector<1x512xf32>
    %5 = vector.broadcast %4 : vector<1x512xf32> to vector<20x512xf32>
    %6 = arith.addf %3, %5 : vector<20x512xf32>
    %cst_6 = arith.constant 0.000000e+00 : f32
    %7 = vector.broadcast %cst_6 : f32 to vector<20x512xf32>
    %8 = arith.maximumf %6, %7 : vector<20x512xf32>
    %9 = arith.truncf %8 : vector<20x512xf32> to vector<20x512xbf16>
    %c0_7 = arith.constant 0 : index
    %c0_8 = arith.constant 0 : index
    %10 = vector.load %arg20[%c0_7, %c0_8] : memref<20x512xbf16, #tpu.memory_space<vmem>>, vector<20x512xbf16>
    tpu.vector_store %arg20[%c0_7, %c0_8], %9 {strides = array<i32>} : memref<20x512xbf16, #tpu.memory_space<vmem>>, vector<20x512xbf16>,
    %c0_9 = arith.constant 0 : index
    %c0_10 = arith.constant 0 : index
    %11 = vector.load %arg20[%c0_9, %c0_10] : memref<20x512xbf16, #tpu.memory_space<vmem>>, vector<18x512xbf16>
    %c0_11 = arith.constant 0 : index
    %c0_12 = arith.constant 0 : index
    %12 = vector.load %arg4[%c0_11, %c0_12] : memref<1536x512xbf16, #tpu.memory_space<vmem>>, vector<512x512xbf16>
    %cst_13 = arith.constant dense<0.000000e+00> : vector<18x512xf32>
    %13 = tpu.matmul %11, %12, %cst_13 {dimension_numbers = #tpu.dot_dimension_numbers<[1], [0], [0], [1], [0, 0, 1, 1], [], []>} : vector<18x512xbf16>, vector<512x512xbf16>, vector<18x512xf32> -> vector<18x512xf32>
    %c1 = arith.constant 1 : index
    %c0_14 = arith.constant 0 : index
    %14 = vector.load %arg20[%c1, %c0_14] : memref<20x512xbf16, #tpu.memory_space<vmem>>, vector<18x512xbf16>
    %c512 = arith.constant 512 : index
    %c0_15 = arith.constant 0 : index
    %15 = vector.load %arg4[%c512, %c0_15] : memref<1536x512xbf16, #tpu.memory_space<vmem>>, vector<512x512xbf16>
    %cst_16 = arith.constant dense<0.000000e+00> : vector<18x512xf32>
    %16 = tpu.matmul %14, %15, %cst_16 {dimension_numbers = #tpu.dot_dimension_numbers<[1], [0], [0], [1], [0, 0, 1, 1], [], []>} : vector<18x512xbf16>, vector<512x512xbf16>, vector<18x512xf32> -> vector<18x512xf32>
    %17 = arith.addf %13, %16 : vector<18x512xf32>
    %c2 = arith.constant 2 : index
    %c0_17 = arith.constant 0 : index
    %18 = vector.load %arg20[%c2, %c0_17] : memref<20x512xbf16, #tpu.memory_space<vmem>>, vector<18x512xbf16>
    %c1024 = arith.constant 1024 : index
    %c0_18 = arith.constant 0 : index
    %19 = vector.load %arg4[%c1024, %c0_18] : memref<1536x512xbf16, #tpu.memory_space<vmem>>, vector<512x512xbf16>
    %cst_19 = arith.constant dense<0.000000e+00> : vector<18x512xf32>
    %20 = tpu.matmul %18, %19, %cst_19 {dimension_numbers = #tpu.dot_dimension_numbers<[1], [0], [0], [1], [0, 0, 1, 1], [], []>} : vector<18x512xbf16>, vector<512x512xbf16>, vector<18x512xf32> -> vector<18x512xf32>
    %21 = arith.addf %17, %20 : vector<18x512xf32>
    %c0_20 = arith.constant 0 : index
    %c0_21 = arith.constant 0 : index
    %22 = vector.load %arg5[%c0_20, %c0_21] : memref<1x512xf32, #tpu.memory_space<vmem>>, vector<1x512xf32>
    %23 = vector.broadcast %22 : vector<1x512xf32> to vector<18x512xf32>
    %24 = arith.addf %21, %23 : vector<18x512xf32>
    %cst_22 = arith.constant 0.000000e+00 : f32
    %25 = vector.broadcast %cst_22 : f32 to vector<18x512xf32>
    %26 = arith.maximumf %24, %25 : vector<18x512xf32>
    %27 = arith.truncf %26 : vector<18x512xf32> to vector<18x512xbf16>
    %c0_23 = arith.constant 0 : index
    %c0_24 = arith.constant 0 : index
    %28 = vector.load %arg21[%c0_23, %c0_24] : memref<20x512xbf16, #tpu.memory_space<vmem>>, vector<18x512xbf16>
    tpu.vector_store %arg21[%c0_23, %c0_24], %27 {strides = array<i32>} : memref<20x512xbf16, #tpu.memory_space<vmem>>, vector<18x512xbf16>,
    %c0_25 = arith.constant 0 : index
    %c0_26 = arith.constant 0 : index
    %29 = vector.load %arg21[%c0_25, %c0_26] : memref<20x512xbf16, #tpu.memory_space<vmem>>, vector<16x512xbf16>
    %c0_27 = arith.constant 0 : index
    %c0_28 = arith.constant 0 : index
    %30 = vector.load %arg6[%c0_27, %c0_28] : memref<1024x512xbf16, #tpu.memory_space<vmem>>, vector<512x512xbf16>
    %cst_29 = arith.constant dense<0.000000e+00> : vector<16x512xf32>
    %31 = tpu.matmul %29, %30, %cst_29 {dimension_numbers = #tpu.dot_dimension_numbers<[1], [0], [0], [1], [0, 0, 1, 1], [], []>} : vector<16x512xbf16>, vector<512x512xbf16>, vector<16x512xf32> -> vector<16x512xf32>
    %c2_30 = arith.constant 2 : index
    %c0_31 = arith.constant 0 : index
    %32 = vector.load %arg21[%c2_30, %c0_31] : memref<20x512xbf16, #tpu.memory_space<vmem>>, vector<16x512xbf16>
    %c512_32 = arith.constant 512 : index
    %c0_33 = arith.constant 0 : index
    %33 = vector.load %arg6[%c512_32, %c0_33] : memref<1024x512xbf16, #tpu.memory_space<vmem>>, vector<512x512xbf16>
    %cst_34 = arith.constant dense<0.000000e+00> : vector<16x512xf32>
    %34 = tpu.matmul %32, %33, %cst_34 {dimension_numbers = #tpu.dot_dimension_numbers<[1], [0], [0], [1], [0, 0, 1, 1], [], []>} : vector<16x512xbf16>, vector<512x512xbf16>, vector<16x512xf32> -> vector<16x512xf32>
    %35 = arith.addf %31, %34 : vector<16x512xf32>
    %c0_35 = arith.constant 0 : index
    %c0_36 = arith.constant 0 : index
    %36 = vector.load %arg7[%c0_35, %c0_36] : memref<1x512xf32, #tpu.memory_space<vmem>>, vector<1x512xf32>
    %37 = vector.broadcast %36 : vector<1x512xf32> to vector<16x512xf32>
    %38 = arith.addf %35, %37 : vector<16x512xf32>
    %cst_37 = arith.constant 0.000000e+00 : f32
    %39 = vector.broadcast %cst_37 : f32 to vector<16x512xf32>
    %40 = arith.maximumf %38, %39 : vector<16x512xf32>
    %41 = arith.truncf %40 : vector<16x512xf32> to vector<16x512xbf16>
    %c0_38 = arith.constant 0 : index
    %c0_39 = arith.constant 0 : index
    %42 = vector.load %arg20[%c0_38, %c0_39] : memref<20x512xbf16, #tpu.memory_space<vmem>>, vector<16x512xbf16>
    tpu.vector_store %arg20[%c0_38, %c0_39], %41 {strides = array<i32>} : memref<20x512xbf16, #tpu.memory_space<vmem>>, vector<16x512xbf16>,
    %c0_40 = arith.constant 0 : index
    %c0_41 = arith.constant 0 : index
    %43 = vector.load %arg20[%c0_40, %c0_41] : memref<20x512xbf16, #tpu.memory_space<vmem>>, vector<16x512xbf16>
    %c0_42 = arith.constant 0 : index
    %c0_43 = arith.constant 0 : index
    %44 = vector.load %arg8[%c0_42, %c0_43] : memref<512x512xbf16, #tpu.memory_space<vmem>>, vector<512x512xbf16>
    %cst_44 = arith.constant dense<0.000000e+00> : vector<16x512xf32>
    %45 = tpu.matmul %43, %44, %cst_44 {dimension_numbers = #tpu.dot_dimension_numbers<[1], [0], [0], [1], [0, 0, 1, 1], [], []>} : vector<16x512xbf16>, vector<512x512xbf16>, vector<16x512xf32> -> vector<16x512xf32>
    %c0_45 = arith.constant 0 : index
    %c0_46 = arith.constant 0 : index
    %46 = vector.load %arg9[%c0_45, %c0_46] : memref<1x512xf32, #tpu.memory_space<vmem>>, vector<1x512xf32>
    %47 = vector.broadcast %46 : vector<1x512xf32> to vector<16x512xf32>
    %48 = arith.addf %45, %47 : vector<16x512xf32>
    %cst_47 = arith.constant 0.000000e+00 : f32
    %49 = vector.broadcast %cst_47 : f32 to vector<16x512xf32>
    %50 = arith.maximumf %48, %49 : vector<16x512xf32>
    %51 = arith.truncf %50 : vector<16x512xf32> to vector<16x512xbf16>
    %c0_48 = arith.constant 0 : index
    %c0_49 = arith.constant 0 : index
    %52 = vector.load %arg21[%c0_48, %c0_49] : memref<20x512xbf16, #tpu.memory_space<vmem>>, vector<16x512xbf16>
    tpu.vector_store %arg21[%c0_48, %c0_49], %51 {strides = array<i32>} : memref<20x512xbf16, #tpu.memory_space<vmem>>, vector<16x512xbf16>,
    %c0_50 = arith.constant 0 : index
    %c0_51 = arith.constant 0 : index
    %53 = vector.load %arg21[%c0_50, %c0_51] : memref<20x512xbf16, #tpu.memory_space<vmem>>, vector<16x512xbf16>
    %c0_52 = arith.constant 0 : index
    %c0_53 = arith.constant 0 : index
    %54 = vector.load %arg10[%c0_52, %c0_53] : memref<512x512xbf16, #tpu.memory_space<vmem>>, vector<512x512xbf16>
    %cst_54 = arith.constant dense<0.000000e+00> : vector<16x512xf32>
    %55 = tpu.matmul %53, %54, %cst_54 {dimension_numbers = #tpu.dot_dimension_numbers<[1], [0], [0], [1], [0, 0, 1, 1], [], []>} : vector<16x512xbf16>, vector<512x512xbf16>, vector<16x512xf32> -> vector<16x512xf32>
    %c0_55 = arith.constant 0 : index
    %c0_56 = arith.constant 0 : index
    %56 = vector.load %arg11[%c0_55, %c0_56] : memref<1x512xf32, #tpu.memory_space<vmem>>, vector<1x512xf32>
    %57 = vector.broadcast %56 : vector<1x512xf32> to vector<16x512xf32>
    %58 = arith.addf %55, %57 : vector<16x512xf32>
    %cst_57 = arith.constant 0.000000e+00 : f32
    %59 = vector.broadcast %cst_57 : f32 to vector<16x512xf32>
    %60 = arith.maximumf %58, %59 : vector<16x512xf32>
    %61 = arith.truncf %60 : vector<16x512xf32> to vector<16x512xbf16>
    %c0_58 = arith.constant 0 : index
    %c0_59 = arith.constant 0 : index
    %62 = vector.load %arg20[%c0_58, %c0_59] : memref<20x512xbf16, #tpu.memory_space<vmem>>, vector<16x512xbf16>
    tpu.vector_store %arg20[%c0_58, %c0_59], %61 {strides = array<i32>} : memref<20x512xbf16, #tpu.memory_space<vmem>>, vector<16x512xbf16>,
    %c0_60 = arith.constant 0 : index
    %c0_61 = arith.constant 0 : index
    %63 = vector.load %arg20[%c0_60, %c0_61] : memref<20x512xbf16, #tpu.memory_space<vmem>>, vector<16x512xbf16>
    %64 = arith.extf %63 : vector<16x512xbf16> to vector<16x512xf32>
    %cst_62 = arith.constant dense<0.000000e+00> : vector<512xf32>
    %65 = vector.multi_reduction <add>, %64, %cst_62 [0] : vector<16x512xf32> to vector<512xf32>
    %66 = vector.shape_cast %65 : vector<512xf32> to vector<1x512xf32>
    %cst_63 = arith.constant 6.250000e-02 : f32
    %67 = vector.broadcast %cst_63 : f32 to vector<1x512xf32>
    %68 = arith.mulf %66, %67 : vector<1x512xf32>
    %69 = vector.broadcast %68 : vector<1x512xf32> to vector<16x512xf32>
    %70 = arith.subf %64, %69 : vector<16x512xf32>
    %71 = arith.mulf %70, %70 : vector<16x512xf32>
    %cst_64 = arith.constant dense<0.000000e+00> : vector<512xf32>
    %72 = vector.multi_reduction <add>, %71, %cst_64 [0] : vector<16x512xf32> to vector<512xf32>
    %73 = vector.shape_cast %72 : vector<512xf32> to vector<1x512xf32>
    %cst_65 = arith.constant 0.0666666701 : f32
    %74 = vector.broadcast %cst_65 : f32 to vector<1x512xf32>
    %75 = arith.mulf %73, %74 : vector<1x512xf32>
    %76 = arith.truncf %68 : vector<1x512xf32> to vector<1x512xbf16>
    %c0_66 = arith.constant 0 : index
    %c0_67 = arith.constant 0 : index
    %77 = vector.load %arg12[%c0_66, %c0_67] : memref<512x512xbf16, #tpu.memory_space<vmem>>, vector<512x512xbf16>
    %cst_68 = arith.constant dense<0.000000e+00> : vector<1x512xf32>
    %78 = tpu.matmul %76, %77, %cst_68 {dimension_numbers = #tpu.dot_dimension_numbers<[1], [0], [0], [1], [0, 0, 1, 1], [], []>} : vector<1x512xbf16>, vector<512x512xbf16>, vector<1x512xf32> -> vector<1x512xf32>
    %79 = arith.truncf %75 : vector<1x512xf32> to vector<1x512xbf16>
    %c0_69 = arith.constant 0 : index
    %c0_70 = arith.constant 0 : index
    %80 = vector.load %arg13[%c0_69, %c0_70] : memref<512x512xbf16, #tpu.memory_space<vmem>>, vector<512x512xbf16>
    %cst_71 = arith.constant dense<0.000000e+00> : vector<1x512xf32>
    %81 = tpu.matmul %79, %80, %cst_71 {dimension_numbers = #tpu.dot_dimension_numbers<[1], [0], [0], [1], [0, 0, 1, 1], [], []>} : vector<1x512xbf16>, vector<512x512xbf16>, vector<1x512xf32> -> vector<1x512xf32>
    %82 = arith.addf %78, %81 : vector<1x512xf32>
    %c0_72 = arith.constant 0 : index
    %c0_73 = arith.constant 0 : index
    %83 = vector.load %arg14[%c0_72, %c0_73] : memref<1x512xf32, #tpu.memory_space<vmem>>, vector<1x512xf32>
    %84 = arith.addf %82, %83 : vector<1x512xf32>
    %85 = arith.truncf %84 : vector<1x512xf32> to vector<1x512xbf16>
    %c0_74 = arith.constant 0 : index
    %c0_75 = arith.constant 0 : index
    %86 = vector.load %arg15[%c0_74, %c0_75] : memref<512x512xbf16, #tpu.memory_space<vmem>>, vector<512x512xbf16>
    %cst_76 = arith.constant dense<0.000000e+00> : vector<1x512xf32>
    %87 = tpu.matmul %85, %86, %cst_76 {dimension_numbers = #tpu.dot_dimension_numbers<[1], [0], [0], [1], [0, 0, 1, 1], [], []>} : vector<1x512xbf16>, vector<512x512xbf16>, vector<1x512xf32> -> vector<1x512xf32>
    %c0_77 = arith.constant 0 : index
    %c0_78 = arith.constant 0 : index
    %88 = vector.load %arg16[%c0_77, %c0_78] : memref<1x512xf32, #tpu.memory_space<vmem>>, vector<1x512xf32>
    %89 = arith.addf %87, %88 : vector<1x512xf32>
    %90 = arith.truncf %89 : vector<1x512xf32> to vector<1x512xbf16>
    %c0_79 = arith.constant 0 : index
    %c0_80 = arith.constant 0 : index
    %91 = vector.load %arg17[%c0_79, %c0_80] : memref<512x128xbf16, #tpu.memory_space<vmem>>, vector<512x128xbf16>
    %cst_81 = arith.constant dense<0.000000e+00> : vector<1x128xf32>
    %92 = tpu.matmul %90, %91, %cst_81 {dimension_numbers = #tpu.dot_dimension_numbers<[1], [0], [0], [1], [0, 0, 1, 1], [], []>} : vector<1x512xbf16>, vector<512x128xbf16>, vector<1x128xf32> -> vector<1x128xf32>
    %c0_82 = arith.constant 0 : index
    %c0_83 = arith.constant 0 : index
    %93 = vector.load %arg18[%c0_82, %c0_83] : memref<1x128xf32, #tpu.memory_space<vmem>>, vector<1x128xf32>
    %94 = arith.addf %92, %93 : vector<1x128xf32>
    %95 = vector.shape_cast %94 : vector<1x128xf32> to vector<1x128xf32>
    %96 = vector.broadcast %95 : vector<1x128xf32> to vector<8x128xf32>
    %c0_84 = arith.constant 0 : index
    %c0_85 = arith.constant 0 : index
    %c0_86 = arith.constant 0 : index
    %97 = vector.load %arg19[%c0_84, %c0_85, %c0_86] : memref<1x8x128xf32, #tpu.memory_space<vmem>>, vector<1x8x128xf32>
    %98 = vector.shape_cast %97 : vector<1x8x128xf32> to vector<8x128xf32>
    %99 = vector.shape_cast %96 : vector<8x128xf32> to vector<1x8x128xf32>
    tpu.vector_store %arg19[%c0_84, %c0_85, %c0_86], %99 {strides = array<i32>} : memref<1x8x128xf32, #tpu.memory_space<vmem>>, vector<1x8x128xf32>,
    return
  }
  func.func @transform_0(%arg0: i32) -> (i32, i32, i32) {
    %c0_i32 = arith.constant 0 : i32
    %c0_i32_0 = arith.constant 0 : i32
    %c0_i32_1 = arith.constant 0 : i32
    return %arg0, %c0_i32, %c0_i32_0 : i32, i32, i32
  }
  func.func @transform_1(%arg0: i32) -> (i32, i32) {
    %c0_i32 = arith.constant 0 : i32
    %c0_i32_0 = arith.constant 0 : i32
    %c0_i32_1 = arith.constant 0 : i32
    return %c0_i32, %c0_i32_0 : i32, i32
  }
  func.func @transform_2(%arg0: i32) -> (i32, i32) {
    %c0_i32 = arith.constant 0 : i32
    %c0_i32_0 = arith.constant 0 : i32
    %c0_i32_1 = arith.constant 0 : i32
    return %c0_i32, %c0_i32_0 : i32, i32
  }
  func.func @transform_3(%arg0: i32) -> (i32, i32) {
    %c0_i32 = arith.constant 0 : i32
    %c0_i32_0 = arith.constant 0 : i32
    %c0_i32_1 = arith.constant 0 : i32
    return %c0_i32, %c0_i32_0 : i32, i32
  }
  func.func @transform_4(%arg0: i32) -> (i32, i32) {
    %c0_i32 = arith.constant 0 : i32
    %c0_i32_0 = arith.constant 0 : i32
    %c0_i32_1 = arith.constant 0 : i32
    return %c0_i32, %c0_i32_0 : i32, i32
  }
  func.func @transform_5(%arg0: i32) -> (i32, i32) {
    %c0_i32 = arith.constant 0 : i32
    %c0_i32_0 = arith.constant 0 : i32
    %c0_i32_1 = arith.constant 0 : i32
    return %c0_i32, %c0_i32_0 : i32, i32
  }
  func.func @transform_6(%arg0: i32) -> (i32, i32) {
    %c0_i32 = arith.constant 0 : i32
    %c0_i32_0 = arith.constant 0 : i32
    %c0_i32_1 = arith.constant 0 : i32
    return %c0_i32, %c0_i32_0 : i32, i32
  }
  func.func @transform_7(%arg0: i32) -> (i32, i32) {
    %c0_i32 = arith.constant 0 : i32
    %c0_i32_0 = arith.constant 0 : i32
    %c0_i32_1 = arith.constant 0 : i32
    return %c0_i32, %c0_i32_0 : i32, i32
  }
  func.func @transform_8(%arg0: i32) -> (i32, i32) {
    %c0_i32 = arith.constant 0 : i32
    %c0_i32_0 = arith.constant 0 : i32
    %c0_i32_1 = arith.constant 0 : i32
    return %c0_i32, %c0_i32_0 : i32, i32
  }
  func.func @transform_9(%arg0: i32) -> (i32, i32) {
    %c0_i32 = arith.constant 0 : i32
    %c0_i32_0 = arith.constant 0 : i32
    %c0_i32_1 = arith.constant 0 : i32
    return %c0_i32, %c0_i32_0 : i32, i32
  }
  func.func @transform_10(%arg0: i32) -> (i32, i32) {
    %c0_i32 = arith.constant 0 : i32
    %c0_i32_0 = arith.constant 0 : i32
    %c0_i32_1 = arith.constant 0 : i32
    return %c0_i32, %c0_i32_0 : i32, i32
  }
  func.func @transform_11(%arg0: i32) -> (i32, i32) {
    %c0_i32 = arith.constant 0 : i32
    %c0_i32_0 = arith.constant 0 : i32
    %c0_i32_1 = arith.constant 0 : i32
    return %c0_i32, %c0_i32_0 : i32, i32
  }
  func.func @transform_12(%arg0: i32) -> (i32, i32) {
    %c0_i32 = arith.constant 0 : i32
    %c0_i32_0 = arith.constant 0 : i32
    %c0_i32_1 = arith.constant 0 : i32
    return %c0_i32, %c0_i32_0 : i32, i32
  }
  func.func @transform_13(%arg0: i32) -> (i32, i32) {
    %c0_i32 = arith.constant 0 : i32
    %c0_i32_0 = arith.constant 0 : i32
    %c0_i32_1 = arith.constant 0 : i32
    return %c0_i32, %c0_i32_0 : i32, i32
  }
  func.func @transform_14(%arg0: i32) -> (i32, i32) {
    %c0_i32 = arith.constant 0 : i32
    %c0_i32_0 = arith.constant 0 : i32
    %c0_i32_1 = arith.constant 0 : i32
    return %c0_i32, %c0_i32_0 : i32, i32
  }
  func.func @transform_15(%arg0: i32) -> (i32, i32) {
    %c0_i32 = arith.constant 0 : i32
    %c0_i32_0 = arith.constant 0 : i32
    %c0_i32_1 = arith.constant 0 : i32
    return %c0_i32, %c0_i32_0 : i32, i32
  }
  func.func @transform_16(%arg0: i32) -> (i32, i32) {
    %c0_i32 = arith.constant 0 : i32
    %c0_i32_0 = arith.constant 0 : i32
    %c0_i32_1 = arith.constant 0 : i32
    return %c0_i32, %c0_i32_0 : i32, i32
  }
  func.func @transform_17(%arg0: i32) -> (i32, i32) {
    %c0_i32 = arith.constant 0 : i32
    %c0_i32_0 = arith.constant 0 : i32
    %c0_i32_1 = arith.constant 0 : i32
    return %c0_i32, %c0_i32_0 : i32, i32
  }
  func.func @transform_18(%arg0: i32) -> (i32, i32, i32) {
    %c0_i32 = arith.constant 0 : i32
    %c0_i32_0 = arith.constant 0 : i32
    %c0_i32_1 = arith.constant 0 : i32
    return %arg0, %c0_i32, %c0_i32_0 : i32, i32, i32
  }
}

</mosaic_0001>

<llo_original>
// kernel: tpu_custom_call.1
$region0: #{tpu_custom_call.1}
  #allocation0 [shape = 'u32[]', space=smem, size = 0x4, offset = 0x4, fixed_abs, tag = 'smem constant byte address 0x4 - core index']
  #allocation1 [shape = 'u32[144,128]{1,0:T(1,128)}', space=vmem, size = 0x12000, scoped, tag = 'internal scratch']
  #allocation2 [shape = 'bf16[20,512]{1,0:T(8,128)(2,1)}', space=vmem, size = 0x6000, scoped, tag = 'scratch operand']
  #allocation3 [shape = 'bf16[20,512]{1,0:T(8,128)(2,1)}', space=vmem, size = 0x6000, scoped, tag = 'scratch operand']
  %s0 = inlined_call_operand.vmem [shape: bf16[2,20,400], index: 0, kind: input, shape index: {}]
  %s1 = inlined_call_operand.hbm [shape: bf16[400,512], index: 1, kind: input, shape index: {}]
  %s2 = inlined_call_operand.hbm [shape: f32[1,512], index: 2, kind: input, shape index: {}]
  %s3 = inlined_call_operand.hbm [shape: bf16[1536,512], index: 3, kind: input, shape index: {}]
  %s4 = inlined_call_operand.hbm [shape: f32[1,512], index: 4, kind: input, shape index: {}]
  %s5 = inlined_call_operand.hbm [shape: bf16[1024,512], index: 5, kind: input, shape index: {}]
  %s6 = inlined_call_operand.hbm [shape: f32[1,512], index: 6, kind: input, shape index: {}]
  %s7 = inlined_call_operand.hbm [shape: bf16[512,512], index: 7, kind: input, shape index: {}]
  %s8 = inlined_call_operand.hbm [shape: f32[1,512], index: 8, kind: input, shape index: {}]
  %s9 = inlined_call_operand.hbm [shape: bf16[512,512], index: 9, kind: input, shape index: {}]
  %s10 = inlined_call_operand.hbm [shape: f32[1,512], index: 10, kind: input, shape index: {}]
  %s11 = inlined_call_operand.hbm [shape: bf16[512,512], index: 11, kind: input, shape index: {}]
  %s12 = inlined_call_operand.hbm [shape: bf16[512,512], index: 12, kind: input, shape index: {}]
  %s13 = inlined_call_operand.hbm [shape: f32[1,512], index: 13, kind: input, shape index: {}]
  %s14 = inlined_call_operand.hbm [shape: bf16[512,512], index: 14, kind: input, shape index: {}]
  %s15 = inlined_call_operand.hbm [shape: f32[1,512], index: 15, kind: input, shape index: {}]
  %s16 = inlined_call_operand.hbm [shape: bf16[512,128], index: 16, kind: input, shape index: {}]
  %s17 = inlined_call_operand.hbm [shape: f32[1,128], index: 17, kind: input, shape index: {}]
  %s18 = inlined_call_operand.hbm [shape: f32[2,8,128], index: 18, kind: output, shape index: {}]
  %s19 = sld [smem:[#allocation0]]
  $region173: #{tpu_custom_call.1} parent=0
    _
  %s21 = ssub.s32 1, %s19
  %s22 = scalar_select 0, %s21, %s19
  $region1: #{tpu_custom_call.1} parent=0
    #allocation4 [shape = 'u8[409600]{0}', space=vmem, size = 0x64000, scoped, tag = 'input window, operand 1, single buffered']
    #allocation5 [shape = 's32[2]{0}', space=sflag, size = 0x8, scoped, tag = 'scoped memory for tpu_custom_call.1']
    #allocation6 [shape = 's32[2]{0}', space=sflag, size = 0x8, scoped, tag = 'scoped memory for tpu_custom_call.1']
    #allocation7 [shape = 'u8[2048]{0}', space=vmem, size = 0x800, scoped, tag = 'input window, operand 2, single buffered']
    #allocation8 [shape = 's32[1]{0}', space=sflag, size = 0x4, scoped, tag = 'scoped memory for tpu_custom_call.1']
    #allocation9 [shape = 'u8[1572864]{0}', space=vmem, size = 0x180000, scoped, tag = 'input window, operand 3, single buffered']
    #allocation10 [shape = 'u8[2048]{0}', space=vmem, size = 0x800, scoped, tag = 'input window, operand 4, single buffered']
    #allocation11 [shape = 's32[1]{0}', space=sflag, size = 0x4, scoped, tag = 'scoped memory for tpu_custom_call.1']
    #allocation12 [shape = 'u8[1048576]{0}', space=vmem, size = 0x100000, scoped, tag = 'input window, operand 5, single buffered']
    #allocation13 [shape = 'u8[2048]{0}', space=vmem, size = 0x800, scoped, tag = 'input window, operand 6, single buffered']
    #allocation14 [shape = 's32[1]{0}', space=sflag, size = 0x4, scoped, tag = 'scoped memory for tpu_custom_call.1']
    #allocation15 [shape = 'u8[524288]{0}', space=vmem, size = 0x80000, scoped, tag = 'input window, operand 7, single buffered']
    #allocation16 [shape = 'u8[2048]{0}', space=vmem, size = 0x800, scoped, tag = 'input window, operand 8, single buffered']
    #allocation17 [shape = 's32[1]{0}', space=sflag, size = 0x4, scoped, tag = 'scoped memory for tpu_custom_call.1']
    #allocation18 [shape = 'u8[524288]{0}', space=vmem, size = 0x80000, scoped, tag = 'input window, operand 9, single buffered']
    #allocation19 [shape = 'u8[2048]{0}', space=vmem, size = 0x800, scoped, tag = 'input window, operand 10, single buffered']
    #allocation20 [shape = 's32[1]{0}', space=sflag, size = 0x4, scoped, tag = 'scoped memory for tpu_custom_call.1']
    #allocation21 [shape = 'u8[524288]{0}', space=vmem, size = 0x80000, scoped, tag = 'input window, operand 11, single buffered']
    #allocation22 [shape = 'u8[524288]{0}', space=vmem, size = 0x80000, scoped, tag = 'input window, operand 12, single buffered']
    #allocation23 [shape = 's32[1]{0}', space=sflag, size = 0x4, scoped, tag = 'scoped memory for tpu_custom_call.1']
    #allocation24 [shape = 'u8[2048]{0}', space=vmem, size = 0x800, scoped, tag = 'input window, operand 13, single buffered']
    #allocation25 [shape = 'u8[524288]{0}', space=vmem, size = 0x80000, scoped, tag = 'input window, operand 14, single buffered']
    #allocation26 [shape = 's32[1]{0}', space=sflag, size = 0x4, scoped, tag = 'scoped memory for tpu_custom_call.1']
    #allocation27 [shape = 'u8[2048]{0}', space=vmem, size = 0x800, scoped, tag = 'input window, operand 15, single buffered']
    #allocation28 [shape = 'u8[131072]{0}', space=vmem, size = 0x20000, scoped, tag = 'input window, operand 16, single buffered']
    #allocation29 [shape = 's32[1]{0}', space=sflag, size = 0x4, scoped, tag = 'scoped memory for tpu_custom_call.1']
    #allocation30 [shape = 'u8[512]{0}', space=vmem, size = 0x400, scoped, tag = 'input window, operand 17, single buffered']
    #allocation31 [shape = 'u8[8192]{0}', space=vmem, size = 0x2000, scoped, tag = 'output window, operand 0']
    %23 = vsyncpa [#allocation5], 0
    %24 = vsyncpa [#allocation8], 0
    %25 = vsyncpa [#allocation11], 0
    %26 = vsyncpa [#allocation14], 0
    %27 = vsyncpa [#allocation17], 0
    %28 = vsyncpa [#allocation20], 0
    %29 = vsyncpa [#allocation23], 0
    %30 = vsyncpa [#allocation26], 0
    %31 = vsyncpa [#allocation29], 0
    %32 = vsyncpa [#allocation6], 0
    %s33 = scalar_lea.sflag [#allocation6], 1
    %34 = vsyncpa %s33, 0
    loop: start=0, step=1, limit=4
    $region2: #{tpu_custom_call.1} parent=1 // loop_pre_header
      _
    $region3: #{tpu_custom_call.1} parent=1 // loop_header
      %s36 = sphi 0, %s40
      %p37 = scmp.ge.s32.totalorder %s36, 4
      %s46 = sphi 0, %s48
      %s49 = sphi 0, %s46
      %s50 = sphi 0, %s49
      %s66 = sphi 0, %s50
      %s70 = sphi 0, %s70
      %s72 = sphi 0, %s70
      %s73 = sphi 0, %s72
      %s87 = sphi 0, %s73
      %s91 = sphi 0, %s91
      %s93 = sphi 0, %s91
      %s94 = sphi 0, %s93
      %s108 = sphi 0, %s94
      %s112 = sphi 0, %s112
      %s114 = sphi 0, %s112
      %s115 = sphi 0, %s114
      %s129 = sphi 0, %s115
      %s133 = sphi 0, %s133
      %s135 = sphi 0, %s133
      %s136 = sphi 0, %s135
      %s150 = sphi 0, %s136
      %s154 = sphi 0, %s154
      %s156 = sphi 0, %s154
      %s157 = sphi 0, %s156
      %s171 = sphi 0, %s157
      %s175 = sphi 0, %s175
      %s177 = sphi 0, %s175
      %s178 = sphi 0, %s177
      %s192 = sphi 0, %s178
      %s196 = sphi 0, %s196
      %s198 = sphi 0, %s196
      %s199 = sphi 0, %s198
      %s213 = sphi 0, %s199
      %s217 = sphi 0, %s217
      %s219 = sphi 0, %s217
      %s220 = sphi 0, %s219
      %s234 = sphi 0, %s220
      %s238 = sphi 0, %s238
      %s240 = sphi 0, %s238
      %s241 = sphi 0, %s240
      %s255 = sphi 0, %s241
      %s259 = sphi 0, %s259
      %s261 = sphi 0, %s259
      %s262 = sphi 0, %s261
      %s276 = sphi 0, %s262
      %s280 = sphi 0, %s280
      %s282 = sphi 0, %s280
      %s283 = sphi 0, %s282
      %s297 = sphi 0, %s283
      %s301 = sphi 0, %s301
      %s303 = sphi 0, %s301
      %s304 = sphi 0, %s303
      %s318 = sphi 0, %s304
      %s322 = sphi 0, %s322
      %s324 = sphi 0, %s322
      %s325 = sphi 0, %s324
      %s339 = sphi 0, %s325
      %s343 = sphi 0, %s343
      %s345 = sphi 0, %s343
      %s346 = sphi 0, %s345
      %s360 = sphi 0, %s346
      %s364 = sphi 0, %s364
      %s366 = sphi 0, %s364
      %s367 = sphi 0, %s366
      %s381 = sphi 0, %s367
      %s385 = sphi 0, %s385
      %s387 = sphi 0, %s385
      %s388 = sphi 0, %s387
      %s402 = sphi 0, %s388
      %s406 = sphi 0, %s406
      %s408 = sphi 0, %s406
      %s409 = sphi 0, %s408
      %s423 = sphi 0, %s409
      %s429 = sphi 0, %s431
      %s432 = sphi 0, %s429
      %s433 = sphi 0, %s432
      %s449 = sphi 0, %s433
    $region4: #{tpu_custom_call.1} parent=1 // loop_header_branch
      %39 = sbr.rel (%p37) target = $region8
    $region5: #{tpu_custom_call.1} parent=1 // loop_body
      %s41 = ssub.s32 %s36, 1
      %s42 = ssub.s32 %s36, 2
      %s43 = sadd.s32 %s36, 1
      %s44 = ssub.s32 %s36, %s43
      %p45 = scmp.eq.s32.totalorder %s44, 0
      %s47 = sadd.s32 %s46, 1
      %s48 = scalar_select %p45, %s46, %s47
      %p51 = pneg %p45
      %p52 = scmp.eq.s32.totalorder %s36, 1
      %p53 = por %p51, %p52
      %p54 = scmp.ne.s32.totalorder %s46, %s49
      %p55 = scmp.eq.s32.totalorder %s36, 0
      %p56 = por %p54, %p55
      %p57 = scmp.ne.s32.totalorder %s46, %s49
      %p58 = scmp.eq.s32.totalorder %s41, 1
      %p59 = por %p57, %p58
      %p60 = scmp.ne.s32.totalorder %s49, %s50
      %p61 = scmp.eq.s32.totalorder %s41, 0
      %p62 = por %p60, %p61
      %p63 = scmp.ne.s32.totalorder %s49, %s50
      %p64 = scmp.eq.s32.totalorder %s42, 1
      %p65 = por %p63, %p64
      %p67 = scmp.ne.s32.totalorder %s50, %s66
      %p68 = scmp.eq.s32.totalorder %s42, 0
      %p69 = por %p67, %p68
      %s71 = sadd.s32 %s70, 1
      %p74 = scmp.eq.s32.totalorder %s36, 1
      %p75 = scmp.ne.s32.totalorder %s70, %s72
      %p76 = scmp.eq.s32.totalorder %s36, 0
      %p77 = por %p75, %p76
      %p78 = scmp.ne.s32.totalorder %s70, %s72
      %p79 = scmp.eq.s32.totalorder %s41, 1
      %p80 = por %p78, %p79
      %p81 = scmp.ne.s32.totalorder %s72, %s73
      %p82 = scmp.eq.s32.totalorder %s41, 0
      %p83 = por %p81, %p82
      %p84 = scmp.ne.s32.totalorder %s72, %s73
      %p85 = scmp.eq.s32.totalorder %s42, 1
      %p86 = por %p84, %p85
      %p88 = scmp.ne.s32.totalorder %s73, %s87
      %p89 = scmp.eq.s32.totalorder %s42, 0
      %p90 = por %p88, %p89
      %s92 = sadd.s32 %s91, 1
      %p95 = scmp.eq.s32.totalorder %s36, 1
      %p96 = scmp.ne.s32.totalorder %s91, %s93
      %p97 = scmp.eq.s32.totalorder %s36, 0
      %p98 = por %p96, %p97
      %p99 = scmp.ne.s32.totalorder %s91, %s93
      %p100 = scmp.eq.s32.totalorder %s41, 1
      %p101 = por %p99, %p100
      %p102 = scmp.ne.s32.totalorder %s93, %s94
      %p103 = scmp.eq.s32.totalorder %s41, 0
      %p104 = por %p102, %p103
      %p105 = scmp.ne.s32.totalorder %s93, %s94
      %p106 = scmp.eq.s32.totalorder %s42, 1
      %p107 = por %p105, %p106
      %p109 = scmp.ne.s32.totalorder %s94, %s108
      %p110 = scmp.eq.s32.totalorder %s42, 0
      %p111 = por %p109, %p110
      %s113 = sadd.s32 %s112, 1
      %p116 = scmp.eq.s32.totalorder %s36, 1
      %p117 = scmp.ne.s32.totalorder %s112, %s114
      %p118 = scmp.eq.s32.totalorder %s36, 0
      %p119 = por %p117, %p118
      %p120 = scmp.ne.s32.totalorder %s112, %s114
      %p121 = scmp.eq.s32.totalorder %s41, 1
      %p122 = por %p120, %p121
      %p123 = scmp.ne.s32.totalorder %s114, %s115
      %p124 = scmp.eq.s32.totalorder %s41, 0
      %p125 = por %p123, %p124
      %p126 = scmp.ne.s32.totalorder %s114, %s115
      %p127 = scmp.eq.s32.totalorder %s42, 1
      %p128 = por %p126, %p127
      %p130 = scmp.ne.s32.totalorder %s115, %s129
      %p131 = scmp.eq.s32.totalorder %s42, 0
      %p132 = por %p130, %p131
      %s134 = sadd.s32 %s133, 1
      %p137 = scmp.eq.s32.totalorder %s36, 1
      %p138 = scmp.ne.s32.totalorder %s133, %s135
      %p139 = scmp.eq.s32.totalorder %s36, 0
      %p140 = por %p138, %p139
      %p141 = scmp.ne.s32.totalorder %s133, %s135
      %p142 = scmp.eq.s32.totalorder %s41, 1
      %p143 = por %p141, %p142
      %p144 = scmp.ne.s32.totalorder %s135, %s136
      %p145 = scmp.eq.s32.totalorder %s41, 0
      %p146 = por %p144, %p145
      %p147 = scmp.ne.s32.totalorder %s135, %s136
      %p148 = scmp.eq.s32.totalorder %s42, 1
      %p149 = por %p147, %p148
      %p151 = scmp.ne.s32.totalorder %s136, %s150
      %p152 = scmp.eq.s32.totalorder %s42, 0
      %p153 = por %p151, %p152
      %s155 = sadd.s32 %s154, 1
      %p158 = scmp.eq.s32.totalorder %s36, 1
      %p159 = scmp.ne.s32.totalorder %s154, %s156
      %p160 = scmp.eq.s32.totalorder %s36, 0
      %p161 = por %p159, %p160
      %p162 = scmp.ne.s32.totalorder %s154, %s156
      %p163 = scmp.eq.s32.totalorder %s41, 1
      %p164 = por %p162, %p163
      %p165 = scmp.ne.s32.totalorder %s156, %s157
      %p166 = scmp.eq.s32.totalorder %s41, 0
      %p167 = por %p165, %p166
      %p168 = scmp.ne.s32.totalorder %s156, %s157
      %p169 = scmp.eq.s32.totalorder %s42, 1
      %p170 = por %p168, %p169
      %p172 = scmp.ne.s32.totalorder %s157, %s171
      %p173 = scmp.eq.s32.totalorder %s42, 0
      %p174 = por %p172, %p173
      %s176 = sadd.s32 %s175, 1
      %p179 = scmp.eq.s32.totalorder %s36, 1
      %p180 = scmp.ne.s32.totalorder %s175, %s177
      %p181 = scmp.eq.s32.totalorder %s36, 0
      %p182 = por %p180, %p181
      %p183 = scmp.ne.s32.totalorder %s175, %s177
      %p184 = scmp.eq.s32.totalorder %s41, 1
      %p185 = por %p183, %p184
      %p186 = scmp.ne.s32.totalorder %s177, %s178
      %p187 = scmp.eq.s32.totalorder %s41, 0
      %p188 = por %p186, %p187
      %p189 = scmp.ne.s32.totalorder %s177, %s178
      %p190 = scmp.eq.s32.totalorder %s42, 1
      %p191 = por %p189, %p190
      %p193 = scmp.ne.s32.totalorder %s178, %s192
      %p194 = scmp.eq.s32.totalorder %s42, 0
      %p195 = por %p193, %p194
      %s197 = sadd.s32 %s196, 1
      %p200 = scmp.eq.s32.totalorder %s36, 1
      %p201 = scmp.ne.s32.totalorder %s196, %s198
      %p202 = scmp.eq.s32.totalorder %s36, 0
      %p203 = por %p201, %p202
      %p204 = scmp.ne.s32.totalorder %s196, %s198
      %p205 = scmp.eq.s32.totalorder %s41, 1
      %p206 = por %p204, %p205
      %p207 = scmp.ne.s32.totalorder %s198, %s199
      %p208 = scmp.eq.s32.totalorder %s41, 0
      %p209 = por %p207, %p208
      %p210 = scmp.ne.s32.totalorder %s198, %s199
      %p211 = scmp.eq.s32.totalorder %s42, 1
      %p212 = por %p210, %p211
      %p214 = scmp.ne.s32.totalorder %s199, %s213
      %p215 = scmp.eq.s32.totalorder %s42, 0
      %p216 = por %p214, %p215
      %s218 = sadd.s32 %s217, 1
      %p221 = scmp.eq.s32.totalorder %s36, 1
      %p222 = scmp.ne.s32.totalorder %s217, %s219
      %p223 = scmp.eq.s32.totalorder %s36, 0
      %p224 = por %p222, %p223
      %p225 = scmp.ne.s32.totalorder %s217, %s219
      %p226 = scmp.eq.s32.totalorder %s41, 1
      %p227 = por %p225, %p226
      %p228 = scmp.ne.s32.totalorder %s219, %s220
      %p229 = scmp.eq.s32.totalorder %s41, 0
      %p230 = por %p228, %p229
      %p231 = scmp.ne.s32.totalorder %s219, %s220
      %p232 = scmp.eq.s32.totalorder %s42, 1
      %p233 = por %p231, %p232
      %p235 = scmp.ne.s32.totalorder %s220, %s234
      %p236 = scmp.eq.s32.totalorder %s42, 0
      %p237 = por %p235, %p236
      %s239 = sadd.s32 %s238, 1
      %p242 = scmp.eq.s32.totalorder %s36, 1
      %p243 = scmp.ne.s32.totalorder %s238, %s240
      %p244 = scmp.eq.s32.totalorder %s36, 0
      %p245 = por %p243, %p244
      %p246 = scmp.ne.s32.totalorder %s238, %s240
      %p247 = scmp.eq.s32.totalorder %s41, 1
      %p248 = por %p246, %p247
      %p249 = scmp.ne.s32.totalorder %s240, %s241
      %p250 = scmp.eq.s32.totalorder %s41, 0
      %p251 = por %p249, %p250
      %p252 = scmp.ne.s32.totalorder %s240, %s241
      %p253 = scmp.eq.s32.totalorder %s42, 1
      %p254 = por %p252, %p253
      %p256 = scmp.ne.s32.totalorder %s241, %s255
      %p257 = scmp.eq.s32.totalorder %s42, 0
      %p258 = por %p256, %p257
      %s260 = sadd.s32 %s259, 1
      %p263 = scmp.eq.s32.totalorder %s36, 1
      %p264 = scmp.ne.s32.totalorder %s259, %s261
      %p265 = scmp.eq.s32.totalorder %s36, 0
      %p266 = por %p264, %p265
      %p267 = scmp.ne.s32.totalorder %s259, %s261
      %p268 = scmp.eq.s32.totalorder %s41, 1
      %p269 = por %p267, %p268
      %p270 = scmp.ne.s32.totalorder %s261, %s262
      %p271 = scmp.eq.s32.totalorder %s41, 0
      %p272 = por %p270, %p271
      %p273 = scmp.ne.s32.totalorder %s261, %s262
      %p274 = scmp.eq.s32.totalorder %s42, 1
      %p275 = por %p273, %p274
      %p277 = scmp.ne.s32.totalorder %s262, %s276
      %p278 = scmp.eq.s32.totalorder %s42, 0
      %p279 = por %p277, %p278
      %s281 = sadd.s32 %s280, 1
      %p284 = scmp.eq.s32.totalorder %s36, 1
      %p285 = scmp.ne.s32.totalorder %s280, %s282
      %p286 = scmp.eq.s32.totalorder %s36, 0
      %p287 = por %p285, %p286
      %p288 = scmp.ne.s32.totalorder %s280, %s282
      %p289 = scmp.eq.s32.totalorder %s41, 1
      %p290 = por %p288, %p289
      %p291 = scmp.ne.s32.totalorder %s282, %s283
      %p292 = scmp.eq.s32.totalorder %s41, 0
      %p293 = por %p291, %p292
      %p294 = scmp.ne.s32.totalorder %s282, %s283
      %p295 = scmp.eq.s32.totalorder %s42, 1
      %p296 = por %p294, %p295
      %p298 = scmp.ne.s32.totalorder %s283, %s297
      %p299 = scmp.eq.s32.totalorder %s42, 0
      %p300 = por %p298, %p299
      %s302 = sadd.s32 %s301, 1
      %p305 = scmp.eq.s32.totalorder %s36, 1
      %p306 = scmp.ne.s32.totalorder %s301, %s303
      %p307 = scmp.eq.s32.totalorder %s36, 0
      %p308 = por %p306, %p307
      %p309 = scmp.ne.s32.totalorder %s301, %s303
      %p310 = scmp.eq.s32.totalorder %s41, 1
      %p311 = por %p309, %p310
      %p312 = scmp.ne.s32.totalorder %s303, %s304
      %p313 = scmp.eq.s32.totalorder %s41, 0
      %p314 = por %p312, %p313
      %p315 = scmp.ne.s32.totalorder %s303, %s304
      %p316 = scmp.eq.s32.totalorder %s42, 1
      %p317 = por %p315, %p316
      %p319 = scmp.ne.s32.totalorder %s304, %s318
      %p320 = scmp.eq.s32.totalorder %s42, 0
      %p321 = por %p319, %p320
      %s323 = sadd.s32 %s322, 1
      %p326 = scmp.eq.s32.totalorder %s36, 1
      %p327 = scmp.ne.s32.totalorder %s322, %s324
      %p328 = scmp.eq.s32.totalorder %s36, 0
      %p329 = por %p327, %p328
      %p330 = scmp.ne.s32.totalorder %s322, %s324
      %p331 = scmp.eq.s32.totalorder %s41, 1
      %p332 = por %p330, %p331
      %p333 = scmp.ne.s32.totalorder %s324, %s325
      %p334 = scmp.eq.s32.totalorder %s41, 0
      %p335 = por %p333, %p334
      %p336 = scmp.ne.s32.totalorder %s324, %s325
      %p337 = scmp.eq.s32.totalorder %s42, 1
      %p338 = por %p336, %p337
      %p340 = scmp.ne.s32.totalorder %s325, %s339
      %p341 = scmp.eq.s32.totalorder %s42, 0
      %p342 = por %p340, %p341
      %s344 = sadd.s32 %s343, 1
      %p347 = scmp.eq.s32.totalorder %s36, 1
      %p348 = scmp.ne.s32.totalorder %s343, %s345
      %p349 = scmp.eq.s32.totalorder %s36, 0
      %p350 = por %p348, %p349
      %p351 = scmp.ne.s32.totalorder %s343, %s345
      %p352 = scmp.eq.s32.totalorder %s41, 1
      %p353 = por %p351, %p352
      %p354 = scmp.ne.s32.totalorder %s345, %s346
      %p355 = scmp.eq.s32.totalorder %s41, 0
      %p356 = por %p354, %p355
      %p357 = scmp.ne.s32.totalorder %s345, %s346
      %p358 = scmp.eq.s32.totalorder %s42, 1
      %p359 = por %p357, %p358
      %p361 = scmp.ne.s32.totalorder %s346, %s360
      %p362 = scmp.eq.s32.totalorder %s42, 0
      %p363 = por %p361, %p362
      %s365 = sadd.s32 %s364, 1
      %p368 = scmp.eq.s32.totalorder %s36, 1
      %p369 = scmp.ne.s32.totalorder %s364, %s366
      %p370 = scmp.eq.s32.totalorder %s36, 0
      %p371 = por %p369, %p370
      %p372 = scmp.ne.s32.totalorder %s364, %s366
      %p373 = scmp.eq.s32.totalorder %s41, 1
      %p374 = por %p372, %p373
      %p375 = scmp.ne.s32.totalorder %s366, %s367
      %p376 = scmp.eq.s32.totalorder %s41, 0
      %p377 = por %p375, %p376
      %p378 = scmp.ne.s32.totalorder %s366, %s367
      %p379 = scmp.eq.s32.totalorder %s42, 1
      %p380 = por %p378, %p379
      %p382 = scmp.ne.s32.totalorder %s367, %s381
      %p383 = scmp.eq.s32.totalorder %s42, 0
      %p384 = por %p382, %p383
      %s386 = sadd.s32 %s385, 1
      %p389 = scmp.eq.s32.totalorder %s36, 1
      %p390 = scmp.ne.s32.totalorder %s385, %s387
      %p391 = scmp.eq.s32.totalorder %s36, 0
      %p392 = por %p390, %p391
      %p393 = scmp.ne.s32.totalorder %s385, %s387
      %p394 = scmp.eq.s32.totalorder %s41, 1
      %p395 = por %p393, %p394
      %p396 = scmp.ne.s32.totalorder %s387, %s388
      %p397 = scmp.eq.s32.totalorder %s41, 0
      %p398 = por %p396, %p397
      %p399 = scmp.ne.s32.totalorder %s387, %s388
      %p400 = scmp.eq.s32.totalorder %s42, 1
      %p401 = por %p399, %p400
      %p403 = scmp.ne.s32.totalorder %s388, %s402
      %p404 = scmp.eq.s32.totalorder %s42, 0
      %p405 = por %p403, %p404
      %s407 = sadd.s32 %s406, 1
      %p410 = scmp.eq.s32.totalorder %s36, 1
      %p411 = scmp.ne.s32.totalorder %s406, %s408
      %p412 = scmp.eq.s32.totalorder %s36, 0
      %p413 = por %p411, %p412
      %p414 = scmp.ne.s32.totalorder %s406, %s408
      %p415 = scmp.eq.s32.totalorder %s41, 1
      %p416 = por %p414, %p415
      %p417 = scmp.ne.s32.totalorder %s408, %s409
      %p418 = scmp.eq.s32.totalorder %s41, 0
      %p419 = por %p417, %p418
      %p420 = scmp.ne.s32.totalorder %s408, %s409
      %p421 = scmp.eq.s32.totalorder %s42, 1
      %p422 = por %p420, %p421
      %p424 = scmp.ne.s32.totalorder %s409, %s423
      %p425 = scmp.eq.s32.totalorder %s42, 0
      %p426 = por %p424, %p425
      %s427 = ssub.s32 %s36, %s43
      %p428 = scmp.eq.s32.totalorder %s427, 0
      %s430 = sadd.s32 %s429, 1
      %s431 = scalar_select %p428, %s429, %s430
      %p434 = pneg %p428
      %p435 = scmp.eq.s32.totalorder %s36, 1
      %p436 = por %p434, %p435
      %p437 = scmp.ne.s32.totalorder %s429, %s432
      %p438 = scmp.eq.s32.totalorder %s36, 0
      %p439 = por %p437, %p438
      %p440 = scmp.ne.s32.totalorder %s429, %s432
      %p441 = scmp.eq.s32.totalorder %s41, 1
      %p442 = por %p440, %p441
      %p443 = scmp.ne.s32.totalorder %s432, %s433
      %p444 = scmp.eq.s32.totalorder %s41, 0
      %p445 = por %p443, %p444
      %p446 = scmp.ne.s32.totalorder %s432, %s433
      %p447 = scmp.eq.s32.totalorder %s42, 1
      %p448 = por %p446, %p447
      %p450 = scmp.ne.s32.totalorder %s433, %s449
      %p451 = scmp.eq.s32.totalorder %s42, 0
      %p452 = por %p450, %p451
      %p453 = scmp.le.s32.totalorder 1, %s36
      %p454 = scmp.lt.s32.totalorder %s36, 3
      %p455 = pnand %p453, %p454
      %p456 = pneg %p455
      // Predicated region
      $region9: #{tpu_custom_call.1} parent=5 // pred_check
        _
      $region10: #{tpu_custom_call.1} parent=5 // pred_check_branch
        %458 = sbr.rel (%p455) target = $region12
      $region11: #{tpu_custom_call.1} parent=5 // pred_region
        %s459 = ssub.s32 %s36, 1
        // Predicated region
        $region13: #{tpu_custom_call.1} parent=11 // pred_check
          %p460 = pneg %p83
        $region14: #{tpu_custom_call.1} parent=11 // pred_check_branch
          %462 = sbr.rel (%p460) target = $region16
        $region15: #{tpu_custom_call.1} parent=11 // pred_region
          %s464 = ssub.s32 12800, 12800
          %465 = vsyncadd [#allocation5], %s464
          %s466 = sshll.u32 [#allocation4], 4
          %s467 = int_to_ptr.vmem [resolvable:$true] %s466
          %472 = dma.hbm_to_vmem [thread:$0]  %s1, 12800, %s467, [#allocation5], 256, 256, 16
        $region16: #{tpu_custom_call.1} parent=11 // pred_fallthru
          _
        // Predicated region
        $region17: #{tpu_custom_call.1} parent=11 // pred_check
          %p473 = pneg %p104
        $region18: #{tpu_custom_call.1} parent=11 // pred_check_branch
          %475 = sbr.rel (%p473) target = $region20
        $region19: #{tpu_custom_call.1} parent=11 // pred_region
          %s477 = ssub.s32 64, 64
          %478 = vsyncadd [#allocation8], %s477
          %s480 = sshll.u32 [#allocation7], 4
          %s481 = int_to_ptr.vmem [resolvable:$true] %s480
          %483 = dma.hbm_to_vmem [thread:$0]  %s2, 64, %s481, [#allocation8]
        $region20: #{tpu_custom_call.1} parent=11 // pred_fallthru
          _
        // Predicated region
        $region21: #{tpu_custom_call.1} parent=11 // pred_check
          %p484 = pneg %p125
        $region22: #{tpu_custom_call.1} parent=11 // pred_check_branch
          %486 = sbr.rel (%p484) target = $region24
        $region23: #{tpu_custom_call.1} parent=11 // pred_region
          %s488 = ssub.s32 49152, 49152
          %489 = vsyncadd [#allocation8], %s488
          %s490 = sshll.u32 [#allocation9], 4
          %s491 = int_to_ptr.vmem [resolvable:$true] %s490
          %496 = dma.hbm_to_vmem [thread:$0]  %s3, 49152, %s491, [#allocation8], 256, 256, 16
        $region24: #{tpu_custom_call.1} parent=11 // pred_fallthru
          _
        // Predicated region
        $region25: #{tpu_custom_call.1} parent=11 // pred_check
          %p497 = pneg %p146
        $region26: #{tpu_custom_call.1} parent=11 // pred_check_branch
          %499 = sbr.rel (%p497) target = $region28
        $region27: #{tpu_custom_call.1} parent=11 // pred_region
          %s501 = ssub.s32 64, 64
          %502 = vsyncadd [#allocation11], %s501
          %s504 = sshll.u32 [#allocation10], 4
          %s505 = int_to_ptr.vmem [resolvable:$true] %s504
          %507 = dma.hbm_to_vmem [thread:$0]  %s4, 64, %s505, [#allocation11]
        $region28: #{tpu_custom_call.1} parent=11 // pred_fallthru
          _
        // Predicated region
        $region29: #{tpu_custom_call.1} parent=11 // pred_check
          %p508 = pneg %p167
        $region30: #{tpu_custom_call.1} parent=11 // pred_check_branch
          %510 = sbr.rel (%p508) target = $region32
        $region31: #{tpu_custom_call.1} parent=11 // pred_region
          %s512 = ssub.s32 32768, 32768
          %513 = vsyncadd [#allocation11], %s512
          %s514 = sshll.u32 [#allocation12], 4
          %s515 = int_to_ptr.vmem [resolvable:$true] %s514
          %520 = dma.hbm_to_vmem [thread:$0]  %s5, 32768, %s515, [#allocation11], 256, 256, 16
        $region32: #{tpu_custom_call.1} parent=11 // pred_fallthru
          _
        // Predicated region
        $region33: #{tpu_custom_call.1} parent=11 // pred_check
          %p521 = pneg %p188
        $region34: #{tpu_custom_call.1} parent=11 // pred_check_branch
          %523 = sbr.rel (%p521) target = $region36
        $region35: #{tpu_custom_call.1} parent=11 // pred_region
          %s525 = ssub.s32 64, 64
          %526 = vsyncadd [#allocation14], %s525
          %s528 = sshll.u32 [#allocation13], 4
          %s529 = int_to_ptr.vmem [resolvable:$true] %s528
          %531 = dma.hbm_to_vmem [thread:$0]  %s6, 64, %s529, [#allocation14]
        $region36: #{tpu_custom_call.1} parent=11 // pred_fallthru
          _
        // Predicated region
        $region37: #{tpu_custom_call.1} parent=11 // pred_check
          %p532 = pneg %p209
        $region38: #{tpu_custom_call.1} parent=11 // pred_check_branch
          %534 = sbr.rel (%p532) target = $region40
        $region39: #{tpu_custom_call.1} parent=11 // pred_region
          %s536 = ssub.s32 16384, 16384
          %537 = vsyncadd [#allocation14], %s536
          %s538 = sshll.u32 [#allocation15], 4
          %s539 = int_to_ptr.vmem [resolvable:$true] %s538
          %544 = dma.hbm_to_vmem [thread:$0]  %s7, 16384, %s539, [#allocation14], 256, 256, 16
        $region40: #{tpu_custom_call.1} parent=11 // pred_fallthru
          _
        // Predicated region
        $region41: #{tpu_custom_call.1} parent=11 // pred_check
          %p545 = pneg %p230
        $region42: #{tpu_custom_call.1} parent=11 // pred_check_branch
          %547 = sbr.rel (%p545) target = $region44
        $region43: #{tpu_custom_call.1} parent=11 // pred_region
          %s549 = ssub.s32 64, 64
          %550 = vsyncadd [#allocation17], %s549
          %s552 = sshll.u32 [#allocation16], 4
          %s553 = int_to_ptr.vmem [resolvable:$true] %s552
          %555 = dma.hbm_to_vmem [thread:$0]  %s8, 64, %s553, [#allocation17]
        $region44: #{tpu_custom_call.1} parent=11 // pred_fallthru
          _
        // Predicated region
        $region45: #{tpu_custom_call.1} parent=11 // pred_check
          %p556 = pneg %p251
        $region46: #{tpu_custom_call.1} parent=11 // pred_check_branch
          %558 = sbr.rel (%p556) target = $region48
        $region47: #{tpu_custom_call.1} parent=11 // pred_region
          %s560 = ssub.s32 16384, 16384
          %561 = vsyncadd [#allocation17], %s560
          %s562 = sshll.u32 [#allocation18], 4
          %s563 = int_to_ptr.vmem [resolvable:$true] %s562
          %568 = dma.hbm_to_vmem [thread:$0]  %s9, 16384, %s563, [#allocation17], 256, 256, 16
        $region48: #{tpu_custom_call.1} parent=11 // pred_fallthru
          _
        // Predicated region
        $region49: #{tpu_custom_call.1} parent=11 // pred_check
          %p569 = pneg %p272
        $region50: #{tpu_custom_call.1} parent=11 // pred_check_branch
          %571 = sbr.rel (%p569) target = $region52
        $region51: #{tpu_custom_call.1} parent=11 // pred_region
          %s573 = ssub.s32 64, 64
          %574 = vsyncadd [#allocation20], %s573
          %s576 = sshll.u32 [#allocation19], 4
          %s577 = int_to_ptr.vmem [resolvable:$true] %s576
          %579 = dma.hbm_to_vmem [thread:$0]  %s10, 64, %s577, [#allocation20]
        $region52: #{tpu_custom_call.1} parent=11 // pred_fallthru
          _
        // Predicated region
        $region53: #{tpu_custom_call.1} parent=11 // pred_check
          %p580 = pneg %p293
        $region54: #{tpu_custom_call.1} parent=11 // pred_check_branch
          %582 = sbr.rel (%p580) target = $region56
        $region55: #{tpu_custom_call.1} parent=11 // pred_region
          %s584 = ssub.s32 16384, 16384
          %585 = vsyncadd [#allocation20], %s584
          %s586 = sshll.u32 [#allocation21], 4
          %s587 = int_to_ptr.vmem [resolvable:$true] %s586
          %592 = dma.hbm_to_vmem [thread:$0]  %s11, 16384, %s587, [#allocation20], 256, 256, 16
        $region56: #{tpu_custom_call.1} parent=11 // pred_fallthru
          _
        // Predicated region
        $region57: #{tpu_custom_call.1} parent=11 // pred_check
          %p593 = pneg %p314
        $region58: #{tpu_custom_call.1} parent=11 // pred_check_branch
          %595 = sbr.rel (%p593) target = $region60
        $region59: #{tpu_custom_call.1} parent=11 // pred_region
          %s597 = ssub.s32 16384, 16384
          %598 = vsyncadd [#allocation23], %s597
          %s599 = sshll.u32 [#allocation22], 4
          %s600 = int_to_ptr.vmem [resolvable:$true] %s599
          %605 = dma.hbm_to_vmem [thread:$0]  %s12, 16384, %s600, [#allocation23], 256, 256, 16
        $region60: #{tpu_custom_call.1} parent=11 // pred_fallthru
          _
        // Predicated region
        $region61: #{tpu_custom_call.1} parent=11 // pred_check
          %p606 = pneg %p335
        $region62: #{tpu_custom_call.1} parent=11 // pred_check_branch
          %608 = sbr.rel (%p606) target = $region64
        $region63: #{tpu_custom_call.1} parent=11 // pred_region
          %s610 = ssub.s32 64, 64
          %611 = vsyncadd [#allocation23], %s610
          %s613 = sshll.u32 [#allocation24], 4
          %s614 = int_to_ptr.vmem [resolvable:$true] %s613
          %616 = dma.hbm_to_vmem [thread:$0]  %s13, 64, %s614, [#allocation23]
        $region64: #{tpu_custom_call.1} parent=11 // pred_fallthru
          _
        // Predicated region
        $region65: #{tpu_custom_call.1} parent=11 // pred_check
          %p617 = pneg %p356
        $region66: #{tpu_custom_call.1} parent=11 // pred_check_branch
          %619 = sbr.rel (%p617) target = $region68
        $region67: #{tpu_custom_call.1} parent=11 // pred_region
          %s621 = ssub.s32 16384, 16384
          %622 = vsyncadd [#allocation26], %s621
          %s623 = sshll.u32 [#allocation25], 4
          %s624 = int_to_ptr.vmem [resolvable:$true] %s623
          %629 = dma.hbm_to_vmem [thread:$0]  %s14, 16384, %s624, [#allocation26], 256, 256, 16
        $region68: #{tpu_custom_call.1} parent=11 // pred_fallthru
          _
        // Predicated region
        $region69: #{tpu_custom_call.1} parent=11 // pred_check
          %p630 = pneg %p377
        $region70: #{tpu_custom_call.1} parent=11 // pred_check_branch
          %632 = sbr.rel (%p630) target = $region72
        $region71: #{tpu_custom_call.1} parent=11 // pred_region
          %s634 = ssub.s32 64, 64
          %635 = vsyncadd [#allocation26], %s634
          %s637 = sshll.u32 [#allocation27], 4
          %s638 = int_to_ptr.vmem [resolvable:$true] %s637
          %640 = dma.hbm_to_vmem [thread:$0]  %s15, 64, %s638, [#allocation26]
        $region72: #{tpu_custom_call.1} parent=11 // pred_fallthru
          _
        // Predicated region
        $region73: #{tpu_custom_call.1} parent=11 // pred_check
          %p641 = pneg %p398
        $region74: #{tpu_custom_call.1} parent=11 // pred_check_branch
          %643 = sbr.rel (%p641) target = $region76
        $region75: #{tpu_custom_call.1} parent=11 // pred_region
          %s645 = ssub.s32 4096, 4096
          %646 = vsyncadd [#allocation29], %s645
          %s647 = sshll.u32 [#allocation28], 4
          %s648 = int_to_ptr.vmem [resolvable:$true] %s647
          %653 = dma.hbm_to_vmem [thread:$0]  %s16, 4096, %s648, [#allocation29], 64, 64, 4
        $region76: #{tpu_custom_call.1} parent=11 // pred_fallthru
          _
        // Predicated region
        $region77: #{tpu_custom_call.1} parent=11 // pred_check
          %p654 = pneg %p419
        $region78: #{tpu_custom_call.1} parent=11 // pred_check_branch
          %656 = sbr.rel (%p654) target = $region80
        $region79: #{tpu_custom_call.1} parent=11 // pred_region
          %s658 = ssub.s32 16, 16
          %659 = vsyncadd [#allocation29], %s658
          %s661 = sshll.u32 [#allocation30], 4
          %s662 = int_to_ptr.vmem [resolvable:$true] %s661
          %664 = dma.hbm_to_vmem [thread:$0]  %s17, 16, %s662, [#allocation29]
        $region80: #{tpu_custom_call.1} parent=11 // pred_fallthru
          _
      $region12: #{tpu_custom_call.1} parent=5 // pred_fallthru
        _
      %p665 = scmp.lt.s32.totalorder %s36, 2
      // Predicated region
      $region81: #{tpu_custom_call.1} parent=5 // pred_check
        %p666 = pneg %p665
      $region82: #{tpu_custom_call.1} parent=5 // pred_check_branch
        %668 = sbr.rel (%p666) target = $region84
      $region83: #{tpu_custom_call.1} parent=5 // pred_region
        // Predicated region
        $region85: #{tpu_custom_call.1} parent=83 // pred_check
          %p669 = pneg %p56
        $region86: #{tpu_custom_call.1} parent=83 // pred_check_branch
          %671 = sbr.rel (%p669) target = $region88
        $region87: #{tpu_custom_call.1} parent=83 // pred_region
          %p672 = scmp.lt.s32.totalorder %s36, 1
          %s673 = scalar_select %p672, %s36, 1
          %s674 = smul.addr %s673, 12
          %s675 = smul.addr %s674, 4
          %s676 = scalar_lea.vmem %s0, %s675
        $region88: #{tpu_custom_call.1} parent=83 // pred_fallthru
          _
      $region84: #{tpu_custom_call.1} parent=5 // pred_fallthru
        _
      %p677 = scmp.le.s32.totalorder 1, %s36
      %p678 = scmp.lt.s32.totalorder %s36, 3
      %p679 = pnand %p677, %p678
      %p680 = pneg %p679
      // Predicated region
      $region89: #{tpu_custom_call.1} parent=5 // pred_check
        _
      $region90: #{tpu_custom_call.1} parent=5 // pred_check_branch
        %682 = sbr.rel (%p679) target = $region92
      $region91: #{tpu_custom_call.1} parent=5 // pred_region
        %s683 = ssub.s32 %s36, 1
        // Predicated region
        $region93: #{tpu_custom_call.1} parent=91 // pred_check
          %p684 = pneg %p83
        $region94: #{tpu_custom_call.1} parent=91 // pred_check_branch
          %686 = sbr.rel (%p684) target = $region96
        $region95: #{tpu_custom_call.1} parent=91 // pred_region
          %687 = dma.done [#allocation5], 12800
        $region96: #{tpu_custom_call.1} parent=91 // pred_fallthru
          _
        // Predicated region
        $region97: #{tpu_custom_call.1} parent=91 // pred_check
          %p688 = pneg %p104
        $region98: #{tpu_custom_call.1} parent=91 // pred_check_branch
          %690 = sbr.rel (%p688) target = $region100
        $region99: #{tpu_custom_call.1} parent=91 // pred_region
          %691 = dma.done [#allocation8], 64
        $region100: #{tpu_custom_call.1} parent=91 // pred_fallthru
          _
        // Predicated region
        $region101: #{tpu_custom_call.1} parent=91 // pred_check
          %p692 = pneg %p125
        $region102: #{tpu_custom_call.1} parent=91 // pred_check_branch
          %694 = sbr.rel (%p692) target = $region104
        $region103: #{tpu_custom_call.1} parent=91 // pred_region
          %695 = dma.done [#allocation8], 49152
        $region104: #{tpu_custom_call.1} parent=91 // pred_fallthru
          _
        // Predicated region
        $region105: #{tpu_custom_call.1} parent=91 // pred_check
          %p696 = pneg %p146
        $region106: #{tpu_custom_call.1} parent=91 // pred_check_branch
          %698 = sbr.rel (%p696) target = $region108
        $region107: #{tpu_custom_call.1} parent=91 // pred_region
          %699 = dma.done [#allocation11], 64
        $region108: #{tpu_custom_call.1} parent=91 // pred_fallthru
          _
        // Predicated region
        $region109: #{tpu_custom_call.1} parent=91 // pred_check
          %p700 = pneg %p167
        $region110: #{tpu_custom_call.1} parent=91 // pred_check_branch
          %702 = sbr.rel (%p700) target = $region112
        $region111: #{tpu_custom_call.1} parent=91 // pred_region
          %703 = dma.done [#allocation11], 32768
        $region112: #{tpu_custom_call.1} parent=91 // pred_fallthru
          _
        // Predicated region
        $region113: #{tpu_custom_call.1} parent=91 // pred_check
          %p704 = pneg %p188
        $region114: #{tpu_custom_call.1} parent=91 // pred_check_branch
          %706 = sbr.rel (%p704) target = $region116
        $region115: #{tpu_custom_call.1} parent=91 // pred_region
          %707 = dma.done [#allocation14], 64
        $region116: #{tpu_custom_call.1} parent=91 // pred_fallthru
          _
        // Predicated region
        $region117: #{tpu_custom_call.1} parent=91 // pred_check
          %p708 = pneg %p209
        $region118: #{tpu_custom_call.1} parent=91 // pred_check_branch
          %710 = sbr.rel (%p708) target = $region120
        $region119: #{tpu_custom_call.1} parent=91 // pred_region
          %711 = dma.done [#allocation14], 16384
        $region120: #{tpu_custom_call.1} parent=91 // pred_fallthru
          _
        // Predicated region
        $region121: #{tpu_custom_call.1} parent=91 // pred_check
          %p712 = pneg %p230
        $region122: #{tpu_custom_call.1} parent=91 // pred_check_branch
          %714 = sbr.rel (%p712) target = $region124
        $region123: #{tpu_custom_call.1} parent=91 // pred_region
          %715 = dma.done [#allocation17], 64
        $region124: #{tpu_custom_call.1} parent=91 // pred_fallthru
          _
        // Predicated region
        $region125: #{tpu_custom_call.1} parent=91 // pred_check
          %p716 = pneg %p251
        $region126: #{tpu_custom_call.1} parent=91 // pred_check_branch
          %718 = sbr.rel (%p716) target = $region128
        $region127: #{tpu_custom_call.1} parent=91 // pred_region
          %719 = dma.done [#allocation17], 16384
        $region128: #{tpu_custom_call.1} parent=91 // pred_fallthru
          _
        // Predicated region
        $region129: #{tpu_custom_call.1} parent=91 // pred_check
          %p720 = pneg %p272
        $region130: #{tpu_custom_call.1} parent=91 // pred_check_branch
          %722 = sbr.rel (%p720) target = $region132
        $region131: #{tpu_custom_call.1} parent=91 // pred_region
          %723 = dma.done [#allocation20], 64
        $region132: #{tpu_custom_call.1} parent=91 // pred_fallthru
          _
        // Predicated region
        $region133: #{tpu_custom_call.1} parent=91 // pred_check
          %p724 = pneg %p293
        $region134: #{tpu_custom_call.1} parent=91 // pred_check_branch
          %726 = sbr.rel (%p724) target = $region136
        $region135: #{tpu_custom_call.1} parent=91 // pred_region
          %727 = dma.done [#allocation20], 16384
        $region136: #{tpu_custom_call.1} parent=91 // pred_fallthru
          _
        // Predicated region
        $region137: #{tpu_custom_call.1} parent=91 // pred_check
          %p728 = pneg %p314
        $region138: #{tpu_custom_call.1} parent=91 // pred_check_branch
          %730 = sbr.rel (%p728) target = $region140
        $region139: #{tpu_custom_call.1} parent=91 // pred_region
          %731 = dma.done [#allocation23], 16384
        $region140: #{tpu_custom_call.1} parent=91 // pred_fallthru
          _
        // Predicated region
        $region141: #{tpu_custom_call.1} parent=91 // pred_check
          %p732 = pneg %p335
        $region142: #{tpu_custom_call.1} parent=91 // pred_check_branch
          %734 = sbr.rel (%p732) target = $region144
        $region143: #{tpu_custom_call.1} parent=91 // pred_region
          %735 = dma.done [#allocation23], 64
        $region144: #{tpu_custom_call.1} parent=91 // pred_fallthru
          _
        // Predicated region
        $region145: #{tpu_custom_call.1} parent=91 // pred_check
          %p736 = pneg %p356
        $region146: #{tpu_custom_call.1} parent=91 // pred_check_branch
          %738 = sbr.rel (%p736) target = $region148
        $region147: #{tpu_custom_call.1} parent=91 // pred_region
          %739 = dma.done [#allocation26], 16384
        $region148: #{tpu_custom_call.1} parent=91 // pred_fallthru
          _
        // Predicated region
        $region149: #{tpu_custom_call.1} parent=91 // pred_check
          %p740 = pneg %p377
        $region150: #{tpu_custom_call.1} parent=91 // pred_check_branch
          %742 = sbr.rel (%p740) target = $region152
        $region151: #{tpu_custom_call.1} parent=91 // pred_region
          %743 = dma.done [#allocation26], 64
        $region152: #{tpu_custom_call.1} parent=91 // pred_fallthru
          _
        // Predicated region
        $region153: #{tpu_custom_call.1} parent=91 // pred_check
          %p744 = pneg %p398
        $region154: #{tpu_custom_call.1} parent=91 // pred_check_branch
          %746 = sbr.rel (%p744) target = $region156
        $region155: #{tpu_custom_call.1} parent=91 // pred_region
          %747 = dma.done [#allocation29], 4096
        $region156: #{tpu_custom_call.1} parent=91 // pred_fallthru
          _
        // Predicated region
        $region157: #{tpu_custom_call.1} parent=91 // pred_check
          %p748 = pneg %p419
        $region158: #{tpu_custom_call.1} parent=91 // pred_check_branch
          %750 = sbr.rel (%p748) target = $region160
        $region159: #{tpu_custom_call.1} parent=91 // pred_region
          %751 = dma.done [#allocation29], 16
        $region160: #{tpu_custom_call.1} parent=91 // pred_fallthru
          _
        %p752 = scmp.lt.s32.totalorder %s41, 1
        %s753 = scalar_select %p752, %s41, 1
        %s754 = smul.addr %s753, 12
        %s755 = smul.addr %s754, 4
        %s756 = scalar_lea.vmem %s0, %s755
        %p757 = pneg %p62
        %p758 = pneg %p59
        %p759 = pneg %p83
        %p760 = pneg %p80
        %p761 = pneg %p104
        %p762 = pneg %p101
        %p763 = pneg %p125
        %p764 = pneg %p122
        %p765 = pneg %p146
        %p766 = pneg %p143
        %p767 = pneg %p167
        %p768 = pneg %p164
        %p769 = pneg %p188
        %p770 = pneg %p185
        %p771 = pneg %p209
        %p772 = pneg %p206
        %p773 = pneg %p230
        %p774 = pneg %p227
        %p775 = pneg %p251
        %p776 = pneg %p248
        %p777 = pneg %p272
        %p778 = pneg %p269
        %p779 = pneg %p293
        %p780 = pneg %p290
        %p781 = pneg %p314
        %p782 = pneg %p311
        %p783 = pneg %p335
        %p784 = pneg %p332
        %p785 = pneg %p356
        %p786 = pneg %p353
        %p787 = pneg %p377
        %p788 = pneg %p374
        %p789 = pneg %p398
        %p790 = pneg %p395
        %p791 = pneg %p419
        %p792 = pneg %p416
        %p793 = pneg %p445
        %p794 = pneg %p442
        %s795 = sand.u32 %s432, 1
        %s796 = scalar_lea.sflag [#allocation6], %s795
        %s797 = sand.u32 %s432, 1
        %s798 = smul.addr %s797, 8
        %s799 = scalar_lea.vmem [#allocation31], %s798
        %p800 = scmp.lt.s32.totalorder %s41, 1
        %s801 = scalar_select %p800, %s41, 1
        %s802 = smul.addr %s801, 12
        %s803 = smul.addr %s802, 4
        %s804 = scalar_lea.vmem %s0, %s803
        %v806 = vld [vmem:[%s804] sm:$0xff]
        %v807 = vld [vmem:[%s804 + $0x8] sm:$0xff]
        %v808 = vld [vmem:[%s804 + $0x10] sm:$0xff]
        %v809 = vld [vmem:[%s804 + $0x18] sm:$0xff]
        %v810 = vld [vmem:[%s804 + $0x20] sm:$0x33]
        %v811 = vld [vmem:[%s804 + $0x28] sm:$0x33]
        %v812 = vld [vmem:[#allocation4] sm:$0xff]
        %v813 = vld [vmem:[#allocation4 + $0x8] sm:$0xff]
        %v814 = vld [vmem:[#allocation4 + $0x10] sm:$0xff]
        %v815 = vld [vmem:[#allocation4 + $0x18] sm:$0xff]
        %v816 = vld [vmem:[#allocation4 + $0x20] sm:$0xff]
        %v817 = vld [vmem:[#allocation4 + $0x28] sm:$0xff]
        %v818 = vld [vmem:[#allocation4 + $0x30] sm:$0xff]
        %v819 = vld [vmem:[#allocation4 + $0x38] sm:$0xff]
        %v820 = vld [vmem:[#allocation4 + $0x40] sm:$0xff]
        %v821 = vld [vmem:[#allocation4 + $0x48] sm:$0xff]
        %v822 = vld [vmem:[#allocation4 + $0x50] sm:$0xff]
        %v823 = vld [vmem:[#allocation4 + $0x58] sm:$0xff]
        %v824 = vld [vmem:[#allocation4 + $0x60] sm:$0xff]
        %v825 = vld [vmem:[#allocation4 + $0x68] sm:$0xff]
        %v826 = vld [vmem:[#allocation4 + $0x70] sm:$0xff]
        %v827 = vld [vmem:[#allocation4 + $0x78] sm:$0xff]
        %v828 = vld [vmem:[#allocation4 + $0x80] sm:$0xff]
        %v829 = vld [vmem:[#allocation4 + $0x88] sm:$0xff]
        %v830 = vld [vmem:[#allocation4 + $0x90] sm:$0xff]
        %v831 = vld [vmem:[#allocation4 + $0x98] sm:$0xff]
        %v832 = vld [vmem:[#allocation4 + $0xa0] sm:$0xff]
        %v833 = vld [vmem:[#allocation4 + $0xa8] sm:$0xff]
        %v834 = vld [vmem:[#allocation4 + $0xb0] sm:$0xff]
        %v835 = vld [vmem:[#allocation4 + $0xb8] sm:$0xff]
        %v836 = vld [vmem:[#allocation4 + $0xc0] sm:$0xff]
        %v837 = vld [vmem:[#allocation4 + $0xc8] sm:$0xff]
        %v838 = vld [vmem:[#allocation4 + $0xd0] sm:$0xff]
        %v839 = vld [vmem:[#allocation4 + $0xd8] sm:$0xff]
        %v840 = vld [vmem:[#allocation4 + $0xe0] sm:$0xff]
        %v841 = vld [vmem:[#allocation4 + $0xe8] sm:$0xff]
        %v842 = vld [vmem:[#allocation4 + $0xf0] sm:$0xff]
        %v843 = vld [vmem:[#allocation4 + $0xf8] sm:$0xff]
        %v844 = vld [vmem:[#allocation4 + $0x100] sm:$0xff]
        %v845 = vld [vmem:[#allocation4 + $0x108] sm:$0xff]
        %v846 = vld [vmem:[#allocation4 + $0x110] sm:$0xff]
        %v847 = vld [vmem:[#allocation4 + $0x118] sm:$0xff]
        %v848 = vld [vmem:[#allocation4 + $0x120] sm:$0xff]
        %v849 = vld [vmem:[#allocation4 + $0x128] sm:$0xff]
        %v850 = vld [vmem:[#allocation4 + $0x130] sm:$0xff]
        %v851 = vld [vmem:[#allocation4 + $0x138] sm:$0xff]
        %v852 = vld [vmem:[#allocation4 + $0x140] sm:$0xff]
        %v853 = vld [vmem:[#allocation4 + $0x148] sm:$0xff]
        %v854 = vld [vmem:[#allocation4 + $0x150] sm:$0xff]
        %v855 = vld [vmem:[#allocation4 + $0x158] sm:$0xff]
        %v856 = vld [vmem:[#allocation4 + $0x160] sm:$0xff]
        %v857 = vld [vmem:[#allocation4 + $0x168] sm:$0xff]
        %v858 = vld [vmem:[#allocation4 + $0x170] sm:$0xff]
        %v859 = vld [vmem:[#allocation4 + $0x178] sm:$0xff]
        %v860 = vld [vmem:[#allocation4 + $0x180] sm:$0xff]
        %v861 = vld [vmem:[#allocation4 + $0x188] sm:$0xff]
        %v862 = vld [vmem:[#allocation4 + $0x190] sm:$0xff]
        %v863 = vld [vmem:[#allocation4 + $0x198] sm:$0xff]
        %v864 = vld [vmem:[#allocation4 + $0x1a0] sm:$0xff]
        %v865 = vld [vmem:[#allocation4 + $0x1a8] sm:$0xff]
        %v866 = vld [vmem:[#allocation4 + $0x1b0] sm:$0xff]
        %v867 = vld [vmem:[#allocation4 + $0x1b8] sm:$0xff]
        %v868 = vld [vmem:[#allocation4 + $0x1c0] sm:$0xff]
        %v869 = vld [vmem:[#allocation4 + $0x1c8] sm:$0xff]
        %v870 = vld [vmem:[#allocation4 + $0x1d0] sm:$0xff]
        %v871 = vld [vmem:[#allocation4 + $0x1d8] sm:$0xff]
        %v872 = vld [vmem:[#allocation4 + $0x1e0] sm:$0xff]
        %v873 = vld [vmem:[#allocation4 + $0x1e8] sm:$0xff]
        %v874 = vld [vmem:[#allocation4 + $0x1f0] sm:$0xff]
        %v875 = vld [vmem:[#allocation4 + $0x1f8] sm:$0xff]
        %v876 = vld [vmem:[#allocation4 + $0x200] sm:$0xff]
        %v877 = vld [vmem:[#allocation4 + $0x208] sm:$0xff]
        %v878 = vld [vmem:[#allocation4 + $0x210] sm:$0xff]
        %v879 = vld [vmem:[#allocation4 + $0x218] sm:$0xff]
        %v880 = vld [vmem:[#allocation4 + $0x220] sm:$0xff]
        %v881 = vld [vmem:[#allocation4 + $0x228] sm:$0xff]
        %v882 = vld [vmem:[#allocation4 + $0x230] sm:$0xff]
        %v883 = vld [vmem:[#allocation4 + $0x238] sm:$0xff]
        %v884 = vld [vmem:[#allocation4 + $0x240] sm:$0xff]
        %v885 = vld [vmem:[#allocation4 + $0x248] sm:$0xff]
        %v886 = vld [vmem:[#allocation4 + $0x250] sm:$0xff]
        %v887 = vld [vmem:[#allocation4 + $0x258] sm:$0xff]
        %v888 = vld [vmem:[#allocation4 + $0x260] sm:$0xff]
        %v889 = vld [vmem:[#allocation4 + $0x268] sm:$0xff]
        %v890 = vld [vmem:[#allocation4 + $0x270] sm:$0xff]
        %v891 = vld [vmem:[#allocation4 + $0x278] sm:$0xff]
        %v892 = vld [vmem:[#allocation4 + $0x280] sm:$0xff]
        %v893 = vld [vmem:[#allocation4 + $0x288] sm:$0xff]
        %v894 = vld [vmem:[#allocation4 + $0x290] sm:$0xff]
        %v895 = vld [vmem:[#allocation4 + $0x298] sm:$0xff]
        %v896 = vld [vmem:[#allocation4 + $0x2a0] sm:$0xff]
        %v897 = vld [vmem:[#allocation4 + $0x2a8] sm:$0xff]
        %v898 = vld [vmem:[#allocation4 + $0x2b0] sm:$0xff]
        %v899 = vld [vmem:[#allocation4 + $0x2b8] sm:$0xff]
        %v900 = vld [vmem:[#allocation4 + $0x2c0] sm:$0xff]
        %v901 = vld [vmem:[#allocation4 + $0x2c8] sm:$0xff]
        %v902 = vld [vmem:[#allocation4 + $0x2d0] sm:$0xff]
        %v903 = vld [vmem:[#allocation4 + $0x2d8] sm:$0xff]
        %v904 = vld [vmem:[#allocation4 + $0x2e0] sm:$0xff]
        %v905 = vld [vmem:[#allocation4 + $0x2e8] sm:$0xff]
        %v906 = vld [vmem:[#allocation4 + $0x2f0] sm:$0xff]
        %v907 = vld [vmem:[#allocation4 + $0x2f8] sm:$0xff]
        %v908 = vld [vmem:[#allocation4 + $0x300] sm:$0xff]
        %v909 = vld [vmem:[#allocation4 + $0x308] sm:$0xff]
        %v910 = vld [vmem:[#allocation4 + $0x310] sm:$0xff]
        %v911 = vld [vmem:[#allocation4 + $0x318] sm:$0xff]
        %v912 = vld [vmem:[#allocation7] sm:$0xf]
        %v914 = vlaneseq
        %v915 = vshrl.u32 %v914, 7
        %v916 = vsub.s32 0, %v915
        %v917 = vrot.slane %v912, %v916
        %v918 = vlaneseq
        %v919 = vshrl.u32 %v918, 7
        %v920 = vsub.s32 1, %v919
        %v921 = vrot.slane %v912, %v920
        %v922 = vlaneseq
        %v923 = vshrl.u32 %v922, 7
        %v924 = vsub.s32 2, %v923
        %v925 = vrot.slane %v912, %v924
        %v926 = vlaneseq
        %v927 = vshrl.u32 %v926, 7
        %v928 = vsub.s32 3, %v927
        %v929 = vrot.slane %v912, %v928
        %v940 = vunpack.c.l.b16 %v806
        %v941 = vunpack.c.h.b16 %v806
        %v942 = vunpack.c.l.b16 %v807
        %v943 = vunpack.c.h.b16 %v807
        %v944 = vunpack.c.l.b16 %v808
        %v945 = vunpack.c.h.b16 %v808
        %v946 = vunpack.c.l.b16 %v809
        %v947 = vunpack.c.h.b16 %v809
        %v948 = vunpack.c.l.b16 %v810
        %v949 = vunpack.c.h.b16 %v810
        %v950 = vunpack.c.l.b16 %v811
        %v951 = vunpack.c.h.b16 %v811
        %v952 = vpack.c.b16 %v944, %v940
        %v953 = vpack.c.b16 %v945, %v941
        %v954 = vpack.c.b16 %v946, %v942
        %v955 = vpack.c.b16 %v947, %v943
        %v956 = vpack.c.b16 %v948, %v948
        %v957 = vpack.c.b16 %v949, %v949
        %v958 = vpack.c.b16 %v950, %v950
        %v959 = vpack.c.b16 %v951, %v951
        %v1066 = vunpack.c.l.b16 %v812
        %v1067 = vunpack.c.h.b16 %v812
        %v1068 = vunpack.c.l.b16 %v813
        %v1069 = vunpack.c.h.b16 %v813
        %v1070 = vunpack.c.l.b16 %v814
        %v1071 = vunpack.c.h.b16 %v814
        %v1072 = vunpack.c.l.b16 %v815
        %v1073 = vunpack.c.h.b16 %v815
        %v1074 = vunpack.c.l.b16 %v816
        %v1075 = vunpack.c.h.b16 %v816
        %v1076 = vunpack.c.l.b16 %v817
        %v1077 = vunpack.c.h.b16 %v817
        %v1078 = vunpack.c.l.b16 %v818
        %v1079 = vunpack.c.h.b16 %v818
        %v1080 = vunpack.c.l.b16 %v819
        %v1081 = vunpack.c.h.b16 %v819
        %v1082 = vunpack.c.l.b16 %v820
        %v1083 = vunpack.c.h.b16 %v820
        %v1084 = vunpack.c.l.b16 %v821
        %v1085 = vunpack.c.h.b16 %v821
        %v1086 = vunpack.c.l.b16 %v822
        %v1087 = vunpack.c.h.b16 %v822
        %v1088 = vunpack.c.l.b16 %v823
        %v1089 = vunpack.c.h.b16 %v823
        %v1090 = vunpack.c.l.b16 %v824
        %v1091 = vunpack.c.h.b16 %v824
        %v1092 = vunpack.c.l.b16 %v825
        %v1093 = vunpack.c.h.b16 %v825
        %v1094 = vunpack.c.l.b16 %v826
        %v1095 = vunpack.c.h.b16 %v826
        %v1096 = vunpack.c.l.b16 %v827
        %v1097 = vunpack.c.h.b16 %v827
        %v1098 = vunpack.c.l.b16 %v828
        %v1099 = vunpack.c.h.b16 %v828
        %v1100 = vunpack.c.l.b16 %v829
        %v1101 = vunpack.c.h.b16 %v829
        %v1102 = vunpack.c.l.b16 %v830
        %v1103 = vunpack.c.h.b16 %v830
        %v1104 = vunpack.c.l.b16 %v831
        %v1105 = vunpack.c.h.b16 %v831
        %v1106 = vunpack.c.l.b16 %v832
        %v1107 = vunpack.c.h.b16 %v832
        %v1108 = vunpack.c.l.b16 %v833
        %v1109 = vunpack.c.h.b16 %v833
        %v1110 = vunpack.c.l.b16 %v834
        %v1111 = vunpack.c.h.b16 %v834
        %v1112 = vunpack.c.l.b16 %v835
        %v1113 = vunpack.c.h.b16 %v835
        %v1114 = vunpack.c.l.b16 %v836
        %v1115 = vunpack.c.h.b16 %v836
        %v1116 = vunpack.c.l.b16 %v837
        %v1117 = vunpack.c.h.b16 %v837
        %v1118 = vunpack.c.l.b16 %v838
        %v1119 = vunpack.c.h.b16 %v838
        %v1120 = vunpack.c.l.b16 %v839
        %v1121 = vunpack.c.h.b16 %v839
        %v1122 = vunpack.c.l.b16 %v840
        %v1123 = vunpack.c.h.b16 %v840
        %v1124 = vunpack.c.l.b16 %v841
        %v1125 = vunpack.c.h.b16 %v841
        %v1126 = vunpack.c.l.b16 %v842
        %v1127 = vunpack.c.h.b16 %v842
        %v1128 = vunpack.c.l.b16 %v843
        %v1129 = vunpack.c.h.b16 %v843
        %v1130 = vunpack.c.l.b16 %v844
        %v1131 = vunpack.c.h.b16 %v844
        %v1132 = vunpack.c.l.b16 %v845
        %v1133 = vunpack.c.h.b16 %v845
        %v1134 = vunpack.c.l.b16 %v846
        %v1135 = vunpack.c.h.b16 %v846
        %v1136 = vunpack.c.l.b16 %v847
        %v1137 = vunpack.c.h.b16 %v847
        %v1138 = vunpack.c.l.b16 %v848
        %v1139 = vunpack.c.h.b16 %v848
        %v1140 = vunpack.c.l.b16 %v849
        %v1141 = vunpack.c.h.b16 %v849
        %v1142 = vunpack.c.l.b16 %v850
        %v1143 = vunpack.c.h.b16 %v850
        %v1144 = vunpack.c.l.b16 %v851
        %v1145 = vunpack.c.h.b16 %v851
        %v1146 = vunpack.c.l.b16 %v852
        %v1147 = vunpack.c.h.b16 %v852
        %v1148 = vunpack.c.l.b16 %v853
        %v1149 = vunpack.c.h.b16 %v853
        %v1150 = vunpack.c.l.b16 %v854
        %v1151 = vunpack.c.h.b16 %v854
        %v1152 = vunpack.c.l.b16 %v855
        %v1153 = vunpack.c.h.b16 %v855
        %v1154 = vunpack.c.l.b16 %v856
        %v1155 = vunpack.c.h.b16 %v856
        %v1156 = vunpack.c.l.b16 %v857
        %v1157 = vunpack.c.h.b16 %v857
        %v1158 = vunpack.c.l.b16 %v858
        %v1159 = vunpack.c.h.b16 %v858
        %v1160 = vunpack.c.l.b16 %v859
        %v1161 = vunpack.c.h.b16 %v859
        %v1162 = vunpack.c.l.b16 %v860
        %v1163 = vunpack.c.h.b16 %v860
        %v1164 = vunpack.c.l.b16 %v861
        %v1165 = vunpack.c.h.b16 %v861
        %v1166 = vunpack.c.l.b16 %v862
        %v1167 = vunpack.c.h.b16 %v862
        %v1168 = vunpack.c.l.b16 %v863
        %v1169 = vunpack.c.h.b16 %v863
        %v1170 = vunpack.c.l.b16 %v864
        %v1171 = vunpack.c.h.b16 %v864
        %v1172 = vunpack.c.l.b16 %v865
        %v1173 = vunpack.c.h.b16 %v865
        %v1174 = vunpack.c.l.b16 %v866
        %v1175 = vunpack.c.h.b16 %v866
        %v1176 = vunpack.c.l.b16 %v867
        %v1177 = vunpack.c.h.b16 %v867
        %v1178 = vunpack.c.l.b16 %v868
        %v1179 = vunpack.c.h.b16 %v868
        %v1180 = vunpack.c.l.b16 %v869
        %v1181 = vunpack.c.h.b16 %v869
        %v1182 = vunpack.c.l.b16 %v870
        %v1183 = vunpack.c.h.b16 %v870
        %v1184 = vunpack.c.l.b16 %v871
        %v1185 = vunpack.c.h.b16 %v871
        %v1186 = vunpack.c.l.b16 %v872
        %v1187 = vunpack.c.h.b16 %v872
        %v1188 = vunpack.c.l.b16 %v873
        %v1189 = vunpack.c.h.b16 %v873
        %v1190 = vunpack.c.l.b16 %v874
        %v1191 = vunpack.c.h.b16 %v874
        %v1192 = vunpack.c.l.b16 %v875
        %v1193 = vunpack.c.h.b16 %v875
        %v1194 = vunpack.c.l.b16 %v876
        %v1195 = vunpack.c.h.b16 %v876
        %v1196 = vunpack.c.l.b16 %v877
        %v1197 = vunpack.c.h.b16 %v877
        %v1198 = vunpack.c.l.b16 %v878
        %v1199 = vunpack.c.h.b16 %v878
        %v1200 = vunpack.c.l.b16 %v879
        %v1201 = vunpack.c.h.b16 %v879
        %v1202 = vunpack.c.l.b16 %v880
        %v1203 = vunpack.c.h.b16 %v880
        %v1204 = vunpack.c.l.b16 %v881
        %v1205 = vunpack.c.h.b16 %v881
        %v1206 = vunpack.c.l.b16 %v882
        %v1207 = vunpack.c.h.b16 %v882
        %v1208 = vunpack.c.l.b16 %v883
        %v1209 = vunpack.c.h.b16 %v883
        %v1210 = vunpack.c.l.b16 %v884
        %v1211 = vunpack.c.h.b16 %v884
        %v1212 = vunpack.c.l.b16 %v885
        %v1213 = vunpack.c.h.b16 %v885
        %v1214 = vunpack.c.l.b16 %v886
        %v1215 = vunpack.c.h.b16 %v886
        %v1216 = vunpack.c.l.b16 %v887
        %v1217 = vunpack.c.h.b16 %v887
        %v1218 = vunpack.c.l.b16 %v888
        %v1219 = vunpack.c.h.b16 %v888
        %v1220 = vunpack.c.l.b16 %v889
        %v1221 = vunpack.c.h.b16 %v889
        %v1222 = vunpack.c.l.b16 %v890
        %v1223 = vunpack.c.h.b16 %v890
        %v1224 = vunpack.c.l.b16 %v891
        %v1225 = vunpack.c.h.b16 %v891
        %v1226 = vunpack.c.l.b16 %v892
        %v1227 = vunpack.c.h.b16 %v892
        %v1228 = vunpack.c.l.b16 %v893
        %v1229 = vunpack.c.h.b16 %v893
        %v1230 = vunpack.c.l.b16 %v894
        %v1231 = vunpack.c.h.b16 %v894
        %v1232 = vunpack.c.l.b16 %v895
        %v1233 = vunpack.c.h.b16 %v895
        %v1234 = vunpack.c.l.b16 %v896
        %v1235 = vunpack.c.h.b16 %v896
        %v1236 = vunpack.c.l.b16 %v897
        %v1237 = vunpack.c.h.b16 %v897
        %v1238 = vunpack.c.l.b16 %v898
        %v1239 = vunpack.c.h.b16 %v898
        %v1240 = vunpack.c.l.b16 %v899
        %v1241 = vunpack.c.h.b16 %v899
        %v1242 = vunpack.c.l.b16 %v900
        %v1243 = vunpack.c.h.b16 %v900
        %v1244 = vunpack.c.l.b16 %v901
        %v1245 = vunpack.c.h.b16 %v901
        %v1246 = vunpack.c.l.b16 %v902
        %v1247 = vunpack.c.h.b16 %v902
        %v1248 = vunpack.c.l.b16 %v903
        %v1249 = vunpack.c.h.b16 %v903
        %v1250 = vunpack.c.l.b16 %v904
        %v1251 = vunpack.c.h.b16 %v904
        %v1252 = vunpack.c.l.b16 %v905
        %v1253 = vunpack.c.h.b16 %v905
        %v1254 = vunpack.c.l.b16 %v906
        %v1255 = vunpack.c.h.b16 %v906
        %v1256 = vunpack.c.l.b16 %v907
        %v1257 = vunpack.c.h.b16 %v907
        %v1258 = vunpack.c.l.b16 %v908
        %v1259 = vunpack.c.h.b16 %v908
        %v1260 = vunpack.c.l.b16 %v909
        %v1261 = vunpack.c.h.b16 %v909
        %v1262 = vunpack.c.l.b16 %v910
        %v1263 = vunpack.c.h.b16 %v910
        %v1264 = vunpack.c.l.b16 %v911
        %v1265 = vunpack.c.h.b16 %v911
        %v1266 = vpack.c.b16 %v1070, %v1066
        %v1267 = vpack.c.b16 %v1071, %v1067
        %v1268 = vpack.c.b16 %v1072, %v1068
        %v1269 = vpack.c.b16 %v1073, %v1069
        %v1270 = vpack.c.b16 %v1078, %v1074
        %v1271 = vpack.c.b16 %v1079, %v1075
        %v1272 = vpack.c.b16 %v1080, %v1076
        %v1273 = vpack.c.b16 %v1081, %v1077
        %v1274 = vpack.c.b16 %v1086, %v1082
        %v1275 = vpack.c.b16 %v1087, %v1083
        %v1276 = vpack.c.b16 %v1088, %v1084
        %v1277 = vpack.c.b16 %v1089, %v1085
        %v1278 = vpack.c.b16 %v1094, %v1090
        %v1279 = vpack.c.b16 %v1095, %v1091
        %v1280 = vpack.c.b16 %v1096, %v1092
        %v1281 = vpack.c.b16 %v1097, %v1093
        %v1282 = vpack.c.b16 %v1102, %v1098
        %v1283 = vpack.c.b16 %v1103, %v1099
        %v1284 = vpack.c.b16 %v1104, %v1100
        %v1285 = vpack.c.b16 %v1105, %v1101
        %v1286 = vpack.c.b16 %v1110, %v1106
        %v1287 = vpack.c.b16 %v1111, %v1107
        %v1288 = vpack.c.b16 %v1112, %v1108
        %v1289 = vpack.c.b16 %v1113, %v1109
        %v1290 = vpack.c.b16 %v1118, %v1114
        %v1291 = vpack.c.b16 %v1119, %v1115
        %v1292 = vpack.c.b16 %v1120, %v1116
        %v1293 = vpack.c.b16 %v1121, %v1117
        %v1294 = vpack.c.b16 %v1126, %v1122
        %v1295 = vpack.c.b16 %v1127, %v1123
        %v1296 = vpack.c.b16 %v1128, %v1124
        %v1297 = vpack.c.b16 %v1129, %v1125
        %v1298 = vpack.c.b16 %v1134, %v1130
        %v1299 = vpack.c.b16 %v1135, %v1131
        %v1300 = vpack.c.b16 %v1136, %v1132
        %v1301 = vpack.c.b16 %v1137, %v1133
        %v1302 = vpack.c.b16 %v1142, %v1138
        %v1303 = vpack.c.b16 %v1143, %v1139
        %v1304 = vpack.c.b16 %v1144, %v1140
        %v1305 = vpack.c.b16 %v1145, %v1141
        %v1306 = vpack.c.b16 %v1150, %v1146
        %v1307 = vpack.c.b16 %v1151, %v1147
        %v1308 = vpack.c.b16 %v1152, %v1148
        %v1309 = vpack.c.b16 %v1153, %v1149
        %v1310 = vpack.c.b16 %v1158, %v1154
        %v1311 = vpack.c.b16 %v1159, %v1155
        %v1312 = vpack.c.b16 %v1160, %v1156
        %v1313 = vpack.c.b16 %v1161, %v1157
        %v1314 = vpack.c.b16 %v1166, %v1162
        %v1315 = vpack.c.b16 %v1167, %v1163
        %v1316 = vpack.c.b16 %v1168, %v1164
        %v1317 = vpack.c.b16 %v1169, %v1165
        %v1318 = vpack.c.b16 %v1174, %v1170
        %v1319 = vpack.c.b16 %v1175, %v1171
        %v1320 = vpack.c.b16 %v1176, %v1172
        %v1321 = vpack.c.b16 %v1177, %v1173
        %v1322 = vpack.c.b16 %v1182, %v1178
        %v1323 = vpack.c.b16 %v1183, %v1179
        %v1324 = vpack.c.b16 %v1184, %v1180
        %v1325 = vpack.c.b16 %v1185, %v1181
        %v1326 = vpack.c.b16 %v1190, %v1186
        %v1327 = vpack.c.b16 %v1191, %v1187
        %v1328 = vpack.c.b16 %v1192, %v1188
        %v1329 = vpack.c.b16 %v1193, %v1189
        %v1330 = vpack.c.b16 %v1198, %v1194
        %v1331 = vpack.c.b16 %v1199, %v1195
        %v1332 = vpack.c.b16 %v1200, %v1196
        %v1333 = vpack.c.b16 %v1201, %v1197
        %v1334 = vpack.c.b16 %v1206, %v1202
        %v1335 = vpack.c.b16 %v1207, %v1203
        %v1336 = vpack.c.b16 %v1208, %v1204
        %v1337 = vpack.c.b16 %v1209, %v1205
        %v1338 = vpack.c.b16 %v1214, %v1210
        %v1339 = vpack.c.b16 %v1215, %v1211
        %v1340 = vpack.c.b16 %v1216, %v1212
        %v1341 = vpack.c.b16 %v1217, %v1213
        %v1342 = vpack.c.b16 %v1222, %v1218
        %v1343 = vpack.c.b16 %v1223, %v1219
        %v1344 = vpack.c.b16 %v1224, %v1220
        %v1345 = vpack.c.b16 %v1225, %v1221
        %v1346 = vpack.c.b16 %v1230, %v1226
        %v1347 = vpack.c.b16 %v1231, %v1227
        %v1348 = vpack.c.b16 %v1232, %v1228
        %v1349 = vpack.c.b16 %v1233, %v1229
        %v1350 = vpack.c.b16 %v1238, %v1234
        %v1351 = vpack.c.b16 %v1239, %v1235
        %v1352 = vpack.c.b16 %v1240, %v1236
        %v1353 = vpack.c.b16 %v1241, %v1237
        %v1354 = vpack.c.b16 %v1246, %v1242
        %v1355 = vpack.c.b16 %v1247, %v1243
        %v1356 = vpack.c.b16 %v1248, %v1244
        %v1357 = vpack.c.b16 %v1249, %v1245
        %v1358 = vpack.c.b16 %v1254, %v1250
        %v1359 = vpack.c.b16 %v1255, %v1251
        %v1360 = vpack.c.b16 %v1256, %v1252
        %v1361 = vpack.c.b16 %v1257, %v1253
        %v1362 = vpack.c.b16 %v1262, %v1258
        %v1363 = vpack.c.b16 %v1263, %v1259
        %v1364 = vpack.c.b16 %v1264, %v1260
        %v1365 = vpack.c.b16 %v1265, %v1261
        %vm1466 = vcmask 130048
        %v1468 = vsel %vm1466, %v955, 0
        %v1471 = vsel %vm1466, %v959, 0
        %1473 = vmatprep.subr.bf16.mxu0 %v1267
        %1474 = vmatpush1.bf16.msra.mxu0 %v1266
        %1475 = vmatprep.subr.bf16.mxu0 %v1271
        %1476 = vmatpush1.bf16.msra.mxu0 %v1270
        %1477 = vmatprep.subr.bf16.mxu0 %v1275
        %1478 = vmatpush1.bf16.msra.mxu0 %v1274
        %1479 = vmatprep.subr.bf16.mxu0 %v1279
        %1480 = vmatpush1.bf16.msra.mxu0 %v1278
        %1481 = vmatprep.subr.bf16.mxu0 %v1283
        %1482 = vmatpush1.bf16.msra.mxu0 %v1282
        %1483 = vmatprep.subr.bf16.mxu0 %v1287
        %1484 = vmatpush1.bf16.msra.mxu0 %v1286
        %1485 = vmatprep.subr.bf16.mxu0 %v1291
        %1486 = vmatpush1.bf16.msra.mxu0 %v1290
        %1487 = vmatprep.subr.bf16.mxu0 %v1295
        %1488 = vmatpush1.bf16.msra.mxu0 %v1294
        %1489 = vmatprep.subr.bf16.mxu0 %v1299
        %1490 = vmatpush1.bf16.msra.mxu0 %v1298
        %1491 = vmatprep.subr.bf16.mxu0 %v1303
        %1492 = vmatpush1.bf16.msra.mxu0 %v1302
        %1493 = vmatprep.subr.bf16.mxu0 %v1307
        %1494 = vmatpush1.bf16.msra.mxu0 %v1306
        %1495 = vmatprep.subr.bf16.mxu0 %v1311
        %1496 = vmatpush1.bf16.msra.mxu0 %v1310
        %1497 = vmatprep.subr.bf16.mxu0 %v1315
        %1498 = vmatpush1.bf16.msra.mxu0 %v1314
        %1499 = vmatprep.subr.bf16.mxu0 %v1319
        %1500 = vmatpush1.bf16.msra.mxu0 %v1318
        %1501 = vmatprep.subr.bf16.mxu0 %v1323
        %1502 = vmatpush1.bf16.msra.mxu0 %v1322
        %1503 = vmatprep.subr.bf16.mxu0 %v1327
        %1504 = vmatpush1.bf16.msra.mxu0 %v1326
        %1505 = vmatprep.mubr.bf16.mxu0 %v953
        %1506 = vmatmul.mubr.bf16.gmra.mrb[0].mxu0 %v952
        %v1507 = vpop.f32.mrb[0].mxu0
        %v1508 = vadd.f32 %v917, %v1507
        %v1509 = vpop.f32.mrb[0].mxu0
        %v1510 = vadd.f32 %v921, %v1509
        %v1511 = vpop.f32.mrb[0].mxu0
        %v1512 = vadd.f32 %v917, %v1511
        %v1513 = vpop.f32.mrb[0].mxu0
        %v1514 = vadd.f32 %v921, %v1513
        %1515 = vmatprep.mubr.bf16.mxu0 %v957
        %1516 = vmatmul.mubr.bf16.gmra.mrb[0].mxu0 %v956
        %v1517 = vpop.f32.mrb[0].mxu0
        %v1518 = vadd.f32 %v917, %v1517
        %v1519 = vpop.f32.mrb[0].mxu0
        %v1520 = vadd.f32 %v921, %v1519
        %v1521 = vpop.f32.mrb[0].mxu0
        %v1522 = vpop.f32.mrb[0].mxu0
        %1523 = vdwg.mxu0
        %1524 = vmatprep.subr.bf16.mxu0 %v1331
        %1525 = vmatpush1.bf16.msra.mxu0 %v1330
        %1526 = vmatprep.subr.bf16.mxu0 %v1335
        %1527 = vmatpush1.bf16.msra.mxu0 %v1334
        %1528 = vmatprep.subr.bf16.mxu0 %v1339
        %1529 = vmatpush1.bf16.msra.mxu0 %v1338
        %1530 = vmatprep.subr.bf16.mxu0 %v1343
        %1531 = vmatpush1.bf16.msra.mxu0 %v1342
        %1532 = vmatprep.subr.bf16.mxu0 %v1347
        %1533 = vmatpush1.bf16.msra.mxu0 %v1346
        %1534 = vmatprep.subr.bf16.mxu0 %v1351
        %1535 = vmatpush1.bf16.msra.mxu0 %v1350
        %1536 = vmatprep.subr.bf16.mxu0 %v1355
        %1537 = vmatpush1.bf16.msra.mxu0 %v1354
        %1538 = vmatprep.subr.bf16.mxu0 %v1359
        %1539 = vmatpush1.bf16.msra.mxu0 %v1358
        %1540 = vmatprep.subr.bf16.mxu0 %v1363
        %1541 = vmatpush1.bf16.msra.mxu0 %v1362
        %1542 = vmatprep.subr.bf16.mxu0 0
        %1543 = vmatpush1.bf16.msra.mxu0 0
        %1544 = vmatprep.subr.bf16.mxu0 0
        %1545 = vmatpush1.bf16.msra.mxu0 0
        %1546 = vmatprep.subr.bf16.mxu0 0
        %1547 = vmatpush1.bf16.msra.mxu0 0
        %1548 = vmatprep.subr.bf16.mxu0 0
        %1549 = vmatpush1.bf16.msra.mxu0 0
        %1550 = vmatprep.subr.bf16.mxu0 0
        %1551 = vmatpush1.bf16.msra.mxu0 0
        %1552 = vmatprep.subr.bf16.mxu0 0
        %1553 = vmatpush1.bf16.msra.mxu0 0
        %1554 = vmatprep.subr.bf16.mxu0 0
        %1555 = vmatpush1.bf16.msra.mxu0 0
        %1556 = vmatprep.mubr.bf16.mxu0 %v1468
        %1557 = vmatmul.mubr.bf16.gmra.mrb[0].mxu0 %v954
        %v1558 = vpop.f32.mrb[0].mxu0
        %v1559 = vadd.f32 %v1508, %v1558
        %v1560 = vpop.f32.mrb[0].mxu0
        %v1561 = vadd.f32 %v1510, %v1560
        %v1562 = vpop.f32.mrb[0].mxu0
        %v1563 = vadd.f32 %v1512, %v1562
        %v1564 = vpop.f32.mrb[0].mxu0
        %v1565 = vadd.f32 %v1514, %v1564
        %1566 = vmatprep.mubr.bf16.mxu0 %v1471
        %1567 = vmatmul.mubr.bf16.gmra.mrb[0].mxu0 %v958
        %v1568 = vpop.f32.mrb[0].mxu0
        %v1569 = vadd.f32 %v1518, %v1568
        %v1570 = vpop.f32.mrb[0].mxu0
        %v1571 = vadd.f32 %v1520, %v1570
        %v1572 = vpop.f32.mrb[0].mxu0
        %v1573 = vpop.f32.mrb[0].mxu0
        %1574 = vdwg.mxu0
        %1575 = vmatprep.subr.bf16.mxu0 %v1269
        %1576 = vmatpush1.bf16.msra.mxu0 %v1268
        %1577 = vmatprep.subr.bf16.mxu0 %v1273
        %1578 = vmatpush1.bf16.msra.mxu0 %v1272
        %1579 = vmatprep.subr.bf16.mxu0 %v1277
        %1580 = vmatpush1.bf16.msra.mxu0 %v1276
        %1581 = vmatprep.subr.bf16.mxu0 %v1281
        %1582 = vmatpush1.bf16.msra.mxu0 %v1280
        %1583 = vmatprep.subr.bf16.mxu0 %v1285
        %1584 = vmatpush1.bf16.msra.mxu0 %v1284
        %1585 = vmatprep.subr.bf16.mxu0 %v1289
        %1586 = vmatpush1.bf16.msra.mxu0 %v1288
        %1587 = vmatprep.subr.bf16.mxu0 %v1293
        %1588 = vmatpush1.bf16.msra.mxu0 %v1292
        %1589 = vmatprep.subr.bf16.mxu0 %v1297
        %1590 = vmatpush1.bf16.msra.mxu0 %v1296
        %1591 = vmatprep.subr.bf16.mxu0 %v1301
        %1592 = vmatpush1.bf16.msra.mxu0 %v1300
        %1593 = vmatprep.subr.bf16.mxu0 %v1305
        %1594 = vmatpush1.bf16.msra.mxu0 %v1304
        %1595 = vmatprep.subr.bf16.mxu0 %v1309
        %1596 = vmatpush1.bf16.msra.mxu0 %v1308
        %1597 = vmatprep.subr.bf16.mxu0 %v1313
        %1598 = vmatpush1.bf16.msra.mxu0 %v1312
        %1599 = vmatprep.subr.bf16.mxu0 %v1317
        %1600 = vmatpush1.bf16.msra.mxu0 %v1316
        %1601 = vmatprep.subr.bf16.mxu0 %v1321
        %1602 = vmatpush1.bf16.msra.mxu0 %v1320
        %1603 = vmatprep.subr.bf16.mxu0 %v1325
        %1604 = vmatpush1.bf16.msra.mxu0 %v1324
        %1605 = vmatprep.subr.bf16.mxu0 %v1329
        %1606 = vmatpush1.bf16.msra.mxu0 %v1328
        %1607 = vmatprep.mubr.bf16.mxu0 %v953
        %1608 = vmatmul.mubr.bf16.gmra.mrb[0].mxu0 %v952
        %v1609 = vpop.f32.mrb[0].mxu0
        %v1610 = vadd.f32 %v925, %v1609
        %v1611 = vpop.f32.mrb[0].mxu0
        %v1612 = vadd.f32 %v929, %v1611
        %v1613 = vpop.f32.mrb[0].mxu0
        %v1614 = vadd.f32 %v925, %v1613
        %v1615 = vpop.f32.mrb[0].mxu0
        %v1616 = vadd.f32 %v929, %v1615
        %1617 = vmatprep.mubr.bf16.mxu0 %v957
        %1618 = vmatmul.mubr.bf16.gmra.mrb[0].mxu0 %v956
        %v1619 = vpop.f32.mrb[0].mxu0
        %v1620 = vadd.f32 %v925, %v1619
        %v1621 = vpop.f32.mrb[0].mxu0
        %v1622 = vadd.f32 %v929, %v1621
        %v1623 = vpop.f32.mrb[0].mxu0
        %v1624 = vpop.f32.mrb[0].mxu0
        %1625 = vdwg.mxu0
        %1626 = vmatprep.subr.bf16.mxu0 %v1333
        %1627 = vmatpush1.bf16.msra.mxu0 %v1332
        %1628 = vmatprep.subr.bf16.mxu0 %v1337
        %1629 = vmatpush1.bf16.msra.mxu0 %v1336
        %1630 = vmatprep.subr.bf16.mxu0 %v1341
        %1631 = vmatpush1.bf16.msra.mxu0 %v1340
        %1632 = vmatprep.subr.bf16.mxu0 %v1345
        %1633 = vmatpush1.bf16.msra.mxu0 %v1344
        %1634 = vmatprep.subr.bf16.mxu0 %v1349
        %1635 = vmatpush1.bf16.msra.mxu0 %v1348
        %1636 = vmatprep.subr.bf16.mxu0 %v1353
        %1637 = vmatpush1.bf16.msra.mxu0 %v1352
        %1638 = vmatprep.subr.bf16.mxu0 %v1357
        %1639 = vmatpush1.bf16.msra.mxu0 %v1356
        %1640 = vmatprep.subr.bf16.mxu0 %v1361
        %1641 = vmatpush1.bf16.msra.mxu0 %v1360
        %1642 = vmatprep.subr.bf16.mxu0 %v1365
        %1643 = vmatpush1.bf16.msra.mxu0 %v1364
        %1644 = vmatprep.subr.bf16.mxu0 0
        %1645 = vmatpush1.bf16.msra.mxu0 0
        %1646 = vmatprep.subr.bf16.mxu0 0
        %1647 = vmatpush1.bf16.msra.mxu0 0
        %1648 = vmatprep.subr.bf16.mxu0 0
        %1649 = vmatpush1.bf16.msra.mxu0 0
        %1650 = vmatprep.subr.bf16.mxu0 0
        %1651 = vmatpush1.bf16.msra.mxu0 0
        %1652 = vmatprep.subr.bf16.mxu0 0
        %1653 = vmatpush1.bf16.msra.mxu0 0
        %1654 = vmatprep.subr.bf16.mxu0 0
        %1655 = vmatpush1.bf16.msra.mxu0 0
        %1656 = vmatprep.subr.bf16.mxu0 0
        %1657 = vmatpush1.bf16.msra.mxu0 0
        %1658 = vmatprep.mubr.bf16.mxu0 %v1468
        %1659 = vmatmul.mubr.bf16.gmra.mrb[0].mxu0 %v954
        %v1660 = vpop.f32.mrb[0].mxu0
        %v1661 = vadd.f32 %v1610, %v1660
        %v1662 = vpop.f32.mrb[0].mxu0
        %v1663 = vadd.f32 %v1612, %v1662
        %v1664 = vpop.f32.mrb[0].mxu0
        %v1665 = vadd.f32 %v1614, %v1664
        %v1666 = vpop.f32.mrb[0].mxu0
        %v1667 = vadd.f32 %v1616, %v1666
        %1668 = vmatprep.mubr.bf16.mxu0 %v1471
        %1669 = vmatmul.mubr.bf16.gmra.mrb[0].mxu0 %v958
        %v1670 = vpop.f32.mrb[0].mxu0
        %v1671 = vadd.f32 %v1620, %v1670
        %v1672 = vpop.f32.mrb[0].mxu0
        %v1673 = vadd.f32 %v1622, %v1672
        %v1674 = vpop.f32.mrb[0].mxu0
        %v1675 = vpop.f32.mrb[0].mxu0
        %1676 = vdwg.mxu0
        %v1677 = vmax.f32 %v1559, 0.0
        %v1678 = vmax.f32 %v1561, 0.0
        %v1679 = vmax.f32 %v1661, 0.0
        %v1680 = vmax.f32 %v1663, 0.0
        %v1681 = vmax.f32 %v1563, 0.0
        %v1682 = vmax.f32 %v1565, 0.0
        %v1683 = vmax.f32 %v1665, 0.0
        %v1684 = vmax.f32 %v1667, 0.0
        %v1685 = vmax.f32 %v1569, 0.0
        %v1686 = vmax.f32 %v1571, 0.0
        %v1687 = vmax.f32 %v1671, 0.0
        %v1688 = vmax.f32 %v1673, 0.0
        %v1689 = vpack.c.bf16 %v1681, %v1677
        %v1690 = vpack.c.bf16 %v1682, %v1678
        %v1691 = vpack.c.bf16 %v1683, %v1679
        %v1692 = vpack.c.bf16 %v1684, %v1680
        %v1693 = vpack.c.bf16 %v1685, %v1685
        %v1694 = vpack.c.bf16 %v1686, %v1686
        %v1695 = vpack.c.bf16 %v1687, %v1687
        %v1696 = vpack.c.bf16 %v1688, %v1688
        %v1705 = vunpack.c.l.b16 %v1689
        %v1706 = vunpack.c.l.b16 %v1690
        %v1707 = vunpack.c.l.b16 %v1691
        %v1708 = vunpack.c.l.b16 %v1692
        %v1709 = vunpack.c.h.b16 %v1689
        %v1710 = vunpack.c.h.b16 %v1690
        %v1711 = vunpack.c.h.b16 %v1691
        %v1712 = vunpack.c.h.b16 %v1692
        %v1713 = vunpack.c.l.b16 %v1693
        %v1714 = vunpack.c.l.b16 %v1694
        %v1715 = vunpack.c.l.b16 %v1695
        %v1716 = vunpack.c.l.b16 %v1696
        %v1717 = vpack.c.b16 %v1706, %v1705
        %v1718 = vpack.c.b16 %v1708, %v1707
        %v1719 = vpack.c.b16 %v1710, %v1709
        %v1720 = vpack.c.b16 %v1712, %v1711
        %v1721 = vpack.c.b16 %v1714, %v1713
        %v1722 = vpack.c.b16 %v1716, %v1715
        %1729 = vst [vmem:[#allocation2] sm:$0xff] %v1717
        %1730 = vst [vmem:[#allocation2 + $0x8] sm:$0xff] %v1718
        %1731 = vst [vmem:[#allocation2 + $0x10] sm:$0xff] %v1719
        %1732 = vst [vmem:[#allocation2 + $0x18] sm:$0xff] %v1720
        %1733 = vst [vmem:[#allocation2 + $0x20] sm:$0x33] %v1721
        %1734 = vst [vmem:[#allocation2 + $0x28] sm:$0x33] %v1722
        %v1735 = vld [vmem:[#allocation2] sm:$0xff]
        %v1736 = vld [vmem:[#allocation2 + $0x8] sm:$0xff]
        %v1737 = vld [vmem:[#allocation2 + $0x10] sm:$0xff]
        %v1738 = vld [vmem:[#allocation2 + $0x18] sm:$0xff]
        %v1739 = vld [vmem:[#allocation2 + $0x20] sm:$0x11]
        %v1740 = vld [vmem:[#allocation2 + $0x28] sm:$0x11]
        %v1741 = vld [vmem:[#allocation9] sm:$0xff]
        %v1742 = vld [vmem:[#allocation9 + $0x8] sm:$0xff]
        %v1743 = vld [vmem:[#allocation9 + $0x10] sm:$0xff]
        %v1744 = vld [vmem:[#allocation9 + $0x18] sm:$0xff]
        %v1745 = vld [vmem:[#allocation9 + $0x20] sm:$0xff]
        %v1746 = vld [vmem:[#allocation9 + $0x28] sm:$0xff]
        %v1747 = vld [vmem:[#allocation9 + $0x30] sm:$0xff]
        %v1748 = vld [vmem:[#allocation9 + $0x38] sm:$0xff]
        %v1749 = vld [vmem:[#allocation9 + $0x40] sm:$0xff]
        %v1750 = vld [vmem:[#allocation9 + $0x48] sm:$0xff]
        %v1751 = vld [vmem:[#allocation9 + $0x50] sm:$0xff]
        %v1752 = vld [vmem:[#allocation9 + $0x58] sm:$0xff]
        %v1753 = vld [vmem:[#allocation9 + $0x60] sm:$0xff]
        %v1754 = vld [vmem:[#allocation9 + $0x68] sm:$0xff]
        %v1755 = vld [vmem:[#allocation9 + $0x70] sm:$0xff]
        %v1756 = vld [vmem:[#allocation9 + $0x78] sm:$0xff]
        %v1757 = vld [vmem:[#allocation9 + $0x80] sm:$0xff]
        %v1758 = vld [vmem:[#allocation9 + $0x88] sm:$0xff]
        %v1759 = vld [vmem:[#allocation9 + $0x90] sm:$0xff]
        %v1760 = vld [vmem:[#allocation9 + $0x98] sm:$0xff]
        %v1761 = vld [vmem:[#allocation9 + $0xa0] sm:$0xff]
        %v1762 = vld [vmem:[#allocation9 + $0xa8] sm:$0xff]
        %v1763 = vld [vmem:[#allocation9 + $0xb0] sm:$0xff]
        %v1764 = vld [vmem:[#allocation9 + $0xb8] sm:$0xff]
        %v1765 = vld [vmem:[#allocation9 + $0xc0] sm:$0xff]
        %v1766 = vld [vmem:[#allocation9 + $0xc8] sm:$0xff]
        %v1767 = vld [vmem:[#allocation9 + $0xd0] sm:$0xff]
        %v1768 = vld [vmem:[#allocation9 + $0xd8] sm:$0xff]
        %v1769 = vld [vmem:[#allocation9 + $0xe0] sm:$0xff]
        %v1770 = vld [vmem:[#allocation9 + $0xe8] sm:$0xff]
        %v1771 = vld [vmem:[#allocation9 + $0xf0] sm:$0xff]
        %v1772 = vld [vmem:[#allocation9 + $0xf8] sm:$0xff]
        %v1773 = vld [vmem:[#allocation9 + $0x100] sm:$0xff]
        %v1774 = vld [vmem:[#allocation9 + $0x108] sm:$0xff]
        %v1775 = vld [vmem:[#allocation9 + $0x110] sm:$0xff]
        %v1776 = vld [vmem:[#allocation9 + $0x118] sm:$0xff]
        %v1777 = vld [vmem:[#allocation9 + $0x120] sm:$0xff]
        %v1778 = vld [vmem:[#allocation9 + $0x128] sm:$0xff]
        %v1779 = vld [vmem:[#allocation9 + $0x130] sm:$0xff]
        %v1780 = vld [vmem:[#allocation9 + $0x138] sm:$0xff]
        %v1781 = vld [vmem:[#allocation9 + $0x140] sm:$0xff]
        %v1782 = vld [vmem:[#allocation9 + $0x148] sm:$0xff]
        %v1783 = vld [vmem:[#allocation9 + $0x150] sm:$0xff]
        %v1784 = vld [vmem:[#allocation9 + $0x158] sm:$0xff]
        %v1785 = vld [vmem:[#allocation9 + $0x160] sm:$0xff]
        %v1786 = vld [vmem:[#allocation9 + $0x168] sm:$0xff]
        %v1787 = vld [vmem:[#allocation9 + $0x170] sm:$0xff]
        %v1788 = vld [vmem:[#allocation9 + $0x178] sm:$0xff]
        %v1789 = vld [vmem:[#allocation9 + $0x180] sm:$0xff]
        %v1790 = vld [vmem:[#allocation9 + $0x188] sm:$0xff]
        %v1791 = vld [vmem:[#allocation9 + $0x190] sm:$0xff]
        %v1792 = vld [vmem:[#allocation9 + $0x198] sm:$0xff]
        %v1793 = vld [vmem:[#allocation9 + $0x1a0] sm:$0xff]
        %v1794 = vld [vmem:[#allocation9 + $0x1a8] sm:$0xff]
        %v1795 = vld [vmem:[#allocation9 + $0x1b0] sm:$0xff]
        %v1796 = vld [vmem:[#allocation9 + $0x1b8] sm:$0xff]
        %v1797 = vld [vmem:[#allocation9 + $0x1c0] sm:$0xff]
        %v1798 = vld [vmem:[#allocation9 + $0x1c8] sm:$0xff]
        %v1799 = vld [vmem:[#allocation9 + $0x1d0] sm:$0xff]
        %v1800 = vld [vmem:[#allocation9 + $0x1d8] sm:$0xff]
        %v1801 = vld [vmem:[#allocation9 + $0x1e0] sm:$0xff]
        %v1802 = vld [vmem:[#allocation9 + $0x1e8] sm:$0xff]
        %v1803 = vld [vmem:[#allocation9 + $0x1f0] sm:$0xff]
        %v1804 = vld [vmem:[#allocation9 + $0x1f8] sm:$0xff]
        %v1805 = vld [vmem:[#allocation9 + $0x200] sm:$0xff]
        %v1806 = vld [vmem:[#allocation9 + $0x208] sm:$0xff]
        %v1807 = vld [vmem:[#allocation9 + $0x210] sm:$0xff]
        %v1808 = vld [vmem:[#allocation9 + $0x218] sm:$0xff]
        %v1809 = vld [vmem:[#allocation9 + $0x220] sm:$0xff]
        %v1810 = vld [vmem:[#allocation9 + $0x228] sm:$0xff]
        %v1811 = vld [vmem:[#allocation9 + $0x230] sm:$0xff]
        %v1812 = vld [vmem:[#allocation9 + $0x238] sm:$0xff]
        %v1813 = vld [vmem:[#allocation9 + $0x240] sm:$0xff]
        %v1814 = vld [vmem:[#allocation9 + $0x248] sm:$0xff]
        %v1815 = vld [vmem:[#allocation9 + $0x250] sm:$0xff]
        %v1816 = vld [vmem:[#allocation9 + $0x258] sm:$0xff]
        %v1817 = vld [vmem:[#allocation9 + $0x260] sm:$0xff]
        %v1818 = vld [vmem:[#allocation9 + $0x268] sm:$0xff]
        %v1819 = vld [vmem:[#allocation9 + $0x270] sm:$0xff]
        %v1820 = vld [vmem:[#allocation9 + $0x278] sm:$0xff]
        %v1821 = vld [vmem:[#allocation9 + $0x280] sm:$0xff]
        %v1822 = vld [vmem:[#allocation9 + $0x288] sm:$0xff]
        %v1823 = vld [vmem:[#allocation9 + $0x290] sm:$0xff]
        %v1824 = vld [vmem:[#allocation9 + $0x298] sm:$0xff]
        %v1825 = vld [vmem:[#allocation9 + $0x2a0] sm:$0xff]
        %v1826 = vld [vmem:[#allocation9 + $0x2a8] sm:$0xff]
        %v1827 = vld [vmem:[#allocation9 + $0x2b0] sm:$0xff]
        %v1828 = vld [vmem:[#allocation9 + $0x2b8] sm:$0xff]
        %v1829 = vld [vmem:[#allocation9 + $0x2c0] sm:$0xff]
        %v1830 = vld [vmem:[#allocation9 + $0x2c8] sm:$0xff]
        %v1831 = vld [vmem:[#allocation9 + $0x2d0] sm:$0xff]
        %v1832 = vld [vmem:[#allocation9 + $0x2d8] sm:$0xff]
        %v1833 = vld [vmem:[#allocation9 + $0x2e0] sm:$0xff]
        %v1834 = vld [vmem:[#allocation9 + $0x2e8] sm:$0xff]
        %v1835 = vld [vmem:[#allocation9 + $0x2f0] sm:$0xff]
        %v1836 = vld [vmem:[#allocation9 + $0x2f8] sm:$0xff]
        %v1837 = vld [vmem:[#allocation9 + $0x300] sm:$0xff]
        %v1838 = vld [vmem:[#allocation9 + $0x308] sm:$0xff]
        %v1839 = vld [vmem:[#allocation9 + $0x310] sm:$0xff]
        %v1840 = vld [vmem:[#allocation9 + $0x318] sm:$0xff]
        %v1841 = vld [vmem:[#allocation9 + $0x320] sm:$0xff]
        %v1842 = vld [vmem:[#allocation9 + $0x328] sm:$0xff]
        %v1843 = vld [vmem:[#allocation9 + $0x330] sm:$0xff]
        %v1844 = vld [vmem:[#allocation9 + $0x338] sm:$0xff]
        %v1845 = vld [vmem:[#allocation9 + $0x340] sm:$0xff]
        %v1846 = vld [vmem:[#allocation9 + $0x348] sm:$0xff]
        %v1847 = vld [vmem:[#allocation9 + $0x350] sm:$0xff]
        %v1848 = vld [vmem:[#allocation9 + $0x358] sm:$0xff]
        %v1849 = vld [vmem:[#allocation9 + $0x360] sm:$0xff]
        %v1850 = vld [vmem:[#allocation9 + $0x368] sm:$0xff]
        %v1851 = vld [vmem:[#allocation9 + $0x370] sm:$0xff]
        %v1852 = vld [vmem:[#allocation9 + $0x378] sm:$0xff]
        %v1853 = vld [vmem:[#allocation9 + $0x380] sm:$0xff]
        %v1854 = vld [vmem:[#allocation9 + $0x388] sm:$0xff]
        %v1855 = vld [vmem:[#allocation9 + $0x390] sm:$0xff]
        %v1856 = vld [vmem:[#allocation9 + $0x398] sm:$0xff]
        %v1857 = vld [vmem:[#allocation9 + $0x3a0] sm:$0xff]
        %v1858 = vld [vmem:[#allocation9 + $0x3a8] sm:$0xff]
        %v1859 = vld [vmem:[#allocation9 + $0x3b0] sm:$0xff]
        %v1860 = vld [vmem:[#allocation9 + $0x3b8] sm:$0xff]
        %v1861 = vld [vmem:[#allocation9 + $0x3c0] sm:$0xff]
        %v1862 = vld [vmem:[#allocation9 + $0x3c8] sm:$0xff]
        %v1863 = vld [vmem:[#allocation9 + $0x3d0] sm:$0xff]
        %v1864 = vld [vmem:[#allocation9 + $0x3d8] sm:$0xff]
        %v1865 = vld [vmem:[#allocation9 + $0x3e0] sm:$0xff]
        %v1866 = vld [vmem:[#allocation9 + $0x3e8] sm:$0xff]
        %v1867 = vld [vmem:[#allocation9 + $0x3f0] sm:$0xff]
        %v1868 = vld [vmem:[#allocation9 + $0x3f8] sm:$0xff]
        %v1869 = vld [vmem:[#allocation2 + $0x20] sm:$0x33]
        %v1870 = vld [vmem:[#allocation2 + $0x28] sm:$0x33]
        %v1871 = vld [vmem:[#allocation9 + $0x400] sm:$0xff]
        %v1872 = vld [vmem:[#allocation9 + $0x408] sm:$0xff]
        %v1873 = vld [vmem:[#allocation9 + $0x410] sm:$0xff]
        %v1874 = vld [vmem:[#allocation9 + $0x418] sm:$0xff]
        %v1875 = vld [vmem:[#allocation9 + $0x420] sm:$0xff]
        %v1876 = vld [vmem:[#allocation9 + $0x428] sm:$0xff]
        %v1877 = vld [vmem:[#allocation9 + $0x430] sm:$0xff]
        %v1878 = vld [vmem:[#allocation9 + $0x438] sm:$0xff]
        %v1879 = vld [vmem:[#allocation9 + $0x440] sm:$0xff]
        %v1880 = vld [vmem:[#allocation9 + $0x448] sm:$0xff]
        %v1881 = vld [vmem:[#allocation9 + $0x450] sm:$0xff]
        %v1882 = vld [vmem:[#allocation9 + $0x458] sm:$0xff]
        %v1883 = vld [vmem:[#allocation9 + $0x460] sm:$0xff]
        %v1884 = vld [vmem:[#allocation9 + $0x468] sm:$0xff]
        %v1885 = vld [vmem:[#allocation9 + $0x470] sm:$0xff]
        %v1886 = vld [vmem:[#allocation9 + $0x478] sm:$0xff]
        %v1887 = vld [vmem:[#allocation9 + $0x480] sm:$0xff]
        %v1888 = vld [vmem:[#allocation9 + $0x488] sm:$0xff]
        %v1889 = vld [vmem:[#allocation9 + $0x490] sm:$0xff]
        %v1890 = vld [vmem:[#allocation9 + $0x498] sm:$0xff]
        %v1891 = vld [vmem:[#allocation9 + $0x4a0] sm:$0xff]
        %v1892 = vld [vmem:[#allocation9 + $0x4a8] sm:$0xff]
        %v1893 = vld [vmem:[#allocation9 + $0x4b0] sm:$0xff]
        %v1894 = vld [vmem:[#allocation9 + $0x4b8] sm:$0xff]
        %v1895 = vld [vmem:[#allocation9 + $0x4c0] sm:$0xff]
        %v1896 = vld [vmem:[#allocation9 + $0x4c8] sm:$0xff]
        %v1897 = vld [vmem:[#allocation9 + $0x4d0] sm:$0xff]
        %v1898 = vld [vmem:[#allocation9 + $0x4d8] sm:$0xff]
        %v1899 = vld [vmem:[#allocation9 + $0x4e0] sm:$0xff]
        %v1900 = vld [vmem:[#allocation9 + $0x4e8] sm:$0xff]
        %v1901 = vld [vmem:[#allocation9 + $0x4f0] sm:$0xff]
        %v1902 = vld [vmem:[#allocation9 + $0x4f8] sm:$0xff]
        %v1903 = vld [vmem:[#allocation9 + $0x500] sm:$0xff]
        %v1904 = vld [vmem:[#allocation9 + $0x508] sm:$0xff]
        %v1905 = vld [vmem:[#allocation9 + $0x510] sm:$0xff]
        %v1906 = vld [vmem:[#allocation9 + $0x518] sm:$0xff]
        %v1907 = vld [vmem:[#allocation9 + $0x520] sm:$0xff]
        %v1908 = vld [vmem:[#allocation9 + $0x528] sm:$0xff]
        %v1909 = vld [vmem:[#allocation9 + $0x530] sm:$0xff]
        %v1910 = vld [vmem:[#allocation9 + $0x538] sm:$0xff]
        %v1911 = vld [vmem:[#allocation9 + $0x540] sm:$0xff]
        %v1912 = vld [vmem:[#allocation9 + $0x548] sm:$0xff]
        %v1913 = vld [vmem:[#allocation9 + $0x550] sm:$0xff]
        %v1914 = vld [vmem:[#allocation9 + $0x558] sm:$0xff]
        %v1915 = vld [vmem:[#allocation9 + $0x560] sm:$0xff]
        %v1916 = vld [vmem:[#allocation9 + $0x568] sm:$0xff]
        %v1917 = vld [vmem:[#allocation9 + $0x570] sm:$0xff]
        %v1918 = vld [vmem:[#allocation9 + $0x578] sm:$0xff]
        %v1919 = vld [vmem:[#allocation9 + $0x580] sm:$0xff]
        %v1920 = vld [vmem:[#allocation9 + $0x588] sm:$0xff]
        %v1921 = vld [vmem:[#allocation9 + $0x590] sm:$0xff]
        %v1922 = vld [vmem:[#allocation9 + $0x598] sm:$0xff]
        %v1923 = vld [vmem:[#allocation9 + $0x5a0] sm:$0xff]
        %v1924 = vld [vmem:[#allocation9 + $0x5a8] sm:$0xff]
        %v1925 = vld [vmem:[#allocation9 + $0x5b0] sm:$0xff]
        %v1926 = vld [vmem:[#allocation9 + $0x5b8] sm:$0xff]
        %v1927 = vld [vmem:[#allocation9 + $0x5c0] sm:$0xff]
        %v1928 = vld [vmem:[#allocation9 + $0x5c8] sm:$0xff]
        %v1929 = vld [vmem:[#allocation9 + $0x5d0] sm:$0xff]
        %v1930 = vld [vmem:[#allocation9 + $0x5d8] sm:$0xff]
        %v1931 = vld [vmem:[#allocation9 + $0x5e0] sm:$0xff]
        %v1932 = vld [vmem:[#allocation9 + $0x5e8] sm:$0xff]
        %v1933 = vld [vmem:[#allocation9 + $0x5f0] sm:$0xff]
        %v1934 = vld [vmem:[#allocation9 + $0x5f8] sm:$0xff]
        %v1935 = vld [vmem:[#allocation9 + $0x600] sm:$0xff]
        %v1936 = vld [vmem:[#allocation9 + $0x608] sm:$0xff]
        %v1937 = vld [vmem:[#allocation9 + $0x610] sm:$0xff]
        %v1938 = vld [vmem:[#allocation9 + $0x618] sm:$0xff]
        %v1939 = vld [vmem:[#allocation9 + $0x620] sm:$0xff]
        %v1940 = vld [vmem:[#allocation9 + $0x628] sm:$0xff]
        %v1941 = vld [vmem:[#allocation9 + $0x630] sm:$0xff]
        %v1942 = vld [vmem:[#allocation9 + $0x638] sm:$0xff]
        %v1943 = vld [vmem:[#allocation9 + $0x640] sm:$0xff]
        %v1944 = vld [vmem:[#allocation9 + $0x648] sm:$0xff]
        %v1945 = vld [vmem:[#allocation9 + $0x650] sm:$0xff]
        %v1946 = vld [vmem:[#allocation9 + $0x658] sm:$0xff]
        %v1947 = vld [vmem:[#allocation9 + $0x660] sm:$0xff]
        %v1948 = vld [vmem:[#allocation9 + $0x668] sm:$0xff]
        %v1949 = vld [vmem:[#allocation9 + $0x670] sm:$0xff]
        %v1950 = vld [vmem:[#allocation9 + $0x678] sm:$0xff]
        %v1951 = vld [vmem:[#allocation9 + $0x680] sm:$0xff]
        %v1952 = vld [vmem:[#allocation9 + $0x688] sm:$0xff]
        %v1953 = vld [vmem:[#allocation9 + $0x690] sm:$0xff]
        %v1954 = vld [vmem:[#allocation9 + $0x698] sm:$0xff]
        %v1955 = vld [vmem:[#allocation9 + $0x6a0] sm:$0xff]
        %v1956 = vld [vmem:[#allocation9 + $0x6a8] sm:$0xff]
        %v1957 = vld [vmem:[#allocation9 + $0x6b0] sm:$0xff]
        %v1958 = vld [vmem:[#allocation9 + $0x6b8] sm:$0xff]
        %v1959 = vld [vmem:[#allocation9 + $0x6c0] sm:$0xff]
        %v1960 = vld [vmem:[#allocation9 + $0x6c8] sm:$0xff]
        %v1961 = vld [vmem:[#allocation9 + $0x6d0] sm:$0xff]
        %v1962 = vld [vmem:[#allocation9 + $0x6d8] sm:$0xff]
        %v1963 = vld [vmem:[#allocation9 + $0x6e0] sm:$0xff]
        %v1964 = vld [vmem:[#allocation9 + $0x6e8] sm:$0xff]
        %v1965 = vld [vmem:[#allocation9 + $0x6f0] sm:$0xff]
        %v1966 = vld [vmem:[#allocation9 + $0x6f8] sm:$0xff]
        %v1967 = vld [vmem:[#allocation9 + $0x700] sm:$0xff]
        %v1968 = vld [vmem:[#allocation9 + $0x708] sm:$0xff]
        %v1969 = vld [vmem:[#allocation9 + $0x710] sm:$0xff]
        %v1970 = vld [vmem:[#allocation9 + $0x718] sm:$0xff]
        %v1971 = vld [vmem:[#allocation9 + $0x720] sm:$0xff]
        %v1972 = vld [vmem:[#allocation9 + $0x728] sm:$0xff]
        %v1973 = vld [vmem:[#allocation9 + $0x730] sm:$0xff]
        %v1974 = vld [vmem:[#allocation9 + $0x738] sm:$0xff]
        %v1975 = vld [vmem:[#allocation9 + $0x740] sm:$0xff]
        %v1976 = vld [vmem:[#allocation9 + $0x748] sm:$0xff]
        %v1977 = vld [vmem:[#allocation9 + $0x750] sm:$0xff]
        %v1978 = vld [vmem:[#allocation9 + $0x758] sm:$0xff]
        %v1979 = vld [vmem:[#allocation9 + $0x760] sm:$0xff]
        %v1980 = vld [vmem:[#allocation9 + $0x768] sm:$0xff]
        %v1981 = vld [vmem:[#allocation9 + $0x770] sm:$0xff]
        %v1982 = vld [vmem:[#allocation9 + $0x778] sm:$0xff]
        %v1983 = vld [vmem:[#allocation9 + $0x780] sm:$0xff]
        %v1984 = vld [vmem:[#allocation9 + $0x788] sm:$0xff]
        %v1985 = vld [vmem:[#allocation9 + $0x790] sm:$0xff]
        %v1986 = vld [vmem:[#allocation9 + $0x798] sm:$0xff]
        %v1987 = vld [vmem:[#allocation9 + $0x7a0] sm:$0xff]
        %v1988 = vld [vmem:[#allocation9 + $0x7a8] sm:$0xff]
        %v1989 = vld [vmem:[#allocation9 + $0x7b0] sm:$0xff]
        %v1990 = vld [vmem:[#allocation9 + $0x7b8] sm:$0xff]
        %v1991 = vld [vmem:[#allocation9 + $0x7c0] sm:$0xff]
        %v1992 = vld [vmem:[#allocation9 + $0x7c8] sm:$0xff]
        %v1993 = vld [vmem:[#allocation9 + $0x7d0] sm:$0xff]
        %v1994 = vld [vmem:[#allocation9 + $0x7d8] sm:$0xff]
        %v1995 = vld [vmem:[#allocation9 + $0x7e0] sm:$0xff]
        %v1996 = vld [vmem:[#allocation9 + $0x7e8] sm:$0xff]
        %v1997 = vld [vmem:[#allocation9 + $0x7f0] sm:$0xff]
        %v1998 = vld [vmem:[#allocation9 + $0x7f8] sm:$0xff]
        %v2005 = vunpack.c.l.b16 %v1735
        %v2006 = vunpack.c.h.b16 %v1735
        %v2007 = vunpack.c.l.b16 %v1736
        %v2008 = vunpack.c.h.b16 %v1736
        %v2009 = vunpack.c.l.b16 %v1737
        %v2010 = vunpack.c.h.b16 %v1737
        %v2011 = vunpack.c.l.b16 %v1738
        %v2012 = vunpack.c.h.b16 %v1738
        %v2013 = vunpack.c.l.b16 %v1869
        %v2014 = vunpack.c.h.b16 %v1869
        %v2015 = vunpack.c.l.b16 %v1870
        %v2016 = vunpack.c.h.b16 %v1870
        %v2017 = vpack.c.b16 %v2009, %v2005
        %v2018 = vpack.c.b16 %v2010, %v2006
        %v2019 = vpack.c.b16 %v2011, %v2007
        %v2020 = vpack.c.b16 %v2012, %v2008
        %v2021 = vpack.c.b16 %v2013, %v2013
        %v2022 = vpack.c.b16 %v2014, %v2014
        %v2023 = vpack.c.b16 %v2015, %v2015
        %v2024 = vpack.c.b16 %v2016, %v2016
        %vm2025 = vsmask.f32 7424
        %v2027 = vshrl.u32 %v2017, 16
        %v2029 = vshll.u32 %v2017, 16
        %v2031 = vrot.slane %v2029, 1
        %v2032 = vor.u32 %v2027, %v2031
        %v2034 = vshll.u32 %v2021, 16
        %v2036 = vrot.slane %v2034, 1
        %v2037 = vsel %vm2025, %v2032, %v2036
        %v2039 = vshrl.u32 %v2018, 16
        %v2041 = vshll.u32 %v2018, 16
        %v2043 = vrot.slane %v2041, 1
        %v2044 = vor.u32 %v2039, %v2043
        %v2046 = vshll.u32 %v2022, 16
        %v2048 = vrot.slane %v2046, 1
        %v2049 = vsel %vm2025, %v2044, %v2048
        %v2051 = vshrl.u32 %v2019, 16
        %v2053 = vshll.u32 %v2019, 16
        %v2055 = vrot.slane %v2053, 1
        %v2056 = vor.u32 %v2051, %v2055
        %v2058 = vshll.u32 %v2023, 16
        %v2060 = vrot.slane %v2058, 1
        %v2061 = vsel %vm2025, %v2056, %v2060
        %v2063 = vshrl.u32 %v2020, 16
        %v2065 = vshll.u32 %v2020, 16
        %v2067 = vrot.slane %v2065, 1
        %v2068 = vor.u32 %v2063, %v2067
        %v2070 = vshll.u32 %v2024, 16
        %v2072 = vrot.slane %v2070, 1
        %v2073 = vsel %vm2025, %v2068, %v2072
        %v2074 = vshrl.u32 %v2021, 16
        %v2076 = vor.u32 %v2074, %v2036
        %v2077 = vshrl.u32 %v2022, 16
        %v2079 = vor.u32 %v2077, %v2048
        %v2080 = vshrl.u32 %v2023, 16
        %v2082 = vor.u32 %v2080, %v2060
        %v2083 = vshrl.u32 %v2024, 16
        %v2085 = vor.u32 %v2083, %v2072
        %v2222 = vunpack.c.l.b16 %v1871
        %v2223 = vunpack.c.h.b16 %v1871
        %v2224 = vunpack.c.l.b16 %v1872
        %v2225 = vunpack.c.h.b16 %v1872
        %v2226 = vunpack.c.l.b16 %v1873
        %v2227 = vunpack.c.h.b16 %v1873
        %v2228 = vunpack.c.l.b16 %v1874
        %v2229 = vunpack.c.h.b16 %v1874
        %v2230 = vunpack.c.l.b16 %v1875
        %v2231 = vunpack.c.h.b16 %v1875
        %v2232 = vunpack.c.l.b16 %v1876
        %v2233 = vunpack.c.h.b16 %v1876
        %v2234 = vunpack.c.l.b16 %v1877
        %v2235 = vunpack.c.h.b16 %v1877
        %v2236 = vunpack.c.l.b16 %v1878
        %v2237 = vunpack.c.h.b16 %v1878
        %v2238 = vunpack.c.l.b16 %v1879
        %v2239 = vunpack.c.h.b16 %v1879
        %v2240 = vunpack.c.l.b16 %v1880
        %v2241 = vunpack.c.h.b16 %v1880
        %v2242 = vunpack.c.l.b16 %v1881
        %v2243 = vunpack.c.h.b16 %v1881
        %v2244 = vunpack.c.l.b16 %v1882
        %v2245 = vunpack.c.h.b16 %v1882
        %v2246 = vunpack.c.l.b16 %v1883
        %v2247 = vunpack.c.h.b16 %v1883
        %v2248 = vunpack.c.l.b16 %v1884
        %v2249 = vunpack.c.h.b16 %v1884
        %v2250 = vunpack.c.l.b16 %v1885
        %v2251 = vunpack.c.h.b16 %v1885
        %v2252 = vunpack.c.l.b16 %v1886
        %v2253 = vunpack.c.h.b16 %v1886
        %v2254 = vunpack.c.l.b16 %v1887
        %v2255 = vunpack.c.h.b16 %v1887
        %v2256 = vunpack.c.l.b16 %v1888
        %v2257 = vunpack.c.h.b16 %v1888
        %v2258 = vunpack.c.l.b16 %v1889
        %v2259 = vunpack.c.h.b16 %v1889
        %v2260 = vunpack.c.l.b16 %v1890
        %v2261 = vunpack.c.h.b16 %v1890
        %v2262 = vunpack.c.l.b16 %v1891
        %v2263 = vunpack.c.h.b16 %v1891
        %v2264 = vunpack.c.l.b16 %v1892
        %v2265 = vunpack.c.h.b16 %v1892
        %v2266 = vunpack.c.l.b16 %v1893
        %v2267 = vunpack.c.h.b16 %v1893
        %v2268 = vunpack.c.l.b16 %v1894
        %v2269 = vunpack.c.h.b16 %v1894
        %v2270 = vunpack.c.l.b16 %v1895
        %v2271 = vunpack.c.h.b16 %v1895
        %v2272 = vunpack.c.l.b16 %v1896
        %v2273 = vunpack.c.h.b16 %v1896
        %v2274 = vunpack.c.l.b16 %v1897
        %v2275 = vunpack.c.h.b16 %v1897
        %v2276 = vunpack.c.l.b16 %v1898
        %v2277 = vunpack.c.h.b16 %v1898
        %v2278 = vunpack.c.l.b16 %v1899
        %v2279 = vunpack.c.h.b16 %v1899
        %v2280 = vunpack.c.l.b16 %v1900
        %v2281 = vunpack.c.h.b16 %v1900
        %v2282 = vunpack.c.l.b16 %v1901
        %v2283 = vunpack.c.h.b16 %v1901
        %v2284 = vunpack.c.l.b16 %v1902
        %v2285 = vunpack.c.h.b16 %v1902
        %v2286 = vunpack.c.l.b16 %v1903
        %v2287 = vunpack.c.h.b16 %v1903
        %v2288 = vunpack.c.l.b16 %v1904
        %v2289 = vunpack.c.h.b16 %v1904
        %v2290 = vunpack.c.l.b16 %v1905
        %v2291 = vunpack.c.h.b16 %v1905
        %v2292 = vunpack.c.l.b16 %v1906
        %v2293 = vunpack.c.h.b16 %v1906
        %v2294 = vunpack.c.l.b16 %v1907
        %v2295 = vunpack.c.h.b16 %v1907
        %v2296 = vunpack.c.l.b16 %v1908
        %v2297 = vunpack.c.h.b16 %v1908
        %v2298 = vunpack.c.l.b16 %v1909
        %v2299 = vunpack.c.h.b16 %v1909
        %v2300 = vunpack.c.l.b16 %v1910
        %v2301 = vunpack.c.h.b16 %v1910
        %v2302 = vunpack.c.l.b16 %v1911
        %v2303 = vunpack.c.h.b16 %v1911
        %v2304 = vunpack.c.l.b16 %v1912
        %v2305 = vunpack.c.h.b16 %v1912
        %v2306 = vunpack.c.l.b16 %v1913
        %v2307 = vunpack.c.h.b16 %v1913
        %v2308 = vunpack.c.l.b16 %v1914
        %v2309 = vunpack.c.h.b16 %v1914
        %v2310 = vunpack.c.l.b16 %v1915
        %v2311 = vunpack.c.h.b16 %v1915
        %v2312 = vunpack.c.l.b16 %v1916
        %v2313 = vunpack.c.h.b16 %v1916
        %v2314 = vunpack.c.l.b16 %v1917
        %v2315 = vunpack.c.h.b16 %v1917
        %v2316 = vunpack.c.l.b16 %v1918
        %v2317 = vunpack.c.h.b16 %v1918
        %v2318 = vunpack.c.l.b16 %v1919
        %v2319 = vunpack.c.h.b16 %v1919
        %v2320 = vunpack.c.l.b16 %v1920
        %v2321 = vunpack.c.h.b16 %v1920
        %v2322 = vunpack.c.l.b16 %v1921
        %v2323 = vunpack.c.h.b16 %v1921
        %v2324 = vunpack.c.l.b16 %v1922
        %v2325 = vunpack.c.h.b16 %v1922
        %v2326 = vunpack.c.l.b16 %v1923
        %v2327 = vunpack.c.h.b16 %v1923
        %v2328 = vunpack.c.l.b16 %v1924
        %v2329 = vunpack.c.h.b16 %v1924
        %v2330 = vunpack.c.l.b16 %v1925
        %v2331 = vunpack.c.h.b16 %v1925
        %v2332 = vunpack.c.l.b16 %v1926
        %v2333 = vunpack.c.h.b16 %v1926
        %v2334 = vunpack.c.l.b16 %v1927
        %v2335 = vunpack.c.h.b16 %v1927
        %v2336 = vunpack.c.l.b16 %v1928
        %v2337 = vunpack.c.h.b16 %v1928
        %v2338 = vunpack.c.l.b16 %v1929
        %v2339 = vunpack.c.h.b16 %v1929
        %v2340 = vunpack.c.l.b16 %v1930
        %v2341 = vunpack.c.h.b16 %v1930
        %v2342 = vunpack.c.l.b16 %v1931
        %v2343 = vunpack.c.h.b16 %v1931
        %v2344 = vunpack.c.l.b16 %v1932
        %v2345 = vunpack.c.h.b16 %v1932
        %v2346 = vunpack.c.l.b16 %v1933
        %v2347 = vunpack.c.h.b16 %v1933
        %v2348 = vunpack.c.l.b16 %v1934
        %v2349 = vunpack.c.h.b16 %v1934
        %v2350 = vunpack.c.l.b16 %v1935
        %v2351 = vunpack.c.h.b16 %v1935
        %v2352 = vunpack.c.l.b16 %v1936
        %v2353 = vunpack.c.h.b16 %v1936
        %v2354 = vunpack.c.l.b16 %v1937
        %v2355 = vunpack.c.h.b16 %v1937
        %v2356 = vunpack.c.l.b16 %v1938
        %v2357 = vunpack.c.h.b16 %v1938
        %v2358 = vunpack.c.l.b16 %v1939
        %v2359 = vunpack.c.h.b16 %v1939
        %v2360 = vunpack.c.l.b16 %v1940
        %v2361 = vunpack.c.h.b16 %v1940
        %v2362 = vunpack.c.l.b16 %v1941
        %v2363 = vunpack.c.h.b16 %v1941
        %v2364 = vunpack.c.l.b16 %v1942
        %v2365 = vunpack.c.h.b16 %v1942
        %v2366 = vunpack.c.l.b16 %v1943
        %v2367 = vunpack.c.h.b16 %v1943
        %v2368 = vunpack.c.l.b16 %v1944
        %v2369 = vunpack.c.h.b16 %v1944
        %v2370 = vunpack.c.l.b16 %v1945
        %v2371 = vunpack.c.h.b16 %v1945
        %v2372 = vunpack.c.l.b16 %v1946
        %v2373 = vunpack.c.h.b16 %v1946
        %v2374 = vunpack.c.l.b16 %v1947
        %v2375 = vunpack.c.h.b16 %v1947
        %v2376 = vunpack.c.l.b16 %v1948
        %v2377 = vunpack.c.h.b16 %v1948
        %v2378 = vunpack.c.l.b16 %v1949
        %v2379 = vunpack.c.h.b16 %v1949
        %v2380 = vunpack.c.l.b16 %v1950
        %v2381 = vunpack.c.h.b16 %v1950
        %v2382 = vunpack.c.l.b16 %v1951
        %v2383 = vunpack.c.h.b16 %v1951
        %v2384 = vunpack.c.l.b16 %v1952
        %v2385 = vunpack.c.h.b16 %v1952
        %v2386 = vunpack.c.l.b16 %v1953
        %v2387 = vunpack.c.h.b16 %v1953
        %v2388 = vunpack.c.l.b16 %v1954
        %v2389 = vunpack.c.h.b16 %v1954
        %v2390 = vunpack.c.l.b16 %v1955
        %v2391 = vunpack.c.h.b16 %v1955
        %v2392 = vunpack.c.l.b16 %v1956
        %v2393 = vunpack.c.h.b16 %v1956
        %v2394 = vunpack.c.l.b16 %v1957
        %v2395 = vunpack.c.h.b16 %v1957
        %v2396 = vunpack.c.l.b16 %v1958
        %v2397 = vunpack.c.h.b16 %v1958
        %v2398 = vunpack.c.l.b16 %v1959
        %v2399 = vunpack.c.h.b16 %v1959
        %v2400 = vunpack.c.l.b16 %v1960
        %v2401 = vunpack.c.h.b16 %v1960
        %v2402 = vunpack.c.l.b16 %v1961
        %v2403 = vunpack.c.h.b16 %v1961
        %v2404 = vunpack.c.l.b16 %v1962
        %v2405 = vunpack.c.h.b16 %v1962
        %v2406 = vunpack.c.l.b16 %v1963
        %v2407 = vunpack.c.h.b16 %v1963
        %v2408 = vunpack.c.l.b16 %v1964
        %v2409 = vunpack.c.h.b16 %v1964
        %v2410 = vunpack.c.l.b16 %v1965
        %v2411 = vunpack.c.h.b16 %v1965
        %v2412 = vunpack.c.l.b16 %v1966
        %v2413 = vunpack.c.h.b16 %v1966
        %v2414 = vunpack.c.l.b16 %v1967
        %v2415 = vunpack.c.h.b16 %v1967
        %v2416 = vunpack.c.l.b16 %v1968
        %v2417 = vunpack.c.h.b16 %v1968
        %v2418 = vunpack.c.l.b16 %v1969
        %v2419 = vunpack.c.h.b16 %v1969
        %v2420 = vunpack.c.l.b16 %v1970
        %v2421 = vunpack.c.h.b16 %v1970
        %v2422 = vunpack.c.l.b16 %v1971
        %v2423 = vunpack.c.h.b16 %v1971
        %v2424 = vunpack.c.l.b16 %v1972
        %v2425 = vunpack.c.h.b16 %v1972
        %v2426 = vunpack.c.l.b16 %v1973
        %v2427 = vunpack.c.h.b16 %v1973
        %v2428 = vunpack.c.l.b16 %v1974
        %v2429 = vunpack.c.h.b16 %v1974
        %v2430 = vunpack.c.l.b16 %v1975
        %v2431 = vunpack.c.h.b16 %v1975
        %v2432 = vunpack.c.l.b16 %v1976
        %v2433 = vunpack.c.h.b16 %v1976
        %v2434 = vunpack.c.l.b16 %v1977
        %v2435 = vunpack.c.h.b16 %v1977
        %v2436 = vunpack.c.l.b16 %v1978
        %v2437 = vunpack.c.h.b16 %v1978
        %v2438 = vunpack.c.l.b16 %v1979
        %v2439 = vunpack.c.h.b16 %v1979
        %v2440 = vunpack.c.l.b16 %v1980
        %v2441 = vunpack.c.h.b16 %v1980
        %v2442 = vunpack.c.l.b16 %v1981
        %v2443 = vunpack.c.h.b16 %v1981
        %v2444 = vunpack.c.l.b16 %v1982
        %v2445 = vunpack.c.h.b16 %v1982
        %v2446 = vunpack.c.l.b16 %v1983
        %v2447 = vunpack.c.h.b16 %v1983
        %v2448 = vunpack.c.l.b16 %v1984
        %v2449 = vunpack.c.h.b16 %v1984
        %v2450 = vunpack.c.l.b16 %v1985
        %v2451 = vunpack.c.h.b16 %v1985
        %v2452 = vunpack.c.l.b16 %v1986
        %v2453 = vunpack.c.h.b16 %v1986
        %v2454 = vunpack.c.l.b16 %v1987
        %v2455 = vunpack.c.h.b16 %v1987
        %v2456 = vunpack.c.l.b16 %v1988
        %v2457 = vunpack.c.h.b16 %v1988
        %v2458 = vunpack.c.l.b16 %v1989
        %v2459 = vunpack.c.h.b16 %v1989
        %v2460 = vunpack.c.l.b16 %v1990
        %v2461 = vunpack.c.h.b16 %v1990
        %v2462 = vunpack.c.l.b16 %v1991
        %v2463 = vunpack.c.h.b16 %v1991
        %v2464 = vunpack.c.l.b16 %v1992
        %v2465 = vunpack.c.h.b16 %v1992
        %v2466 = vunpack.c.l.b16 %v1993
        %v2467 = vunpack.c.h.b16 %v1993
        %v2468 = vunpack.c.l.b16 %v1994
        %v2469 = vunpack.c.h.b16 %v1994
        %v2470 = vunpack.c.l.b16 %v1995
        %v2471 = vunpack.c.h.b16 %v1995
        %v2472 = vunpack.c.l.b16 %v1996
        %v2473 = vunpack.c.h.b16 %v1996
        %v2474 = vunpack.c.l.b16 %v1997
        %v2475 = vunpack.c.h.b16 %v1997
        %v2476 = vunpack.c.l.b16 %v1998
        %v2477 = vunpack.c.h.b16 %v1998
        %v2478 = vpack.c.b16 %v2226, %v2222
        %v2479 = vpack.c.b16 %v2227, %v2223
        %v2480 = vpack.c.b16 %v2228, %v2224
        %v2481 = vpack.c.b16 %v2229, %v2225
        %v2482 = vpack.c.b16 %v2234, %v2230
        %v2483 = vpack.c.b16 %v2235, %v2231
        %v2484 = vpack.c.b16 %v2236, %v2232
        %v2485 = vpack.c.b16 %v2237, %v2233
        %v2486 = vpack.c.b16 %v2242, %v2238
        %v2487 = vpack.c.b16 %v2243, %v2239
        %v2488 = vpack.c.b16 %v2244, %v2240
        %v2489 = vpack.c.b16 %v2245, %v2241
        %v2490 = vpack.c.b16 %v2250, %v2246
        %v2491 = vpack.c.b16 %v2251, %v2247
        %v2492 = vpack.c.b16 %v2252, %v2248
        %v2493 = vpack.c.b16 %v2253, %v2249
        %v2494 = vpack.c.b16 %v2258, %v2254
        %v2495 = vpack.c.b16 %v2259, %v2255
        %v2496 = vpack.c.b16 %v2260, %v2256
        %v2497 = vpack.c.b16 %v2261, %v2257
        %v2498 = vpack.c.b16 %v2266, %v2262
        %v2499 = vpack.c.b16 %v2267, %v2263
        %v2500 = vpack.c.b16 %v2268, %v2264
        %v2501 = vpack.c.b16 %v2269, %v2265
        %v2502 = vpack.c.b16 %v2274, %v2270
        %v2503 = vpack.c.b16 %v2275, %v2271
        %v2504 = vpack.c.b16 %v2276, %v2272
        %v2505 = vpack.c.b16 %v2277, %v2273
        %v2506 = vpack.c.b16 %v2282, %v2278
        %v2507 = vpack.c.b16 %v2283, %v2279
        %v2508 = vpack.c.b16 %v2284, %v2280
        %v2509 = vpack.c.b16 %v2285, %v2281
        %v2510 = vpack.c.b16 %v2290, %v2286
        %v2511 = vpack.c.b16 %v2291, %v2287
        %v2512 = vpack.c.b16 %v2292, %v2288
        %v2513 = vpack.c.b16 %v2293, %v2289
        %v2514 = vpack.c.b16 %v2298, %v2294
        %v2515 = vpack.c.b16 %v2299, %v2295
        %v2516 = vpack.c.b16 %v2300, %v2296
        %v2517 = vpack.c.b16 %v2301, %v2297
        %v2518 = vpack.c.b16 %v2306, %v2302
        %v2519 = vpack.c.b16 %v2307, %v2303
        %v2520 = vpack.c.b16 %v2308, %v2304
        %v2521 = vpack.c.b16 %v2309, %v2305
        %v2522 = vpack.c.b16 %v2314, %v2310
        %v2523 = vpack.c.b16 %v2315, %v2311
        %v2524 = vpack.c.b16 %v2316, %v2312
        %v2525 = vpack.c.b16 %v2317, %v2313
        %v2526 = vpack.c.b16 %v2322, %v2318
        %v2527 = vpack.c.b16 %v2323, %v2319
        %v2528 = vpack.c.b16 %v2324, %v2320
        %v2529 = vpack.c.b16 %v2325, %v2321
        %v2530 = vpack.c.b16 %v2330, %v2326
        %v2531 = vpack.c.b16 %v2331, %v2327
        %v2532 = vpack.c.b16 %v2332, %v2328
        %v2533 = vpack.c.b16 %v2333, %v2329
        %v2534 = vpack.c.b16 %v2338, %v2334
        %v2535 = vpack.c.b16 %v2339, %v2335
        %v2536 = vpack.c.b16 %v2340, %v2336
        %v2537 = vpack.c.b16 %v2341, %v2337
        %v2538 = vpack.c.b16 %v2346, %v2342
        %v2539 = vpack.c.b16 %v2347, %v2343
        %v2540 = vpack.c.b16 %v2348, %v2344
        %v2541 = vpack.c.b16 %v2349, %v2345
        %v2542 = vpack.c.b16 %v2354, %v2350
        %v2543 = vpack.c.b16 %v2355, %v2351
        %v2544 = vpack.c.b16 %v2356, %v2352
        %v2545 = vpack.c.b16 %v2357, %v2353
        %v2546 = vpack.c.b16 %v2362, %v2358
        %v2547 = vpack.c.b16 %v2363, %v2359
        %v2548 = vpack.c.b16 %v2364, %v2360
        %v2549 = vpack.c.b16 %v2365, %v2361
        %v2550 = vpack.c.b16 %v2370, %v2366
        %v2551 = vpack.c.b16 %v2371, %v2367
        %v2552 = vpack.c.b16 %v2372, %v2368
        %v2553 = vpack.c.b16 %v2373, %v2369
        %v2554 = vpack.c.b16 %v2378, %v2374
        %v2555 = vpack.c.b16 %v2379, %v2375
        %v2556 = vpack.c.b16 %v2380, %v2376
        %v2557 = vpack.c.b16 %v2381, %v2377
        %v2558 = vpack.c.b16 %v2386, %v2382
        %v2559 = vpack.c.b16 %v2387, %v2383
        %v2560 = vpack.c.b16 %v2388, %v2384
        %v2561 = vpack.c.b16 %v2389, %v2385
        %v2562 = vpack.c.b16 %v2394, %v2390
        %v2563 = vpack.c.b16 %v2395, %v2391
        %v2564 = vpack.c.b16 %v2396, %v2392
        %v2565 = vpack.c.b16 %v2397, %v2393
        %v2566 = vpack.c.b16 %v2402, %v2398
        %v2567 = vpack.c.b16 %v2403, %v2399
        %v2568 = vpack.c.b16 %v2404, %v2400
        %v2569 = vpack.c.b16 %v2405, %v2401
        %v2570 = vpack.c.b16 %v2410, %v2406
        %v2571 = vpack.c.b16 %v2411, %v2407
        %v2572 = vpack.c.b16 %v2412, %v2408
        %v2573 = vpack.c.b16 %v2413, %v2409
        %v2574 = vpack.c.b16 %v2418, %v2414
        %v2575 = vpack.c.b16 %v2419, %v2415
        %v2576 = vpack.c.b16 %v2420, %v2416
        %v2577 = vpack.c.b16 %v2421, %v2417
        %v2578 = vpack.c.b16 %v2426, %v2422
        %v2579 = vpack.c.b16 %v2427, %v2423
        %v2580 = vpack.c.b16 %v2428, %v2424
        %v2581 = vpack.c.b16 %v2429, %v2425
        %v2582 = vpack.c.b16 %v2434, %v2430
        %v2583 = vpack.c.b16 %v2435, %v2431
        %v2584 = vpack.c.b16 %v2436, %v2432
        %v2585 = vpack.c.b16 %v2437, %v2433
        %v2586 = vpack.c.b16 %v2442, %v2438
        %v2587 = vpack.c.b16 %v2443, %v2439
        %v2588 = vpack.c.b16 %v2444, %v2440
        %v2589 = vpack.c.b16 %v2445, %v2441
        %v2590 = vpack.c.b16 %v2450, %v2446
        %v2591 = vpack.c.b16 %v2451, %v2447
        %v2592 = vpack.c.b16 %v2452, %v2448
        %v2593 = vpack.c.b16 %v2453, %v2449
        %v2594 = vpack.c.b16 %v2458, %v2454
        %v2595 = vpack.c.b16 %v2459, %v2455
        %v2596 = vpack.c.b16 %v2460, %v2456
        %v2597 = vpack.c.b16 %v2461, %v2457
        %v2598 = vpack.c.b16 %v2466, %v2462
        %v2599 = vpack.c.b16 %v2467, %v2463
        %v2600 = vpack.c.b16 %v2468, %v2464
        %v2601 = vpack.c.b16 %v2469, %v2465
        %v2602 = vpack.c.b16 %v2474, %v2470
        %v2603 = vpack.c.b16 %v2475, %v2471
        %v2604 = vpack.c.b16 %v2476, %v2472
        %v2605 = vpack.c.b16 %v2477, %v2473
        %2734 = vmatprep.subr.bf16.mxu0 %v2479
        %2735 = vmatpush1.bf16.msra.mxu0 %v2478
        %2736 = vmatprep.subr.bf16.mxu0 %v2483
        %2737 = vmatpush1.bf16.msra.mxu0 %v2482
        %2738 = vmatprep.subr.bf16.mxu0 %v2487
        %2739 = vmatpush1.bf16.msra.mxu0 %v2486
        %2740 = vmatprep.subr.bf16.mxu0 %v2491
        %2741 = vmatpush1.bf16.msra.mxu0 %v2490
        %2742 = vmatprep.subr.bf16.mxu0 %v2495
        %2743 = vmatpush1.bf16.msra.mxu0 %v2494
        %2744 = vmatprep.subr.bf16.mxu0 %v2499
        %2745 = vmatpush1.bf16.msra.mxu0 %v2498
        %2746 = vmatprep.subr.bf16.mxu0 %v2503
        %2747 = vmatpush1.bf16.msra.mxu0 %v2502
        %2748 = vmatprep.subr.bf16.mxu0 %v2507
        %2749 = vmatpush1.bf16.msra.mxu0 %v2506
        %2750 = vmatprep.subr.bf16.mxu0 %v2511
        %2751 = vmatpush1.bf16.msra.mxu0 %v2510
        %2752 = vmatprep.subr.bf16.mxu0 %v2515
        %2753 = vmatpush1.bf16.msra.mxu0 %v2514
        %2754 = vmatprep.subr.bf16.mxu0 %v2519
        %2755 = vmatpush1.bf16.msra.mxu0 %v2518
        %2756 = vmatprep.subr.bf16.mxu0 %v2523
        %2757 = vmatpush1.bf16.msra.mxu0 %v2522
        %2758 = vmatprep.subr.bf16.mxu0 %v2527
        %2759 = vmatpush1.bf16.msra.mxu0 %v2526
        %2760 = vmatprep.subr.bf16.mxu0 %v2531
        %2761 = vmatpush1.bf16.msra.mxu0 %v2530
        %2762 = vmatprep.subr.bf16.mxu0 %v2535
        %2763 = vmatpush1.bf16.msra.mxu0 %v2534
        %2764 = vmatprep.subr.bf16.mxu0 %v2539
        %2765 = vmatpush1.bf16.msra.mxu0 %v2538
        %2766 = vmatprep.mubr.bf16.mxu0 %v2049
        %2767 = vmatmul.mubr.bf16.gmra.mrb[0].mxu0 %v2037
        %v2768 = vpop.f32.mrb[0].mxu0
        %v2769 = vadd.f32 0.0, %v2768
        %v2770 = vpop.f32.mrb[0].mxu0
        %v2771 = vadd.f32 0.0, %v2770
        %v2772 = vpop.f32.mrb[0].mxu0
        %v2773 = vadd.f32 0.0, %v2772
        %v2774 = vpop.f32.mrb[0].mxu0
        %v2775 = vadd.f32 0.0, %v2774
        %2776 = vmatprep.mubr.bf16.mxu0 %v2079
        %2777 = vmatmul.mubr.bf16.gmra.mrb[0].mxu0 %v2076
        %v2778 = vpop.f32.mrb[0].mxu0
        %v2779 = vadd.f32 0.0, %v2778
        %v2780 = vpop.f32.mrb[0].mxu0
        %v2781 = vadd.f32 0.0, %v2780
        %v2782 = vpop.f32.mrb[0].mxu0
        %v2783 = vpop.f32.mrb[0].mxu0
        %2784 = vdwg.mxu0
        %2785 = vmatprep.subr.bf16.mxu0 %v2543
        %2786 = vmatpush1.bf16.msra.mxu0 %v2542
        %2787 = vmatprep.subr.bf16.mxu0 %v2547
        %2788 = vmatpush1.bf16.msra.mxu0 %v2546
        %2789 = vmatprep.subr.bf16.mxu0 %v2551
        %2790 = vmatpush1.bf16.msra.mxu0 %v2550
        %2791 = vmatprep.subr.bf16.mxu0 %v2555
        %2792 = vmatpush1.bf16.msra.mxu0 %v2554
        %2793 = vmatprep.subr.bf16.mxu0 %v2559
        %2794 = vmatpush1.bf16.msra.mxu0 %v2558
        %2795 = vmatprep.subr.bf16.mxu0 %v2563
        %2796 = vmatpush1.bf16.msra.mxu0 %v2562
        %2797 = vmatprep.subr.bf16.mxu0 %v2567
        %2798 = vmatpush1.bf16.msra.mxu0 %v2566
        %2799 = vmatprep.subr.bf16.mxu0 %v2571
        %2800 = vmatpush1.bf16.msra.mxu0 %v2570
        %2801 = vmatprep.subr.bf16.mxu0 %v2575
        %2802 = vmatpush1.bf16.msra.mxu0 %v2574
        %2803 = vmatprep.subr.bf16.mxu0 %v2579
        %2804 = vmatpush1.bf16.msra.mxu0 %v2578
        %2805 = vmatprep.subr.bf16.mxu0 %v2583
        %2806 = vmatpush1.bf16.msra.mxu0 %v2582
        %2807 = vmatprep.subr.bf16.mxu0 %v2587
        %2808 = vmatpush1.bf16.msra.mxu0 %v2586
        %2809 = vmatprep.subr.bf16.mxu0 %v2591
        %2810 = vmatpush1.bf16.msra.mxu0 %v2590
        %2811 = vmatprep.subr.bf16.mxu0 %v2595
        %2812 = vmatpush1.bf16.msra.mxu0 %v2594
        %2813 = vmatprep.subr.bf16.mxu0 %v2599
        %2814 = vmatpush1.bf16.msra.mxu0 %v2598
        %2815 = vmatprep.subr.bf16.mxu0 %v2603
        %2816 = vmatpush1.bf16.msra.mxu0 %v2602
        %2817 = vmatprep.mubr.bf16.mxu0 %v2073
        %2818 = vmatmul.mubr.bf16.gmra.mrb[0].mxu0 %v2061
        %v2819 = vpop.f32.mrb[0].mxu0
        %v2820 = vadd.f32 %v2769, %v2819
        %v2821 = vpop.f32.mrb[0].mxu0
        %v2822 = vadd.f32 %v2771, %v2821
        %v2823 = vpop.f32.mrb[0].mxu0
        %v2824 = vadd.f32 %v2773, %v2823
        %v2825 = vpop.f32.mrb[0].mxu0
        %v2826 = vadd.f32 %v2775, %v2825
        %2827 = vmatprep.mubr.bf16.mxu0 %v2085
        %2828 = vmatmul.mubr.bf16.gmra.mrb[0].mxu0 %v2082
        %v2829 = vpop.f32.mrb[0].mxu0
        %v2830 = vadd.f32 %v2779, %v2829
        %v2831 = vpop.f32.mrb[0].mxu0
        %v2832 = vadd.f32 %v2781, %v2831
        %v2833 = vpop.f32.mrb[0].mxu0
        %v2834 = vpop.f32.mrb[0].mxu0
        %2835 = vdwg.mxu0
        %2836 = vmatprep.subr.bf16.mxu0 %v2481
        %2837 = vmatpush1.bf16.msra.mxu0 %v2480
        %2838 = vmatprep.subr.bf16.mxu0 %v2485
        %2839 = vmatpush1.bf16.msra.mxu0 %v2484
        %2840 = vmatprep.subr.bf16.mxu0 %v2489
        %2841 = vmatpush1.bf16.msra.mxu0 %v2488
        %2842 = vmatprep.subr.bf16.mxu0 %v2493
        %2843 = vmatpush1.bf16.msra.mxu0 %v2492
        %2844 = vmatprep.subr.bf16.mxu0 %v2497
        %2845 = vmatpush1.bf16.msra.mxu0 %v2496
        %2846 = vmatprep.subr.bf16.mxu0 %v2501
        %2847 = vmatpush1.bf16.msra.mxu0 %v2500
        %2848 = vmatprep.subr.bf16.mxu0 %v2505
        %2849 = vmatpush1.bf16.msra.mxu0 %v2504
        %2850 = vmatprep.subr.bf16.mxu0 %v2509
        %2851 = vmatpush1.bf16.msra.mxu0 %v2508
        %2852 = vmatprep.subr.bf16.mxu0 %v2513
        %2853 = vmatpush1.bf16.msra.mxu0 %v2512
        %2854 = vmatprep.subr.bf16.mxu0 %v2517
        %2855 = vmatpush1.bf16.msra.mxu0 %v2516
        %2856 = vmatprep.subr.bf16.mxu0 %v2521
        %2857 = vmatpush1.bf16.msra.mxu0 %v2520
        %2858 = vmatprep.subr.bf16.mxu0 %v2525
        %2859 = vmatpush1.bf16.msra.mxu0 %v2524
        %2860 = vmatprep.subr.bf16.mxu0 %v2529
        %2861 = vmatpush1.bf16.msra.mxu0 %v2528
        %2862 = vmatprep.subr.bf16.mxu0 %v2533
        %2863 = vmatpush1.bf16.msra.mxu0 %v2532
        %2864 = vmatprep.subr.bf16.mxu0 %v2537
        %2865 = vmatpush1.bf16.msra.mxu0 %v2536
        %2866 = vmatprep.subr.bf16.mxu0 %v2541
        %2867 = vmatpush1.bf16.msra.mxu0 %v2540
        %2868 = vmatprep.mubr.bf16.mxu0 %v2049
        %2869 = vmatmul.mubr.bf16.gmra.mrb[0].mxu0 %v2037
        %v2870 = vpop.f32.mrb[0].mxu0
        %v2871 = vadd.f32 0.0, %v2870
        %v2872 = vpop.f32.mrb[0].mxu0
        %v2873 = vadd.f32 0.0, %v2872
        %v2874 = vpop.f32.mrb[0].mxu0
        %v2875 = vadd.f32 0.0, %v2874
        %v2876 = vpop.f32.mrb[0].mxu0
        %v2877 = vadd.f32 0.0, %v2876
        %2878 = vmatprep.mubr.bf16.mxu0 %v2079
        %2879 = vmatmul.mubr.bf16.gmra.mrb[0].mxu0 %v2076
        %v2880 = vpop.f32.mrb[0].mxu0
        %v2881 = vadd.f32 0.0, %v2880
        %v2882 = vpop.f32.mrb[0].mxu0
        %v2883 = vadd.f32 0.0, %v2882
        %v2884 = vpop.f32.mrb[0].mxu0
        %v2885 = vpop.f32.mrb[0].mxu0
        %2886 = vdwg.mxu0
        %2887 = vmatprep.subr.bf16.mxu0 %v2545
        %2888 = vmatpush1.bf16.msra.mxu0 %v2544
        %2889 = vmatprep.subr.bf16.mxu0 %v2549
        %2890 = vmatpush1.bf16.msra.mxu0 %v2548
        %2891 = vmatprep.subr.bf16.mxu0 %v2553
        %2892 = vmatpush1.bf16.msra.mxu0 %v2552
        %2893 = vmatprep.subr.bf16.mxu0 %v2557
        %2894 = vmatpush1.bf16.msra.mxu0 %v2556
        %2895 = vmatprep.subr.bf16.mxu0 %v2561
        %2896 = vmatpush1.bf16.msra.mxu0 %v2560
        %2897 = vmatprep.subr.bf16.mxu0 %v2565
        %2898 = vmatpush1.bf16.msra.mxu0 %v2564
        %2899 = vmatprep.subr.bf16.mxu0 %v2569
        %2900 = vmatpush1.bf16.msra.mxu0 %v2568
        %2901 = vmatprep.subr.bf16.mxu0 %v2573
        %2902 = vmatpush1.bf16.msra.mxu0 %v2572
        %2903 = vmatprep.subr.bf16.mxu0 %v2577
        %2904 = vmatpush1.bf16.msra.mxu0 %v2576
        %2905 = vmatprep.subr.bf16.mxu0 %v2581
        %2906 = vmatpush1.bf16.msra.mxu0 %v2580
        %2907 = vmatprep.subr.bf16.mxu0 %v2585
        %2908 = vmatpush1.bf16.msra.mxu0 %v2584
        %2909 = vmatprep.subr.bf16.mxu0 %v2589
        %2910 = vmatpush1.bf16.msra.mxu0 %v2588
        %2911 = vmatprep.subr.bf16.mxu0 %v2593
        %2912 = vmatpush1.bf16.msra.mxu0 %v2592
        %2913 = vmatprep.subr.bf16.mxu0 %v2597
        %2914 = vmatpush1.bf16.msra.mxu0 %v2596
        %2915 = vmatprep.subr.bf16.mxu0 %v2601
        %2916 = vmatpush1.bf16.msra.mxu0 %v2600
        %2917 = vmatprep.subr.bf16.mxu0 %v2605
        %2918 = vmatpush1.bf16.msra.mxu0 %v2604
        %2919 = vmatprep.mubr.bf16.mxu0 %v2073
        %2920 = vmatmul.mubr.bf16.gmra.mrb[0].mxu0 %v2061
        %v2921 = vpop.f32.mrb[0].mxu0
        %v2922 = vadd.f32 %v2871, %v2921
        %v2923 = vpop.f32.mrb[0].mxu0
        %v2924 = vadd.f32 %v2873, %v2923
        %v2925 = vpop.f32.mrb[0].mxu0
        %v2926 = vadd.f32 %v2875, %v2925
        %v2927 = vpop.f32.mrb[0].mxu0
        %v2928 = vadd.f32 %v2877, %v2927
        %2929 = vmatprep.mubr.bf16.mxu0 %v2085
        %2930 = vmatmul.mubr.bf16.gmra.mrb[0].mxu0 %v2082
        %v2931 = vpop.f32.mrb[0].mxu0
        %v2932 = vadd.f32 %v2881, %v2931
        %v2933 = vpop.f32.mrb[0].mxu0
        %v2934 = vadd.f32 %v2883, %v2933
        %v2935 = vpop.f32.mrb[0].mxu0
        %v2936 = vpop.f32.mrb[0].mxu0
        %2937 = vdwg.mxu0
        %v2940 = vunpack.c.l.b16 %v1739
        %v2941 = vunpack.c.h.b16 %v1739
        %v2942 = vunpack.c.l.b16 %v1740
        %v2943 = vunpack.c.h.b16 %v1740
        %v2944 = vpack.c.b16 %v2940, %v2940
        %v2945 = vpack.c.b16 %v2941, %v2941
        %v2946 = vpack.c.b16 %v2942, %v2942
        %v2947 = vpack.c.b16 %v2943, %v2943
        %v3084 = vunpack.c.l.b16 %v1741
        %v3085 = vunpack.c.h.b16 %v1741
        %v3086 = vunpack.c.l.b16 %v1742
        %v3087 = vunpack.c.h.b16 %v1742
        %v3088 = vunpack.c.l.b16 %v1743
        %v3089 = vunpack.c.h.b16 %v1743
        %v3090 = vunpack.c.l.b16 %v1744
        %v3091 = vunpack.c.h.b16 %v1744
        %v3092 = vunpack.c.l.b16 %v1745
        %v3093 = vunpack.c.h.b16 %v1745
        %v3094 = vunpack.c.l.b16 %v1746
        %v3095 = vunpack.c.h.b16 %v1746
        %v3096 = vunpack.c.l.b16 %v1747
        %v3097 = vunpack.c.h.b16 %v1747
        %v3098 = vunpack.c.l.b16 %v1748
        %v3099 = vunpack.c.h.b16 %v1748
        %v3100 = vunpack.c.l.b16 %v1749
        %v3101 = vunpack.c.h.b16 %v1749
        %v3102 = vunpack.c.l.b16 %v1750
        %v3103 = vunpack.c.h.b16 %v1750
        %v3104 = vunpack.c.l.b16 %v1751
        %v3105 = vunpack.c.h.b16 %v1751
        %v3106 = vunpack.c.l.b16 %v1752
        %v3107 = vunpack.c.h.b16 %v1752
        %v3108 = vunpack.c.l.b16 %v1753
        %v3109 = vunpack.c.h.b16 %v1753
        %v3110 = vunpack.c.l.b16 %v1754
        %v3111 = vunpack.c.h.b16 %v1754
        %v3112 = vunpack.c.l.b16 %v1755
        %v3113 = vunpack.c.h.b16 %v1755
        %v3114 = vunpack.c.l.b16 %v1756
        %v3115 = vunpack.c.h.b16 %v1756
        %v3116 = vunpack.c.l.b16 %v1757
        %v3117 = vunpack.c.h.b16 %v1757
        %v3118 = vunpack.c.l.b16 %v1758
        %v3119 = vunpack.c.h.b16 %v1758
        %v3120 = vunpack.c.l.b16 %v1759
        %v3121 = vunpack.c.h.b16 %v1759
        %v3122 = vunpack.c.l.b16 %v1760
        %v3123 = vunpack.c.h.b16 %v1760
        %v3124 = vunpack.c.l.b16 %v1761
        %v3125 = vunpack.c.h.b16 %v1761
        %v3126 = vunpack.c.l.b16 %v1762
        %v3127 = vunpack.c.h.b16 %v1762
        %v3128 = vunpack.c.l.b16 %v1763
        %v3129 = vunpack.c.h.b16 %v1763
        %v3130 = vunpack.c.l.b16 %v1764
        %v3131 = vunpack.c.h.b16 %v1764
        %v3132 = vunpack.c.l.b16 %v1765
        %v3133 = vunpack.c.h.b16 %v1765
        %v3134 = vunpack.c.l.b16 %v1766
        %v3135 = vunpack.c.h.b16 %v1766
        %v3136 = vunpack.c.l.b16 %v1767
        %v3137 = vunpack.c.h.b16 %v1767
        %v3138 = vunpack.c.l.b16 %v1768
        %v3139 = vunpack.c.h.b16 %v1768
        %v3140 = vunpack.c.l.b16 %v1769
        %v3141 = vunpack.c.h.b16 %v1769
        %v3142 = vunpack.c.l.b16 %v1770
        %v3143 = vunpack.c.h.b16 %v1770
        %v3144 = vunpack.c.l.b16 %v1771
        %v3145 = vunpack.c.h.b16 %v1771
        %v3146 = vunpack.c.l.b16 %v1772
        %v3147 = vunpack.c.h.b16 %v1772
        %v3148 = vunpack.c.l.b16 %v1773
        %v3149 = vunpack.c.h.b16 %v1773
        %v3150 = vunpack.c.l.b16 %v1774
        %v3151 = vunpack.c.h.b16 %v1774
        %v3152 = vunpack.c.l.b16 %v1775
        %v3153 = vunpack.c.h.b16 %v1775
        %v3154 = vunpack.c.l.b16 %v1776
        %v3155 = vunpack.c.h.b16 %v1776
        %v3156 = vunpack.c.l.b16 %v1777
        %v3157 = vunpack.c.h.b16 %v1777
        %v3158 = vunpack.c.l.b16 %v1778
        %v3159 = vunpack.c.h.b16 %v1778
        %v3160 = vunpack.c.l.b16 %v1779
        %v3161 = vunpack.c.h.b16 %v1779
        %v3162 = vunpack.c.l.b16 %v1780
        %v3163 = vunpack.c.h.b16 %v1780
        %v3164 = vunpack.c.l.b16 %v1781
        %v3165 = vunpack.c.h.b16 %v1781
        %v3166 = vunpack.c.l.b16 %v1782
        %v3167 = vunpack.c.h.b16 %v1782
        %v3168 = vunpack.c.l.b16 %v1783
        %v3169 = vunpack.c.h.b16 %v1783
        %v3170 = vunpack.c.l.b16 %v1784
        %v3171 = vunpack.c.h.b16 %v1784
        %v3172 = vunpack.c.l.b16 %v1785
        %v3173 = vunpack.c.h.b16 %v1785
        %v3174 = vunpack.c.l.b16 %v1786
        %v3175 = vunpack.c.h.b16 %v1786
        %v3176 = vunpack.c.l.b16 %v1787
        %v3177 = vunpack.c.h.b16 %v1787
        %v3178 = vunpack.c.l.b16 %v1788
        %v3179 = vunpack.c.h.b16 %v1788
        %v3180 = vunpack.c.l.b16 %v1789
        %v3181 = vunpack.c.h.b16 %v1789
        %v3182 = vunpack.c.l.b16 %v1790
        %v3183 = vunpack.c.h.b16 %v1790
        %v3184 = vunpack.c.l.b16 %v1791
        %v3185 = vunpack.c.h.b16 %v1791
        %v3186 = vunpack.c.l.b16 %v1792
        %v3187 = vunpack.c.h.b16 %v1792
        %v3188 = vunpack.c.l.b16 %v1793
        %v3189 = vunpack.c.h.b16 %v1793
        %v3190 = vunpack.c.l.b16 %v1794
        %v3191 = vunpack.c.h.b16 %v1794
        %v3192 = vunpack.c.l.b16 %v1795
        %v3193 = vunpack.c.h.b16 %v1795
        %v3194 = vunpack.c.l.b16 %v1796
        %v3195 = vunpack.c.h.b16 %v1796
        %v3196 = vunpack.c.l.b16 %v1797
        %v3197 = vunpack.c.h.b16 %v1797
        %v3198 = vunpack.c.l.b16 %v1798
        %v3199 = vunpack.c.h.b16 %v1798
        %v3200 = vunpack.c.l.b16 %v1799
        %v3201 = vunpack.c.h.b16 %v1799
        %v3202 = vunpack.c.l.b16 %v1800
        %v3203 = vunpack.c.h.b16 %v1800
        %v3204 = vunpack.c.l.b16 %v1801
        %v3205 = vunpack.c.h.b16 %v1801
        %v3206 = vunpack.c.l.b16 %v1802
        %v3207 = vunpack.c.h.b16 %v1802
        %v3208 = vunpack.c.l.b16 %v1803
        %v3209 = vunpack.c.h.b16 %v1803
        %v3210 = vunpack.c.l.b16 %v1804
        %v3211 = vunpack.c.h.b16 %v1804
        %v3212 = vunpack.c.l.b16 %v1805
        %v3213 = vunpack.c.h.b16 %v1805
        %v3214 = vunpack.c.l.b16 %v1806
        %v3215 = vunpack.c.h.b16 %v1806
        %v3216 = vunpack.c.l.b16 %v1807
        %v3217 = vunpack.c.h.b16 %v1807
        %v3218 = vunpack.c.l.b16 %v1808
        %v3219 = vunpack.c.h.b16 %v1808
        %v3220 = vunpack.c.l.b16 %v1809
        %v3221 = vunpack.c.h.b16 %v1809
        %v3222 = vunpack.c.l.b16 %v1810
        %v3223 = vunpack.c.h.b16 %v1810
        %v3224 = vunpack.c.l.b16 %v1811
        %v3225 = vunpack.c.h.b16 %v1811
        %v3226 = vunpack.c.l.b16 %v1812
        %v3227 = vunpack.c.h.b16 %v1812
        %v3228 = vunpack.c.l.b16 %v1813
        %v3229 = vunpack.c.h.b16 %v1813
        %v3230 = vunpack.c.l.b16 %v1814
        %v3231 = vunpack.c.h.b16 %v1814
        %v3232 = vunpack.c.l.b16 %v1815
        %v3233 = vunpack.c.h.b16 %v1815
        %v3234 = vunpack.c.l.b16 %v1816
        %v3235 = vunpack.c.h.b16 %v1816
        %v3236 = vunpack.c.l.b16 %v1817
        %v3237 = vunpack.c.h.b16 %v1817
        %v3238 = vunpack.c.l.b16 %v1818
        %v3239 = vunpack.c.h.b16 %v1818
        %v3240 = vunpack.c.l.b16 %v1819
        %v3241 = vunpack.c.h.b16 %v1819
        %v3242 = vunpack.c.l.b16 %v1820
        %v3243 = vunpack.c.h.b16 %v1820
        %v3244 = vunpack.c.l.b16 %v1821
        %v3245 = vunpack.c.h.b16 %v1821
        %v3246 = vunpack.c.l.b16 %v1822
        %v3247 = vunpack.c.h.b16 %v1822
        %v3248 = vunpack.c.l.b16 %v1823
        %v3249 = vunpack.c.h.b16 %v1823
        %v3250 = vunpack.c.l.b16 %v1824
        %v3251 = vunpack.c.h.b16 %v1824
        %v3252 = vunpack.c.l.b16 %v1825
        %v3253 = vunpack.c.h.b16 %v1825
        %v3254 = vunpack.c.l.b16 %v1826
        %v3255 = vunpack.c.h.b16 %v1826
        %v3256 = vunpack.c.l.b16 %v1827
        %v3257 = vunpack.c.h.b16 %v1827
        %v3258 = vunpack.c.l.b16 %v1828
        %v3259 = vunpack.c.h.b16 %v1828
        %v3260 = vunpack.c.l.b16 %v1829
        %v3261 = vunpack.c.h.b16 %v1829
        %v3262 = vunpack.c.l.b16 %v1830
        %v3263 = vunpack.c.h.b16 %v1830
        %v3264 = vunpack.c.l.b16 %v1831
        %v3265 = vunpack.c.h.b16 %v1831
        %v3266 = vunpack.c.l.b16 %v1832
        %v3267 = vunpack.c.h.b16 %v1832
        %v3268 = vunpack.c.l.b16 %v1833
        %v3269 = vunpack.c.h.b16 %v1833
        %v3270 = vunpack.c.l.b16 %v1834
        %v3271 = vunpack.c.h.b16 %v1834
        %v3272 = vunpack.c.l.b16 %v1835
        %v3273 = vunpack.c.h.b16 %v1835
        %v3274 = vunpack.c.l.b16 %v1836
        %v3275 = vunpack.c.h.b16 %v1836
        %v3276 = vunpack.c.l.b16 %v1837
        %v3277 = vunpack.c.h.b16 %v1837
        %v3278 = vunpack.c.l.b16 %v1838
        %v3279 = vunpack.c.h.b16 %v1838
        %v3280 = vunpack.c.l.b16 %v1839
        %v3281 = vunpack.c.h.b16 %v1839
        %v3282 = vunpack.c.l.b16 %v1840
        %v3283 = vunpack.c.h.b16 %v1840
        %v3284 = vunpack.c.l.b16 %v1841
        %v3285 = vunpack.c.h.b16 %v1841
        %v3286 = vunpack.c.l.b16 %v1842
        %v3287 = vunpack.c.h.b16 %v1842
        %v3288 = vunpack.c.l.b16 %v1843
        %v3289 = vunpack.c.h.b16 %v1843
        %v3290 = vunpack.c.l.b16 %v1844
        %v3291 = vunpack.c.h.b16 %v1844
        %v3292 = vunpack.c.l.b16 %v1845
        %v3293 = vunpack.c.h.b16 %v1845
        %v3294 = vunpack.c.l.b16 %v1846
        %v3295 = vunpack.c.h.b16 %v1846
        %v3296 = vunpack.c.l.b16 %v1847
        %v3297 = vunpack.c.h.b16 %v1847
        %v3298 = vunpack.c.l.b16 %v1848
        %v3299 = vunpack.c.h.b16 %v1848
        %v3300 = vunpack.c.l.b16 %v1849
        %v3301 = vunpack.c.h.b16 %v1849
        %v3302 = vunpack.c.l.b16 %v1850
        %v3303 = vunpack.c.h.b16 %v1850
        %v3304 = vunpack.c.l.b16 %v1851
        %v3305 = vunpack.c.h.b16 %v1851
        %v3306 = vunpack.c.l.b16 %v1852
        %v3307 = vunpack.c.h.b16 %v1852
        %v3308 = vunpack.c.l.b16 %v1853
        %v3309 = vunpack.c.h.b16 %v1853
        %v3310 = vunpack.c.l.b16 %v1854
        %v3311 = vunpack.c.h.b16 %v1854
        %v3312 = vunpack.c.l.b16 %v1855
        %v3313 = vunpack.c.h.b16 %v1855
        %v3314 = vunpack.c.l.b16 %v1856
        %v3315 = vunpack.c.h.b16 %v1856
        %v3316 = vunpack.c.l.b16 %v1857
        %v3317 = vunpack.c.h.b16 %v1857
        %v3318 = vunpack.c.l.b16 %v1858
        %v3319 = vunpack.c.h.b16 %v1858
        %v3320 = vunpack.c.l.b16 %v1859
        %v3321 = vunpack.c.h.b16 %v1859
        %v3322 = vunpack.c.l.b16 %v1860
        %v3323 = vunpack.c.h.b16 %v1860
        %v3324 = vunpack.c.l.b16 %v1861
        %v3325 = vunpack.c.h.b16 %v1861
        %v3326 = vunpack.c.l.b16 %v1862
        %v3327 = vunpack.c.h.b16 %v1862
        %v3328 = vunpack.c.l.b16 %v1863
        %v3329 = vunpack.c.h.b16 %v1863
        %v3330 = vunpack.c.l.b16 %v1864
        %v3331 = vunpack.c.h.b16 %v1864
        %v3332 = vunpack.c.l.b16 %v1865
        %v3333 = vunpack.c.h.b16 %v1865
        %v3334 = vunpack.c.l.b16 %v1866
        %v3335 = vunpack.c.h.b16 %v1866
        %v3336 = vunpack.c.l.b16 %v1867
        %v3337 = vunpack.c.h.b16 %v1867
        %v3338 = vunpack.c.l.b16 %v1868
        %v3339 = vunpack.c.h.b16 %v1868
        %v3340 = vpack.c.b16 %v3088, %v3084
        %v3341 = vpack.c.b16 %v3089, %v3085
        %v3342 = vpack.c.b16 %v3090, %v3086
        %v3343 = vpack.c.b16 %v3091, %v3087
        %v3344 = vpack.c.b16 %v3096, %v3092
        %v3345 = vpack.c.b16 %v3097, %v3093
        %v3346 = vpack.c.b16 %v3098, %v3094
        %v3347 = vpack.c.b16 %v3099, %v3095
        %v3348 = vpack.c.b16 %v3104, %v3100
        %v3349 = vpack.c.b16 %v3105, %v3101
        %v3350 = vpack.c.b16 %v3106, %v3102
        %v3351 = vpack.c.b16 %v3107, %v3103
        %v3352 = vpack.c.b16 %v3112, %v3108
        %v3353 = vpack.c.b16 %v3113, %v3109
        %v3354 = vpack.c.b16 %v3114, %v3110
        %v3355 = vpack.c.b16 %v3115, %v3111
        %v3356 = vpack.c.b16 %v3120, %v3116
        %v3357 = vpack.c.b16 %v3121, %v3117
        %v3358 = vpack.c.b16 %v3122, %v3118
        %v3359 = vpack.c.b16 %v3123, %v3119
        %v3360 = vpack.c.b16 %v3128, %v3124
        %v3361 = vpack.c.b16 %v3129, %v3125
        %v3362 = vpack.c.b16 %v3130, %v3126
        %v3363 = vpack.c.b16 %v3131, %v3127
        %v3364 = vpack.c.b16 %v3136, %v3132
        %v3365 = vpack.c.b16 %v3137, %v3133
        %v3366 = vpack.c.b16 %v3138, %v3134
        %v3367 = vpack.c.b16 %v3139, %v3135
        %v3368 = vpack.c.b16 %v3144, %v3140
        %v3369 = vpack.c.b16 %v3145, %v3141
        %v3370 = vpack.c.b16 %v3146, %v3142
        %v3371 = vpack.c.b16 %v3147, %v3143
        %v3372 = vpack.c.b16 %v3152, %v3148
        %v3373 = vpack.c.b16 %v3153, %v3149
        %v3374 = vpack.c.b16 %v3154, %v3150
        %v3375 = vpack.c.b16 %v3155, %v3151
        %v3376 = vpack.c.b16 %v3160, %v3156
        %v3377 = vpack.c.b16 %v3161, %v3157
        %v3378 = vpack.c.b16 %v3162, %v3158
        %v3379 = vpack.c.b16 %v3163, %v3159
        %v3380 = vpack.c.b16 %v3168, %v3164
        %v3381 = vpack.c.b16 %v3169, %v3165
        %v3382 = vpack.c.b16 %v3170, %v3166
        %v3383 = vpack.c.b16 %v3171, %v3167
        %v3384 = vpack.c.b16 %v3176, %v3172
        %v3385 = vpack.c.b16 %v3177, %v3173
        %v3386 = vpack.c.b16 %v3178, %v3174
        %v3387 = vpack.c.b16 %v3179, %v3175
        %v3388 = vpack.c.b16 %v3184, %v3180
        %v3389 = vpack.c.b16 %v3185, %v3181
        %v3390 = vpack.c.b16 %v3186, %v3182
        %v3391 = vpack.c.b16 %v3187, %v3183
        %v3392 = vpack.c.b16 %v3192, %v3188
        %v3393 = vpack.c.b16 %v3193, %v3189
        %v3394 = vpack.c.b16 %v3194, %v3190
        %v3395 = vpack.c.b16 %v3195, %v3191
        %v3396 = vpack.c.b16 %v3200, %v3196
        %v3397 = vpack.c.b16 %v3201, %v3197
        %v3398 = vpack.c.b16 %v3202, %v3198
        %v3399 = vpack.c.b16 %v3203, %v3199
        %v3400 = vpack.c.b16 %v3208, %v3204
        %v3401 = vpack.c.b16 %v3209, %v3205
        %v3402 = vpack.c.b16 %v3210, %v3206
        %v3403 = vpack.c.b16 %v3211, %v3207
        %v3404 = vpack.c.b16 %v3216, %v3212
        %v3405 = vpack.c.b16 %v3217, %v3213
        %v3406 = vpack.c.b16 %v3218, %v3214
        %v3407 = vpack.c.b16 %v3219, %v3215
        %v3408 = vpack.c.b16 %v3224, %v3220
        %v3409 = vpack.c.b16 %v3225, %v3221
        %v3410 = vpack.c.b16 %v3226, %v3222
        %v3411 = vpack.c.b16 %v3227, %v3223
        %v3412 = vpack.c.b16 %v3232, %v3228
        %v3413 = vpack.c.b16 %v3233, %v3229
        %v3414 = vpack.c.b16 %v3234, %v3230
        %v3415 = vpack.c.b16 %v3235, %v3231
        %v3416 = vpack.c.b16 %v3240, %v3236
        %v3417 = vpack.c.b16 %v3241, %v3237
        %v3418 = vpack.c.b16 %v3242, %v3238
        %v3419 = vpack.c.b16 %v3243, %v3239
        %v3420 = vpack.c.b16 %v3248, %v3244
        %v3421 = vpack.c.b16 %v3249, %v3245
        %v3422 = vpack.c.b16 %v3250, %v3246
        %v3423 = vpack.c.b16 %v3251, %v3247
        %v3424 = vpack.c.b16 %v3256, %v3252
        %v3425 = vpack.c.b16 %v3257, %v3253
        %v3426 = vpack.c.b16 %v3258, %v3254
        %v3427 = vpack.c.b16 %v3259, %v3255
        %v3428 = vpack.c.b16 %v3264, %v3260
        %v3429 = vpack.c.b16 %v3265, %v3261
        %v3430 = vpack.c.b16 %v3266, %v3262
        %v3431 = vpack.c.b16 %v3267, %v3263
        %v3432 = vpack.c.b16 %v3272, %v3268
        %v3433 = vpack.c.b16 %v3273, %v3269
        %v3434 = vpack.c.b16 %v3274, %v3270
        %v3435 = vpack.c.b16 %v3275, %v3271
        %v3436 = vpack.c.b16 %v3280, %v3276
        %v3437 = vpack.c.b16 %v3281, %v3277
        %v3438 = vpack.c.b16 %v3282, %v3278
        %v3439 = vpack.c.b16 %v3283, %v3279
        %v3440 = vpack.c.b16 %v3288, %v3284
        %v3441 = vpack.c.b16 %v3289, %v3285
        %v3442 = vpack.c.b16 %v3290, %v3286
        %v3443 = vpack.c.b16 %v3291, %v3287
        %v3444 = vpack.c.b16 %v3296, %v3292
        %v3445 = vpack.c.b16 %v3297, %v3293
        %v3446 = vpack.c.b16 %v3298, %v3294
        %v3447 = vpack.c.b16 %v3299, %v3295
        %v3448 = vpack.c.b16 %v3304, %v3300
        %v3449 = vpack.c.b16 %v3305, %v3301
        %v3450 = vpack.c.b16 %v3306, %v3302
        %v3451 = vpack.c.b16 %v3307, %v3303
        %v3452 = vpack.c.b16 %v3312, %v3308
        %v3453 = vpack.c.b16 %v3313, %v3309
        %v3454 = vpack.c.b16 %v3314, %v3310
        %v3455 = vpack.c.b16 %v3315, %v3311
        %v3456 = vpack.c.b16 %v3320, %v3316
        %v3457 = vpack.c.b16 %v3321, %v3317
        %v3458 = vpack.c.b16 %v3322, %v3318
        %v3459 = vpack.c.b16 %v3323, %v3319
        %v3460 = vpack.c.b16 %v3328, %v3324
        %v3461 = vpack.c.b16 %v3329, %v3325
        %v3462 = vpack.c.b16 %v3330, %v3326
        %v3463 = vpack.c.b16 %v3331, %v3327
        %v3464 = vpack.c.b16 %v3336, %v3332
        %v3465 = vpack.c.b16 %v3337, %v3333
        %v3466 = vpack.c.b16 %v3338, %v3334
        %v3467 = vpack.c.b16 %v3339, %v3335
        %3596 = vmatprep.subr.bf16.mxu0 %v3341
        %3597 = vmatpush1.bf16.msra.mxu0 %v3340
        %3598 = vmatprep.subr.bf16.mxu0 %v3345
        %3599 = vmatpush1.bf16.msra.mxu0 %v3344
        %3600 = vmatprep.subr.bf16.mxu0 %v3349
        %3601 = vmatpush1.bf16.msra.mxu0 %v3348
        %3602 = vmatprep.subr.bf16.mxu0 %v3353
        %3603 = vmatpush1.bf16.msra.mxu0 %v3352
        %3604 = vmatprep.subr.bf16.mxu0 %v3357
        %3605 = vmatpush1.bf16.msra.mxu0 %v3356
        %3606 = vmatprep.subr.bf16.mxu0 %v3361
        %3607 = vmatpush1.bf16.msra.mxu0 %v3360
        %3608 = vmatprep.subr.bf16.mxu0 %v3365
        %3609 = vmatpush1.bf16.msra.mxu0 %v3364
        %3610 = vmatprep.subr.bf16.mxu0 %v3369
        %3611 = vmatpush1.bf16.msra.mxu0 %v3368
        %3612 = vmatprep.subr.bf16.mxu0 %v3373
        %3613 = vmatpush1.bf16.msra.mxu0 %v3372
        %3614 = vmatprep.subr.bf16.mxu0 %v3377
        %3615 = vmatpush1.bf16.msra.mxu0 %v3376
        %3616 = vmatprep.subr.bf16.mxu0 %v3381
        %3617 = vmatpush1.bf16.msra.mxu0 %v3380
        %3618 = vmatprep.subr.bf16.mxu0 %v3385
        %3619 = vmatpush1.bf16.msra.mxu0 %v3384
        %3620 = vmatprep.subr.bf16.mxu0 %v3389
        %3621 = vmatpush1.bf16.msra.mxu0 %v3388
        %3622 = vmatprep.subr.bf16.mxu0 %v3393
        %3623 = vmatpush1.bf16.msra.mxu0 %v3392
        %3624 = vmatprep.subr.bf16.mxu0 %v3397
        %3625 = vmatpush1.bf16.msra.mxu0 %v3396
        %3626 = vmatprep.subr.bf16.mxu0 %v3401
        %3627 = vmatpush1.bf16.msra.mxu0 %v3400
        %3628 = vmatprep.mubr.bf16.mxu0 %v2018
        %3629 = vmatmul.mubr.bf16.gmra.mrb[0].mxu0 %v2017
        %v3630 = vpop.f32.mrb[0].mxu0
        %v3631 = vadd.f32 %v2820, %v3630
        %v3632 = vpop.f32.mrb[0].mxu0
        %v3633 = vadd.f32 %v2822, %v3632
        %v3634 = vpop.f32.mrb[0].mxu0
        %v3635 = vadd.f32 %v2824, %v3634
        %v3636 = vpop.f32.mrb[0].mxu0
        %v3637 = vadd.f32 %v2826, %v3636
        %3638 = vmatprep.mubr.bf16.mxu0 %v2945
        %3639 = vmatmul.mubr.bf16.gmra.mrb[0].mxu0 %v2944
        %v3640 = vpop.f32.mrb[0].mxu0
        %v3641 = vadd.f32 %v2830, %v3640
        %v3642 = vpop.f32.mrb[0].mxu0
        %v3643 = vadd.f32 %v2832, %v3642
        %v3644 = vpop.f32.mrb[0].mxu0
        %v3645 = vpop.f32.mrb[0].mxu0
        %3646 = vdwg.mxu0
        %3647 = vmatprep.subr.bf16.mxu0 %v3405
        %3648 = vmatpush1.bf16.msra.mxu0 %v3404
        %3649 = vmatprep.subr.bf16.mxu0 %v3409
        %3650 = vmatpush1.bf16.msra.mxu0 %v3408
        %3651 = vmatprep.subr.bf16.mxu0 %v3413
        %3652 = vmatpush1.bf16.msra.mxu0 %v3412
        %3653 = vmatprep.subr.bf16.mxu0 %v3417
        %3654 = vmatpush1.bf16.msra.mxu0 %v3416
        %3655 = vmatprep.subr.bf16.mxu0 %v3421
        %3656 = vmatpush1.bf16.msra.mxu0 %v3420
        %3657 = vmatprep.subr.bf16.mxu0 %v3425
        %3658 = vmatpush1.bf16.msra.mxu0 %v3424
        %3659 = vmatprep.subr.bf16.mxu0 %v3429
        %3660 = vmatpush1.bf16.msra.mxu0 %v3428
        %3661 = vmatprep.subr.bf16.mxu0 %v3433
        %3662 = vmatpush1.bf16.msra.mxu0 %v3432
        %3663 = vmatprep.subr.bf16.mxu0 %v3437
        %3664 = vmatpush1.bf16.msra.mxu0 %v3436
        %3665 = vmatprep.subr.bf16.mxu0 %v3441
        %3666 = vmatpush1.bf16.msra.mxu0 %v3440
        %3667 = vmatprep.subr.bf16.mxu0 %v3445
        %3668 = vmatpush1.bf16.msra.mxu0 %v3444
        %3669 = vmatprep.subr.bf16.mxu0 %v3449
        %3670 = vmatpush1.bf16.msra.mxu0 %v3448
        %3671 = vmatprep.subr.bf16.mxu0 %v3453
        %3672 = vmatpush1.bf16.msra.mxu0 %v3452
        %3673 = vmatprep.subr.bf16.mxu0 %v3457
        %3674 = vmatpush1.bf16.msra.mxu0 %v3456
        %3675 = vmatprep.subr.bf16.mxu0 %v3461
        %3676 = vmatpush1.bf16.msra.mxu0 %v3460
        %3677 = vmatprep.subr.bf16.mxu0 %v3465
        %3678 = vmatpush1.bf16.msra.mxu0 %v3464
        %3679 = vmatprep.mubr.bf16.mxu0 %v2020
        %3680 = vmatmul.mubr.bf16.gmra.mrb[0].mxu0 %v2019
        %v3681 = vpop.f32.mrb[0].mxu0
        %v3682 = vadd.f32 %v3631, %v3681
        %v3683 = vpop.f32.mrb[0].mxu0
        %v3684 = vadd.f32 %v3633, %v3683
        %v3685 = vpop.f32.mrb[0].mxu0
        %v3686 = vadd.f32 %v3635, %v3685
        %v3687 = vpop.f32.mrb[0].mxu0
        %v3688 = vadd.f32 %v3637, %v3687
        %3689 = vmatprep.mubr.bf16.mxu0 %v2947
        %3690 = vmatmul.mubr.bf16.gmra.mrb[0].mxu0 %v2946
        %v3691 = vpop.f32.mrb[0].mxu0
        %v3692 = vadd.f32 %v3641, %v3691
        %v3693 = vpop.f32.mrb[0].mxu0
        %v3694 = vadd.f32 %v3643, %v3693
        %v3695 = vpop.f32.mrb[0].mxu0
        %v3696 = vpop.f32.mrb[0].mxu0
        %3697 = vdwg.mxu0
        %3698 = vmatprep.subr.bf16.mxu0 %v3343
        %3699 = vmatpush1.bf16.msra.mxu0 %v3342
        %3700 = vmatprep.subr.bf16.mxu0 %v3347
        %3701 = vmatpush1.bf16.msra.mxu0 %v3346
        %3702 = vmatprep.subr.bf16.mxu0 %v3351
        %3703 = vmatpush1.bf16.msra.mxu0 %v3350
        %3704 = vmatprep.subr.bf16.mxu0 %v3355
        %3705 = vmatpush1.bf16.msra.mxu0 %v3354
        %3706 = vmatprep.subr.bf16.mxu0 %v3359
        %3707 = vmatpush1.bf16.msra.mxu0 %v3358
        %3708 = vmatprep.subr.bf16.mxu0 %v3363
        %3709 = vmatpush1.bf16.msra.mxu0 %v3362
        %3710 = vmatprep.subr.bf16.mxu0 %v3367
        %3711 = vmatpush1.bf16.msra.mxu0 %v3366
        %3712 = vmatprep.subr.bf16.mxu0 %v3371
        %3713 = vmatpush1.bf16.msra.mxu0 %v3370
        %3714 = vmatprep.subr.bf16.mxu0 %v3375
        %3715 = vmatpush1.bf16.msra.mxu0 %v3374
        %3716 = vmatprep.subr.bf16.mxu0 %v3379
        %3717 = vmatpush1.bf16.msra.mxu0 %v3378
        %3718 = vmatprep.subr.bf16.mxu0 %v3383
        %3719 = vmatpush1.bf16.msra.mxu0 %v3382
        %3720 = vmatprep.subr.bf16.mxu0 %v3387
        %3721 = vmatpush1.bf16.msra.mxu0 %v3386
        %3722 = vmatprep.subr.bf16.mxu0 %v3391
        %3723 = vmatpush1.bf16.msra.mxu0 %v3390
        %3724 = vmatprep.subr.bf16.mxu0 %v3395
        %3725 = vmatpush1.bf16.msra.mxu0 %v3394
        %3726 = vmatprep.subr.bf16.mxu0 %v3399
        %3727 = vmatpush1.bf16.msra.mxu0 %v3398
        %3728 = vmatprep.subr.bf16.mxu0 %v3403
        %3729 = vmatpush1.bf16.msra.mxu0 %v3402
        %3730 = vmatprep.mubr.bf16.mxu0 %v2018
        %3731 = vmatmul.mubr.bf16.gmra.mrb[0].mxu0 %v2017
        %v3732 = vpop.f32.mrb[0].mxu0
        %v3733 = vadd.f32 %v2922, %v3732
        %v3734 = vpop.f32.mrb[0].mxu0
        %v3735 = vadd.f32 %v2924, %v3734
        %v3736 = vpop.f32.mrb[0].mxu0
        %v3737 = vadd.f32 %v2926, %v3736
        %v3738 = vpop.f32.mrb[0].mxu0
        %v3739 = vadd.f32 %v2928, %v3738
        %3740 = vmatprep.mubr.bf16.mxu0 %v2945
        %3741 = vmatmul.mubr.bf16.gmra.mrb[0].mxu0 %v2944
        %v3742 = vpop.f32.mrb[0].mxu0
        %v3743 = vadd.f32 %v2932, %v3742
        %v3744 = vpop.f32.mrb[0].mxu0
        %v3745 = vadd.f32 %v2934, %v3744
        %v3746 = vpop.f32.mrb[0].mxu0
        %v3747 = vpop.f32.mrb[0].mxu0
        %3748 = vdwg.mxu0
        %3749 = vmatprep.subr.bf16.mxu0 %v3407
        %3750 = vmatpush1.bf16.msra.mxu0 %v3406
        %3751 = vmatprep.subr.bf16.mxu0 %v3411
        %3752 = vmatpush1.bf16.msra.mxu0 %v3410
        %3753 = vmatprep.subr.bf16.mxu0 %v3415
        %3754 = vmatpush1.bf16.msra.mxu0 %v3414
        %3755 = vmatprep.subr.bf16.mxu0 %v3419
        %3756 = vmatpush1.bf16.msra.mxu0 %v3418
        %3757 = vmatprep.subr.bf16.mxu0 %v3423
        %3758 = vmatpush1.bf16.msra.mxu0 %v3422
        %3759 = vmatprep.subr.bf16.mxu0 %v3427
        %3760 = vmatpush1.bf16.msra.mxu0 %v3426
        %3761 = vmatprep.subr.bf16.mxu0 %v3431
        %3762 = vmatpush1.bf16.msra.mxu0 %v3430
        %3763 = vmatprep.subr.bf16.mxu0 %v3435
        %3764 = vmatpush1.bf16.msra.mxu0 %v3434
        %3765 = vmatprep.subr.bf16.mxu0 %v3439
        %3766 = vmatpush1.bf16.msra.mxu0 %v3438
        %3767 = vmatprep.subr.bf16.mxu0 %v3443
        %3768 = vmatpush1.bf16.msra.mxu0 %v3442
        %3769 = vmatprep.subr.bf16.mxu0 %v3447
        %3770 = vmatpush1.bf16.msra.mxu0 %v3446
        %3771 = vmatprep.subr.bf16.mxu0 %v3451
        %3772 = vmatpush1.bf16.msra.mxu0 %v3450
        %3773 = vmatprep.subr.bf16.mxu0 %v3455
        %3774 = vmatpush1.bf16.msra.mxu0 %v3454
        %3775 = vmatprep.subr.bf16.mxu0 %v3459
        %3776 = vmatpush1.bf16.msra.mxu0 %v3458
        %3777 = vmatprep.subr.bf16.mxu0 %v3463
        %3778 = vmatpush1.bf16.msra.mxu0 %v3462
        %3779 = vmatprep.subr.bf16.mxu0 %v3467
        %3780 = vmatpush1.bf16.msra.mxu0 %v3466
        %3781 = vmatprep.mubr.bf16.mxu0 %v2020
        %3782 = vmatmul.mubr.bf16.gmra.mrb[0].mxu0 %v2019
        %v3783 = vpop.f32.mrb[0].mxu0
        %v3784 = vadd.f32 %v3733, %v3783
        %v3785 = vpop.f32.mrb[0].mxu0
        %v3786 = vadd.f32 %v3735, %v3785
        %v3787 = vpop.f32.mrb[0].mxu0
        %v3788 = vadd.f32 %v3737, %v3787
        %v3789 = vpop.f32.mrb[0].mxu0
        %v3790 = vadd.f32 %v3739, %v3789
        %3791 = vmatprep.mubr.bf16.mxu0 %v2947
        %3792 = vmatmul.mubr.bf16.gmra.mrb[0].mxu0 %v2946
        %v3793 = vpop.f32.mrb[0].mxu0
        %v3794 = vadd.f32 %v3743, %v3793
        %v3795 = vpop.f32.mrb[0].mxu0
        %v3796 = vadd.f32 %v3745, %v3795
        %v3797 = vpop.f32.mrb[0].mxu0
        %v3798 = vpop.f32.mrb[0].mxu0
        %3799 = vdwg.mxu0
        %v3800 = vld [vmem:[#allocation2] sm:$0xee]
        %v3801 = vld [vmem:[#allocation2 + $0x8] sm:$0xee]
        %v3802 = vld [vmem:[#allocation9 + $0x800] sm:$0xff]
        %v3803 = vld [vmem:[#allocation9 + $0x808] sm:$0xff]
        %v3804 = vld [vmem:[#allocation9 + $0x810] sm:$0xff]
        %v3805 = vld [vmem:[#allocation9 + $0x818] sm:$0xff]
        %v3806 = vld [vmem:[#allocation9 + $0x820] sm:$0xff]
        %v3807 = vld [vmem:[#allocation9 + $0x828] sm:$0xff]
        %v3808 = vld [vmem:[#allocation9 + $0x830] sm:$0xff]
        %v3809 = vld [vmem:[#allocation9 + $0x838] sm:$0xff]
        %v3810 = vld [vmem:[#allocation9 + $0x840] sm:$0xff]
        %v3811 = vld [vmem:[#allocation9 + $0x848] sm:$0xff]
        %v3812 = vld [vmem:[#allocation9 + $0x850] sm:$0xff]
        %v3813 = vld [vmem:[#allocation9 + $0x858] sm:$0xff]
        %v3814 = vld [vmem:[#allocation9 + $0x860] sm:$0xff]
        %v3815 = vld [vmem:[#allocation9 + $0x868] sm:$0xff]
        %v3816 = vld [vmem:[#allocation9 + $0x870] sm:$0xff]
        %v3817 = vld [vmem:[#allocation9 + $0x878] sm:$0xff]
        %v3818 = vld [vmem:[#allocation9 + $0x880] sm:$0xff]
        %v3819 = vld [vmem:[#allocation9 + $0x888] sm:$0xff]
        %v3820 = vld [vmem:[#allocation9 + $0x890] sm:$0xff]
        %v3821 = vld [vmem:[#allocation9 + $0x898] sm:$0xff]
        %v3822 = vld [vmem:[#allocation9 + $0x8a0] sm:$0xff]
        %v3823 = vld [vmem:[#allocation9 + $0x8a8] sm:$0xff]
        %v3824 = vld [vmem:[#allocation9 + $0x8b0] sm:$0xff]
        %v3825 = vld [vmem:[#allocation9 + $0x8b8] sm:$0xff]
        %v3826 = vld [vmem:[#allocation9 + $0x8c0] sm:$0xff]
        %v3827 = vld [vmem:[#allocation9 + $0x8c8] sm:$0xff]
        %v3828 = vld [vmem:[#allocation9 + $0x8d0] sm:$0xff]
        %v3829 = vld [vmem:[#allocation9 + $0x8d8] sm:$0xff]
        %v3830 = vld [vmem:[#allocation9 + $0x8e0] sm:$0xff]
        %v3831 = vld [vmem:[#allocation9 + $0x8e8] sm:$0xff]
        %v3832 = vld [vmem:[#allocation9 + $0x8f0] sm:$0xff]
        %v3833 = vld [vmem:[#allocation9 + $0x8f8] sm:$0xff]
        %v3834 = vld [vmem:[#allocation9 + $0x900] sm:$0xff]
        %v3835 = vld [vmem:[#allocation9 + $0x908] sm:$0xff]
        %v3836 = vld [vmem:[#allocation9 + $0x910] sm:$0xff]
        %v3837 = vld [vmem:[#allocation9 + $0x918] sm:$0xff]
        %v3838 = vld [vmem:[#allocation9 + $0x920] sm:$0xff]
        %v3839 = vld [vmem:[#allocation9 + $0x928] sm:$0xff]
        %v3840 = vld [vmem:[#allocation9 + $0x930] sm:$0xff]
        %v3841 = vld [vmem:[#allocation9 + $0x938] sm:$0xff]
        %v3842 = vld [vmem:[#allocation9 + $0x940] sm:$0xff]
        %v3843 = vld [vmem:[#allocation9 + $0x948] sm:$0xff]
        %v3844 = vld [vmem:[#allocation9 + $0x950] sm:$0xff]
        %v3845 = vld [vmem:[#allocation9 + $0x958] sm:$0xff]
        %v3846 = vld [vmem:[#allocation9 + $0x960] sm:$0xff]
        %v3847 = vld [vmem:[#allocation9 + $0x968] sm:$0xff]
        %v3848 = vld [vmem:[#allocation9 + $0x970] sm:$0xff]
        %v3849 = vld [vmem:[#allocation9 + $0x978] sm:$0xff]
        %v3850 = vld [vmem:[#allocation9 + $0x980] sm:$0xff]
        %v3851 = vld [vmem:[#allocation9 + $0x988] sm:$0xff]
        %v3852 = vld [vmem:[#allocation9 + $0x990] sm:$0xff]
        %v3853 = vld [vmem:[#allocation9 + $0x998] sm:$0xff]
        %v3854 = vld [vmem:[#allocation9 + $0x9a0] sm:$0xff]
        %v3855 = vld [vmem:[#allocation9 + $0x9a8] sm:$0xff]
        %v3856 = vld [vmem:[#allocation9 + $0x9b0] sm:$0xff]
        %v3857 = vld [vmem:[#allocation9 + $0x9b8] sm:$0xff]
        %v3858 = vld [vmem:[#allocation9 + $0x9c0] sm:$0xff]
        %v3859 = vld [vmem:[#allocation9 + $0x9c8] sm:$0xff]
        %v3860 = vld [vmem:[#allocation9 + $0x9d0] sm:$0xff]
        %v3861 = vld [vmem:[#allocation9 + $0x9d8] sm:$0xff]
        %v3862 = vld [vmem:[#allocation9 + $0x9e0] sm:$0xff]
        %v3863 = vld [vmem:[#allocation9 + $0x9e8] sm:$0xff]
        %v3864 = vld [vmem:[#allocation9 + $0x9f0] sm:$0xff]
        %v3865 = vld [vmem:[#allocation9 + $0x9f8] sm:$0xff]
        %v3866 = vld [vmem:[#allocation9 + $0xa00] sm:$0xff]
        %v3867 = vld [vmem:[#allocation9 + $0xa08] sm:$0xff]
        %v3868 = vld [vmem:[#allocation9 + $0xa10] sm:$0xff]
        %v3869 = vld [vmem:[#allocation9 + $0xa18] sm:$0xff]
        %v3870 = vld [vmem:[#allocation9 + $0xa20] sm:$0xff]
        %v3871 = vld [vmem:[#allocation9 + $0xa28] sm:$0xff]
        %v3872 = vld [vmem:[#allocation9 + $0xa30] sm:$0xff]
        %v3873 = vld [vmem:[#allocation9 + $0xa38] sm:$0xff]
        %v3874 = vld [vmem:[#allocation9 + $0xa40] sm:$0xff]
        %v3875 = vld [vmem:[#allocation9 + $0xa48] sm:$0xff]
        %v3876 = vld [vmem:[#allocation9 + $0xa50] sm:$0xff]
        %v3877 = vld [vmem:[#allocation9 + $0xa58] sm:$0xff]
        %v3878 = vld [vmem:[#allocation9 + $0xa60] sm:$0xff]
        %v3879 = vld [vmem:[#allocation9 + $0xa68] sm:$0xff]
        %v3880 = vld [vmem:[#allocation9 + $0xa70] sm:$0xff]
        %v3881 = vld [vmem:[#allocation9 + $0xa78] sm:$0xff]
        %v3882 = vld [vmem:[#allocation9 + $0xa80] sm:$0xff]
        %v3883 = vld [vmem:[#allocation9 + $0xa88] sm:$0xff]
        %v3884 = vld [vmem:[#allocation9 + $0xa90] sm:$0xff]
        %v3885 = vld [vmem:[#allocation9 + $0xa98] sm:$0xff]
        %v3886 = vld [vmem:[#allocation9 + $0xaa0] sm:$0xff]
        %v3887 = vld [vmem:[#allocation9 + $0xaa8] sm:$0xff]
        %v3888 = vld [vmem:[#allocation9 + $0xab0] sm:$0xff]
        %v3889 = vld [vmem:[#allocation9 + $0xab8] sm:$0xff]
        %v3890 = vld [vmem:[#allocation9 + $0xac0] sm:$0xff]
        %v3891 = vld [vmem:[#allocation9 + $0xac8] sm:$0xff]
        %v3892 = vld [vmem:[#allocation9 + $0xad0] sm:$0xff]
        %v3893 = vld [vmem:[#allocation9 + $0xad8] sm:$0xff]
        %v3894 = vld [vmem:[#allocation9 + $0xae0] sm:$0xff]
        %v3895 = vld [vmem:[#allocation9 + $0xae8] sm:$0xff]
        %v3896 = vld [vmem:[#allocation9 + $0xaf0] sm:$0xff]
        %v3897 = vld [vmem:[#allocation9 + $0xaf8] sm:$0xff]
        %v3898 = vld [vmem:[#allocation9 + $0xb00] sm:$0xff]
        %v3899 = vld [vmem:[#allocation9 + $0xb08] sm:$0xff]
        %v3900 = vld [vmem:[#allocation9 + $0xb10] sm:$0xff]
        %v3901 = vld [vmem:[#allocation9 + $0xb18] sm:$0xff]
        %v3902 = vld [vmem:[#allocation9 + $0xb20] sm:$0xff]
        %v3903 = vld [vmem:[#allocation9 + $0xb28] sm:$0xff]
        %v3904 = vld [vmem:[#allocation9 + $0xb30] sm:$0xff]
        %v3905 = vld [vmem:[#allocation9 + $0xb38] sm:$0xff]
        %v3906 = vld [vmem:[#allocation9 + $0xb40] sm:$0xff]
        %v3907 = vld [vmem:[#allocation9 + $0xb48] sm:$0xff]
        %v3908 = vld [vmem:[#allocation9 + $0xb50] sm:$0xff]
        %v3909 = vld [vmem:[#allocation9 + $0xb58] sm:$0xff]
        %v3910 = vld [vmem:[#allocation9 + $0xb60] sm:$0xff]
        %v3911 = vld [vmem:[#allocation9 + $0xb68] sm:$0xff]
        %v3912 = vld [vmem:[#allocation9 + $0xb70] sm:$0xff]
        %v3913 = vld [vmem:[#allocation9 + $0xb78] sm:$0xff]
        %v3914 = vld [vmem:[#allocation9 + $0xb80] sm:$0xff]
        %v3915 = vld [vmem:[#allocation9 + $0xb88] sm:$0xff]
        %v3916 = vld [vmem:[#allocation9 + $0xb90] sm:$0xff]
        %v3917 = vld [vmem:[#allocation9 + $0xb98] sm:$0xff]
        %v3918 = vld [vmem:[#allocation9 + $0xba0] sm:$0xff]
        %v3919 = vld [vmem:[#allocation9 + $0xba8] sm:$0xff]
        %v3920 = vld [vmem:[#allocation9 + $0xbb0] sm:$0xff]
        %v3921 = vld [vmem:[#allocation9 + $0xbb8] sm:$0xff]
        %v3922 = vld [vmem:[#allocation9 + $0xbc0] sm:$0xff]
        %v3923 = vld [vmem:[#allocation9 + $0xbc8] sm:$0xff]
        %v3924 = vld [vmem:[#allocation9 + $0xbd0] sm:$0xff]
        %v3925 = vld [vmem:[#allocation9 + $0xbd8] sm:$0xff]
        %v3926 = vld [vmem:[#allocation9 + $0xbe0] sm:$0xff]
        %v3927 = vld [vmem:[#allocation9 + $0xbe8] sm:$0xff]
        %v3928 = vld [vmem:[#allocation9 + $0xbf0] sm:$0xff]
        %v3929 = vld [vmem:[#allocation9 + $0xbf8] sm:$0xff]
        %v3932 = vunpack.c.l.b16 %v3800
        %v3933 = vunpack.c.h.b16 %v3800
        %v3934 = vunpack.c.l.b16 %v3801
        %v3935 = vunpack.c.h.b16 %v3801
        %v3936 = vpack.c.b16 %v2009, %v3932
        %v3937 = vpack.c.b16 %v2010, %v3933
        %v3938 = vpack.c.b16 %v2011, %v3934
        %v3939 = vpack.c.b16 %v2012, %v3935
        %vm3940 = vcmask 1046528
        %v3941 = vrot.slane %v3936, 1
        %v3942 = vrot.slane %v2021, 1
        %v3943 = vsel %vm3940, %v3941, %v3942
        %v3944 = vrot.slane %v3937, 1
        %v3945 = vrot.slane %v2022, 1
        %v3946 = vsel %vm3940, %v3944, %v3945
        %v3947 = vrot.slane %v3938, 1
        %v3948 = vrot.slane %v2023, 1
        %v3949 = vsel %vm3940, %v3947, %v3948
        %v3950 = vrot.slane %v3939, 1
        %v3951 = vrot.slane %v2024, 1
        %v3952 = vsel %vm3940, %v3950, %v3951
        %v4089 = vunpack.c.l.b16 %v3802
        %v4090 = vunpack.c.h.b16 %v3802
        %v4091 = vunpack.c.l.b16 %v3803
        %v4092 = vunpack.c.h.b16 %v3803
        %v4093 = vunpack.c.l.b16 %v3804
        %v4094 = vunpack.c.h.b16 %v3804
        %v4095 = vunpack.c.l.b16 %v3805
        %v4096 = vunpack.c.h.b16 %v3805
        %v4097 = vunpack.c.l.b16 %v3806
        %v4098 = vunpack.c.h.b16 %v3806
        %v4099 = vunpack.c.l.b16 %v3807
        %v4100 = vunpack.c.h.b16 %v3807
        %v4101 = vunpack.c.l.b16 %v3808
        %v4102 = vunpack.c.h.b16 %v3808
        %v4103 = vunpack.c.l.b16 %v3809
        %v4104 = vunpack.c.h.b16 %v3809
        %v4105 = vunpack.c.l.b16 %v3810
        %v4106 = vunpack.c.h.b16 %v3810
        %v4107 = vunpack.c.l.b16 %v3811
        %v4108 = vunpack.c.h.b16 %v3811
        %v4109 = vunpack.c.l.b16 %v3812
        %v4110 = vunpack.c.h.b16 %v3812
        %v4111 = vunpack.c.l.b16 %v3813
        %v4112 = vunpack.c.h.b16 %v3813
        %v4113 = vunpack.c.l.b16 %v3814
        %v4114 = vunpack.c.h.b16 %v3814
        %v4115 = vunpack.c.l.b16 %v3815
        %v4116 = vunpack.c.h.b16 %v3815
        %v4117 = vunpack.c.l.b16 %v3816
        %v4118 = vunpack.c.h.b16 %v3816
        %v4119 = vunpack.c.l.b16 %v3817
        %v4120 = vunpack.c.h.b16 %v3817
        %v4121 = vunpack.c.l.b16 %v3818
        %v4122 = vunpack.c.h.b16 %v3818
        %v4123 = vunpack.c.l.b16 %v3819
        %v4124 = vunpack.c.h.b16 %v3819
        %v4125 = vunpack.c.l.b16 %v3820
        %v4126 = vunpack.c.h.b16 %v3820
        %v4127 = vunpack.c.l.b16 %v3821
        %v4128 = vunpack.c.h.b16 %v3821
        %v4129 = vunpack.c.l.b16 %v3822
        %v4130 = vunpack.c.h.b16 %v3822
        %v4131 = vunpack.c.l.b16 %v3823
        %v4132 = vunpack.c.h.b16 %v3823
        %v4133 = vunpack.c.l.b16 %v3824
        %v4134 = vunpack.c.h.b16 %v3824
        %v4135 = vunpack.c.l.b16 %v3825
        %v4136 = vunpack.c.h.b16 %v3825
        %v4137 = vunpack.c.l.b16 %v3826
        %v4138 = vunpack.c.h.b16 %v3826
        %v4139 = vunpack.c.l.b16 %v3827
        %v4140 = vunpack.c.h.b16 %v3827
        %v4141 = vunpack.c.l.b16 %v3828
        %v4142 = vunpack.c.h.b16 %v3828
        %v4143 = vunpack.c.l.b16 %v3829
        %v4144 = vunpack.c.h.b16 %v3829
        %v4145 = vunpack.c.l.b16 %v3830
        %v4146 = vunpack.c.h.b16 %v3830
        %v4147 = vunpack.c.l.b16 %v3831
        %v4148 = vunpack.c.h.b16 %v3831
        %v4149 = vunpack.c.l.b16 %v3832
        %v4150 = vunpack.c.h.b16 %v3832
        %v4151 = vunpack.c.l.b16 %v3833
        %v4152 = vunpack.c.h.b16 %v3833
        %v4153 = vunpack.c.l.b16 %v3834
        %v4154 = vunpack.c.h.b16 %v3834
        %v4155 = vunpack.c.l.b16 %v3835
        %v4156 = vunpack.c.h.b16 %v3835
        %v4157 = vunpack.c.l.b16 %v3836
        %v4158 = vunpack.c.h.b16 %v3836
        %v4159 = vunpack.c.l.b16 %v3837
        %v4160 = vunpack.c.h.b16 %v3837
        %v4161 = vunpack.c.l.b16 %v3838
        %v4162 = vunpack.c.h.b16 %v3838
        %v4163 = vunpack.c.l.b16 %v3839
        %v4164 = vunpack.c.h.b16 %v3839
        %v4165 = vunpack.c.l.b16 %v3840
        %v4166 = vunpack.c.h.b16 %v3840
        %v4167 = vunpack.c.l.b16 %v3841
        %v4168 = vunpack.c.h.b16 %v3841
        %v4169 = vunpack.c.l.b16 %v3842
        %v4170 = vunpack.c.h.b16 %v3842
        %v4171 = vunpack.c.l.b16 %v3843
        %v4172 = vunpack.c.h.b16 %v3843
        %v4173 = vunpack.c.l.b16 %v3844
        %v4174 = vunpack.c.h.b16 %v3844
        %v4175 = vunpack.c.l.b16 %v3845
        %v4176 = vunpack.c.h.b16 %v3845
        %v4177 = vunpack.c.l.b16 %v3846
        %v4178 = vunpack.c.h.b16 %v3846
        %v4179 = vunpack.c.l.b16 %v3847
        %v4180 = vunpack.c.h.b16 %v3847
        %v4181 = vunpack.c.l.b16 %v3848
        %v4182 = vunpack.c.h.b16 %v3848
        %v4183 = vunpack.c.l.b16 %v3849
        %v4184 = vunpack.c.h.b16 %v3849
        %v4185 = vunpack.c.l.b16 %v3850
        %v4186 = vunpack.c.h.b16 %v3850
        %v4187 = vunpack.c.l.b16 %v3851
        %v4188 = vunpack.c.h.b16 %v3851
        %v4189 = vunpack.c.l.b16 %v3852
        %v4190 = vunpack.c.h.b16 %v3852
        %v4191 = vunpack.c.l.b16 %v3853
        %v4192 = vunpack.c.h.b16 %v3853
        %v4193 = vunpack.c.l.b16 %v3854
        %v4194 = vunpack.c.h.b16 %v3854
        %v4195 = vunpack.c.l.b16 %v3855
        %v4196 = vunpack.c.h.b16 %v3855
        %v4197 = vunpack.c.l.b16 %v3856
        %v4198 = vunpack.c.h.b16 %v3856
        %v4199 = vunpack.c.l.b16 %v3857
        %v4200 = vunpack.c.h.b16 %v3857
        %v4201 = vunpack.c.l.b16 %v3858
        %v4202 = vunpack.c.h.b16 %v3858
        %v4203 = vunpack.c.l.b16 %v3859
        %v4204 = vunpack.c.h.b16 %v3859
        %v4205 = vunpack.c.l.b16 %v3860
        %v4206 = vunpack.c.h.b16 %v3860
        %v4207 = vunpack.c.l.b16 %v3861
        %v4208 = vunpack.c.h.b16 %v3861
        %v4209 = vunpack.c.l.b16 %v3862
        %v4210 = vunpack.c.h.b16 %v3862
        %v4211 = vunpack.c.l.b16 %v3863
        %v4212 = vunpack.c.h.b16 %v3863
        %v4213 = vunpack.c.l.b16 %v3864
        %v4214 = vunpack.c.h.b16 %v3864
        %v4215 = vunpack.c.l.b16 %v3865
        %v4216 = vunpack.c.h.b16 %v3865
        %v4217 = vunpack.c.l.b16 %v3866
        %v4218 = vunpack.c.h.b16 %v3866
        %v4219 = vunpack.c.l.b16 %v3867
        %v4220 = vunpack.c.h.b16 %v3867
        %v4221 = vunpack.c.l.b16 %v3868
        %v4222 = vunpack.c.h.b16 %v3868
        %v4223 = vunpack.c.l.b16 %v3869
        %v4224 = vunpack.c.h.b16 %v3869
        %v4225 = vunpack.c.l.b16 %v3870
        %v4226 = vunpack.c.h.b16 %v3870
        %v4227 = vunpack.c.l.b16 %v3871
        %v4228 = vunpack.c.h.b16 %v3871
        %v4229 = vunpack.c.l.b16 %v3872
        %v4230 = vunpack.c.h.b16 %v3872
        %v4231 = vunpack.c.l.b16 %v3873
        %v4232 = vunpack.c.h.b16 %v3873
        %v4233 = vunpack.c.l.b16 %v3874
        %v4234 = vunpack.c.h.b16 %v3874
        %v4235 = vunpack.c.l.b16 %v3875
        %v4236 = vunpack.c.h.b16 %v3875
        %v4237 = vunpack.c.l.b16 %v3876
        %v4238 = vunpack.c.h.b16 %v3876
        %v4239 = vunpack.c.l.b16 %v3877
        %v4240 = vunpack.c.h.b16 %v3877
        %v4241 = vunpack.c.l.b16 %v3878
        %v4242 = vunpack.c.h.b16 %v3878
        %v4243 = vunpack.c.l.b16 %v3879
        %v4244 = vunpack.c.h.b16 %v3879
        %v4245 = vunpack.c.l.b16 %v3880
        %v4246 = vunpack.c.h.b16 %v3880
        %v4247 = vunpack.c.l.b16 %v3881
        %v4248 = vunpack.c.h.b16 %v3881
        %v4249 = vunpack.c.l.b16 %v3882
        %v4250 = vunpack.c.h.b16 %v3882
        %v4251 = vunpack.c.l.b16 %v3883
        %v4252 = vunpack.c.h.b16 %v3883
        %v4253 = vunpack.c.l.b16 %v3884
        %v4254 = vunpack.c.h.b16 %v3884
        %v4255 = vunpack.c.l.b16 %v3885
        %v4256 = vunpack.c.h.b16 %v3885
        %v4257 = vunpack.c.l.b16 %v3886
        %v4258 = vunpack.c.h.b16 %v3886
        %v4259 = vunpack.c.l.b16 %v3887
        %v4260 = vunpack.c.h.b16 %v3887
        %v4261 = vunpack.c.l.b16 %v3888
        %v4262 = vunpack.c.h.b16 %v3888
        %v4263 = vunpack.c.l.b16 %v3889
        %v4264 = vunpack.c.h.b16 %v3889
        %v4265 = vunpack.c.l.b16 %v3890
        %v4266 = vunpack.c.h.b16 %v3890
        %v4267 = vunpack.c.l.b16 %v3891
        %v4268 = vunpack.c.h.b16 %v3891
        %v4269 = vunpack.c.l.b16 %v3892
        %v4270 = vunpack.c.h.b16 %v3892
        %v4271 = vunpack.c.l.b16 %v3893
        %v4272 = vunpack.c.h.b16 %v3893
        %v4273 = vunpack.c.l.b16 %v3894
        %v4274 = vunpack.c.h.b16 %v3894
        %v4275 = vunpack.c.l.b16 %v3895
        %v4276 = vunpack.c.h.b16 %v3895
        %v4277 = vunpack.c.l.b16 %v3896
        %v4278 = vunpack.c.h.b16 %v3896
        %v4279 = vunpack.c.l.b16 %v3897
        %v4280 = vunpack.c.h.b16 %v3897
        %v4281 = vunpack.c.l.b16 %v3898
        %v4282 = vunpack.c.h.b16 %v3898
        %v4283 = vunpack.c.l.b16 %v3899
        %v4284 = vunpack.c.h.b16 %v3899
        %v4285 = vunpack.c.l.b16 %v3900
        %v4286 = vunpack.c.h.b16 %v3900
        %v4287 = vunpack.c.l.b16 %v3901
        %v4288 = vunpack.c.h.b16 %v3901
        %v4289 = vunpack.c.l.b16 %v3902
        %v4290 = vunpack.c.h.b16 %v3902
        %v4291 = vunpack.c.l.b16 %v3903
        %v4292 = vunpack.c.h.b16 %v3903
        %v4293 = vunpack.c.l.b16 %v3904
        %v4294 = vunpack.c.h.b16 %v3904
        %v4295 = vunpack.c.l.b16 %v3905
        %v4296 = vunpack.c.h.b16 %v3905
        %v4297 = vunpack.c.l.b16 %v3906
        %v4298 = vunpack.c.h.b16 %v3906
        %v4299 = vunpack.c.l.b16 %v3907
        %v4300 = vunpack.c.h.b16 %v3907
        %v4301 = vunpack.c.l.b16 %v3908
        %v4302 = vunpack.c.h.b16 %v3908
        %v4303 = vunpack.c.l.b16 %v3909
        %v4304 = vunpack.c.h.b16 %v3909
        %v4305 = vunpack.c.l.b16 %v3910
        %v4306 = vunpack.c.h.b16 %v3910
        %v4307 = vunpack.c.l.b16 %v3911
        %v4308 = vunpack.c.h.b16 %v3911
        %v4309 = vunpack.c.l.b16 %v3912
        %v4310 = vunpack.c.h.b16 %v3912
        %v4311 = vunpack.c.l.b16 %v3913
        %v4312 = vunpack.c.h.b16 %v3913
        %v4313 = vunpack.c.l.b16 %v3914
        %v4314 = vunpack.c.h.b16 %v3914
        %v4315 = vunpack.c.l.b16 %v3915
        %v4316 = vunpack.c.h.b16 %v3915
        %v4317 = vunpack.c.l.b16 %v3916
        %v4318 = vunpack.c.h.b16 %v3916
        %v4319 = vunpack.c.l.b16 %v3917
        %v4320 = vunpack.c.h.b16 %v3917
        %v4321 = vunpack.c.l.b16 %v3918
        %v4322 = vunpack.c.h.b16 %v3918
        %v4323 = vunpack.c.l.b16 %v3919
        %v4324 = vunpack.c.h.b16 %v3919
        %v4325 = vunpack.c.l.b16 %v3920
        %v4326 = vunpack.c.h.b16 %v3920
        %v4327 = vunpack.c.l.b16 %v3921
        %v4328 = vunpack.c.h.b16 %v3921
        %v4329 = vunpack.c.l.b16 %v3922
        %v4330 = vunpack.c.h.b16 %v3922
        %v4331 = vunpack.c.l.b16 %v3923
        %v4332 = vunpack.c.h.b16 %v3923
        %v4333 = vunpack.c.l.b16 %v3924
        %v4334 = vunpack.c.h.b16 %v3924
        %v4335 = vunpack.c.l.b16 %v3925
        %v4336 = vunpack.c.h.b16 %v3925
        %v4337 = vunpack.c.l.b16 %v3926
        %v4338 = vunpack.c.h.b16 %v3926
        %v4339 = vunpack.c.l.b16 %v3927
        %v4340 = vunpack.c.h.b16 %v3927
        %v4341 = vunpack.c.l.b16 %v3928
        %v4342 = vunpack.c.h.b16 %v3928
        %v4343 = vunpack.c.l.b16 %v3929
        %v4344 = vunpack.c.h.b16 %v3929
        %v4345 = vpack.c.b16 %v4093, %v4089
        %v4346 = vpack.c.b16 %v4094, %v4090
        %v4347 = vpack.c.b16 %v4095, %v4091
        %v4348 = vpack.c.b16 %v4096, %v4092
        %v4349 = vpack.c.b16 %v4101, %v4097
        %v4350 = vpack.c.b16 %v4102, %v4098
        %v4351 = vpack.c.b16 %v4103, %v4099
        %v4352 = vpack.c.b16 %v4104, %v4100
        %v4353 = vpack.c.b16 %v4109, %v4105
        %v4354 = vpack.c.b16 %v4110, %v4106
        %v4355 = vpack.c.b16 %v4111, %v4107
        %v4356 = vpack.c.b16 %v4112, %v4108
        %v4357 = vpack.c.b16 %v4117, %v4113
        %v4358 = vpack.c.b16 %v4118, %v4114
        %v4359 = vpack.c.b16 %v4119, %v4115
        %v4360 = vpack.c.b16 %v4120, %v4116
        %v4361 = vpack.c.b16 %v4125, %v4121
        %v4362 = vpack.c.b16 %v4126, %v4122
        %v4363 = vpack.c.b16 %v4127, %v4123
        %v4364 = vpack.c.b16 %v4128, %v4124
        %v4365 = vpack.c.b16 %v4133, %v4129
        %v4366 = vpack.c.b16 %v4134, %v4130
        %v4367 = vpack.c.b16 %v4135, %v4131
        %v4368 = vpack.c.b16 %v4136, %v4132
        %v4369 = vpack.c.b16 %v4141, %v4137
        %v4370 = vpack.c.b16 %v4142, %v4138
        %v4371 = vpack.c.b16 %v4143, %v4139
        %v4372 = vpack.c.b16 %v4144, %v4140
        %v4373 = vpack.c.b16 %v4149, %v4145
        %v4374 = vpack.c.b16 %v4150, %v4146
        %v4375 = vpack.c.b16 %v4151, %v4147
        %v4376 = vpack.c.b16 %v4152, %v4148
        %v4377 = vpack.c.b16 %v4157, %v4153
        %v4378 = vpack.c.b16 %v4158, %v4154
        %v4379 = vpack.c.b16 %v4159, %v4155
        %v4380 = vpack.c.b16 %v4160, %v4156
        %v4381 = vpack.c.b16 %v4165, %v4161
        %v4382 = vpack.c.b16 %v4166, %v4162
        %v4383 = vpack.c.b16 %v4167, %v4163
        %v4384 = vpack.c.b16 %v4168, %v4164
        %v4385 = vpack.c.b16 %v4173, %v4169
        %v4386 = vpack.c.b16 %v4174, %v4170
        %v4387 = vpack.c.b16 %v4175, %v4171
        %v4388 = vpack.c.b16 %v4176, %v4172
        %v4389 = vpack.c.b16 %v4181, %v4177
        %v4390 = vpack.c.b16 %v4182, %v4178
        %v4391 = vpack.c.b16 %v4183, %v4179
        %v4392 = vpack.c.b16 %v4184, %v4180
        %v4393 = vpack.c.b16 %v4189, %v4185
        %v4394 = vpack.c.b16 %v4190, %v4186
        %v4395 = vpack.c.b16 %v4191, %v4187
        %v4396 = vpack.c.b16 %v4192, %v4188
        %v4397 = vpack.c.b16 %v4197, %v4193
        %v4398 = vpack.c.b16 %v4198, %v4194
        %v4399 = vpack.c.b16 %v4199, %v4195
        %v4400 = vpack.c.b16 %v4200, %v4196
        %v4401 = vpack.c.b16 %v4205, %v4201
        %v4402 = vpack.c.b16 %v4206, %v4202
        %v4403 = vpack.c.b16 %v4207, %v4203
        %v4404 = vpack.c.b16 %v4208, %v4204
        %v4405 = vpack.c.b16 %v4213, %v4209
        %v4406 = vpack.c.b16 %v4214, %v4210
        %v4407 = vpack.c.b16 %v4215, %v4211
        %v4408 = vpack.c.b16 %v4216, %v4212
        %v4409 = vpack.c.b16 %v4221, %v4217
        %v4410 = vpack.c.b16 %v4222, %v4218
        %v4411 = vpack.c.b16 %v4223, %v4219
        %v4412 = vpack.c.b16 %v4224, %v4220
        %v4413 = vpack.c.b16 %v4229, %v4225
        %v4414 = vpack.c.b16 %v4230, %v4226
        %v4415 = vpack.c.b16 %v4231, %v4227
        %v4416 = vpack.c.b16 %v4232, %v4228
        %v4417 = vpack.c.b16 %v4237, %v4233
        %v4418 = vpack.c.b16 %v4238, %v4234
        %v4419 = vpack.c.b16 %v4239, %v4235
        %v4420 = vpack.c.b16 %v4240, %v4236
        %v4421 = vpack.c.b16 %v4245, %v4241
        %v4422 = vpack.c.b16 %v4246, %v4242
        %v4423 = vpack.c.b16 %v4247, %v4243
        %v4424 = vpack.c.b16 %v4248, %v4244
        %v4425 = vpack.c.b16 %v4253, %v4249
        %v4426 = vpack.c.b16 %v4254, %v4250
        %v4427 = vpack.c.b16 %v4255, %v4251
        %v4428 = vpack.c.b16 %v4256, %v4252
        %v4429 = vpack.c.b16 %v4261, %v4257
        %v4430 = vpack.c.b16 %v4262, %v4258
        %v4431 = vpack.c.b16 %v4263, %v4259
        %v4432 = vpack.c.b16 %v4264, %v4260
        %v4433 = vpack.c.b16 %v4269, %v4265
        %v4434 = vpack.c.b16 %v4270, %v4266
        %v4435 = vpack.c.b16 %v4271, %v4267
        %v4436 = vpack.c.b16 %v4272, %v4268
        %v4437 = vpack.c.b16 %v4277, %v4273
        %v4438 = vpack.c.b16 %v4278, %v4274
        %v4439 = vpack.c.b16 %v4279, %v4275
        %v4440 = vpack.c.b16 %v4280, %v4276
        %v4441 = vpack.c.b16 %v4285, %v4281
        %v4442 = vpack.c.b16 %v4286, %v4282
        %v4443 = vpack.c.b16 %v4287, %v4283
        %v4444 = vpack.c.b16 %v4288, %v4284
        %v4445 = vpack.c.b16 %v4293, %v4289
        %v4446 = vpack.c.b16 %v4294, %v4290
        %v4447 = vpack.c.b16 %v4295, %v4291
        %v4448 = vpack.c.b16 %v4296, %v4292
        %v4449 = vpack.c.b16 %v4301, %v4297
        %v4450 = vpack.c.b16 %v4302, %v4298
        %v4451 = vpack.c.b16 %v4303, %v4299
        %v4452 = vpack.c.b16 %v4304, %v4300
        %v4453 = vpack.c.b16 %v4309, %v4305
        %v4454 = vpack.c.b16 %v4310, %v4306
        %v4455 = vpack.c.b16 %v4311, %v4307
        %v4456 = vpack.c.b16 %v4312, %v4308
        %v4457 = vpack.c.b16 %v4317, %v4313
        %v4458 = vpack.c.b16 %v4318, %v4314
        %v4459 = vpack.c.b16 %v4319, %v4315
        %v4460 = vpack.c.b16 %v4320, %v4316
        %v4461 = vpack.c.b16 %v4325, %v4321
        %v4462 = vpack.c.b16 %v4326, %v4322
        %v4463 = vpack.c.b16 %v4327, %v4323
        %v4464 = vpack.c.b16 %v4328, %v4324
        %v4465 = vpack.c.b16 %v4333, %v4329
        %v4466 = vpack.c.b16 %v4334, %v4330
        %v4467 = vpack.c.b16 %v4335, %v4331
        %v4468 = vpack.c.b16 %v4336, %v4332
        %v4469 = vpack.c.b16 %v4341, %v4337
        %v4470 = vpack.c.b16 %v4342, %v4338
        %v4471 = vpack.c.b16 %v4343, %v4339
        %v4472 = vpack.c.b16 %v4344, %v4340
        %4601 = vmatprep.subr.bf16.mxu0 %v4346
        %4602 = vmatpush1.bf16.msra.mxu0 %v4345
        %4603 = vmatprep.subr.bf16.mxu0 %v4350
        %4604 = vmatpush1.bf16.msra.mxu0 %v4349
        %4605 = vmatprep.subr.bf16.mxu0 %v4354
        %4606 = vmatpush1.bf16.msra.mxu0 %v4353
        %4607 = vmatprep.subr.bf16.mxu0 %v4358
        %4608 = vmatpush1.bf16.msra.mxu0 %v4357
        %4609 = vmatprep.subr.bf16.mxu0 %v4362
        %4610 = vmatpush1.bf16.msra.mxu0 %v4361
        %4611 = vmatprep.subr.bf16.mxu0 %v4366
        %4612 = vmatpush1.bf16.msra.mxu0 %v4365
        %4613 = vmatprep.subr.bf16.mxu0 %v4370
        %4614 = vmatpush1.bf16.msra.mxu0 %v4369
        %4615 = vmatprep.subr.bf16.mxu0 %v4374
        %4616 = vmatpush1.bf16.msra.mxu0 %v4373
        %4617 = vmatprep.subr.bf16.mxu0 %v4378
        %4618 = vmatpush1.bf16.msra.mxu0 %v4377
        %4619 = vmatprep.subr.bf16.mxu0 %v4382
        %4620 = vmatpush1.bf16.msra.mxu0 %v4381
        %4621 = vmatprep.subr.bf16.mxu0 %v4386
        %4622 = vmatpush1.bf16.msra.mxu0 %v4385
        %4623 = vmatprep.subr.bf16.mxu0 %v4390
        %4624 = vmatpush1.bf16.msra.mxu0 %v4389
        %4625 = vmatprep.subr.bf16.mxu0 %v4394
        %4626 = vmatpush1.bf16.msra.mxu0 %v4393
        %4627 = vmatprep.subr.bf16.mxu0 %v4398
        %4628 = vmatpush1.bf16.msra.mxu0 %v4397
        %4629 = vmatprep.subr.bf16.mxu0 %v4402
        %4630 = vmatpush1.bf16.msra.mxu0 %v4401
        %4631 = vmatprep.subr.bf16.mxu0 %v4406
        %4632 = vmatpush1.bf16.msra.mxu0 %v4405
        %4633 = vmatprep.mubr.bf16.mxu0 %v3946
        %4634 = vmatmul.mubr.bf16.gmra.mrb[0].mxu0 %v3943
        %v4635 = vpop.f32.mrb[0].mxu0
        %v4636 = vadd.f32 0.0, %v4635
        %v4637 = vpop.f32.mrb[0].mxu0
        %v4638 = vadd.f32 0.0, %v4637
        %v4639 = vpop.f32.mrb[0].mxu0
        %v4640 = vadd.f32 0.0, %v4639
        %v4641 = vpop.f32.mrb[0].mxu0
        %v4642 = vadd.f32 0.0, %v4641
        %4643 = vmatprep.mubr.bf16.mxu0 %v3945
        %4644 = vmatmul.mubr.bf16.gmra.mrb[0].mxu0 %v3942
        %v4645 = vpop.f32.mrb[0].mxu0
        %v4646 = vadd.f32 0.0, %v4645
        %v4647 = vpop.f32.mrb[0].mxu0
        %v4648 = vadd.f32 0.0, %v4647
        %v4649 = vpop.f32.mrb[0].mxu0
        %v4650 = vpop.f32.mrb[0].mxu0
        %4651 = vdwg.mxu0
        %4652 = vmatprep.subr.bf16.mxu0 %v4410
        %4653 = vmatpush1.bf16.msra.mxu0 %v4409
        %4654 = vmatprep.subr.bf16.mxu0 %v4414
        %4655 = vmatpush1.bf16.msra.mxu0 %v4413
        %4656 = vmatprep.subr.bf16.mxu0 %v4418
        %4657 = vmatpush1.bf16.msra.mxu0 %v4417
        %4658 = vmatprep.subr.bf16.mxu0 %v4422
        %4659 = vmatpush1.bf16.msra.mxu0 %v4421
        %4660 = vmatprep.subr.bf16.mxu0 %v4426
        %4661 = vmatpush1.bf16.msra.mxu0 %v4425
        %4662 = vmatprep.subr.bf16.mxu0 %v4430
        %4663 = vmatpush1.bf16.msra.mxu0 %v4429
        %4664 = vmatprep.subr.bf16.mxu0 %v4434
        %4665 = vmatpush1.bf16.msra.mxu0 %v4433
        %4666 = vmatprep.subr.bf16.mxu0 %v4438
        %4667 = vmatpush1.bf16.msra.mxu0 %v4437
        %4668 = vmatprep.subr.bf16.mxu0 %v4442
        %4669 = vmatpush1.bf16.msra.mxu0 %v4441
        %4670 = vmatprep.subr.bf16.mxu0 %v4446
        %4671 = vmatpush1.bf16.msra.mxu0 %v4445
        %4672 = vmatprep.subr.bf16.mxu0 %v4450
        %4673 = vmatpush1.bf16.msra.mxu0 %v4449
        %4674 = vmatprep.subr.bf16.mxu0 %v4454
        %4675 = vmatpush1.bf16.msra.mxu0 %v4453
        %4676 = vmatprep.subr.bf16.mxu0 %v4458
        %4677 = vmatpush1.bf16.msra.mxu0 %v4457
        %4678 = vmatprep.subr.bf16.mxu0 %v4462
        %4679 = vmatpush1.bf16.msra.mxu0 %v4461
        %4680 = vmatprep.subr.bf16.mxu0 %v4466
        %4681 = vmatpush1.bf16.msra.mxu0 %v4465
        %4682 = vmatprep.subr.bf16.mxu0 %v4470
        %4683 = vmatpush1.bf16.msra.mxu0 %v4469
        %4684 = vmatprep.mubr.bf16.mxu0 %v3952
        %4685 = vmatmul.mubr.bf16.gmra.mrb[0].mxu0 %v3949
        %v4686 = vpop.f32.mrb[0].mxu0
        %v4687 = vadd.f32 %v4636, %v4686
        %v4688 = vpop.f32.mrb[0].mxu0
        %v4689 = vadd.f32 %v4638, %v4688
        %v4690 = vpop.f32.mrb[0].mxu0
        %v4691 = vadd.f32 %v4640, %v4690
        %v4692 = vpop.f32.mrb[0].mxu0
        %v4693 = vadd.f32 %v4642, %v4692
        %4694 = vmatprep.mubr.bf16.mxu0 %v3951
        %4695 = vmatmul.mubr.bf16.gmra.mrb[0].mxu0 %v3948
        %v4696 = vpop.f32.mrb[0].mxu0
        %v4697 = vadd.f32 %v4646, %v4696
        %v4698 = vpop.f32.mrb[0].mxu0
        %v4699 = vadd.f32 %v4648, %v4698
        %v4700 = vpop.f32.mrb[0].mxu0
        %v4701 = vpop.f32.mrb[0].mxu0
        %4702 = vdwg.mxu0
        %4703 = vmatprep.subr.bf16.mxu0 %v4348
        %4704 = vmatpush1.bf16.msra.mxu0 %v4347
        %4705 = vmatprep.subr.bf16.mxu0 %v4352
        %4706 = vmatpush1.bf16.msra.mxu0 %v4351
        %4707 = vmatprep.subr.bf16.mxu0 %v4356
        %4708 = vmatpush1.bf16.msra.mxu0 %v4355
        %4709 = vmatprep.subr.bf16.mxu0 %v4360
        %4710 = vmatpush1.bf16.msra.mxu0 %v4359
        %4711 = vmatprep.subr.bf16.mxu0 %v4364
        %4712 = vmatpush1.bf16.msra.mxu0 %v4363
        %4713 = vmatprep.subr.bf16.mxu0 %v4368
        %4714 = vmatpush1.bf16.msra.mxu0 %v4367
        %4715 = vmatprep.subr.bf16.mxu0 %v4372
        %4716 = vmatpush1.bf16.msra.mxu0 %v4371
        %4717 = vmatprep.subr.bf16.mxu0 %v4376
        %4718 = vmatpush1.bf16.msra.mxu0 %v4375
        %4719 = vmatprep.subr.bf16.mxu0 %v4380
        %4720 = vmatpush1.bf16.msra.mxu0 %v4379
        %4721 = vmatprep.subr.bf16.mxu0 %v4384
        %4722 = vmatpush1.bf16.msra.mxu0 %v4383
        %4723 = vmatprep.subr.bf16.mxu0 %v4388
        %4724 = vmatpush1.bf16.msra.mxu0 %v4387
        %4725 = vmatprep.subr.bf16.mxu0 %v4392
        %4726 = vmatpush1.bf16.msra.mxu0 %v4391
        %4727 = vmatprep.subr.bf16.mxu0 %v4396
        %4728 = vmatpush1.bf16.msra.mxu0 %v4395
        %4729 = vmatprep.subr.bf16.mxu0 %v4400
        %4730 = vmatpush1.bf16.msra.mxu0 %v4399
        %4731 = vmatprep.subr.bf16.mxu0 %v4404
        %4732 = vmatpush1.bf16.msra.mxu0 %v4403
        %4733 = vmatprep.subr.bf16.mxu0 %v4408
        %4734 = vmatpush1.bf16.msra.mxu0 %v4407
        %4735 = vmatprep.mubr.bf16.mxu0 %v3946
        %4736 = vmatmul.mubr.bf16.gmra.mrb[0].mxu0 %v3943
        %v4737 = vpop.f32.mrb[0].mxu0
        %v4738 = vadd.f32 0.0, %v4737
        %v4739 = vpop.f32.mrb[0].mxu0
        %v4740 = vadd.f32 0.0, %v4739
        %v4741 = vpop.f32.mrb[0].mxu0
        %v4742 = vadd.f32 0.0, %v4741
        %v4743 = vpop.f32.mrb[0].mxu0
        %v4744 = vadd.f32 0.0, %v4743
        %4745 = vmatprep.mubr.bf16.mxu0 %v3945
        %4746 = vmatmul.mubr.bf16.gmra.mrb[0].mxu0 %v3942
        %v4747 = vpop.f32.mrb[0].mxu0
        %v4748 = vadd.f32 0.0, %v4747
        %v4749 = vpop.f32.mrb[0].mxu0
        %v4750 = vadd.f32 0.0, %v4749
        %v4751 = vpop.f32.mrb[0].mxu0
        %v4752 = vpop.f32.mrb[0].mxu0
        %4753 = vdwg.mxu0
        %4754 = vmatprep.subr.bf16.mxu0 %v4412
        %4755 = vmatpush1.bf16.msra.mxu0 %v4411
        %4756 = vmatprep.subr.bf16.mxu0 %v4416
        %4757 = vmatpush1.bf16.msra.mxu0 %v4415
        %4758 = vmatprep.subr.bf16.mxu0 %v4420
        %4759 = vmatpush1.bf16.msra.mxu0 %v4419
        %4760 = vmatprep.subr.bf16.mxu0 %v4424
        %4761 = vmatpush1.bf16.msra.mxu0 %v4423
        %4762 = vmatprep.subr.bf16.mxu0 %v4428
        %4763 = vmatpush1.bf16.msra.mxu0 %v4427
        %4764 = vmatprep.subr.bf16.mxu0 %v4432
        %4765 = vmatpush1.bf16.msra.mxu0 %v4431
        %4766 = vmatprep.subr.bf16.mxu0 %v4436
        %4767 = vmatpush1.bf16.msra.mxu0 %v4435
        %4768 = vmatprep.subr.bf16.mxu0 %v4440
        %4769 = vmatpush1.bf16.msra.mxu0 %v4439
        %4770 = vmatprep.subr.bf16.mxu0 %v4444
        %4771 = vmatpush1.bf16.msra.mxu0 %v4443
        %4772 = vmatprep.subr.bf16.mxu0 %v4448
        %4773 = vmatpush1.bf16.msra.mxu0 %v4447
        %4774 = vmatprep.subr.bf16.mxu0 %v4452
        %4775 = vmatpush1.bf16.msra.mxu0 %v4451
        %4776 = vmatprep.subr.bf16.mxu0 %v4456
        %4777 = vmatpush1.bf16.msra.mxu0 %v4455
        %4778 = vmatprep.subr.bf16.mxu0 %v4460
        %4779 = vmatpush1.bf16.msra.mxu0 %v4459
        %4780 = vmatprep.subr.bf16.mxu0 %v4464
        %4781 = vmatpush1.bf16.msra.mxu0 %v4463
        %4782 = vmatprep.subr.bf16.mxu0 %v4468
        %4783 = vmatpush1.bf16.msra.mxu0 %v4467
        %4784 = vmatprep.subr.bf16.mxu0 %v4472
        %4785 = vmatpush1.bf16.msra.mxu0 %v4471
        %4786 = vmatprep.mubr.bf16.mxu0 %v3952
        %4787 = vmatmul.mubr.bf16.gmra.mrb[0].mxu0 %v3949
        %v4788 = vpop.f32.mrb[0].mxu0
        %v4789 = vadd.f32 %v4738, %v4788
        %v4790 = vpop.f32.mrb[0].mxu0
        %v4791 = vadd.f32 %v4740, %v4790
        %v4792 = vpop.f32.mrb[0].mxu0
        %v4793 = vadd.f32 %v4742, %v4792
        %v4794 = vpop.f32.mrb[0].mxu0
        %v4795 = vadd.f32 %v4744, %v4794
        %4796 = vmatprep.mubr.bf16.mxu0 %v3951
        %4797 = vmatmul.mubr.bf16.gmra.mrb[0].mxu0 %v3948
        %v4798 = vpop.f32.mrb[0].mxu0
        %v4799 = vadd.f32 %v4748, %v4798
        %v4800 = vpop.f32.mrb[0].mxu0
        %v4801 = vadd.f32 %v4750, %v4800
        %v4802 = vpop.f32.mrb[0].mxu0
        %v4803 = vpop.f32.mrb[0].mxu0
        %4804 = vdwg.mxu0
        %v4805 = vadd.f32 %v3682, %v4687
        %v4806 = vadd.f32 %v3684, %v4689
        %v4807 = vadd.f32 %v3784, %v4789
        %v4808 = vadd.f32 %v3786, %v4791
        %v4809 = vadd.f32 %v3686, %v4691
        %v4810 = vadd.f32 %v3688, %v4693
        %v4811 = vadd.f32 %v3788, %v4793
        %v4812 = vadd.f32 %v3790, %v4795
        %v4813 = vadd.f32 %v3692, %v4697
        %v4814 = vadd.f32 %v3694, %v4699
        %v4815 = vadd.f32 %v3794, %v4799
        %v4816 = vadd.f32 %v3796, %v4801
        %v4817 = vld [vmem:[#allocation10] sm:$0xf]
        %v4819 = vlaneseq
        %v4820 = vshrl.u32 %v4819, 7
        %v4821 = vsub.s32 0, %v4820
        %v4822 = vrot.slane %v4817, %v4821
        %v4823 = vlaneseq
        %v4824 = vshrl.u32 %v4823, 7
        %v4825 = vsub.s32 1, %v4824
        %v4826 = vrot.slane %v4817, %v4825
        %v4827 = vlaneseq
        %v4828 = vshrl.u32 %v4827, 7
        %v4829 = vsub.s32 2, %v4828
        %v4830 = vrot.slane %v4817, %v4829
        %v4831 = vlaneseq
        %v4832 = vshrl.u32 %v4831, 7
        %v4833 = vsub.s32 3, %v4832
        %v4834 = vrot.slane %v4817, %v4833
        %v4839 = vadd.f32 %v4805, %v4822
        %v4840 = vadd.f32 %v4806, %v4826
        %v4841 = vadd.f32 %v4807, %v4830
        %v4842 = vadd.f32 %v4808, %v4834
        %v4843 = vadd.f32 %v4809, %v4822
        %v4844 = vadd.f32 %v4810, %v4826
        %v4845 = vadd.f32 %v4811, %v4830
        %v4846 = vadd.f32 %v4812, %v4834
        %v4847 = vadd.f32 %v4813, %v4822
        %v4848 = vadd.f32 %v4814, %v4826
        %v4849 = vadd.f32 %v4815, %v4830
        %v4850 = vadd.f32 %v4816, %v4834
        %v4851 = vmax.f32 %v4839, 0.0
        %v4852 = vmax.f32 %v4840, 0.0
        %v4853 = vmax.f32 %v4841, 0.0
        %v4854 = vmax.f32 %v4842, 0.0
        %v4855 = vmax.f32 %v4843, 0.0
        %v4856 = vmax.f32 %v4844, 0.0
        %v4857 = vmax.f32 %v4845, 0.0
        %v4858 = vmax.f32 %v4846, 0.0
        %v4859 = vmax.f32 %v4847, 0.0
        %v4860 = vmax.f32 %v4848, 0.0
        %v4861 = vmax.f32 %v4849, 0.0
        %v4862 = vmax.f32 %v4850, 0.0
        %v4863 = vpack.c.bf16 %v4855, %v4851
        %v4864 = vpack.c.bf16 %v4856, %v4852
        %v4865 = vpack.c.bf16 %v4857, %v4853
        %v4866 = vpack.c.bf16 %v4858, %v4854
        %v4867 = vpack.c.bf16 %v4859, %v4859
        %v4868 = vpack.c.bf16 %v4860, %v4860
        %v4869 = vpack.c.bf16 %v4861, %v4861
        %v4870 = vpack.c.bf16 %v4862, %v4862
        %v4879 = vunpack.c.l.b16 %v4863
        %v4880 = vunpack.c.l.b16 %v4864
        %v4881 = vunpack.c.l.b16 %v4865
        %v4882 = vunpack.c.l.b16 %v4866
        %v4883 = vunpack.c.h.b16 %v4863
        %v4884 = vunpack.c.h.b16 %v4864
        %v4885 = vunpack.c.h.b16 %v4865
        %v4886 = vunpack.c.h.b16 %v4866
        %v4887 = vunpack.c.l.b16 %v4867
        %v4888 = vunpack.c.l.b16 %v4868
        %v4889 = vunpack.c.l.b16 %v4869
        %v4890 = vunpack.c.l.b16 %v4870
        %v4891 = vpack.c.b16 %v4880, %v4879
        %v4892 = vpack.c.b16 %v4882, %v4881
        %v4893 = vpack.c.b16 %v4884, %v4883
        %v4894 = vpack.c.b16 %v4886, %v4885
        %v4895 = vpack.c.b16 %v4888, %v4887
        %v4896 = vpack.c.b16 %v4890, %v4889
        %4903 = vst [vmem:[#allocation3] sm:$0xff] %v4891
        %4904 = vst [vmem:[#allocation3 + $0x8] sm:$0xff] %v4892
        %4905 = vst [vmem:[#allocation3 + $0x10] sm:$0xff] %v4893
        %4906 = vst [vmem:[#allocation3 + $0x18] sm:$0xff] %v4894
        %4907 = vst [vmem:[#allocation3 + $0x20] sm:$0x11] %v4895
        %4908 = vst [vmem:[#allocation3 + $0x28] sm:$0x11] %v4896
        %v4909 = vld [vmem:[#allocation3] sm:$0xff]
        %v4910 = vld [vmem:[#allocation3 + $0x8] sm:$0xff]
        %v4911 = vld [vmem:[#allocation3 + $0x10] sm:$0xff]
        %v4912 = vld [vmem:[#allocation3 + $0x18] sm:$0xff]
        %v4913 = vld [vmem:[#allocation12] sm:$0xff]
        %v4914 = vld [vmem:[#allocation12 + $0x8] sm:$0xff]
        %v4915 = vld [vmem:[#allocation12 + $0x10] sm:$0xff]
        %v4916 = vld [vmem:[#allocation12 + $0x18] sm:$0xff]
        %v4917 = vld [vmem:[#allocation12 + $0x20] sm:$0xff]
        %v4918 = vld [vmem:[#allocation12 + $0x28] sm:$0xff]
        %v4919 = vld [vmem:[#allocation12 + $0x30] sm:$0xff]
        %v4920 = vld [vmem:[#allocation12 + $0x38] sm:$0xff]
        %v4921 = vld [vmem:[#allocation12 + $0x40] sm:$0xff]
        %v4922 = vld [vmem:[#allocation12 + $0x48] sm:$0xff]
        %v4923 = vld [vmem:[#allocation12 + $0x50] sm:$0xff]
        %v4924 = vld [vmem:[#allocation12 + $0x58] sm:$0xff]
        %v4925 = vld [vmem:[#allocation12 + $0x60] sm:$0xff]
        %v4926 = vld [vmem:[#allocation12 + $0x68] sm:$0xff]
        %v4927 = vld [vmem:[#allocation12 + $0x70] sm:$0xff]
        %v4928 = vld [vmem:[#allocation12 + $0x78] sm:$0xff]
        %v4929 = vld [vmem:[#allocation12 + $0x80] sm:$0xff]
        %v4930 = vld [vmem:[#allocation12 + $0x88] sm:$0xff]
        %v4931 = vld [vmem:[#allocation12 + $0x90] sm:$0xff]
        %v4932 = vld [vmem:[#allocation12 + $0x98] sm:$0xff]
        %v4933 = vld [vmem:[#allocation12 + $0xa0] sm:$0xff]
        %v4934 = vld [vmem:[#allocation12 + $0xa8] sm:$0xff]
        %v4935 = vld [vmem:[#allocation12 + $0xb0] sm:$0xff]
        %v4936 = vld [vmem:[#allocation12 + $0xb8] sm:$0xff]
        %v4937 = vld [vmem:[#allocation12 + $0xc0] sm:$0xff]
        %v4938 = vld [vmem:[#allocation12 + $0xc8] sm:$0xff]
        %v4939 = vld [vmem:[#allocation12 + $0xd0] sm:$0xff]
        %v4940 = vld [vmem:[#allocation12 + $0xd8] sm:$0xff]
        %v4941 = vld [vmem:[#allocation12 + $0xe0] sm:$0xff]
        %v4942 = vld [vmem:[#allocation12 + $0xe8] sm:$0xff]
        %v4943 = vld [vmem:[#allocation12 + $0xf0] sm:$0xff]
        %v4944 = vld [vmem:[#allocation12 + $0xf8] sm:$0xff]
        %v4945 = vld [vmem:[#allocation12 + $0x100] sm:$0xff]
        %v4946 = vld [vmem:[#allocation12 + $0x108] sm:$0xff]
        %v4947 = vld [vmem:[#allocation12 + $0x110] sm:$0xff]
        %v4948 = vld [vmem:[#allocation12 + $0x118] sm:$0xff]
        %v4949 = vld [vmem:[#allocation12 + $0x120] sm:$0xff]
        %v4950 = vld [vmem:[#allocation12 + $0x128] sm:$0xff]
        %v4951 = vld [vmem:[#allocation12 + $0x130] sm:$0xff]
        %v4952 = vld [vmem:[#allocation12 + $0x138] sm:$0xff]
        %v4953 = vld [vmem:[#allocation12 + $0x140] sm:$0xff]
        %v4954 = vld [vmem:[#allocation12 + $0x148] sm:$0xff]
        %v4955 = vld [vmem:[#allocation12 + $0x150] sm:$0xff]
        %v4956 = vld [vmem:[#allocation12 + $0x158] sm:$0xff]
        %v4957 = vld [vmem:[#allocation12 + $0x160] sm:$0xff]
        %v4958 = vld [vmem:[#allocation12 + $0x168] sm:$0xff]
        %v4959 = vld [vmem:[#allocation12 + $0x170] sm:$0xff]
        %v4960 = vld [vmem:[#allocation12 + $0x178] sm:$0xff]
        %v4961 = vld [vmem:[#allocation12 + $0x180] sm:$0xff]
        %v4962 = vld [vmem:[#allocation12 + $0x188] sm:$0xff]
        %v4963 = vld [vmem:[#allocation12 + $0x190] sm:$0xff]
        %v4964 = vld [vmem:[#allocation12 + $0x198] sm:$0xff]
        %v4965 = vld [vmem:[#allocation12 + $0x1a0] sm:$0xff]
        %v4966 = vld [vmem:[#allocation12 + $0x1a8] sm:$0xff]
        %v4967 = vld [vmem:[#allocation12 + $0x1b0] sm:$0xff]
        %v4968 = vld [vmem:[#allocation12 + $0x1b8] sm:$0xff]
        %v4969 = vld [vmem:[#allocation12 + $0x1c0] sm:$0xff]
        %v4970 = vld [vmem:[#allocation12 + $0x1c8] sm:$0xff]
        %v4971 = vld [vmem:[#allocation12 + $0x1d0] sm:$0xff]
        %v4972 = vld [vmem:[#allocation12 + $0x1d8] sm:$0xff]
        %v4973 = vld [vmem:[#allocation12 + $0x1e0] sm:$0xff]
        %v4974 = vld [vmem:[#allocation12 + $0x1e8] sm:$0xff]
        %v4975 = vld [vmem:[#allocation12 + $0x1f0] sm:$0xff]
        %v4976 = vld [vmem:[#allocation12 + $0x1f8] sm:$0xff]
        %v4977 = vld [vmem:[#allocation12 + $0x200] sm:$0xff]
        %v4978 = vld [vmem:[#allocation12 + $0x208] sm:$0xff]
        %v4979 = vld [vmem:[#allocation12 + $0x210] sm:$0xff]
        %v4980 = vld [vmem:[#allocation12 + $0x218] sm:$0xff]
        %v4981 = vld [vmem:[#allocation12 + $0x220] sm:$0xff]
        %v4982 = vld [vmem:[#allocation12 + $0x228] sm:$0xff]
        %v4983 = vld [vmem:[#allocation12 + $0x230] sm:$0xff]
        %v4984 = vld [vmem:[#allocation12 + $0x238] sm:$0xff]
        %v4985 = vld [vmem:[#allocation12 + $0x240] sm:$0xff]
        %v4986 = vld [vmem:[#allocation12 + $0x248] sm:$0xff]
        %v4987 = vld [vmem:[#allocation12 + $0x250] sm:$0xff]
        %v4988 = vld [vmem:[#allocation12 + $0x258] sm:$0xff]
        %v4989 = vld [vmem:[#allocation12 + $0x260] sm:$0xff]
        %v4990 = vld [vmem:[#allocation12 + $0x268] sm:$0xff]
        %v4991 = vld [vmem:[#allocation12 + $0x270] sm:$0xff]
        %v4992 = vld [vmem:[#allocation12 + $0x278] sm:$0xff]
        %v4993 = vld [vmem:[#allocation12 + $0x280] sm:$0xff]
        %v4994 = vld [vmem:[#allocation12 + $0x288] sm:$0xff]
        %v4995 = vld [vmem:[#allocation12 + $0x290] sm:$0xff]
        %v4996 = vld [vmem:[#allocation12 + $0x298] sm:$0xff]
        %v4997 = vld [vmem:[#allocation12 + $0x2a0] sm:$0xff]
        %v4998 = vld [vmem:[#allocation12 + $0x2a8] sm:$0xff]
        %v4999 = vld [vmem:[#allocation12 + $0x2b0] sm:$0xff]
        %v5000 = vld [vmem:[#allocation12 + $0x2b8] sm:$0xff]
        %v5001 = vld [vmem:[#allocation12 + $0x2c0] sm:$0xff]
        %v5002 = vld [vmem:[#allocation12 + $0x2c8] sm:$0xff]
        %v5003 = vld [vmem:[#allocation12 + $0x2d0] sm:$0xff]
        %v5004 = vld [vmem:[#allocation12 + $0x2d8] sm:$0xff]
        %v5005 = vld [vmem:[#allocation12 + $0x2e0] sm:$0xff]
        %v5006 = vld [vmem:[#allocation12 + $0x2e8] sm:$0xff]
        %v5007 = vld [vmem:[#allocation12 + $0x2f0] sm:$0xff]
        %v5008 = vld [vmem:[#allocation12 + $0x2f8] sm:$0xff]
        %v5009 = vld [vmem:[#allocation12 + $0x300] sm:$0xff]
        %v5010 = vld [vmem:[#allocation12 + $0x308] sm:$0xff]
        %v5011 = vld [vmem:[#allocation12 + $0x310] sm:$0xff]
        %v5012 = vld [vmem:[#allocation12 + $0x318] sm:$0xff]
        %v5013 = vld [vmem:[#allocation12 + $0x320] sm:$0xff]
        %v5014 = vld [vmem:[#allocation12 + $0x328] sm:$0xff]
        %v5015 = vld [vmem:[#allocation12 + $0x330] sm:$0xff]
        %v5016 = vld [vmem:[#allocation12 + $0x338] sm:$0xff]
        %v5017 = vld [vmem:[#allocation12 + $0x340] sm:$0xff]
        %v5018 = vld [vmem:[#allocation12 + $0x348] sm:$0xff]
        %v5019 = vld [vmem:[#allocation12 + $0x350] sm:$0xff]
        %v5020 = vld [vmem:[#allocation12 + $0x358] sm:$0xff]
        %v5021 = vld [vmem:[#allocation12 + $0x360] sm:$0xff]
        %v5022 = vld [vmem:[#allocation12 + $0x368] sm:$0xff]
        %v5023 = vld [vmem:[#allocation12 + $0x370] sm:$0xff]
        %v5024 = vld [vmem:[#allocation12 + $0x378] sm:$0xff]
        %v5025 = vld [vmem:[#allocation12 + $0x380] sm:$0xff]
        %v5026 = vld [vmem:[#allocation12 + $0x388] sm:$0xff]
        %v5027 = vld [vmem:[#allocation12 + $0x390] sm:$0xff]
        %v5028 = vld [vmem:[#allocation12 + $0x398] sm:$0xff]
        %v5029 = vld [vmem:[#allocation12 + $0x3a0] sm:$0xff]
        %v5030 = vld [vmem:[#allocation12 + $0x3a8] sm:$0xff]
        %v5031 = vld [vmem:[#allocation12 + $0x3b0] sm:$0xff]
        %v5032 = vld [vmem:[#allocation12 + $0x3b8] sm:$0xff]
        %v5033 = vld [vmem:[#allocation12 + $0x3c0] sm:$0xff]
        %v5034 = vld [vmem:[#allocation12 + $0x3c8] sm:$0xff]
        %v5035 = vld [vmem:[#allocation12 + $0x3d0] sm:$0xff]
        %v5036 = vld [vmem:[#allocation12 + $0x3d8] sm:$0xff]
        %v5037 = vld [vmem:[#allocation12 + $0x3e0] sm:$0xff]
        %v5038 = vld [vmem:[#allocation12 + $0x3e8] sm:$0xff]
        %v5039 = vld [vmem:[#allocation12 + $0x3f0] sm:$0xff]
        %v5040 = vld [vmem:[#allocation12 + $0x3f8] sm:$0xff]
        %v5041 = vld [vmem:[#allocation3] sm:$0xee]
        %v5042 = vld [vmem:[#allocation3 + $0x8] sm:$0xee]
        %v5043 = vld [vmem:[#allocation3 + $0x20] sm:$0x11]
        %v5044 = vld [vmem:[#allocation3 + $0x28] sm:$0x11]
        %v5045 = vld [vmem:[#allocation12 + $0x400] sm:$0xff]
        %v5046 = vld [vmem:[#allocation12 + $0x408] sm:$0xff]
        %v5047 = vld [vmem:[#allocation12 + $0x410] sm:$0xff]
        %v5048 = vld [vmem:[#allocation12 + $0x418] sm:$0xff]
        %v5049 = vld [vmem:[#allocation12 + $0x420] sm:$0xff]
        %v5050 = vld [vmem:[#allocation12 + $0x428] sm:$0xff]
        %v5051 = vld [vmem:[#allocation12 + $0x430] sm:$0xff]
        %v5052 = vld [vmem:[#allocation12 + $0x438] sm:$0xff]
        %v5053 = vld [vmem:[#allocation12 + $0x440] sm:$0xff]
        %v5054 = vld [vmem:[#allocation12 + $0x448] sm:$0xff]
        %v5055 = vld [vmem:[#allocation12 + $0x450] sm:$0xff]
        %v5056 = vld [vmem:[#allocation12 + $0x458] sm:$0xff]
        %v5057 = vld [vmem:[#allocation12 + $0x460] sm:$0xff]
        %v5058 = vld [vmem:[#allocation12 + $0x468] sm:$0xff]
        %v5059 = vld [vmem:[#allocation12 + $0x470] sm:$0xff]
        %v5060 = vld [vmem:[#allocation12 + $0x478] sm:$0xff]
        %v5061 = vld [vmem:[#allocation12 + $0x480] sm:$0xff]
        %v5062 = vld [vmem:[#allocation12 + $0x488] sm:$0xff]
        %v5063 = vld [vmem:[#allocation12 + $0x490] sm:$0xff]
        %v5064 = vld [vmem:[#allocation12 + $0x498] sm:$0xff]
        %v5065 = vld [vmem:[#allocation12 + $0x4a0] sm:$0xff]
        %v5066 = vld [vmem:[#allocation12 + $0x4a8] sm:$0xff]
        %v5067 = vld [vmem:[#allocation12 + $0x4b0] sm:$0xff]
        %v5068 = vld [vmem:[#allocation12 + $0x4b8] sm:$0xff]
        %v5069 = vld [vmem:[#allocation12 + $0x4c0] sm:$0xff]
        %v5070 = vld [vmem:[#allocation12 + $0x4c8] sm:$0xff]
        %v5071 = vld [vmem:[#allocation12 + $0x4d0] sm:$0xff]
        %v5072 = vld [vmem:[#allocation12 + $0x4d8] sm:$0xff]
        %v5073 = vld [vmem:[#allocation12 + $0x4e0] sm:$0xff]
        %v5074 = vld [vmem:[#allocation12 + $0x4e8] sm:$0xff]
        %v5075 = vld [vmem:[#allocation12 + $0x4f0] sm:$0xff]
        %v5076 = vld [vmem:[#allocation12 + $0x4f8] sm:$0xff]
        %v5077 = vld [vmem:[#allocation12 + $0x500] sm:$0xff]
        %v5078 = vld [vmem:[#allocation12 + $0x508] sm:$0xff]
        %v5079 = vld [vmem:[#allocation12 + $0x510] sm:$0xff]
        %v5080 = vld [vmem:[#allocation12 + $0x518] sm:$0xff]
        %v5081 = vld [vmem:[#allocation12 + $0x520] sm:$0xff]
        %v5082 = vld [vmem:[#allocation12 + $0x528] sm:$0xff]
        %v5083 = vld [vmem:[#allocation12 + $0x530] sm:$0xff]
        %v5084 = vld [vmem:[#allocation12 + $0x538] sm:$0xff]
        %v5085 = vld [vmem:[#allocation12 + $0x540] sm:$0xff]
        %v5086 = vld [vmem:[#allocation12 + $0x548] sm:$0xff]
        %v5087 = vld [vmem:[#allocation12 + $0x550] sm:$0xff]
        %v5088 = vld [vmem:[#allocation12 + $0x558] sm:$0xff]
        %v5089 = vld [vmem:[#allocation12 + $0x560] sm:$0xff]
        %v5090 = vld [vmem:[#allocation12 + $0x568] sm:$0xff]
        %v5091 = vld [vmem:[#allocation12 + $0x570] sm:$0xff]
        %v5092 = vld [vmem:[#allocation12 + $0x578] sm:$0xff]
        %v5093 = vld [vmem:[#allocation12 + $0x580] sm:$0xff]
        %v5094 = vld [vmem:[#allocation12 + $0x588] sm:$0xff]
        %v5095 = vld [vmem:[#allocation12 + $0x590] sm:$0xff]
        %v5096 = vld [vmem:[#allocation12 + $0x598] sm:$0xff]
        %v5097 = vld [vmem:[#allocation12 + $0x5a0] sm:$0xff]
        %v5098 = vld [vmem:[#allocation12 + $0x5a8] sm:$0xff]
        %v5099 = vld [vmem:[#allocation12 + $0x5b0] sm:$0xff]
        %v5100 = vld [vmem:[#allocation12 + $0x5b8] sm:$0xff]
        %v5101 = vld [vmem:[#allocation12 + $0x5c0] sm:$0xff]
        %v5102 = vld [vmem:[#allocation12 + $0x5c8] sm:$0xff]
        %v5103 = vld [vmem:[#allocation12 + $0x5d0] sm:$0xff]
        %v5104 = vld [vmem:[#allocation12 + $0x5d8] sm:$0xff]
        %v5105 = vld [vmem:[#allocation12 + $0x5e0] sm:$0xff]
        %v5106 = vld [vmem:[#allocation12 + $0x5e8] sm:$0xff]
        %v5107 = vld [vmem:[#allocation12 + $0x5f0] sm:$0xff]
        %v5108 = vld [vmem:[#allocation12 + $0x5f8] sm:$0xff]
        %v5109 = vld [vmem:[#allocation12 + $0x600] sm:$0xff]
        %v5110 = vld [vmem:[#allocation12 + $0x608] sm:$0xff]
        %v5111 = vld [vmem:[#allocation12 + $0x610] sm:$0xff]
        %v5112 = vld [vmem:[#allocation12 + $0x618] sm:$0xff]
        %v5113 = vld [vmem:[#allocation12 + $0x620] sm:$0xff]
        %v5114 = vld [vmem:[#allocation12 + $0x628] sm:$0xff]
        %v5115 = vld [vmem:[#allocation12 + $0x630] sm:$0xff]
        %v5116 = vld [vmem:[#allocation12 + $0x638] sm:$0xff]
        %v5117 = vld [vmem:[#allocation12 + $0x640] sm:$0xff]
        %v5118 = vld [vmem:[#allocation12 + $0x648] sm:$0xff]
        %v5119 = vld [vmem:[#allocation12 + $0x650] sm:$0xff]
        %v5120 = vld [vmem:[#allocation12 + $0x658] sm:$0xff]
        %v5121 = vld [vmem:[#allocation12 + $0x660] sm:$0xff]
        %v5122 = vld [vmem:[#allocation12 + $0x668] sm:$0xff]
        %v5123 = vld [vmem:[#allocation12 + $0x670] sm:$0xff]
        %v5124 = vld [vmem:[#allocation12 + $0x678] sm:$0xff]
        %v5125 = vld [vmem:[#allocation12 + $0x680] sm:$0xff]
        %v5126 = vld [vmem:[#allocation12 + $0x688] sm:$0xff]
        %v5127 = vld [vmem:[#allocation12 + $0x690] sm:$0xff]
        %v5128 = vld [vmem:[#allocation12 + $0x698] sm:$0xff]
        %v5129 = vld [vmem:[#allocation12 + $0x6a0] sm:$0xff]
        %v5130 = vld [vmem:[#allocation12 + $0x6a8] sm:$0xff]
        %v5131 = vld [vmem:[#allocation12 + $0x6b0] sm:$0xff]
        %v5132 = vld [vmem:[#allocation12 + $0x6b8] sm:$0xff]
        %v5133 = vld [vmem:[#allocation12 + $0x6c0] sm:$0xff]
        %v5134 = vld [vmem:[#allocation12 + $0x6c8] sm:$0xff]
        %v5135 = vld [vmem:[#allocation12 + $0x6d0] sm:$0xff]
        %v5136 = vld [vmem:[#allocation12 + $0x6d8] sm:$0xff]
        %v5137 = vld [vmem:[#allocation12 + $0x6e0] sm:$0xff]
        %v5138 = vld [vmem:[#allocation12 + $0x6e8] sm:$0xff]
        %v5139 = vld [vmem:[#allocation12 + $0x6f0] sm:$0xff]
        %v5140 = vld [vmem:[#allocation12 + $0x6f8] sm:$0xff]
        %v5141 = vld [vmem:[#allocation12 + $0x700] sm:$0xff]
        %v5142 = vld [vmem:[#allocation12 + $0x708] sm:$0xff]
        %v5143 = vld [vmem:[#allocation12 + $0x710] sm:$0xff]
        %v5144 = vld [vmem:[#allocation12 + $0x718] sm:$0xff]
        %v5145 = vld [vmem:[#allocation12 + $0x720] sm:$0xff]
        %v5146 = vld [vmem:[#allocation12 + $0x728] sm:$0xff]
        %v5147 = vld [vmem:[#allocation12 + $0x730] sm:$0xff]
        %v5148 = vld [vmem:[#allocation12 + $0x738] sm:$0xff]
        %v5149 = vld [vmem:[#allocation12 + $0x740] sm:$0xff]
        %v5150 = vld [vmem:[#allocation12 + $0x748] sm:$0xff]
        %v5151 = vld [vmem:[#allocation12 + $0x750] sm:$0xff]
        %v5152 = vld [vmem:[#allocation12 + $0x758] sm:$0xff]
        %v5153 = vld [vmem:[#allocation12 + $0x760] sm:$0xff]
        %v5154 = vld [vmem:[#allocation12 + $0x768] sm:$0xff]
        %v5155 = vld [vmem:[#allocation12 + $0x770] sm:$0xff]
        %v5156 = vld [vmem:[#allocation12 + $0x778] sm:$0xff]
        %v5157 = vld [vmem:[#allocation12 + $0x780] sm:$0xff]
        %v5158 = vld [vmem:[#allocation12 + $0x788] sm:$0xff]
        %v5159 = vld [vmem:[#allocation12 + $0x790] sm:$0xff]
        %v5160 = vld [vmem:[#allocation12 + $0x798] sm:$0xff]
        %v5161 = vld [vmem:[#allocation12 + $0x7a0] sm:$0xff]
        %v5162 = vld [vmem:[#allocation12 + $0x7a8] sm:$0xff]
        %v5163 = vld [vmem:[#allocation12 + $0x7b0] sm:$0xff]
        %v5164 = vld [vmem:[#allocation12 + $0x7b8] sm:$0xff]
        %v5165 = vld [vmem:[#allocation12 + $0x7c0] sm:$0xff]
        %v5166 = vld [vmem:[#allocation12 + $0x7c8] sm:$0xff]
        %v5167 = vld [vmem:[#allocation12 + $0x7d0] sm:$0xff]
        %v5168 = vld [vmem:[#allocation12 + $0x7d8] sm:$0xff]
        %v5169 = vld [vmem:[#allocation12 + $0x7e0] sm:$0xff]
        %v5170 = vld [vmem:[#allocation12 + $0x7e8] sm:$0xff]
        %v5171 = vld [vmem:[#allocation12 + $0x7f0] sm:$0xff]
        %v5172 = vld [vmem:[#allocation12 + $0x7f8] sm:$0xff]
        %v5179 = vunpack.c.l.b16 %v5041
        %v5180 = vunpack.c.h.b16 %v5041
        %v5181 = vunpack.c.l.b16 %v5042
        %v5182 = vunpack.c.h.b16 %v5042
        %v5183 = vunpack.c.l.b16 %v4911
        %v5184 = vunpack.c.h.b16 %v4911
        %v5185 = vunpack.c.l.b16 %v4912
        %v5186 = vunpack.c.h.b16 %v4912
        %v5187 = vunpack.c.l.b16 %v5043
        %v5188 = vunpack.c.h.b16 %v5043
        %v5189 = vunpack.c.l.b16 %v5044
        %v5190 = vunpack.c.h.b16 %v5044
        %v5191 = vpack.c.b16 %v5183, %v5179
        %v5192 = vpack.c.b16 %v5184, %v5180
        %v5193 = vpack.c.b16 %v5185, %v5181
        %v5194 = vpack.c.b16 %v5186, %v5182
        %v5195 = vpack.c.b16 %v5187, %v5187
        %v5196 = vpack.c.b16 %v5188, %v5188
        %v5197 = vpack.c.b16 %v5189, %v5189
        %v5198 = vpack.c.b16 %v5190, %v5190
        %v5199 = vrot.slane %v5191, 1
        %v5200 = vrot.slane %v5195, 1
        %v5201 = vsel %vm3940, %v5199, %v5200
        %v5202 = vrot.slane %v5192, 1
        %v5203 = vrot.slane %v5196, 1
        %v5204 = vsel %vm3940, %v5202, %v5203
        %v5205 = vrot.slane %v5193, 1
        %v5206 = vrot.slane %v5197, 1
        %v5207 = vsel %vm3940, %v5205, %v5206
        %v5208 = vrot.slane %v5194, 1
        %v5209 = vrot.slane %v5198, 1
        %v5210 = vsel %vm3940, %v5208, %v5209
        %v5343 = vunpack.c.l.b16 %v5045
        %v5344 = vunpack.c.h.b16 %v5045
        %v5345 = vunpack.c.l.b16 %v5046
        %v5346 = vunpack.c.h.b16 %v5046
        %v5347 = vunpack.c.l.b16 %v5047
        %v5348 = vunpack.c.h.b16 %v5047
        %v5349 = vunpack.c.l.b16 %v5048
        %v5350 = vunpack.c.h.b16 %v5048
        %v5351 = vunpack.c.l.b16 %v5049
        %v5352 = vunpack.c.h.b16 %v5049
        %v5353 = vunpack.c.l.b16 %v5050
        %v5354 = vunpack.c.h.b16 %v5050
        %v5355 = vunpack.c.l.b16 %v5051
        %v5356 = vunpack.c.h.b16 %v5051
        %v5357 = vunpack.c.l.b16 %v5052
        %v5358 = vunpack.c.h.b16 %v5052
        %v5359 = vunpack.c.l.b16 %v5053
        %v5360 = vunpack.c.h.b16 %v5053
        %v5361 = vunpack.c.l.b16 %v5054
        %v5362 = vunpack.c.h.b16 %v5054
        %v5363 = vunpack.c.l.b16 %v5055
        %v5364 = vunpack.c.h.b16 %v5055
        %v5365 = vunpack.c.l.b16 %v5056
        %v5366 = vunpack.c.h.b16 %v5056
        %v5367 = vunpack.c.l.b16 %v5057
        %v5368 = vunpack.c.h.b16 %v5057
        %v5369 = vunpack.c.l.b16 %v5058
        %v5370 = vunpack.c.h.b16 %v5058
        %v5371 = vunpack.c.l.b16 %v5059
        %v5372 = vunpack.c.h.b16 %v5059
        %v5373 = vunpack.c.l.b16 %v5060
        %v5374 = vunpack.c.h.b16 %v5060
        %v5375 = vunpack.c.l.b16 %v5061
        %v5376 = vunpack.c.h.b16 %v5061
        %v5377 = vunpack.c.l.b16 %v5062
        %v5378 = vunpack.c.h.b16 %v5062
        %v5379 = vunpack.c.l.b16 %v5063
        %v5380 = vunpack.c.h.b16 %v5063
        %v5381 = vunpack.c.l.b16 %v5064
        %v5382 = vunpack.c.h.b16 %v5064
        %v5383 = vunpack.c.l.b16 %v5065
        %v5384 = vunpack.c.h.b16 %v5065
        %v5385 = vunpack.c.l.b16 %v5066
        %v5386 = vunpack.c.h.b16 %v5066
        %v5387 = vunpack.c.l.b16 %v5067
        %v5388 = vunpack.c.h.b16 %v5067
        %v5389 = vunpack.c.l.b16 %v5068
        %v5390 = vunpack.c.h.b16 %v5068
        %v5391 = vunpack.c.l.b16 %v5069
        %v5392 = vunpack.c.h.b16 %v5069
        %v5393 = vunpack.c.l.b16 %v5070
        %v5394 = vunpack.c.h.b16 %v5070
        %v5395 = vunpack.c.l.b16 %v5071
        %v5396 = vunpack.c.h.b16 %v5071
        %v5397 = vunpack.c.l.b16 %v5072
        %v5398 = vunpack.c.h.b16 %v5072
        %v5399 = vunpack.c.l.b16 %v5073
        %v5400 = vunpack.c.h.b16 %v5073
        %v5401 = vunpack.c.l.b16 %v5074
        %v5402 = vunpack.c.h.b16 %v5074
        %v5403 = vunpack.c.l.b16 %v5075
        %v5404 = vunpack.c.h.b16 %v5075
        %v5405 = vunpack.c.l.b16 %v5076
        %v5406 = vunpack.c.h.b16 %v5076
        %v5407 = vunpack.c.l.b16 %v5077
        %v5408 = vunpack.c.h.b16 %v5077
        %v5409 = vunpack.c.l.b16 %v5078
        %v5410 = vunpack.c.h.b16 %v5078
        %v5411 = vunpack.c.l.b16 %v5079
        %v5412 = vunpack.c.h.b16 %v5079
        %v5413 = vunpack.c.l.b16 %v5080
        %v5414 = vunpack.c.h.b16 %v5080
        %v5415 = vunpack.c.l.b16 %v5081
        %v5416 = vunpack.c.h.b16 %v5081
        %v5417 = vunpack.c.l.b16 %v5082
        %v5418 = vunpack.c.h.b16 %v5082
        %v5419 = vunpack.c.l.b16 %v5083
        %v5420 = vunpack.c.h.b16 %v5083
        %v5421 = vunpack.c.l.b16 %v5084
        %v5422 = vunpack.c.h.b16 %v5084
        %v5423 = vunpack.c.l.b16 %v5085
        %v5424 = vunpack.c.h.b16 %v5085
        %v5425 = vunpack.c.l.b16 %v5086
        %v5426 = vunpack.c.h.b16 %v5086
        %v5427 = vunpack.c.l.b16 %v5087
        %v5428 = vunpack.c.h.b16 %v5087
        %v5429 = vunpack.c.l.b16 %v5088
        %v5430 = vunpack.c.h.b16 %v5088
        %v5431 = vunpack.c.l.b16 %v5089
        %v5432 = vunpack.c.h.b16 %v5089
        %v5433 = vunpack.c.l.b16 %v5090
        %v5434 = vunpack.c.h.b16 %v5090
        %v5435 = vunpack.c.l.b16 %v5091
        %v5436 = vunpack.c.h.b16 %v5091
        %v5437 = vunpack.c.l.b16 %v5092
        %v5438 = vunpack.c.h.b16 %v5092
        %v5439 = vunpack.c.l.b16 %v5093
        %v5440 = vunpack.c.h.b16 %v5093
        %v5441 = vunpack.c.l.b16 %v5094
        %v5442 = vunpack.c.h.b16 %v5094
        %v5443 = vunpack.c.l.b16 %v5095
        %v5444 = vunpack.c.h.b16 %v5095
        %v5445 = vunpack.c.l.b16 %v5096
        %v5446 = vunpack.c.h.b16 %v5096
        %v5447 = vunpack.c.l.b16 %v5097
        %v5448 = vunpack.c.h.b16 %v5097
        %v5449 = vunpack.c.l.b16 %v5098
        %v5450 = vunpack.c.h.b16 %v5098
        %v5451 = vunpack.c.l.b16 %v5099
        %v5452 = vunpack.c.h.b16 %v5099
        %v5453 = vunpack.c.l.b16 %v5100
        %v5454 = vunpack.c.h.b16 %v5100
        %v5455 = vunpack.c.l.b16 %v5101
        %v5456 = vunpack.c.h.b16 %v5101
        %v5457 = vunpack.c.l.b16 %v5102
        %v5458 = vunpack.c.h.b16 %v5102
        %v5459 = vunpack.c.l.b16 %v5103
        %v5460 = vunpack.c.h.b16 %v5103
        %v5461 = vunpack.c.l.b16 %v5104
        %v5462 = vunpack.c.h.b16 %v5104
        %v5463 = vunpack.c.l.b16 %v5105
        %v5464 = vunpack.c.h.b16 %v5105
        %v5465 = vunpack.c.l.b16 %v5106
        %v5466 = vunpack.c.h.b16 %v5106
        %v5467 = vunpack.c.l.b16 %v5107
        %v5468 = vunpack.c.h.b16 %v5107
        %v5469 = vunpack.c.l.b16 %v5108
        %v5470 = vunpack.c.h.b16 %v5108
        %v5471 = vunpack.c.l.b16 %v5109
        %v5472 = vunpack.c.h.b16 %v5109
        %v5473 = vunpack.c.l.b16 %v5110
        %v5474 = vunpack.c.h.b16 %v5110
        %v5475 = vunpack.c.l.b16 %v5111
        %v5476 = vunpack.c.h.b16 %v5111
        %v5477 = vunpack.c.l.b16 %v5112
        %v5478 = vunpack.c.h.b16 %v5112
        %v5479 = vunpack.c.l.b16 %v5113
        %v5480 = vunpack.c.h.b16 %v5113
        %v5481 = vunpack.c.l.b16 %v5114
        %v5482 = vunpack.c.h.b16 %v5114
        %v5483 = vunpack.c.l.b16 %v5115
        %v5484 = vunpack.c.h.b16 %v5115
        %v5485 = vunpack.c.l.b16 %v5116
        %v5486 = vunpack.c.h.b16 %v5116
        %v5487 = vunpack.c.l.b16 %v5117
        %v5488 = vunpack.c.h.b16 %v5117
        %v5489 = vunpack.c.l.b16 %v5118
        %v5490 = vunpack.c.h.b16 %v5118
        %v5491 = vunpack.c.l.b16 %v5119
        %v5492 = vunpack.c.h.b16 %v5119
        %v5493 = vunpack.c.l.b16 %v5120
        %v5494 = vunpack.c.h.b16 %v5120
        %v5495 = vunpack.c.l.b16 %v5121
        %v5496 = vunpack.c.h.b16 %v5121
        %v5497 = vunpack.c.l.b16 %v5122
        %v5498 = vunpack.c.h.b16 %v5122
        %v5499 = vunpack.c.l.b16 %v5123
        %v5500 = vunpack.c.h.b16 %v5123
        %v5501 = vunpack.c.l.b16 %v5124
        %v5502 = vunpack.c.h.b16 %v5124
        %v5503 = vunpack.c.l.b16 %v5125
        %v5504 = vunpack.c.h.b16 %v5125
        %v5505 = vunpack.c.l.b16 %v5126
        %v5506 = vunpack.c.h.b16 %v5126
        %v5507 = vunpack.c.l.b16 %v5127
        %v5508 = vunpack.c.h.b16 %v5127
        %v5509 = vunpack.c.l.b16 %v5128
        %v5510 = vunpack.c.h.b16 %v5128
        %v5511 = vunpack.c.l.b16 %v5129
        %v5512 = vunpack.c.h.b16 %v5129
        %v5513 = vunpack.c.l.b16 %v5130
        %v5514 = vunpack.c.h.b16 %v5130
        %v5515 = vunpack.c.l.b16 %v5131
        %v5516 = vunpack.c.h.b16 %v5131
        %v5517 = vunpack.c.l.b16 %v5132
        %v5518 = vunpack.c.h.b16 %v5132
        %v5519 = vunpack.c.l.b16 %v5133
        %v5520 = vunpack.c.h.b16 %v5133
        %v5521 = vunpack.c.l.b16 %v5134
        %v5522 = vunpack.c.h.b16 %v5134
        %v5523 = vunpack.c.l.b16 %v5135
        %v5524 = vunpack.c.h.b16 %v5135
        %v5525 = vunpack.c.l.b16 %v5136
        %v5526 = vunpack.c.h.b16 %v5136
        %v5527 = vunpack.c.l.b16 %v5137
        %v5528 = vunpack.c.h.b16 %v5137
        %v5529 = vunpack.c.l.b16 %v5138
        %v5530 = vunpack.c.h.b16 %v5138
        %v5531 = vunpack.c.l.b16 %v5139
        %v5532 = vunpack.c.h.b16 %v5139
        %v5533 = vunpack.c.l.b16 %v5140
        %v5534 = vunpack.c.h.b16 %v5140
        %v5535 = vunpack.c.l.b16 %v5141
        %v5536 = vunpack.c.h.b16 %v5141
        %v5537 = vunpack.c.l.b16 %v5142
        %v5538 = vunpack.c.h.b16 %v5142
        %v5539 = vunpack.c.l.b16 %v5143
        %v5540 = vunpack.c.h.b16 %v5143
        %v5541 = vunpack.c.l.b16 %v5144
        %v5542 = vunpack.c.h.b16 %v5144
        %v5543 = vunpack.c.l.b16 %v5145
        %v5544 = vunpack.c.h.b16 %v5145
        %v5545 = vunpack.c.l.b16 %v5146
        %v5546 = vunpack.c.h.b16 %v5146
        %v5547 = vunpack.c.l.b16 %v5147
        %v5548 = vunpack.c.h.b16 %v5147
        %v5549 = vunpack.c.l.b16 %v5148
        %v5550 = vunpack.c.h.b16 %v5148
        %v5551 = vunpack.c.l.b16 %v5149
        %v5552 = vunpack.c.h.b16 %v5149
        %v5553 = vunpack.c.l.b16 %v5150
        %v5554 = vunpack.c.h.b16 %v5150
        %v5555 = vunpack.c.l.b16 %v5151
        %v5556 = vunpack.c.h.b16 %v5151
        %v5557 = vunpack.c.l.b16 %v5152
        %v5558 = vunpack.c.h.b16 %v5152
        %v5559 = vunpack.c.l.b16 %v5153
        %v5560 = vunpack.c.h.b16 %v5153
        %v5561 = vunpack.c.l.b16 %v5154
        %v5562 = vunpack.c.h.b16 %v5154
        %v5563 = vunpack.c.l.b16 %v5155
        %v5564 = vunpack.c.h.b16 %v5155
        %v5565 = vunpack.c.l.b16 %v5156
        %v5566 = vunpack.c.h.b16 %v5156
        %v5567 = vunpack.c.l.b16 %v5157
        %v5568 = vunpack.c.h.b16 %v5157
        %v5569 = vunpack.c.l.b16 %v5158
        %v5570 = vunpack.c.h.b16 %v5158
        %v5571 = vunpack.c.l.b16 %v5159
        %v5572 = vunpack.c.h.b16 %v5159
        %v5573 = vunpack.c.l.b16 %v5160
        %v5574 = vunpack.c.h.b16 %v5160
        %v5575 = vunpack.c.l.b16 %v5161
        %v5576 = vunpack.c.h.b16 %v5161
        %v5577 = vunpack.c.l.b16 %v5162
        %v5578 = vunpack.c.h.b16 %v5162
        %v5579 = vunpack.c.l.b16 %v5163
        %v5580 = vunpack.c.h.b16 %v5163
        %v5581 = vunpack.c.l.b16 %v5164
        %v5582 = vunpack.c.h.b16 %v5164
        %v5583 = vunpack.c.l.b16 %v5165
        %v5584 = vunpack.c.h.b16 %v5165
        %v5585 = vunpack.c.l.b16 %v5166
        %v5586 = vunpack.c.h.b16 %v5166
        %v5587 = vunpack.c.l.b16 %v5167
        %v5588 = vunpack.c.h.b16 %v5167
        %v5589 = vunpack.c.l.b16 %v5168
        %v5590 = vunpack.c.h.b16 %v5168
        %v5591 = vunpack.c.l.b16 %v5169
        %v5592 = vunpack.c.h.b16 %v5169
        %v5593 = vunpack.c.l.b16 %v5170
        %v5594 = vunpack.c.h.b16 %v5170
        %v5595 = vunpack.c.l.b16 %v5171
        %v5596 = vunpack.c.h.b16 %v5171
        %v5597 = vunpack.c.l.b16 %v5172
        %v5598 = vunpack.c.h.b16 %v5172
        %v5599 = vpack.c.b16 %v5347, %v5343
        %v5600 = vpack.c.b16 %v5348, %v5344
        %v5601 = vpack.c.b16 %v5349, %v5345
        %v5602 = vpack.c.b16 %v5350, %v5346
        %v5603 = vpack.c.b16 %v5355, %v5351
        %v5604 = vpack.c.b16 %v5356, %v5352
        %v5605 = vpack.c.b16 %v5357, %v5353
        %v5606 = vpack.c.b16 %v5358, %v5354
        %v5607 = vpack.c.b16 %v5363, %v5359
        %v5608 = vpack.c.b16 %v5364, %v5360
        %v5609 = vpack.c.b16 %v5365, %v5361
        %v5610 = vpack.c.b16 %v5366, %v5362
        %v5611 = vpack.c.b16 %v5371, %v5367
        %v5612 = vpack.c.b16 %v5372, %v5368
        %v5613 = vpack.c.b16 %v5373, %v5369
        %v5614 = vpack.c.b16 %v5374, %v5370
        %v5615 = vpack.c.b16 %v5379, %v5375
        %v5616 = vpack.c.b16 %v5380, %v5376
        %v5617 = vpack.c.b16 %v5381, %v5377
        %v5618 = vpack.c.b16 %v5382, %v5378
        %v5619 = vpack.c.b16 %v5387, %v5383
        %v5620 = vpack.c.b16 %v5388, %v5384
        %v5621 = vpack.c.b16 %v5389, %v5385
        %v5622 = vpack.c.b16 %v5390, %v5386
        %v5623 = vpack.c.b16 %v5395, %v5391
        %v5624 = vpack.c.b16 %v5396, %v5392
        %v5625 = vpack.c.b16 %v5397, %v5393
        %v5626 = vpack.c.b16 %v5398, %v5394
        %v5627 = vpack.c.b16 %v5403, %v5399
        %v5628 = vpack.c.b16 %v5404, %v5400
        %v5629 = vpack.c.b16 %v5405, %v5401
        %v5630 = vpack.c.b16 %v5406, %v5402
        %v5631 = vpack.c.b16 %v5411, %v5407
        %v5632 = vpack.c.b16 %v5412, %v5408
        %v5633 = vpack.c.b16 %v5413, %v5409
        %v5634 = vpack.c.b16 %v5414, %v5410
        %v5635 = vpack.c.b16 %v5419, %v5415
        %v5636 = vpack.c.b16 %v5420, %v5416
        %v5637 = vpack.c.b16 %v5421, %v5417
        %v5638 = vpack.c.b16 %v5422, %v5418
        %v5639 = vpack.c.b16 %v5427, %v5423
        %v5640 = vpack.c.b16 %v5428, %v5424
        %v5641 = vpack.c.b16 %v5429, %v5425
        %v5642 = vpack.c.b16 %v5430, %v5426
        %v5643 = vpack.c.b16 %v5435, %v5431
        %v5644 = vpack.c.b16 %v5436, %v5432
        %v5645 = vpack.c.b16 %v5437, %v5433
        %v5646 = vpack.c.b16 %v5438, %v5434
        %v5647 = vpack.c.b16 %v5443, %v5439
        %v5648 = vpack.c.b16 %v5444, %v5440
        %v5649 = vpack.c.b16 %v5445, %v5441
        %v5650 = vpack.c.b16 %v5446, %v5442
        %v5651 = vpack.c.b16 %v5451, %v5447
        %v5652 = vpack.c.b16 %v5452, %v5448
        %v5653 = vpack.c.b16 %v5453, %v5449
        %v5654 = vpack.c.b16 %v5454, %v5450
        %v5655 = vpack.c.b16 %v5459, %v5455
        %v5656 = vpack.c.b16 %v5460, %v5456
        %v5657 = vpack.c.b16 %v5461, %v5457
        %v5658 = vpack.c.b16 %v5462, %v5458
        %v5659 = vpack.c.b16 %v5467, %v5463
        %v5660 = vpack.c.b16 %v5468, %v5464
        %v5661 = vpack.c.b16 %v5469, %v5465
        %v5662 = vpack.c.b16 %v5470, %v5466
        %v5663 = vpack.c.b16 %v5475, %v5471
        %v5664 = vpack.c.b16 %v5476, %v5472
        %v5665 = vpack.c.b16 %v5477, %v5473
        %v5666 = vpack.c.b16 %v5478, %v5474
        %v5667 = vpack.c.b16 %v5483, %v5479
        %v5668 = vpack.c.b16 %v5484, %v5480
        %v5669 = vpack.c.b16 %v5485, %v5481
        %v5670 = vpack.c.b16 %v5486, %v5482
        %v5671 = vpack.c.b16 %v5491, %v5487
        %v5672 = vpack.c.b16 %v5492, %v5488
        %v5673 = vpack.c.b16 %v5493, %v5489
        %v5674 = vpack.c.b16 %v5494, %v5490
        %v5675 = vpack.c.b16 %v5499, %v5495
        %v5676 = vpack.c.b16 %v5500, %v5496
        %v5677 = vpack.c.b16 %v5501, %v5497
        %v5678 = vpack.c.b16 %v5502, %v5498
        %v5679 = vpack.c.b16 %v5507, %v5503
        %v5680 = vpack.c.b16 %v5508, %v5504
        %v5681 = vpack.c.b16 %v5509, %v5505
        %v5682 = vpack.c.b16 %v5510, %v5506
        %v5683 = vpack.c.b16 %v5515, %v5511
        %v5684 = vpack.c.b16 %v5516, %v5512
        %v5685 = vpack.c.b16 %v5517, %v5513
        %v5686 = vpack.c.b16 %v5518, %v5514
        %v5687 = vpack.c.b16 %v5523, %v5519
        %v5688 = vpack.c.b16 %v5524, %v5520
        %v5689 = vpack.c.b16 %v5525, %v5521
        %v5690 = vpack.c.b16 %v5526, %v5522
        %v5691 = vpack.c.b16 %v5531, %v5527
        %v5692 = vpack.c.b16 %v5532, %v5528
        %v5693 = vpack.c.b16 %v5533, %v5529
        %v5694 = vpack.c.b16 %v5534, %v5530
        %v5695 = vpack.c.b16 %v5539, %v5535
        %v5696 = vpack.c.b16 %v5540, %v5536
        %v5697 = vpack.c.b16 %v5541, %v5537
        %v5698 = vpack.c.b16 %v5542, %v5538
        %v5699 = vpack.c.b16 %v5547, %v5543
        %v5700 = vpack.c.b16 %v5548, %v5544
        %v5701 = vpack.c.b16 %v5549, %v5545
        %v5702 = vpack.c.b16 %v5550, %v5546
        %v5703 = vpack.c.b16 %v5555, %v5551
        %v5704 = vpack.c.b16 %v5556, %v5552
        %v5705 = vpack.c.b16 %v5557, %v5553
        %v5706 = vpack.c.b16 %v5558, %v5554
        %v5707 = vpack.c.b16 %v5563, %v5559
        %v5708 = vpack.c.b16 %v5564, %v5560
        %v5709 = vpack.c.b16 %v5565, %v5561
        %v5710 = vpack.c.b16 %v5566, %v5562
        %v5711 = vpack.c.b16 %v5571, %v5567
        %v5712 = vpack.c.b16 %v5572, %v5568
        %v5713 = vpack.c.b16 %v5573, %v5569
        %v5714 = vpack.c.b16 %v5574, %v5570
        %v5715 = vpack.c.b16 %v5579, %v5575
        %v5716 = vpack.c.b16 %v5580, %v5576
        %v5717 = vpack.c.b16 %v5581, %v5577
        %v5718 = vpack.c.b16 %v5582, %v5578
        %v5719 = vpack.c.b16 %v5587, %v5583
        %v5720 = vpack.c.b16 %v5588, %v5584
        %v5721 = vpack.c.b16 %v5589, %v5585
        %v5722 = vpack.c.b16 %v5590, %v5586
        %v5723 = vpack.c.b16 %v5595, %v5591
        %v5724 = vpack.c.b16 %v5596, %v5592
        %v5725 = vpack.c.b16 %v5597, %v5593
        %v5726 = vpack.c.b16 %v5598, %v5594
        %5855 = vmatprep.subr.bf16.mxu0 %v5600
        %5856 = vmatpush1.bf16.msra.mxu0 %v5599
        %5857 = vmatprep.subr.bf16.mxu0 %v5604
        %5858 = vmatpush1.bf16.msra.mxu0 %v5603
        %5859 = vmatprep.subr.bf16.mxu0 %v5608
        %5860 = vmatpush1.bf16.msra.mxu0 %v5607
        %5861 = vmatprep.subr.bf16.mxu0 %v5612
        %5862 = vmatpush1.bf16.msra.mxu0 %v5611
        %5863 = vmatprep.subr.bf16.mxu0 %v5616
        %5864 = vmatpush1.bf16.msra.mxu0 %v5615
        %5865 = vmatprep.subr.bf16.mxu0 %v5620
        %5866 = vmatpush1.bf16.msra.mxu0 %v5619
        %5867 = vmatprep.subr.bf16.mxu0 %v5624
        %5868 = vmatpush1.bf16.msra.mxu0 %v5623
        %5869 = vmatprep.subr.bf16.mxu0 %v5628
        %5870 = vmatpush1.bf16.msra.mxu0 %v5627
        %5871 = vmatprep.subr.bf16.mxu0 %v5632
        %5872 = vmatpush1.bf16.msra.mxu0 %v5631
        %5873 = vmatprep.subr.bf16.mxu0 %v5636
        %5874 = vmatpush1.bf16.msra.mxu0 %v5635
        %5875 = vmatprep.subr.bf16.mxu0 %v5640
        %5876 = vmatpush1.bf16.msra.mxu0 %v5639
        %5877 = vmatprep.subr.bf16.mxu0 %v5644
        %5878 = vmatpush1.bf16.msra.mxu0 %v5643
        %5879 = vmatprep.subr.bf16.mxu0 %v5648
        %5880 = vmatpush1.bf16.msra.mxu0 %v5647
        %5881 = vmatprep.subr.bf16.mxu0 %v5652
        %5882 = vmatpush1.bf16.msra.mxu0 %v5651
        %5883 = vmatprep.subr.bf16.mxu0 %v5656
        %5884 = vmatpush1.bf16.msra.mxu0 %v5655
        %5885 = vmatprep.subr.bf16.mxu0 %v5660
        %5886 = vmatpush1.bf16.msra.mxu0 %v5659
        %5887 = vmatprep.mubr.bf16.mxu0 %v5204
        %5888 = vmatmul.mubr.bf16.gmra.mrb[0].mxu0 %v5201
        %v5889 = vpop.f32.mrb[0].mxu0
        %v5890 = vadd.f32 0.0, %v5889
        %v5891 = vpop.f32.mrb[0].mxu0
        %v5892 = vadd.f32 0.0, %v5891
        %v5893 = vpop.f32.mrb[0].mxu0
        %v5894 = vadd.f32 0.0, %v5893
        %v5895 = vpop.f32.mrb[0].mxu0
        %v5896 = vadd.f32 0.0, %v5895
        %5897 = vdwg.mxu0
        %5898 = vmatprep.subr.bf16.mxu0 %v5664
        %5899 = vmatpush1.bf16.msra.mxu0 %v5663
        %5900 = vmatprep.subr.bf16.mxu0 %v5668
        %5901 = vmatpush1.bf16.msra.mxu0 %v5667
        %5902 = vmatprep.subr.bf16.mxu0 %v5672
        %5903 = vmatpush1.bf16.msra.mxu0 %v5671
        %5904 = vmatprep.subr.bf16.mxu0 %v5676
        %5905 = vmatpush1.bf16.msra.mxu0 %v5675
        %5906 = vmatprep.subr.bf16.mxu0 %v5680
        %5907 = vmatpush1.bf16.msra.mxu0 %v5679
        %5908 = vmatprep.subr.bf16.mxu0 %v5684
        %5909 = vmatpush1.bf16.msra.mxu0 %v5683
        %5910 = vmatprep.subr.bf16.mxu0 %v5688
        %5911 = vmatpush1.bf16.msra.mxu0 %v5687
        %5912 = vmatprep.subr.bf16.mxu0 %v5692
        %5913 = vmatpush1.bf16.msra.mxu0 %v5691
        %5914 = vmatprep.subr.bf16.mxu0 %v5696
        %5915 = vmatpush1.bf16.msra.mxu0 %v5695
        %5916 = vmatprep.subr.bf16.mxu0 %v5700
        %5917 = vmatpush1.bf16.msra.mxu0 %v5699
        %5918 = vmatprep.subr.bf16.mxu0 %v5704
        %5919 = vmatpush1.bf16.msra.mxu0 %v5703
        %5920 = vmatprep.subr.bf16.mxu0 %v5708
        %5921 = vmatpush1.bf16.msra.mxu0 %v5707
        %5922 = vmatprep.subr.bf16.mxu0 %v5712
        %5923 = vmatpush1.bf16.msra.mxu0 %v5711
        %5924 = vmatprep.subr.bf16.mxu0 %v5716
        %5925 = vmatpush1.bf16.msra.mxu0 %v5715
        %5926 = vmatprep.subr.bf16.mxu0 %v5720
        %5927 = vmatpush1.bf16.msra.mxu0 %v5719
        %5928 = vmatprep.subr.bf16.mxu0 %v5724
        %5929 = vmatpush1.bf16.msra.mxu0 %v5723
        %5930 = vmatprep.mubr.bf16.mxu0 %v5210
        %5931 = vmatmul.mubr.bf16.gmra.mrb[0].mxu0 %v5207
        %v5932 = vpop.f32.mrb[0].mxu0
        %v5933 = vadd.f32 %v5890, %v5932
        %v5934 = vpop.f32.mrb[0].mxu0
        %v5935 = vadd.f32 %v5892, %v5934
        %v5936 = vpop.f32.mrb[0].mxu0
        %v5937 = vadd.f32 %v5894, %v5936
        %v5938 = vpop.f32.mrb[0].mxu0
        %v5939 = vadd.f32 %v5896, %v5938
        %5940 = vdwg.mxu0
        %5941 = vmatprep.subr.bf16.mxu0 %v5602
        %5942 = vmatpush1.bf16.msra.mxu0 %v5601
        %5943 = vmatprep.subr.bf16.mxu0 %v5606
        %5944 = vmatpush1.bf16.msra.mxu0 %v5605
        %5945 = vmatprep.subr.bf16.mxu0 %v5610
        %5946 = vmatpush1.bf16.msra.mxu0 %v5609
        %5947 = vmatprep.subr.bf16.mxu0 %v5614
        %5948 = vmatpush1.bf16.msra.mxu0 %v5613
        %5949 = vmatprep.subr.bf16.mxu0 %v5618
        %5950 = vmatpush1.bf16.msra.mxu0 %v5617
        %5951 = vmatprep.subr.bf16.mxu0 %v5622
        %5952 = vmatpush1.bf16.msra.mxu0 %v5621
        %5953 = vmatprep.subr.bf16.mxu0 %v5626
        %5954 = vmatpush1.bf16.msra.mxu0 %v5625
        %5955 = vmatprep.subr.bf16.mxu0 %v5630
        %5956 = vmatpush1.bf16.msra.mxu0 %v5629
        %5957 = vmatprep.subr.bf16.mxu0 %v5634
        %5958 = vmatpush1.bf16.msra.mxu0 %v5633
        %5959 = vmatprep.subr.bf16.mxu0 %v5638
        %5960 = vmatpush1.bf16.msra.mxu0 %v5637
        %5961 = vmatprep.subr.bf16.mxu0 %v5642
        %5962 = vmatpush1.bf16.msra.mxu0 %v5641
        %5963 = vmatprep.subr.bf16.mxu0 %v5646
        %5964 = vmatpush1.bf16.msra.mxu0 %v5645
        %5965 = vmatprep.subr.bf16.mxu0 %v5650
        %5966 = vmatpush1.bf16.msra.mxu0 %v5649
        %5967 = vmatprep.subr.bf16.mxu0 %v5654
        %5968 = vmatpush1.bf16.msra.mxu0 %v5653
        %5969 = vmatprep.subr.bf16.mxu0 %v5658
        %5970 = vmatpush1.bf16.msra.mxu0 %v5657
        %5971 = vmatprep.subr.bf16.mxu0 %v5662
        %5972 = vmatpush1.bf16.msra.mxu0 %v5661
        %5973 = vmatprep.mubr.bf16.mxu0 %v5204
        %5974 = vmatmul.mubr.bf16.gmra.mrb[0].mxu0 %v5201
        %v5975 = vpop.f32.mrb[0].mxu0
        %v5976 = vadd.f32 0.0, %v5975
        %v5977 = vpop.f32.mrb[0].mxu0
        %v5978 = vadd.f32 0.0, %v5977
        %v5979 = vpop.f32.mrb[0].mxu0
        %v5980 = vadd.f32 0.0, %v5979
        %v5981 = vpop.f32.mrb[0].mxu0
        %v5982 = vadd.f32 0.0, %v5981
        %5983 = vdwg.mxu0
        %5984 = vmatprep.subr.bf16.mxu0 %v5666
        %5985 = vmatpush1.bf16.msra.mxu0 %v5665
        %5986 = vmatprep.subr.bf16.mxu0 %v5670
        %5987 = vmatpush1.bf16.msra.mxu0 %v5669
        %5988 = vmatprep.subr.bf16.mxu0 %v5674
        %5989 = vmatpush1.bf16.msra.mxu0 %v5673
        %5990 = vmatprep.subr.bf16.mxu0 %v5678
        %5991 = vmatpush1.bf16.msra.mxu0 %v5677
        %5992 = vmatprep.subr.bf16.mxu0 %v5682
        %5993 = vmatpush1.bf16.msra.mxu0 %v5681
        %5994 = vmatprep.subr.bf16.mxu0 %v5686
        %5995 = vmatpush1.bf16.msra.mxu0 %v5685
        %5996 = vmatprep.subr.bf16.mxu0 %v5690
        %5997 = vmatpush1.bf16.msra.mxu0 %v5689
        %5998 = vmatprep.subr.bf16.mxu0 %v5694
        %5999 = vmatpush1.bf16.msra.mxu0 %v5693
        %6000 = vmatprep.subr.bf16.mxu0 %v5698
        %6001 = vmatpush1.bf16.msra.mxu0 %v5697
        %6002 = vmatprep.subr.bf16.mxu0 %v5702
        %6003 = vmatpush1.bf16.msra.mxu0 %v5701
        %6004 = vmatprep.subr.bf16.mxu0 %v5706
        %6005 = vmatpush1.bf16.msra.mxu0 %v5705
        %6006 = vmatprep.subr.bf16.mxu0 %v5710
        %6007 = vmatpush1.bf16.msra.mxu0 %v5709
        %6008 = vmatprep.subr.bf16.mxu0 %v5714
        %6009 = vmatpush1.bf16.msra.mxu0 %v5713
        %6010 = vmatprep.subr.bf16.mxu0 %v5718
        %6011 = vmatpush1.bf16.msra.mxu0 %v5717
        %6012 = vmatprep.subr.bf16.mxu0 %v5722
        %6013 = vmatpush1.bf16.msra.mxu0 %v5721
        %6014 = vmatprep.subr.bf16.mxu0 %v5726
        %6015 = vmatpush1.bf16.msra.mxu0 %v5725
        %6016 = vmatprep.mubr.bf16.mxu0 %v5210
        %6017 = vmatmul.mubr.bf16.gmra.mrb[0].mxu0 %v5207
        %v6018 = vpop.f32.mrb[0].mxu0
        %v6019 = vadd.f32 %v5976, %v6018
        %v6020 = vpop.f32.mrb[0].mxu0
        %v6021 = vadd.f32 %v5978, %v6020
        %v6022 = vpop.f32.mrb[0].mxu0
        %v6023 = vadd.f32 %v5980, %v6022
        %v6024 = vpop.f32.mrb[0].mxu0
        %v6025 = vadd.f32 %v5982, %v6024
        %6026 = vdwg.mxu0
        %v6029 = vunpack.c.l.b16 %v4909
        %v6030 = vunpack.c.h.b16 %v4909
        %v6031 = vunpack.c.l.b16 %v4910
        %v6032 = vunpack.c.h.b16 %v4910
        %v6033 = vpack.c.b16 %v5183, %v6029
        %v6034 = vpack.c.b16 %v5184, %v6030
        %v6035 = vpack.c.b16 %v5185, %v6031
        %v6036 = vpack.c.b16 %v5186, %v6032
        %v6169 = vunpack.c.l.b16 %v4913
        %v6170 = vunpack.c.h.b16 %v4913
        %v6171 = vunpack.c.l.b16 %v4914
        %v6172 = vunpack.c.h.b16 %v4914
        %v6173 = vunpack.c.l.b16 %v4915
        %v6174 = vunpack.c.h.b16 %v4915
        %v6175 = vunpack.c.l.b16 %v4916
        %v6176 = vunpack.c.h.b16 %v4916
        %v6177 = vunpack.c.l.b16 %v4917
        %v6178 = vunpack.c.h.b16 %v4917
        %v6179 = vunpack.c.l.b16 %v4918
        %v6180 = vunpack.c.h.b16 %v4918
        %v6181 = vunpack.c.l.b16 %v4919
        %v6182 = vunpack.c.h.b16 %v4919
        %v6183 = vunpack.c.l.b16 %v4920
        %v6184 = vunpack.c.h.b16 %v4920
        %v6185 = vunpack.c.l.b16 %v4921
        %v6186 = vunpack.c.h.b16 %v4921
        %v6187 = vunpack.c.l.b16 %v4922
        %v6188 = vunpack.c.h.b16 %v4922
        %v6189 = vunpack.c.l.b16 %v4923
        %v6190 = vunpack.c.h.b16 %v4923
        %v6191 = vunpack.c.l.b16 %v4924
        %v6192 = vunpack.c.h.b16 %v4924
        %v6193 = vunpack.c.l.b16 %v4925
        %v6194 = vunpack.c.h.b16 %v4925
        %v6195 = vunpack.c.l.b16 %v4926
        %v6196 = vunpack.c.h.b16 %v4926
        %v6197 = vunpack.c.l.b16 %v4927
        %v6198 = vunpack.c.h.b16 %v4927
        %v6199 = vunpack.c.l.b16 %v4928
        %v6200 = vunpack.c.h.b16 %v4928
        %v6201 = vunpack.c.l.b16 %v4929
        %v6202 = vunpack.c.h.b16 %v4929
        %v6203 = vunpack.c.l.b16 %v4930
        %v6204 = vunpack.c.h.b16 %v4930
        %v6205 = vunpack.c.l.b16 %v4931
        %v6206 = vunpack.c.h.b16 %v4931
        %v6207 = vunpack.c.l.b16 %v4932
        %v6208 = vunpack.c.h.b16 %v4932
        %v6209 = vunpack.c.l.b16 %v4933
        %v6210 = vunpack.c.h.b16 %v4933
        %v6211 = vunpack.c.l.b16 %v4934
        %v6212 = vunpack.c.h.b16 %v4934
        %v6213 = vunpack.c.l.b16 %v4935
        %v6214 = vunpack.c.h.b16 %v4935
        %v6215 = vunpack.c.l.b16 %v4936
        %v6216 = vunpack.c.h.b16 %v4936
        %v6217 = vunpack.c.l.b16 %v4937
        %v6218 = vunpack.c.h.b16 %v4937
        %v6219 = vunpack.c.l.b16 %v4938
        %v6220 = vunpack.c.h.b16 %v4938
        %v6221 = vunpack.c.l.b16 %v4939
        %v6222 = vunpack.c.h.b16 %v4939
        %v6223 = vunpack.c.l.b16 %v4940
        %v6224 = vunpack.c.h.b16 %v4940
        %v6225 = vunpack.c.l.b16 %v4941
        %v6226 = vunpack.c.h.b16 %v4941
        %v6227 = vunpack.c.l.b16 %v4942
        %v6228 = vunpack.c.h.b16 %v4942
        %v6229 = vunpack.c.l.b16 %v4943
        %v6230 = vunpack.c.h.b16 %v4943
        %v6231 = vunpack.c.l.b16 %v4944
        %v6232 = vunpack.c.h.b16 %v4944
        %v6233 = vunpack.c.l.b16 %v4945
        %v6234 = vunpack.c.h.b16 %v4945
        %v6235 = vunpack.c.l.b16 %v4946
        %v6236 = vunpack.c.h.b16 %v4946
        %v6237 = vunpack.c.l.b16 %v4947
        %v6238 = vunpack.c.h.b16 %v4947
        %v6239 = vunpack.c.l.b16 %v4948
        %v6240 = vunpack.c.h.b16 %v4948
        %v6241 = vunpack.c.l.b16 %v4949
        %v6242 = vunpack.c.h.b16 %v4949
        %v6243 = vunpack.c.l.b16 %v4950
        %v6244 = vunpack.c.h.b16 %v4950
        %v6245 = vunpack.c.l.b16 %v4951
        %v6246 = vunpack.c.h.b16 %v4951
        %v6247 = vunpack.c.l.b16 %v4952
        %v6248 = vunpack.c.h.b16 %v4952
        %v6249 = vunpack.c.l.b16 %v4953
        %v6250 = vunpack.c.h.b16 %v4953
        %v6251 = vunpack.c.l.b16 %v4954
        %v6252 = vunpack.c.h.b16 %v4954
        %v6253 = vunpack.c.l.b16 %v4955
        %v6254 = vunpack.c.h.b16 %v4955
        %v6255 = vunpack.c.l.b16 %v4956
        %v6256 = vunpack.c.h.b16 %v4956
        %v6257 = vunpack.c.l.b16 %v4957
        %v6258 = vunpack.c.h.b16 %v4957
        %v6259 = vunpack.c.l.b16 %v4958
        %v6260 = vunpack.c.h.b16 %v4958
        %v6261 = vunpack.c.l.b16 %v4959
        %v6262 = vunpack.c.h.b16 %v4959
        %v6263 = vunpack.c.l.b16 %v4960
        %v6264 = vunpack.c.h.b16 %v4960
        %v6265 = vunpack.c.l.b16 %v4961
        %v6266 = vunpack.c.h.b16 %v4961
        %v6267 = vunpack.c.l.b16 %v4962
        %v6268 = vunpack.c.h.b16 %v4962
        %v6269 = vunpack.c.l.b16 %v4963
        %v6270 = vunpack.c.h.b16 %v4963
        %v6271 = vunpack.c.l.b16 %v4964
        %v6272 = vunpack.c.h.b16 %v4964
        %v6273 = vunpack.c.l.b16 %v4965
        %v6274 = vunpack.c.h.b16 %v4965
        %v6275 = vunpack.c.l.b16 %v4966
        %v6276 = vunpack.c.h.b16 %v4966
        %v6277 = vunpack.c.l.b16 %v4967
        %v6278 = vunpack.c.h.b16 %v4967
        %v6279 = vunpack.c.l.b16 %v4968
        %v6280 = vunpack.c.h.b16 %v4968
        %v6281 = vunpack.c.l.b16 %v4969
        %v6282 = vunpack.c.h.b16 %v4969
        %v6283 = vunpack.c.l.b16 %v4970
        %v6284 = vunpack.c.h.b16 %v4970
        %v6285 = vunpack.c.l.b16 %v4971
        %v6286 = vunpack.c.h.b16 %v4971
        %v6287 = vunpack.c.l.b16 %v4972
        %v6288 = vunpack.c.h.b16 %v4972
        %v6289 = vunpack.c.l.b16 %v4973
        %v6290 = vunpack.c.h.b16 %v4973
        %v6291 = vunpack.c.l.b16 %v4974
        %v6292 = vunpack.c.h.b16 %v4974
        %v6293 = vunpack.c.l.b16 %v4975
        %v6294 = vunpack.c.h.b16 %v4975
        %v6295 = vunpack.c.l.b16 %v4976
        %v6296 = vunpack.c.h.b16 %v4976
        %v6297 = vunpack.c.l.b16 %v4977
        %v6298 = vunpack.c.h.b16 %v4977
        %v6299 = vunpack.c.l.b16 %v4978
        %v6300 = vunpack.c.h.b16 %v4978
        %v6301 = vunpack.c.l.b16 %v4979
        %v6302 = vunpack.c.h.b16 %v4979
        %v6303 = vunpack.c.l.b16 %v4980
        %v6304 = vunpack.c.h.b16 %v4980
        %v6305 = vunpack.c.l.b16 %v4981
        %v6306 = vunpack.c.h.b16 %v4981
        %v6307 = vunpack.c.l.b16 %v4982
        %v6308 = vunpack.c.h.b16 %v4982
        %v6309 = vunpack.c.l.b16 %v4983
        %v6310 = vunpack.c.h.b16 %v4983
        %v6311 = vunpack.c.l.b16 %v4984
        %v6312 = vunpack.c.h.b16 %v4984
        %v6313 = vunpack.c.l.b16 %v4985
        %v6314 = vunpack.c.h.b16 %v4985
        %v6315 = vunpack.c.l.b16 %v4986
        %v6316 = vunpack.c.h.b16 %v4986
        %v6317 = vunpack.c.l.b16 %v4987
        %v6318 = vunpack.c.h.b16 %v4987
        %v6319 = vunpack.c.l.b16 %v4988
        %v6320 = vunpack.c.h.b16 %v4988
        %v6321 = vunpack.c.l.b16 %v4989
        %v6322 = vunpack.c.h.b16 %v4989
        %v6323 = vunpack.c.l.b16 %v4990
        %v6324 = vunpack.c.h.b16 %v4990
        %v6325 = vunpack.c.l.b16 %v4991
        %v6326 = vunpack.c.h.b16 %v4991
        %v6327 = vunpack.c.l.b16 %v4992
        %v6328 = vunpack.c.h.b16 %v4992
        %v6329 = vunpack.c.l.b16 %v4993
        %v6330 = vunpack.c.h.b16 %v4993
        %v6331 = vunpack.c.l.b16 %v4994
        %v6332 = vunpack.c.h.b16 %v4994
        %v6333 = vunpack.c.l.b16 %v4995
        %v6334 = vunpack.c.h.b16 %v4995
        %v6335 = vunpack.c.l.b16 %v4996
        %v6336 = vunpack.c.h.b16 %v4996
        %v6337 = vunpack.c.l.b16 %v4997
        %v6338 = vunpack.c.h.b16 %v4997
        %v6339 = vunpack.c.l.b16 %v4998
        %v6340 = vunpack.c.h.b16 %v4998
        %v6341 = vunpack.c.l.b16 %v4999
        %v6342 = vunpack.c.h.b16 %v4999
        %v6343 = vunpack.c.l.b16 %v5000
        %v6344 = vunpack.c.h.b16 %v5000
        %v6345 = vunpack.c.l.b16 %v5001
        %v6346 = vunpack.c.h.b16 %v5001
        %v6347 = vunpack.c.l.b16 %v5002
        %v6348 = vunpack.c.h.b16 %v5002
        %v6349 = vunpack.c.l.b16 %v5003
        %v6350 = vunpack.c.h.b16 %v5003
        %v6351 = vunpack.c.l.b16 %v5004
        %v6352 = vunpack.c.h.b16 %v5004
        %v6353 = vunpack.c.l.b16 %v5005
        %v6354 = vunpack.c.h.b16 %v5005
        %v6355 = vunpack.c.l.b16 %v5006
        %v6356 = vunpack.c.h.b16 %v5006
        %v6357 = vunpack.c.l.b16 %v5007
        %v6358 = vunpack.c.h.b16 %v5007
        %v6359 = vunpack.c.l.b16 %v5008
        %v6360 = vunpack.c.h.b16 %v5008
        %v6361 = vunpack.c.l.b16 %v5009
        %v6362 = vunpack.c.h.b16 %v5009
        %v6363 = vunpack.c.l.b16 %v5010
        %v6364 = vunpack.c.h.b16 %v5010
        %v6365 = vunpack.c.l.b16 %v5011
        %v6366 = vunpack.c.h.b16 %v5011
        %v6367 = vunpack.c.l.b16 %v5012
        %v6368 = vunpack.c.h.b16 %v5012
        %v6369 = vunpack.c.l.b16 %v5013
        %v6370 = vunpack.c.h.b16 %v5013
        %v6371 = vunpack.c.l.b16 %v5014
        %v6372 = vunpack.c.h.b16 %v5014
        %v6373 = vunpack.c.l.b16 %v5015
        %v6374 = vunpack.c.h.b16 %v5015
        %v6375 = vunpack.c.l.b16 %v5016
        %v6376 = vunpack.c.h.b16 %v5016
        %v6377 = vunpack.c.l.b16 %v5017
        %v6378 = vunpack.c.h.b16 %v5017
        %v6379 = vunpack.c.l.b16 %v5018
        %v6380 = vunpack.c.h.b16 %v5018
        %v6381 = vunpack.c.l.b16 %v5019
        %v6382 = vunpack.c.h.b16 %v5019
        %v6383 = vunpack.c.l.b16 %v5020
        %v6384 = vunpack.c.h.b16 %v5020
        %v6385 = vunpack.c.l.b16 %v5021
        %v6386 = vunpack.c.h.b16 %v5021
        %v6387 = vunpack.c.l.b16 %v5022
        %v6388 = vunpack.c.h.b16 %v5022
        %v6389 = vunpack.c.l.b16 %v5023
        %v6390 = vunpack.c.h.b16 %v5023
        %v6391 = vunpack.c.l.b16 %v5024
        %v6392 = vunpack.c.h.b16 %v5024
        %v6393 = vunpack.c.l.b16 %v5025
        %v6394 = vunpack.c.h.b16 %v5025
        %v6395 = vunpack.c.l.b16 %v5026
        %v6396 = vunpack.c.h.b16 %v5026
        %v6397 = vunpack.c.l.b16 %v5027
        %v6398 = vunpack.c.h.b16 %v5027
        %v6399 = vunpack.c.l.b16 %v5028
        %v6400 = vunpack.c.h.b16 %v5028
        %v6401 = vunpack.c.l.b16 %v5029
        %v6402 = vunpack.c.h.b16 %v5029
        %v6403 = vunpack.c.l.b16 %v5030
        %v6404 = vunpack.c.h.b16 %v5030
        %v6405 = vunpack.c.l.b16 %v5031
        %v6406 = vunpack.c.h.b16 %v5031
        %v6407 = vunpack.c.l.b16 %v5032
        %v6408 = vunpack.c.h.b16 %v5032
        %v6409 = vunpack.c.l.b16 %v5033
        %v6410 = vunpack.c.h.b16 %v5033
        %v6411 = vunpack.c.l.b16 %v5034
        %v6412 = vunpack.c.h.b16 %v5034
        %v6413 = vunpack.c.l.b16 %v5035
        %v6414 = vunpack.c.h.b16 %v5035
        %v6415 = vunpack.c.l.b16 %v5036
        %v6416 = vunpack.c.h.b16 %v5036
        %v6417 = vunpack.c.l.b16 %v5037
        %v6418 = vunpack.c.h.b16 %v5037
        %v6419 = vunpack.c.l.b16 %v5038
        %v6420 = vunpack.c.h.b16 %v5038
        %v6421 = vunpack.c.l.b16 %v5039
        %v6422 = vunpack.c.h.b16 %v5039
        %v6423 = vunpack.c.l.b16 %v5040
        %v6424 = vunpack.c.h.b16 %v5040
        %v6425 = vpack.c.b16 %v6173, %v6169
        %v6426 = vpack.c.b16 %v6174, %v6170
        %v6427 = vpack.c.b16 %v6175, %v6171
        %v6428 = vpack.c.b16 %v6176, %v6172
        %v6429 = vpack.c.b16 %v6181, %v6177
        %v6430 = vpack.c.b16 %v6182, %v6178
        %v6431 = vpack.c.b16 %v6183, %v6179
        %v6432 = vpack.c.b16 %v6184, %v6180
        %v6433 = vpack.c.b16 %v6189, %v6185
        %v6434 = vpack.c.b16 %v6190, %v6186
        %v6435 = vpack.c.b16 %v6191, %v6187
        %v6436 = vpack.c.b16 %v6192, %v6188
        %v6437 = vpack.c.b16 %v6197, %v6193
        %v6438 = vpack.c.b16 %v6198, %v6194
        %v6439 = vpack.c.b16 %v6199, %v6195
        %v6440 = vpack.c.b16 %v6200, %v6196
        %v6441 = vpack.c.b16 %v6205, %v6201
        %v6442 = vpack.c.b16 %v6206, %v6202
        %v6443 = vpack.c.b16 %v6207, %v6203
        %v6444 = vpack.c.b16 %v6208, %v6204
        %v6445 = vpack.c.b16 %v6213, %v6209
        %v6446 = vpack.c.b16 %v6214, %v6210
        %v6447 = vpack.c.b16 %v6215, %v6211
        %v6448 = vpack.c.b16 %v6216, %v6212
        %v6449 = vpack.c.b16 %v6221, %v6217
        %v6450 = vpack.c.b16 %v6222, %v6218
        %v6451 = vpack.c.b16 %v6223, %v6219
        %v6452 = vpack.c.b16 %v6224, %v6220
        %v6453 = vpack.c.b16 %v6229, %v6225
        %v6454 = vpack.c.b16 %v6230, %v6226
        %v6455 = vpack.c.b16 %v6231, %v6227
        %v6456 = vpack.c.b16 %v6232, %v6228
        %v6457 = vpack.c.b16 %v6237, %v6233
        %v6458 = vpack.c.b16 %v6238, %v6234
        %v6459 = vpack.c.b16 %v6239, %v6235
        %v6460 = vpack.c.b16 %v6240, %v6236
        %v6461 = vpack.c.b16 %v6245, %v6241
        %v6462 = vpack.c.b16 %v6246, %v6242
        %v6463 = vpack.c.b16 %v6247, %v6243
        %v6464 = vpack.c.b16 %v6248, %v6244
        %v6465 = vpack.c.b16 %v6253, %v6249
        %v6466 = vpack.c.b16 %v6254, %v6250
        %v6467 = vpack.c.b16 %v6255, %v6251
        %v6468 = vpack.c.b16 %v6256, %v6252
        %v6469 = vpack.c.b16 %v6261, %v6257
        %v6470 = vpack.c.b16 %v6262, %v6258
        %v6471 = vpack.c.b16 %v6263, %v6259
        %v6472 = vpack.c.b16 %v6264, %v6260
        %v6473 = vpack.c.b16 %v6269, %v6265
        %v6474 = vpack.c.b16 %v6270, %v6266
        %v6475 = vpack.c.b16 %v6271, %v6267
        %v6476 = vpack.c.b16 %v6272, %v6268
        %v6477 = vpack.c.b16 %v6277, %v6273
        %v6478 = vpack.c.b16 %v6278, %v6274
        %v6479 = vpack.c.b16 %v6279, %v6275
        %v6480 = vpack.c.b16 %v6280, %v6276
        %v6481 = vpack.c.b16 %v6285, %v6281
        %v6482 = vpack.c.b16 %v6286, %v6282
        %v6483 = vpack.c.b16 %v6287, %v6283
        %v6484 = vpack.c.b16 %v6288, %v6284
        %v6485 = vpack.c.b16 %v6293, %v6289
        %v6486 = vpack.c.b16 %v6294, %v6290
        %v6487 = vpack.c.b16 %v6295, %v6291
        %v6488 = vpack.c.b16 %v6296, %v6292
        %v6489 = vpack.c.b16 %v6301, %v6297
        %v6490 = vpack.c.b16 %v6302, %v6298
        %v6491 = vpack.c.b16 %v6303, %v6299
        %v6492 = vpack.c.b16 %v6304, %v6300
        %v6493 = vpack.c.b16 %v6309, %v6305
        %v6494 = vpack.c.b16 %v6310, %v6306
        %v6495 = vpack.c.b16 %v6311, %v6307
        %v6496 = vpack.c.b16 %v6312, %v6308
        %v6497 = vpack.c.b16 %v6317, %v6313
        %v6498 = vpack.c.b16 %v6318, %v6314
        %v6499 = vpack.c.b16 %v6319, %v6315
        %v6500 = vpack.c.b16 %v6320, %v6316
        %v6501 = vpack.c.b16 %v6325, %v6321
        %v6502 = vpack.c.b16 %v6326, %v6322
        %v6503 = vpack.c.b16 %v6327, %v6323
        %v6504 = vpack.c.b16 %v6328, %v6324
        %v6505 = vpack.c.b16 %v6333, %v6329
        %v6506 = vpack.c.b16 %v6334, %v6330
        %v6507 = vpack.c.b16 %v6335, %v6331
        %v6508 = vpack.c.b16 %v6336, %v6332
        %v6509 = vpack.c.b16 %v6341, %v6337
        %v6510 = vpack.c.b16 %v6342, %v6338
        %v6511 = vpack.c.b16 %v6343, %v6339
        %v6512 = vpack.c.b16 %v6344, %v6340
        %v6513 = vpack.c.b16 %v6349, %v6345
        %v6514 = vpack.c.b16 %v6350, %v6346
        %v6515 = vpack.c.b16 %v6351, %v6347
        %v6516 = vpack.c.b16 %v6352, %v6348
        %v6517 = vpack.c.b16 %v6357, %v6353
        %v6518 = vpack.c.b16 %v6358, %v6354
        %v6519 = vpack.c.b16 %v6359, %v6355
        %v6520 = vpack.c.b16 %v6360, %v6356
        %v6521 = vpack.c.b16 %v6365, %v6361
        %v6522 = vpack.c.b16 %v6366, %v6362
        %v6523 = vpack.c.b16 %v6367, %v6363
        %v6524 = vpack.c.b16 %v6368, %v6364
        %v6525 = vpack.c.b16 %v6373, %v6369
        %v6526 = vpack.c.b16 %v6374, %v6370
        %v6527 = vpack.c.b16 %v6375, %v6371
        %v6528 = vpack.c.b16 %v6376, %v6372
        %v6529 = vpack.c.b16 %v6381, %v6377
        %v6530 = vpack.c.b16 %v6382, %v6378
        %v6531 = vpack.c.b16 %v6383, %v6379
        %v6532 = vpack.c.b16 %v6384, %v6380
        %v6533 = vpack.c.b16 %v6389, %v6385
        %v6534 = vpack.c.b16 %v6390, %v6386
        %v6535 = vpack.c.b16 %v6391, %v6387
        %v6536 = vpack.c.b16 %v6392, %v6388
        %v6537 = vpack.c.b16 %v6397, %v6393
        %v6538 = vpack.c.b16 %v6398, %v6394
        %v6539 = vpack.c.b16 %v6399, %v6395
        %v6540 = vpack.c.b16 %v6400, %v6396
        %v6541 = vpack.c.b16 %v6405, %v6401
        %v6542 = vpack.c.b16 %v6406, %v6402
        %v6543 = vpack.c.b16 %v6407, %v6403
        %v6544 = vpack.c.b16 %v6408, %v6404
        %v6545 = vpack.c.b16 %v6413, %v6409
        %v6546 = vpack.c.b16 %v6414, %v6410
        %v6547 = vpack.c.b16 %v6415, %v6411
        %v6548 = vpack.c.b16 %v6416, %v6412
        %v6549 = vpack.c.b16 %v6421, %v6417
        %v6550 = vpack.c.b16 %v6422, %v6418
        %v6551 = vpack.c.b16 %v6423, %v6419
        %v6552 = vpack.c.b16 %v6424, %v6420
        %6681 = vmatprep.subr.bf16.mxu0 %v6426
        %6682 = vmatpush1.bf16.msra.mxu0 %v6425
        %6683 = vmatprep.subr.bf16.mxu0 %v6430
        %6684 = vmatpush1.bf16.msra.mxu0 %v6429
        %6685 = vmatprep.subr.bf16.mxu0 %v6434
        %6686 = vmatpush1.bf16.msra.mxu0 %v6433
        %6687 = vmatprep.subr.bf16.mxu0 %v6438
        %6688 = vmatpush1.bf16.msra.mxu0 %v6437
        %6689 = vmatprep.subr.bf16.mxu0 %v6442
        %6690 = vmatpush1.bf16.msra.mxu0 %v6441
        %6691 = vmatprep.subr.bf16.mxu0 %v6446
        %6692 = vmatpush1.bf16.msra.mxu0 %v6445
        %6693 = vmatprep.subr.bf16.mxu0 %v6450
        %6694 = vmatpush1.bf16.msra.mxu0 %v6449
        %6695 = vmatprep.subr.bf16.mxu0 %v6454
        %6696 = vmatpush1.bf16.msra.mxu0 %v6453
        %6697 = vmatprep.subr.bf16.mxu0 %v6458
        %6698 = vmatpush1.bf16.msra.mxu0 %v6457
        %6699 = vmatprep.subr.bf16.mxu0 %v6462
        %6700 = vmatpush1.bf16.msra.mxu0 %v6461
        %6701 = vmatprep.subr.bf16.mxu0 %v6466
        %6702 = vmatpush1.bf16.msra.mxu0 %v6465
        %6703 = vmatprep.subr.bf16.mxu0 %v6470
        %6704 = vmatpush1.bf16.msra.mxu0 %v6469
        %6705 = vmatprep.subr.bf16.mxu0 %v6474
        %6706 = vmatpush1.bf16.msra.mxu0 %v6473
        %6707 = vmatprep.subr.bf16.mxu0 %v6478
        %6708 = vmatpush1.bf16.msra.mxu0 %v6477
        %6709 = vmatprep.subr.bf16.mxu0 %v6482
        %6710 = vmatpush1.bf16.msra.mxu0 %v6481
        %6711 = vmatprep.subr.bf16.mxu0 %v6486
        %6712 = vmatpush1.bf16.msra.mxu0 %v6485
        %6713 = vmatprep.mubr.bf16.mxu0 %v6034
        %6714 = vmatmul.mubr.bf16.gmra.mrb[0].mxu0 %v6033
        %v6715 = vpop.f32.mrb[0].mxu0
        %v6716 = vadd.f32 %v5933, %v6715
        %v6717 = vpop.f32.mrb[0].mxu0
        %v6718 = vadd.f32 %v5935, %v6717
        %v6719 = vpop.f32.mrb[0].mxu0
        %v6720 = vadd.f32 %v5937, %v6719
        %v6721 = vpop.f32.mrb[0].mxu0
        %v6722 = vadd.f32 %v5939, %v6721
        %6723 = vdwg.mxu0
        %6724 = vmatprep.subr.bf16.mxu0 %v6490
        %6725 = vmatpush1.bf16.msra.mxu0 %v6489
        %6726 = vmatprep.subr.bf16.mxu0 %v6494
        %6727 = vmatpush1.bf16.msra.mxu0 %v6493
        %6728 = vmatprep.subr.bf16.mxu0 %v6498
        %6729 = vmatpush1.bf16.msra.mxu0 %v6497
        %6730 = vmatprep.subr.bf16.mxu0 %v6502
        %6731 = vmatpush1.bf16.msra.mxu0 %v6501
        %6732 = vmatprep.subr.bf16.mxu0 %v6506
        %6733 = vmatpush1.bf16.msra.mxu0 %v6505
        %6734 = vmatprep.subr.bf16.mxu0 %v6510
        %6735 = vmatpush1.bf16.msra.mxu0 %v6509
        %6736 = vmatprep.subr.bf16.mxu0 %v6514
        %6737 = vmatpush1.bf16.msra.mxu0 %v6513
        %6738 = vmatprep.subr.bf16.mxu0 %v6518
        %6739 = vmatpush1.bf16.msra.mxu0 %v6517
        %6740 = vmatprep.subr.bf16.mxu0 %v6522
        %6741 = vmatpush1.bf16.msra.mxu0 %v6521
        %6742 = vmatprep.subr.bf16.mxu0 %v6526
        %6743 = vmatpush1.bf16.msra.mxu0 %v6525
        %6744 = vmatprep.subr.bf16.mxu0 %v6530
        %6745 = vmatpush1.bf16.msra.mxu0 %v6529
        %6746 = vmatprep.subr.bf16.mxu0 %v6534
        %6747 = vmatpush1.bf16.msra.mxu0 %v6533
        %6748 = vmatprep.subr.bf16.mxu0 %v6538
        %6749 = vmatpush1.bf16.msra.mxu0 %v6537
        %6750 = vmatprep.subr.bf16.mxu0 %v6542
        %6751 = vmatpush1.bf16.msra.mxu0 %v6541
        %6752 = vmatprep.subr.bf16.mxu0 %v6546
        %6753 = vmatpush1.bf16.msra.mxu0 %v6545
        %6754 = vmatprep.subr.bf16.mxu0 %v6550
        %6755 = vmatpush1.bf16.msra.mxu0 %v6549
        %6756 = vmatprep.mubr.bf16.mxu0 %v6036
        %6757 = vmatmul.mubr.bf16.gmra.mrb[0].mxu0 %v6035
        %v6758 = vpop.f32.mrb[0].mxu0
        %v6759 = vadd.f32 %v6716, %v6758
        %v6760 = vpop.f32.mrb[0].mxu0
        %v6761 = vadd.f32 %v6718, %v6760
        %v6762 = vpop.f32.mrb[0].mxu0
        %v6763 = vadd.f32 %v6720, %v6762
        %v6764 = vpop.f32.mrb[0].mxu0
        %v6765 = vadd.f32 %v6722, %v6764
        %6766 = vdwg.mxu0
        %6767 = vmatprep.subr.bf16.mxu0 %v6428
        %6768 = vmatpush1.bf16.msra.mxu0 %v6427
        %6769 = vmatprep.subr.bf16.mxu0 %v6432
        %6770 = vmatpush1.bf16.msra.mxu0 %v6431
        %6771 = vmatprep.subr.bf16.mxu0 %v6436
        %6772 = vmatpush1.bf16.msra.mxu0 %v6435
        %6773 = vmatprep.subr.bf16.mxu0 %v6440
        %6774 = vmatpush1.bf16.msra.mxu0 %v6439
        %6775 = vmatprep.subr.bf16.mxu0 %v6444
        %6776 = vmatpush1.bf16.msra.mxu0 %v6443
        %6777 = vmatprep.subr.bf16.mxu0 %v6448
        %6778 = vmatpush1.bf16.msra.mxu0 %v6447
        %6779 = vmatprep.subr.bf16.mxu0 %v6452
        %6780 = vmatpush1.bf16.msra.mxu0 %v6451
        %6781 = vmatprep.subr.bf16.mxu0 %v6456
        %6782 = vmatpush1.bf16.msra.mxu0 %v6455
        %6783 = vmatprep.subr.bf16.mxu0 %v6460
        %6784 = vmatpush1.bf16.msra.mxu0 %v6459
        %6785 = vmatprep.subr.bf16.mxu0 %v6464
        %6786 = vmatpush1.bf16.msra.mxu0 %v6463
        %6787 = vmatprep.subr.bf16.mxu0 %v6468
        %6788 = vmatpush1.bf16.msra.mxu0 %v6467
        %6789 = vmatprep.subr.bf16.mxu0 %v6472
        %6790 = vmatpush1.bf16.msra.mxu0 %v6471
        %6791 = vmatprep.subr.bf16.mxu0 %v6476
        %6792 = vmatpush1.bf16.msra.mxu0 %v6475
        %6793 = vmatprep.subr.bf16.mxu0 %v6480
        %6794 = vmatpush1.bf16.msra.mxu0 %v6479
        %6795 = vmatprep.subr.bf16.mxu0 %v6484
        %6796 = vmatpush1.bf16.msra.mxu0 %v6483
        %6797 = vmatprep.subr.bf16.mxu0 %v6488
        %6798 = vmatpush1.bf16.msra.mxu0 %v6487
        %6799 = vmatprep.mubr.bf16.mxu0 %v6034
        %6800 = vmatmul.mubr.bf16.gmra.mrb[0].mxu0 %v6033
        %v6801 = vpop.f32.mrb[0].mxu0
        %v6802 = vadd.f32 %v6019, %v6801
        %v6803 = vpop.f32.mrb[0].mxu0
        %v6804 = vadd.f32 %v6021, %v6803
        %v6805 = vpop.f32.mrb[0].mxu0
        %v6806 = vadd.f32 %v6023, %v6805
        %v6807 = vpop.f32.mrb[0].mxu0
        %v6808 = vadd.f32 %v6025, %v6807
        %6809 = vdwg.mxu0
        %6810 = vmatprep.subr.bf16.mxu0 %v6492
        %6811 = vmatpush1.bf16.msra.mxu0 %v6491
        %6812 = vmatprep.subr.bf16.mxu0 %v6496
        %6813 = vmatpush1.bf16.msra.mxu0 %v6495
        %6814 = vmatprep.subr.bf16.mxu0 %v6500
        %6815 = vmatpush1.bf16.msra.mxu0 %v6499
        %6816 = vmatprep.subr.bf16.mxu0 %v6504
        %6817 = vmatpush1.bf16.msra.mxu0 %v6503
        %6818 = vmatprep.subr.bf16.mxu0 %v6508
        %6819 = vmatpush1.bf16.msra.mxu0 %v6507
        %6820 = vmatprep.subr.bf16.mxu0 %v6512
        %6821 = vmatpush1.bf16.msra.mxu0 %v6511
        %6822 = vmatprep.subr.bf16.mxu0 %v6516
        %6823 = vmatpush1.bf16.msra.mxu0 %v6515
        %6824 = vmatprep.subr.bf16.mxu0 %v6520
        %6825 = vmatpush1.bf16.msra.mxu0 %v6519
        %6826 = vmatprep.subr.bf16.mxu0 %v6524
        %6827 = vmatpush1.bf16.msra.mxu0 %v6523
        %6828 = vmatprep.subr.bf16.mxu0 %v6528
        %6829 = vmatpush1.bf16.msra.mxu0 %v6527
        %6830 = vmatprep.subr.bf16.mxu0 %v6532
        %6831 = vmatpush1.bf16.msra.mxu0 %v6531
        %6832 = vmatprep.subr.bf16.mxu0 %v6536
        %6833 = vmatpush1.bf16.msra.mxu0 %v6535
        %6834 = vmatprep.subr.bf16.mxu0 %v6540
        %6835 = vmatpush1.bf16.msra.mxu0 %v6539
        %6836 = vmatprep.subr.bf16.mxu0 %v6544
        %6837 = vmatpush1.bf16.msra.mxu0 %v6543
        %6838 = vmatprep.subr.bf16.mxu0 %v6548
        %6839 = vmatpush1.bf16.msra.mxu0 %v6547
        %6840 = vmatprep.subr.bf16.mxu0 %v6552
        %6841 = vmatpush1.bf16.msra.mxu0 %v6551
        %6842 = vmatprep.mubr.bf16.mxu0 %v6036
        %6843 = vmatmul.mubr.bf16.gmra.mrb[0].mxu0 %v6035
        %v6844 = vpop.f32.mrb[0].mxu0
        %v6845 = vadd.f32 %v6802, %v6844
        %v6846 = vpop.f32.mrb[0].mxu0
        %v6847 = vadd.f32 %v6804, %v6846
        %v6848 = vpop.f32.mrb[0].mxu0
        %v6849 = vadd.f32 %v6806, %v6848
        %v6850 = vpop.f32.mrb[0].mxu0
        %v6851 = vadd.f32 %v6808, %v6850
        %6852 = vdwg.mxu0
        %v6853 = vld [vmem:[#allocation13] sm:$0xf]
        %v6855 = vlaneseq
        %v6856 = vshrl.u32 %v6855, 7
        %v6857 = vsub.s32 0, %v6856
        %v6858 = vrot.slane %v6853, %v6857
        %v6859 = vlaneseq
        %v6860 = vshrl.u32 %v6859, 7
        %v6861 = vsub.s32 1, %v6860
        %v6862 = vrot.slane %v6853, %v6861
        %v6863 = vlaneseq
        %v6864 = vshrl.u32 %v6863, 7
        %v6865 = vsub.s32 2, %v6864
        %v6866 = vrot.slane %v6853, %v6865
        %v6867 = vlaneseq
        %v6868 = vshrl.u32 %v6867, 7
        %v6869 = vsub.s32 3, %v6868
        %v6870 = vrot.slane %v6853, %v6869
        %v6875 = vadd.f32 %v6759, %v6858
        %v6876 = vadd.f32 %v6761, %v6862
        %v6877 = vadd.f32 %v6845, %v6866
        %v6878 = vadd.f32 %v6847, %v6870
        %v6879 = vadd.f32 %v6763, %v6858
        %v6880 = vadd.f32 %v6765, %v6862
        %v6881 = vadd.f32 %v6849, %v6866
        %v6882 = vadd.f32 %v6851, %v6870
        %v6883 = vmax.f32 %v6875, 0.0
        %v6884 = vmax.f32 %v6876, 0.0
        %v6885 = vmax.f32 %v6877, 0.0
        %v6886 = vmax.f32 %v6878, 0.0
        %v6887 = vmax.f32 %v6879, 0.0
        %v6888 = vmax.f32 %v6880, 0.0
        %v6889 = vmax.f32 %v6881, 0.0
        %v6890 = vmax.f32 %v6882, 0.0
        %v6891 = vpack.c.bf16 %v6887, %v6883
        %v6892 = vpack.c.bf16 %v6888, %v6884
        %v6893 = vpack.c.bf16 %v6889, %v6885
        %v6894 = vpack.c.bf16 %v6890, %v6886
        %v6899 = vunpack.c.l.b16 %v6891
        %v6900 = vunpack.c.l.b16 %v6892
        %v6901 = vunpack.c.l.b16 %v6893
        %v6902 = vunpack.c.l.b16 %v6894
        %v6903 = vunpack.c.h.b16 %v6891
        %v6904 = vunpack.c.h.b16 %v6892
        %v6905 = vunpack.c.h.b16 %v6893
        %v6906 = vunpack.c.h.b16 %v6894
        %v6907 = vpack.c.b16 %v6900, %v6899
        %v6908 = vpack.c.b16 %v6902, %v6901
        %v6909 = vpack.c.b16 %v6904, %v6903
        %v6910 = vpack.c.b16 %v6906, %v6905
        %6915 = vst [vmem:[#allocation2] sm:$0xff] %v6907
        %6916 = vst [vmem:[#allocation2 + $0x8] sm:$0xff] %v6908
        %6917 = vst [vmem:[#allocation2 + $0x10] sm:$0xff] %v6909
        %6918 = vst [vmem:[#allocation2 + $0x18] sm:$0xff] %v6910
        %v6919 = vld [vmem:[#allocation2] sm:$0xff]
        %v6920 = vld [vmem:[#allocation2 + $0x8] sm:$0xff]
        %v6921 = vld [vmem:[#allocation2 + $0x10] sm:$0xff]
        %v6922 = vld [vmem:[#allocation2 + $0x18] sm:$0xff]
        %v6923 = vld [vmem:[#allocation15] sm:$0xff]
        %v6924 = vld [vmem:[#allocation15 + $0x8] sm:$0xff]
        %v6925 = vld [vmem:[#allocation15 + $0x10] sm:$0xff]
        %v6926 = vld [vmem:[#allocation15 + $0x18] sm:$0xff]
        %v6927 = vld [vmem:[#allocation15 + $0x20] sm:$0xff]
        %v6928 = vld [vmem:[#allocation15 + $0x28] sm:$0xff]
        %v6929 = vld [vmem:[#allocation15 + $0x30] sm:$0xff]
        %v6930 = vld [vmem:[#allocation15 + $0x38] sm:$0xff]
        %v6931 = vld [vmem:[#allocation15 + $0x40] sm:$0xff]
        %v6932 = vld [vmem:[#allocation15 + $0x48] sm:$0xff]
        %v6933 = vld [vmem:[#allocation15 + $0x50] sm:$0xff]
        %v6934 = vld [vmem:[#allocation15 + $0x58] sm:$0xff]
        %v6935 = vld [vmem:[#allocation15 + $0x60] sm:$0xff]
        %v6936 = vld [vmem:[#allocation15 + $0x68] sm:$0xff]
        %v6937 = vld [vmem:[#allocation15 + $0x70] sm:$0xff]
        %v6938 = vld [vmem:[#allocation15 + $0x78] sm:$0xff]
        %v6939 = vld [vmem:[#allocation15 + $0x80] sm:$0xff]
        %v6940 = vld [vmem:[#allocation15 + $0x88] sm:$0xff]
        %v6941 = vld [vmem:[#allocation15 + $0x90] sm:$0xff]
        %v6942 = vld [vmem:[#allocation15 + $0x98] sm:$0xff]
        %v6943 = vld [vmem:[#allocation15 + $0xa0] sm:$0xff]
        %v6944 = vld [vmem:[#allocation15 + $0xa8] sm:$0xff]
        %v6945 = vld [vmem:[#allocation15 + $0xb0] sm:$0xff]
        %v6946 = vld [vmem:[#allocation15 + $0xb8] sm:$0xff]
        %v6947 = vld [vmem:[#allocation15 + $0xc0] sm:$0xff]
        %v6948 = vld [vmem:[#allocation15 + $0xc8] sm:$0xff]
        %v6949 = vld [vmem:[#allocation15 + $0xd0] sm:$0xff]
        %v6950 = vld [vmem:[#allocation15 + $0xd8] sm:$0xff]
        %v6951 = vld [vmem:[#allocation15 + $0xe0] sm:$0xff]
        %v6952 = vld [vmem:[#allocation15 + $0xe8] sm:$0xff]
        %v6953 = vld [vmem:[#allocation15 + $0xf0] sm:$0xff]
        %v6954 = vld [vmem:[#allocation15 + $0xf8] sm:$0xff]
        %v6955 = vld [vmem:[#allocation15 + $0x100] sm:$0xff]
        %v6956 = vld [vmem:[#allocation15 + $0x108] sm:$0xff]
        %v6957 = vld [vmem:[#allocation15 + $0x110] sm:$0xff]
        %v6958 = vld [vmem:[#allocation15 + $0x118] sm:$0xff]
        %v6959 = vld [vmem:[#allocation15 + $0x120] sm:$0xff]
        %v6960 = vld [vmem:[#allocation15 + $0x128] sm:$0xff]
        %v6961 = vld [vmem:[#allocation15 + $0x130] sm:$0xff]
        %v6962 = vld [vmem:[#allocation15 + $0x138] sm:$0xff]
        %v6963 = vld [vmem:[#allocation15 + $0x140] sm:$0xff]
        %v6964 = vld [vmem:[#allocation15 + $0x148] sm:$0xff]
        %v6965 = vld [vmem:[#allocation15 + $0x150] sm:$0xff]
        %v6966 = vld [vmem:[#allocation15 + $0x158] sm:$0xff]
        %v6967 = vld [vmem:[#allocation15 + $0x160] sm:$0xff]
        %v6968 = vld [vmem:[#allocation15 + $0x168] sm:$0xff]
        %v6969 = vld [vmem:[#allocation15 + $0x170] sm:$0xff]
        %v6970 = vld [vmem:[#allocation15 + $0x178] sm:$0xff]
        %v6971 = vld [vmem:[#allocation15 + $0x180] sm:$0xff]
        %v6972 = vld [vmem:[#allocation15 + $0x188] sm:$0xff]
        %v6973 = vld [vmem:[#allocation15 + $0x190] sm:$0xff]
        %v6974 = vld [vmem:[#allocation15 + $0x198] sm:$0xff]
        %v6975 = vld [vmem:[#allocation15 + $0x1a0] sm:$0xff]
        %v6976 = vld [vmem:[#allocation15 + $0x1a8] sm:$0xff]
        %v6977 = vld [vmem:[#allocation15 + $0x1b0] sm:$0xff]
        %v6978 = vld [vmem:[#allocation15 + $0x1b8] sm:$0xff]
        %v6979 = vld [vmem:[#allocation15 + $0x1c0] sm:$0xff]
        %v6980 = vld [vmem:[#allocation15 + $0x1c8] sm:$0xff]
        %v6981 = vld [vmem:[#allocation15 + $0x1d0] sm:$0xff]
        %v6982 = vld [vmem:[#allocation15 + $0x1d8] sm:$0xff]
        %v6983 = vld [vmem:[#allocation15 + $0x1e0] sm:$0xff]
        %v6984 = vld [vmem:[#allocation15 + $0x1e8] sm:$0xff]
        %v6985 = vld [vmem:[#allocation15 + $0x1f0] sm:$0xff]
        %v6986 = vld [vmem:[#allocation15 + $0x1f8] sm:$0xff]
        %v6987 = vld [vmem:[#allocation15 + $0x200] sm:$0xff]
        %v6988 = vld [vmem:[#allocation15 + $0x208] sm:$0xff]
        %v6989 = vld [vmem:[#allocation15 + $0x210] sm:$0xff]
        %v6990 = vld [vmem:[#allocation15 + $0x218] sm:$0xff]
        %v6991 = vld [vmem:[#allocation15 + $0x220] sm:$0xff]
        %v6992 = vld [vmem:[#allocation15 + $0x228] sm:$0xff]
        %v6993 = vld [vmem:[#allocation15 + $0x230] sm:$0xff]
        %v6994 = vld [vmem:[#allocation15 + $0x238] sm:$0xff]
        %v6995 = vld [vmem:[#allocation15 + $0x240] sm:$0xff]
        %v6996 = vld [vmem:[#allocation15 + $0x248] sm:$0xff]
        %v6997 = vld [vmem:[#allocation15 + $0x250] sm:$0xff]
        %v6998 = vld [vmem:[#allocation15 + $0x258] sm:$0xff]
        %v6999 = vld [vmem:[#allocation15 + $0x260] sm:$0xff]
        %v7000 = vld [vmem:[#allocation15 + $0x268] sm:$0xff]
        %v7001 = vld [vmem:[#allocation15 + $0x270] sm:$0xff]
        %v7002 = vld [vmem:[#allocation15 + $0x278] sm:$0xff]
        %v7003 = vld [vmem:[#allocation15 + $0x280] sm:$0xff]
        %v7004 = vld [vmem:[#allocation15 + $0x288] sm:$0xff]
        %v7005 = vld [vmem:[#allocation15 + $0x290] sm:$0xff]
        %v7006 = vld [vmem:[#allocation15 + $0x298] sm:$0xff]
        %v7007 = vld [vmem:[#allocation15 + $0x2a0] sm:$0xff]
        %v7008 = vld [vmem:[#allocation15 + $0x2a8] sm:$0xff]
        %v7009 = vld [vmem:[#allocation15 + $0x2b0] sm:$0xff]
        %v7010 = vld [vmem:[#allocation15 + $0x2b8] sm:$0xff]
        %v7011 = vld [vmem:[#allocation15 + $0x2c0] sm:$0xff]
        %v7012 = vld [vmem:[#allocation15 + $0x2c8] sm:$0xff]
        %v7013 = vld [vmem:[#allocation15 + $0x2d0] sm:$0xff]
        %v7014 = vld [vmem:[#allocation15 + $0x2d8] sm:$0xff]
        %v7015 = vld [vmem:[#allocation15 + $0x2e0] sm:$0xff]
        %v7016 = vld [vmem:[#allocation15 + $0x2e8] sm:$0xff]
        %v7017 = vld [vmem:[#allocation15 + $0x2f0] sm:$0xff]
        %v7018 = vld [vmem:[#allocation15 + $0x2f8] sm:$0xff]
        %v7019 = vld [vmem:[#allocation15 + $0x300] sm:$0xff]
        %v7020 = vld [vmem:[#allocation15 + $0x308] sm:$0xff]
        %v7021 = vld [vmem:[#allocation15 + $0x310] sm:$0xff]
        %v7022 = vld [vmem:[#allocation15 + $0x318] sm:$0xff]
        %v7023 = vld [vmem:[#allocation15 + $0x320] sm:$0xff]
        %v7024 = vld [vmem:[#allocation15 + $0x328] sm:$0xff]
        %v7025 = vld [vmem:[#allocation15 + $0x330] sm:$0xff]
        %v7026 = vld [vmem:[#allocation15 + $0x338] sm:$0xff]
        %v7027 = vld [vmem:[#allocation15 + $0x340] sm:$0xff]
        %v7028 = vld [vmem:[#allocation15 + $0x348] sm:$0xff]
        %v7029 = vld [vmem:[#allocation15 + $0x350] sm:$0xff]
        %v7030 = vld [vmem:[#allocation15 + $0x358] sm:$0xff]
        %v7031 = vld [vmem:[#allocation15 + $0x360] sm:$0xff]
        %v7032 = vld [vmem:[#allocation15 + $0x368] sm:$0xff]
        %v7033 = vld [vmem:[#allocation15 + $0x370] sm:$0xff]
        %v7034 = vld [vmem:[#allocation15 + $0x378] sm:$0xff]
        %v7035 = vld [vmem:[#allocation15 + $0x380] sm:$0xff]
        %v7036 = vld [vmem:[#allocation15 + $0x388] sm:$0xff]
        %v7037 = vld [vmem:[#allocation15 + $0x390] sm:$0xff]
        %v7038 = vld [vmem:[#allocation15 + $0x398] sm:$0xff]
        %v7039 = vld [vmem:[#allocation15 + $0x3a0] sm:$0xff]
        %v7040 = vld [vmem:[#allocation15 + $0x3a8] sm:$0xff]
        %v7041 = vld [vmem:[#allocation15 + $0x3b0] sm:$0xff]
        %v7042 = vld [vmem:[#allocation15 + $0x3b8] sm:$0xff]
        %v7043 = vld [vmem:[#allocation15 + $0x3c0] sm:$0xff]
        %v7044 = vld [vmem:[#allocation15 + $0x3c8] sm:$0xff]
        %v7045 = vld [vmem:[#allocation15 + $0x3d0] sm:$0xff]
        %v7046 = vld [vmem:[#allocation15 + $0x3d8] sm:$0xff]
        %v7047 = vld [vmem:[#allocation15 + $0x3e0] sm:$0xff]
        %v7048 = vld [vmem:[#allocation15 + $0x3e8] sm:$0xff]
        %v7049 = vld [vmem:[#allocation15 + $0x3f0] sm:$0xff]
        %v7050 = vld [vmem:[#allocation15 + $0x3f8] sm:$0xff]
        %v7051 = vld [vmem:[#allocation16] sm:$0xf]
        %v7053 = vlaneseq
        %v7054 = vshrl.u32 %v7053, 7
        %v7055 = vsub.s32 0, %v7054
        %v7056 = vrot.slane %v7051, %v7055
        %v7057 = vlaneseq
        %v7058 = vshrl.u32 %v7057, 7
        %v7059 = vsub.s32 1, %v7058
        %v7060 = vrot.slane %v7051, %v7059
        %v7061 = vlaneseq
        %v7062 = vshrl.u32 %v7061, 7
        %v7063 = vsub.s32 2, %v7062
        %v7064 = vrot.slane %v7051, %v7063
        %v7065 = vlaneseq
        %v7066 = vshrl.u32 %v7065, 7
        %v7067 = vsub.s32 3, %v7066
        %v7068 = vrot.slane %v7051, %v7067
        %v7077 = vunpack.c.l.b16 %v6919
        %v7078 = vunpack.c.h.b16 %v6919
        %v7079 = vunpack.c.l.b16 %v6920
        %v7080 = vunpack.c.h.b16 %v6920
        %v7081 = vunpack.c.l.b16 %v6921
        %v7082 = vunpack.c.h.b16 %v6921
        %v7083 = vunpack.c.l.b16 %v6922
        %v7084 = vunpack.c.h.b16 %v6922
        %v7085 = vpack.c.b16 %v7081, %v7077
        %v7086 = vpack.c.b16 %v7082, %v7078
        %v7087 = vpack.c.b16 %v7083, %v7079
        %v7088 = vpack.c.b16 %v7084, %v7080
        %v7221 = vunpack.c.l.b16 %v6923
        %v7222 = vunpack.c.h.b16 %v6923
        %v7223 = vunpack.c.l.b16 %v6924
        %v7224 = vunpack.c.h.b16 %v6924
        %v7225 = vunpack.c.l.b16 %v6925
        %v7226 = vunpack.c.h.b16 %v6925
        %v7227 = vunpack.c.l.b16 %v6926
        %v7228 = vunpack.c.h.b16 %v6926
        %v7229 = vunpack.c.l.b16 %v6927
        %v7230 = vunpack.c.h.b16 %v6927
        %v7231 = vunpack.c.l.b16 %v6928
        %v7232 = vunpack.c.h.b16 %v6928
        %v7233 = vunpack.c.l.b16 %v6929
        %v7234 = vunpack.c.h.b16 %v6929
        %v7235 = vunpack.c.l.b16 %v6930
        %v7236 = vunpack.c.h.b16 %v6930
        %v7237 = vunpack.c.l.b16 %v6931
        %v7238 = vunpack.c.h.b16 %v6931
        %v7239 = vunpack.c.l.b16 %v6932
        %v7240 = vunpack.c.h.b16 %v6932
        %v7241 = vunpack.c.l.b16 %v6933
        %v7242 = vunpack.c.h.b16 %v6933
        %v7243 = vunpack.c.l.b16 %v6934
        %v7244 = vunpack.c.h.b16 %v6934
        %v7245 = vunpack.c.l.b16 %v6935
        %v7246 = vunpack.c.h.b16 %v6935
        %v7247 = vunpack.c.l.b16 %v6936
        %v7248 = vunpack.c.h.b16 %v6936
        %v7249 = vunpack.c.l.b16 %v6937
        %v7250 = vunpack.c.h.b16 %v6937
        %v7251 = vunpack.c.l.b16 %v6938
        %v7252 = vunpack.c.h.b16 %v6938
        %v7253 = vunpack.c.l.b16 %v6939
        %v7254 = vunpack.c.h.b16 %v6939
        %v7255 = vunpack.c.l.b16 %v6940
        %v7256 = vunpack.c.h.b16 %v6940
        %v7257 = vunpack.c.l.b16 %v6941
        %v7258 = vunpack.c.h.b16 %v6941
        %v7259 = vunpack.c.l.b16 %v6942
        %v7260 = vunpack.c.h.b16 %v6942
        %v7261 = vunpack.c.l.b16 %v6943
        %v7262 = vunpack.c.h.b16 %v6943
        %v7263 = vunpack.c.l.b16 %v6944
        %v7264 = vunpack.c.h.b16 %v6944
        %v7265 = vunpack.c.l.b16 %v6945
        %v7266 = vunpack.c.h.b16 %v6945
        %v7267 = vunpack.c.l.b16 %v6946
        %v7268 = vunpack.c.h.b16 %v6946
        %v7269 = vunpack.c.l.b16 %v6947
        %v7270 = vunpack.c.h.b16 %v6947
        %v7271 = vunpack.c.l.b16 %v6948
        %v7272 = vunpack.c.h.b16 %v6948
        %v7273 = vunpack.c.l.b16 %v6949
        %v7274 = vunpack.c.h.b16 %v6949
        %v7275 = vunpack.c.l.b16 %v6950
        %v7276 = vunpack.c.h.b16 %v6950
        %v7277 = vunpack.c.l.b16 %v6951
        %v7278 = vunpack.c.h.b16 %v6951
        %v7279 = vunpack.c.l.b16 %v6952
        %v7280 = vunpack.c.h.b16 %v6952
        %v7281 = vunpack.c.l.b16 %v6953
        %v7282 = vunpack.c.h.b16 %v6953
        %v7283 = vunpack.c.l.b16 %v6954
        %v7284 = vunpack.c.h.b16 %v6954
        %v7285 = vunpack.c.l.b16 %v6955
        %v7286 = vunpack.c.h.b16 %v6955
        %v7287 = vunpack.c.l.b16 %v6956
        %v7288 = vunpack.c.h.b16 %v6956
        %v7289 = vunpack.c.l.b16 %v6957
        %v7290 = vunpack.c.h.b16 %v6957
        %v7291 = vunpack.c.l.b16 %v6958
        %v7292 = vunpack.c.h.b16 %v6958
        %v7293 = vunpack.c.l.b16 %v6959
        %v7294 = vunpack.c.h.b16 %v6959
        %v7295 = vunpack.c.l.b16 %v6960
        %v7296 = vunpack.c.h.b16 %v6960
        %v7297 = vunpack.c.l.b16 %v6961
        %v7298 = vunpack.c.h.b16 %v6961
        %v7299 = vunpack.c.l.b16 %v6962
        %v7300 = vunpack.c.h.b16 %v6962
        %v7301 = vunpack.c.l.b16 %v6963
        %v7302 = vunpack.c.h.b16 %v6963
        %v7303 = vunpack.c.l.b16 %v6964
        %v7304 = vunpack.c.h.b16 %v6964
        %v7305 = vunpack.c.l.b16 %v6965
        %v7306 = vunpack.c.h.b16 %v6965
        %v7307 = vunpack.c.l.b16 %v6966
        %v7308 = vunpack.c.h.b16 %v6966
        %v7309 = vunpack.c.l.b16 %v6967
        %v7310 = vunpack.c.h.b16 %v6967
        %v7311 = vunpack.c.l.b16 %v6968
        %v7312 = vunpack.c.h.b16 %v6968
        %v7313 = vunpack.c.l.b16 %v6969
        %v7314 = vunpack.c.h.b16 %v6969
        %v7315 = vunpack.c.l.b16 %v6970
        %v7316 = vunpack.c.h.b16 %v6970
        %v7317 = vunpack.c.l.b16 %v6971
        %v7318 = vunpack.c.h.b16 %v6971
        %v7319 = vunpack.c.l.b16 %v6972
        %v7320 = vunpack.c.h.b16 %v6972
        %v7321 = vunpack.c.l.b16 %v6973
        %v7322 = vunpack.c.h.b16 %v6973
        %v7323 = vunpack.c.l.b16 %v6974
        %v7324 = vunpack.c.h.b16 %v6974
        %v7325 = vunpack.c.l.b16 %v6975
        %v7326 = vunpack.c.h.b16 %v6975
        %v7327 = vunpack.c.l.b16 %v6976
        %v7328 = vunpack.c.h.b16 %v6976
        %v7329 = vunpack.c.l.b16 %v6977
        %v7330 = vunpack.c.h.b16 %v6977
        %v7331 = vunpack.c.l.b16 %v6978
        %v7332 = vunpack.c.h.b16 %v6978
        %v7333 = vunpack.c.l.b16 %v6979
        %v7334 = vunpack.c.h.b16 %v6979
        %v7335 = vunpack.c.l.b16 %v6980
        %v7336 = vunpack.c.h.b16 %v6980
        %v7337 = vunpack.c.l.b16 %v6981
        %v7338 = vunpack.c.h.b16 %v6981
        %v7339 = vunpack.c.l.b16 %v6982
        %v7340 = vunpack.c.h.b16 %v6982
        %v7341 = vunpack.c.l.b16 %v6983
        %v7342 = vunpack.c.h.b16 %v6983
        %v7343 = vunpack.c.l.b16 %v6984
        %v7344 = vunpack.c.h.b16 %v6984
        %v7345 = vunpack.c.l.b16 %v6985
        %v7346 = vunpack.c.h.b16 %v6985
        %v7347 = vunpack.c.l.b16 %v6986
        %v7348 = vunpack.c.h.b16 %v6986
        %v7349 = vunpack.c.l.b16 %v6987
        %v7350 = vunpack.c.h.b16 %v6987
        %v7351 = vunpack.c.l.b16 %v6988
        %v7352 = vunpack.c.h.b16 %v6988
        %v7353 = vunpack.c.l.b16 %v6989
        %v7354 = vunpack.c.h.b16 %v6989
        %v7355 = vunpack.c.l.b16 %v6990
        %v7356 = vunpack.c.h.b16 %v6990
        %v7357 = vunpack.c.l.b16 %v6991
        %v7358 = vunpack.c.h.b16 %v6991
        %v7359 = vunpack.c.l.b16 %v6992
        %v7360 = vunpack.c.h.b16 %v6992
        %v7361 = vunpack.c.l.b16 %v6993
        %v7362 = vunpack.c.h.b16 %v6993
        %v7363 = vunpack.c.l.b16 %v6994
        %v7364 = vunpack.c.h.b16 %v6994
        %v7365 = vunpack.c.l.b16 %v6995
        %v7366 = vunpack.c.h.b16 %v6995
        %v7367 = vunpack.c.l.b16 %v6996
        %v7368 = vunpack.c.h.b16 %v6996
        %v7369 = vunpack.c.l.b16 %v6997
        %v7370 = vunpack.c.h.b16 %v6997
        %v7371 = vunpack.c.l.b16 %v6998
        %v7372 = vunpack.c.h.b16 %v6998
        %v7373 = vunpack.c.l.b16 %v6999
        %v7374 = vunpack.c.h.b16 %v6999
        %v7375 = vunpack.c.l.b16 %v7000
        %v7376 = vunpack.c.h.b16 %v7000
        %v7377 = vunpack.c.l.b16 %v7001
        %v7378 = vunpack.c.h.b16 %v7001
        %v7379 = vunpack.c.l.b16 %v7002
        %v7380 = vunpack.c.h.b16 %v7002
        %v7381 = vunpack.c.l.b16 %v7003
        %v7382 = vunpack.c.h.b16 %v7003
        %v7383 = vunpack.c.l.b16 %v7004
        %v7384 = vunpack.c.h.b16 %v7004
        %v7385 = vunpack.c.l.b16 %v7005
        %v7386 = vunpack.c.h.b16 %v7005
        %v7387 = vunpack.c.l.b16 %v7006
        %v7388 = vunpack.c.h.b16 %v7006
        %v7389 = vunpack.c.l.b16 %v7007
        %v7390 = vunpack.c.h.b16 %v7007
        %v7391 = vunpack.c.l.b16 %v7008
        %v7392 = vunpack.c.h.b16 %v7008
        %v7393 = vunpack.c.l.b16 %v7009
        %v7394 = vunpack.c.h.b16 %v7009
        %v7395 = vunpack.c.l.b16 %v7010
        %v7396 = vunpack.c.h.b16 %v7010
        %v7397 = vunpack.c.l.b16 %v7011
        %v7398 = vunpack.c.h.b16 %v7011
        %v7399 = vunpack.c.l.b16 %v7012
        %v7400 = vunpack.c.h.b16 %v7012
        %v7401 = vunpack.c.l.b16 %v7013
        %v7402 = vunpack.c.h.b16 %v7013
        %v7403 = vunpack.c.l.b16 %v7014
        %v7404 = vunpack.c.h.b16 %v7014
        %v7405 = vunpack.c.l.b16 %v7015
        %v7406 = vunpack.c.h.b16 %v7015
        %v7407 = vunpack.c.l.b16 %v7016
        %v7408 = vunpack.c.h.b16 %v7016
        %v7409 = vunpack.c.l.b16 %v7017
        %v7410 = vunpack.c.h.b16 %v7017
        %v7411 = vunpack.c.l.b16 %v7018
        %v7412 = vunpack.c.h.b16 %v7018
        %v7413 = vunpack.c.l.b16 %v7019
        %v7414 = vunpack.c.h.b16 %v7019
        %v7415 = vunpack.c.l.b16 %v7020
        %v7416 = vunpack.c.h.b16 %v7020
        %v7417 = vunpack.c.l.b16 %v7021
        %v7418 = vunpack.c.h.b16 %v7021
        %v7419 = vunpack.c.l.b16 %v7022
        %v7420 = vunpack.c.h.b16 %v7022
        %v7421 = vunpack.c.l.b16 %v7023
        %v7422 = vunpack.c.h.b16 %v7023
        %v7423 = vunpack.c.l.b16 %v7024
        %v7424 = vunpack.c.h.b16 %v7024
        %v7425 = vunpack.c.l.b16 %v7025
        %v7426 = vunpack.c.h.b16 %v7025
        %v7427 = vunpack.c.l.b16 %v7026
        %v7428 = vunpack.c.h.b16 %v7026
        %v7429 = vunpack.c.l.b16 %v7027
        %v7430 = vunpack.c.h.b16 %v7027
        %v7431 = vunpack.c.l.b16 %v7028
        %v7432 = vunpack.c.h.b16 %v7028
        %v7433 = vunpack.c.l.b16 %v7029
        %v7434 = vunpack.c.h.b16 %v7029
        %v7435 = vunpack.c.l.b16 %v7030
        %v7436 = vunpack.c.h.b16 %v7030
        %v7437 = vunpack.c.l.b16 %v7031
        %v7438 = vunpack.c.h.b16 %v7031
        %v7439 = vunpack.c.l.b16 %v7032
        %v7440 = vunpack.c.h.b16 %v7032
        %v7441 = vunpack.c.l.b16 %v7033
        %v7442 = vunpack.c.h.b16 %v7033
        %v7443 = vunpack.c.l.b16 %v7034
        %v7444 = vunpack.c.h.b16 %v7034
        %v7445 = vunpack.c.l.b16 %v7035
        %v7446 = vunpack.c.h.b16 %v7035
        %v7447 = vunpack.c.l.b16 %v7036
        %v7448 = vunpack.c.h.b16 %v7036
        %v7449 = vunpack.c.l.b16 %v7037
        %v7450 = vunpack.c.h.b16 %v7037
        %v7451 = vunpack.c.l.b16 %v7038
        %v7452 = vunpack.c.h.b16 %v7038
        %v7453 = vunpack.c.l.b16 %v7039
        %v7454 = vunpack.c.h.b16 %v7039
        %v7455 = vunpack.c.l.b16 %v7040
        %v7456 = vunpack.c.h.b16 %v7040
        %v7457 = vunpack.c.l.b16 %v7041
        %v7458 = vunpack.c.h.b16 %v7041
        %v7459 = vunpack.c.l.b16 %v7042
        %v7460 = vunpack.c.h.b16 %v7042
        %v7461 = vunpack.c.l.b16 %v7043
        %v7462 = vunpack.c.h.b16 %v7043
        %v7463 = vunpack.c.l.b16 %v7044
        %v7464 = vunpack.c.h.b16 %v7044
        %v7465 = vunpack.c.l.b16 %v7045
        %v7466 = vunpack.c.h.b16 %v7045
        %v7467 = vunpack.c.l.b16 %v7046
        %v7468 = vunpack.c.h.b16 %v7046
        %v7469 = vunpack.c.l.b16 %v7047
        %v7470 = vunpack.c.h.b16 %v7047
        %v7471 = vunpack.c.l.b16 %v7048
        %v7472 = vunpack.c.h.b16 %v7048
        %v7473 = vunpack.c.l.b16 %v7049
        %v7474 = vunpack.c.h.b16 %v7049
        %v7475 = vunpack.c.l.b16 %v7050
        %v7476 = vunpack.c.h.b16 %v7050
        %v7477 = vpack.c.b16 %v7225, %v7221
        %v7478 = vpack.c.b16 %v7226, %v7222
        %v7479 = vpack.c.b16 %v7227, %v7223
        %v7480 = vpack.c.b16 %v7228, %v7224
        %v7481 = vpack.c.b16 %v7233, %v7229
        %v7482 = vpack.c.b16 %v7234, %v7230
        %v7483 = vpack.c.b16 %v7235, %v7231
        %v7484 = vpack.c.b16 %v7236, %v7232
        %v7485 = vpack.c.b16 %v7241, %v7237
        %v7486 = vpack.c.b16 %v7242, %v7238
        %v7487 = vpack.c.b16 %v7243, %v7239
        %v7488 = vpack.c.b16 %v7244, %v7240
        %v7489 = vpack.c.b16 %v7249, %v7245
        %v7490 = vpack.c.b16 %v7250, %v7246
        %v7491 = vpack.c.b16 %v7251, %v7247
        %v7492 = vpack.c.b16 %v7252, %v7248
        %v7493 = vpack.c.b16 %v7257, %v7253
        %v7494 = vpack.c.b16 %v7258, %v7254
        %v7495 = vpack.c.b16 %v7259, %v7255
        %v7496 = vpack.c.b16 %v7260, %v7256
        %v7497 = vpack.c.b16 %v7265, %v7261
        %v7498 = vpack.c.b16 %v7266, %v7262
        %v7499 = vpack.c.b16 %v7267, %v7263
        %v7500 = vpack.c.b16 %v7268, %v7264
        %v7501 = vpack.c.b16 %v7273, %v7269
        %v7502 = vpack.c.b16 %v7274, %v7270
        %v7503 = vpack.c.b16 %v7275, %v7271
        %v7504 = vpack.c.b16 %v7276, %v7272
        %v7505 = vpack.c.b16 %v7281, %v7277
        %v7506 = vpack.c.b16 %v7282, %v7278
        %v7507 = vpack.c.b16 %v7283, %v7279
        %v7508 = vpack.c.b16 %v7284, %v7280
        %v7509 = vpack.c.b16 %v7289, %v7285
        %v7510 = vpack.c.b16 %v7290, %v7286
        %v7511 = vpack.c.b16 %v7291, %v7287
        %v7512 = vpack.c.b16 %v7292, %v7288
        %v7513 = vpack.c.b16 %v7297, %v7293
        %v7514 = vpack.c.b16 %v7298, %v7294
        %v7515 = vpack.c.b16 %v7299, %v7295
        %v7516 = vpack.c.b16 %v7300, %v7296
        %v7517 = vpack.c.b16 %v7305, %v7301
        %v7518 = vpack.c.b16 %v7306, %v7302
        %v7519 = vpack.c.b16 %v7307, %v7303
        %v7520 = vpack.c.b16 %v7308, %v7304
        %v7521 = vpack.c.b16 %v7313, %v7309
        %v7522 = vpack.c.b16 %v7314, %v7310
        %v7523 = vpack.c.b16 %v7315, %v7311
        %v7524 = vpack.c.b16 %v7316, %v7312
        %v7525 = vpack.c.b16 %v7321, %v7317
        %v7526 = vpack.c.b16 %v7322, %v7318
        %v7527 = vpack.c.b16 %v7323, %v7319
        %v7528 = vpack.c.b16 %v7324, %v7320
        %v7529 = vpack.c.b16 %v7329, %v7325
        %v7530 = vpack.c.b16 %v7330, %v7326
        %v7531 = vpack.c.b16 %v7331, %v7327
        %v7532 = vpack.c.b16 %v7332, %v7328
        %v7533 = vpack.c.b16 %v7337, %v7333
        %v7534 = vpack.c.b16 %v7338, %v7334
        %v7535 = vpack.c.b16 %v7339, %v7335
        %v7536 = vpack.c.b16 %v7340, %v7336
        %v7537 = vpack.c.b16 %v7345, %v7341
        %v7538 = vpack.c.b16 %v7346, %v7342
        %v7539 = vpack.c.b16 %v7347, %v7343
        %v7540 = vpack.c.b16 %v7348, %v7344
        %v7541 = vpack.c.b16 %v7353, %v7349
        %v7542 = vpack.c.b16 %v7354, %v7350
        %v7543 = vpack.c.b16 %v7355, %v7351
        %v7544 = vpack.c.b16 %v7356, %v7352
        %v7545 = vpack.c.b16 %v7361, %v7357
        %v7546 = vpack.c.b16 %v7362, %v7358
        %v7547 = vpack.c.b16 %v7363, %v7359
        %v7548 = vpack.c.b16 %v7364, %v7360
        %v7549 = vpack.c.b16 %v7369, %v7365
        %v7550 = vpack.c.b16 %v7370, %v7366
        %v7551 = vpack.c.b16 %v7371, %v7367
        %v7552 = vpack.c.b16 %v7372, %v7368
        %v7553 = vpack.c.b16 %v7377, %v7373
        %v7554 = vpack.c.b16 %v7378, %v7374
        %v7555 = vpack.c.b16 %v7379, %v7375
        %v7556 = vpack.c.b16 %v7380, %v7376
        %v7557 = vpack.c.b16 %v7385, %v7381
        %v7558 = vpack.c.b16 %v7386, %v7382
        %v7559 = vpack.c.b16 %v7387, %v7383
        %v7560 = vpack.c.b16 %v7388, %v7384
        %v7561 = vpack.c.b16 %v7393, %v7389
        %v7562 = vpack.c.b16 %v7394, %v7390
        %v7563 = vpack.c.b16 %v7395, %v7391
        %v7564 = vpack.c.b16 %v7396, %v7392
        %v7565 = vpack.c.b16 %v7401, %v7397
        %v7566 = vpack.c.b16 %v7402, %v7398
        %v7567 = vpack.c.b16 %v7403, %v7399
        %v7568 = vpack.c.b16 %v7404, %v7400
        %v7569 = vpack.c.b16 %v7409, %v7405
        %v7570 = vpack.c.b16 %v7410, %v7406
        %v7571 = vpack.c.b16 %v7411, %v7407
        %v7572 = vpack.c.b16 %v7412, %v7408
        %v7573 = vpack.c.b16 %v7417, %v7413
        %v7574 = vpack.c.b16 %v7418, %v7414
        %v7575 = vpack.c.b16 %v7419, %v7415
        %v7576 = vpack.c.b16 %v7420, %v7416
        %v7577 = vpack.c.b16 %v7425, %v7421
        %v7578 = vpack.c.b16 %v7426, %v7422
        %v7579 = vpack.c.b16 %v7427, %v7423
        %v7580 = vpack.c.b16 %v7428, %v7424
        %v7581 = vpack.c.b16 %v7433, %v7429
        %v7582 = vpack.c.b16 %v7434, %v7430
        %v7583 = vpack.c.b16 %v7435, %v7431
        %v7584 = vpack.c.b16 %v7436, %v7432
        %v7585 = vpack.c.b16 %v7441, %v7437
        %v7586 = vpack.c.b16 %v7442, %v7438
        %v7587 = vpack.c.b16 %v7443, %v7439
        %v7588 = vpack.c.b16 %v7444, %v7440
        %v7589 = vpack.c.b16 %v7449, %v7445
        %v7590 = vpack.c.b16 %v7450, %v7446
        %v7591 = vpack.c.b16 %v7451, %v7447
        %v7592 = vpack.c.b16 %v7452, %v7448
        %v7593 = vpack.c.b16 %v7457, %v7453
        %v7594 = vpack.c.b16 %v7458, %v7454
        %v7595 = vpack.c.b16 %v7459, %v7455
        %v7596 = vpack.c.b16 %v7460, %v7456
        %v7597 = vpack.c.b16 %v7465, %v7461
        %v7598 = vpack.c.b16 %v7466, %v7462
        %v7599 = vpack.c.b16 %v7467, %v7463
        %v7600 = vpack.c.b16 %v7468, %v7464
        %v7601 = vpack.c.b16 %v7473, %v7469
        %v7602 = vpack.c.b16 %v7474, %v7470
        %v7603 = vpack.c.b16 %v7475, %v7471
        %v7604 = vpack.c.b16 %v7476, %v7472
        %7733 = vmatprep.subr.bf16.mxu0 %v7478
        %7734 = vmatpush1.bf16.msra.mxu0 %v7477
        %7735 = vmatprep.subr.bf16.mxu0 %v7482
        %7736 = vmatpush1.bf16.msra.mxu0 %v7481
        %7737 = vmatprep.subr.bf16.mxu0 %v7486
        %7738 = vmatpush1.bf16.msra.mxu0 %v7485
        %7739 = vmatprep.subr.bf16.mxu0 %v7490
        %7740 = vmatpush1.bf16.msra.mxu0 %v7489
        %7741 = vmatprep.subr.bf16.mxu0 %v7494
        %7742 = vmatpush1.bf16.msra.mxu0 %v7493
        %7743 = vmatprep.subr.bf16.mxu0 %v7498
        %7744 = vmatpush1.bf16.msra.mxu0 %v7497
        %7745 = vmatprep.subr.bf16.mxu0 %v7502
        %7746 = vmatpush1.bf16.msra.mxu0 %v7501
        %7747 = vmatprep.subr.bf16.mxu0 %v7506
        %7748 = vmatpush1.bf16.msra.mxu0 %v7505
        %7749 = vmatprep.subr.bf16.mxu0 %v7510
        %7750 = vmatpush1.bf16.msra.mxu0 %v7509
        %7751 = vmatprep.subr.bf16.mxu0 %v7514
        %7752 = vmatpush1.bf16.msra.mxu0 %v7513
        %7753 = vmatprep.subr.bf16.mxu0 %v7518
        %7754 = vmatpush1.bf16.msra.mxu0 %v7517
        %7755 = vmatprep.subr.bf16.mxu0 %v7522
        %7756 = vmatpush1.bf16.msra.mxu0 %v7521
        %7757 = vmatprep.subr.bf16.mxu0 %v7526
        %7758 = vmatpush1.bf16.msra.mxu0 %v7525
        %7759 = vmatprep.subr.bf16.mxu0 %v7530
        %7760 = vmatpush1.bf16.msra.mxu0 %v7529
        %7761 = vmatprep.subr.bf16.mxu0 %v7534
        %7762 = vmatpush1.bf16.msra.mxu0 %v7533
        %7763 = vmatprep.subr.bf16.mxu0 %v7538
        %7764 = vmatpush1.bf16.msra.mxu0 %v7537
        %7765 = vmatprep.mubr.bf16.mxu0 %v7086
        %7766 = vmatmul.mubr.bf16.gmra.mrb[0].mxu0 %v7085
        %v7767 = vpop.f32.mrb[0].mxu0
        %v7768 = vadd.f32 %v7056, %v7767
        %v7769 = vpop.f32.mrb[0].mxu0
        %v7770 = vadd.f32 %v7060, %v7769
        %v7771 = vpop.f32.mrb[0].mxu0
        %v7772 = vadd.f32 %v7056, %v7771
        %v7773 = vpop.f32.mrb[0].mxu0
        %v7774 = vadd.f32 %v7060, %v7773
        %7775 = vdwg.mxu0
        %7776 = vmatprep.subr.bf16.mxu0 %v7542
        %7777 = vmatpush1.bf16.msra.mxu0 %v7541
        %7778 = vmatprep.subr.bf16.mxu0 %v7546
        %7779 = vmatpush1.bf16.msra.mxu0 %v7545
        %7780 = vmatprep.subr.bf16.mxu0 %v7550
        %7781 = vmatpush1.bf16.msra.mxu0 %v7549
        %7782 = vmatprep.subr.bf16.mxu0 %v7554
        %7783 = vmatpush1.bf16.msra.mxu0 %v7553
        %7784 = vmatprep.subr.bf16.mxu0 %v7558
        %7785 = vmatpush1.bf16.msra.mxu0 %v7557
        %7786 = vmatprep.subr.bf16.mxu0 %v7562
        %7787 = vmatpush1.bf16.msra.mxu0 %v7561
        %7788 = vmatprep.subr.bf16.mxu0 %v7566
        %7789 = vmatpush1.bf16.msra.mxu0 %v7565
        %7790 = vmatprep.subr.bf16.mxu0 %v7570
        %7791 = vmatpush1.bf16.msra.mxu0 %v7569
        %7792 = vmatprep.subr.bf16.mxu0 %v7574
        %7793 = vmatpush1.bf16.msra.mxu0 %v7573
        %7794 = vmatprep.subr.bf16.mxu0 %v7578
        %7795 = vmatpush1.bf16.msra.mxu0 %v7577
        %7796 = vmatprep.subr.bf16.mxu0 %v7582
        %7797 = vmatpush1.bf16.msra.mxu0 %v7581
        %7798 = vmatprep.subr.bf16.mxu0 %v7586
        %7799 = vmatpush1.bf16.msra.mxu0 %v7585
        %7800 = vmatprep.subr.bf16.mxu0 %v7590
        %7801 = vmatpush1.bf16.msra.mxu0 %v7589
        %7802 = vmatprep.subr.bf16.mxu0 %v7594
        %7803 = vmatpush1.bf16.msra.mxu0 %v7593
        %7804 = vmatprep.subr.bf16.mxu0 %v7598
        %7805 = vmatpush1.bf16.msra.mxu0 %v7597
        %7806 = vmatprep.subr.bf16.mxu0 %v7602
        %7807 = vmatpush1.bf16.msra.mxu0 %v7601
        %7808 = vmatprep.mubr.bf16.mxu0 %v7088
        %7809 = vmatmul.mubr.bf16.gmra.mrb[0].mxu0 %v7087
        %v7810 = vpop.f32.mrb[0].mxu0
        %v7811 = vadd.f32 %v7768, %v7810
        %v7812 = vpop.f32.mrb[0].mxu0
        %v7813 = vadd.f32 %v7770, %v7812
        %v7814 = vpop.f32.mrb[0].mxu0
        %v7815 = vadd.f32 %v7772, %v7814
        %v7816 = vpop.f32.mrb[0].mxu0
        %v7817 = vadd.f32 %v7774, %v7816
        %7818 = vdwg.mxu0
        %7819 = vmatprep.subr.bf16.mxu0 %v7480
        %7820 = vmatpush1.bf16.msra.mxu0 %v7479
        %7821 = vmatprep.subr.bf16.mxu0 %v7484
        %7822 = vmatpush1.bf16.msra.mxu0 %v7483
        %7823 = vmatprep.subr.bf16.mxu0 %v7488
        %7824 = vmatpush1.bf16.msra.mxu0 %v7487
        %7825 = vmatprep.subr.bf16.mxu0 %v7492
        %7826 = vmatpush1.bf16.msra.mxu0 %v7491
        %7827 = vmatprep.subr.bf16.mxu0 %v7496
        %7828 = vmatpush1.bf16.msra.mxu0 %v7495
        %7829 = vmatprep.subr.bf16.mxu0 %v7500
        %7830 = vmatpush1.bf16.msra.mxu0 %v7499
        %7831 = vmatprep.subr.bf16.mxu0 %v7504
        %7832 = vmatpush1.bf16.msra.mxu0 %v7503
        %7833 = vmatprep.subr.bf16.mxu0 %v7508
        %7834 = vmatpush1.bf16.msra.mxu0 %v7507
        %7835 = vmatprep.subr.bf16.mxu0 %v7512
        %7836 = vmatpush1.bf16.msra.mxu0 %v7511
        %7837 = vmatprep.subr.bf16.mxu0 %v7516
        %7838 = vmatpush1.bf16.msra.mxu0 %v7515
        %7839 = vmatprep.subr.bf16.mxu0 %v7520
        %7840 = vmatpush1.bf16.msra.mxu0 %v7519
        %7841 = vmatprep.subr.bf16.mxu0 %v7524
        %7842 = vmatpush1.bf16.msra.mxu0 %v7523
        %7843 = vmatprep.subr.bf16.mxu0 %v7528
        %7844 = vmatpush1.bf16.msra.mxu0 %v7527
        %7845 = vmatprep.subr.bf16.mxu0 %v7532
        %7846 = vmatpush1.bf16.msra.mxu0 %v7531
        %7847 = vmatprep.subr.bf16.mxu0 %v7536
        %7848 = vmatpush1.bf16.msra.mxu0 %v7535
        %7849 = vmatprep.subr.bf16.mxu0 %v7540
        %7850 = vmatpush1.bf16.msra.mxu0 %v7539
        %7851 = vmatprep.mubr.bf16.mxu0 %v7086
        %7852 = vmatmul.mubr.bf16.gmra.mrb[0].mxu0 %v7085
        %v7853 = vpop.f32.mrb[0].mxu0
        %v7854 = vadd.f32 %v7064, %v7853
        %v7855 = vpop.f32.mrb[0].mxu0
        %v7856 = vadd.f32 %v7068, %v7855
        %v7857 = vpop.f32.mrb[0].mxu0
        %v7858 = vadd.f32 %v7064, %v7857
        %v7859 = vpop.f32.mrb[0].mxu0
        %v7860 = vadd.f32 %v7068, %v7859
        %7861 = vdwg.mxu0
        %7862 = vmatprep.subr.bf16.mxu0 %v7544
        %7863 = vmatpush1.bf16.msra.mxu0 %v7543
        %7864 = vmatprep.subr.bf16.mxu0 %v7548
        %7865 = vmatpush1.bf16.msra.mxu0 %v7547
        %7866 = vmatprep.subr.bf16.mxu0 %v7552
        %7867 = vmatpush1.bf16.msra.mxu0 %v7551
        %7868 = vmatprep.subr.bf16.mxu0 %v7556
        %7869 = vmatpush1.bf16.msra.mxu0 %v7555
        %7870 = vmatprep.subr.bf16.mxu0 %v7560
        %7871 = vmatpush1.bf16.msra.mxu0 %v7559
        %7872 = vmatprep.subr.bf16.mxu0 %v7564
        %7873 = vmatpush1.bf16.msra.mxu0 %v7563
        %7874 = vmatprep.subr.bf16.mxu0 %v7568
        %7875 = vmatpush1.bf16.msra.mxu0 %v7567
        %7876 = vmatprep.subr.bf16.mxu0 %v7572
        %7877 = vmatpush1.bf16.msra.mxu0 %v7571
        %7878 = vmatprep.subr.bf16.mxu0 %v7576
        %7879 = vmatpush1.bf16.msra.mxu0 %v7575
        %7880 = vmatprep.subr.bf16.mxu0 %v7580
        %7881 = vmatpush1.bf16.msra.mxu0 %v7579
        %7882 = vmatprep.subr.bf16.mxu0 %v7584
        %7883 = vmatpush1.bf16.msra.mxu0 %v7583
        %7884 = vmatprep.subr.bf16.mxu0 %v7588
        %7885 = vmatpush1.bf16.msra.mxu0 %v7587
        %7886 = vmatprep.subr.bf16.mxu0 %v7592
        %7887 = vmatpush1.bf16.msra.mxu0 %v7591
        %7888 = vmatprep.subr.bf16.mxu0 %v7596
        %7889 = vmatpush1.bf16.msra.mxu0 %v7595
        %7890 = vmatprep.subr.bf16.mxu0 %v7600
        %7891 = vmatpush1.bf16.msra.mxu0 %v7599
        %7892 = vmatprep.subr.bf16.mxu0 %v7604
        %7893 = vmatpush1.bf16.msra.mxu0 %v7603
        %7894 = vmatprep.mubr.bf16.mxu0 %v7088
        %7895 = vmatmul.mubr.bf16.gmra.mrb[0].mxu0 %v7087
        %v7896 = vpop.f32.mrb[0].mxu0
        %v7897 = vadd.f32 %v7854, %v7896
        %v7898 = vpop.f32.mrb[0].mxu0
        %v7899 = vadd.f32 %v7856, %v7898
        %v7900 = vpop.f32.mrb[0].mxu0
        %v7901 = vadd.f32 %v7858, %v7900
        %v7902 = vpop.f32.mrb[0].mxu0
        %v7903 = vadd.f32 %v7860, %v7902
        %7904 = vdwg.mxu0
        %v7905 = vmax.f32 %v7811, 0.0
        %v7906 = vmax.f32 %v7813, 0.0
        %v7907 = vmax.f32 %v7897, 0.0
        %v7908 = vmax.f32 %v7899, 0.0
        %v7909 = vmax.f32 %v7815, 0.0
        %v7910 = vmax.f32 %v7817, 0.0
        %v7911 = vmax.f32 %v7901, 0.0
        %v7912 = vmax.f32 %v7903, 0.0
        %v7913 = vpack.c.bf16 %v7909, %v7905
        %v7914 = vpack.c.bf16 %v7910, %v7906
        %v7915 = vpack.c.bf16 %v7911, %v7907
        %v7916 = vpack.c.bf16 %v7912, %v7908
        %v7921 = vunpack.c.l.b16 %v7913
        %v7922 = vunpack.c.l.b16 %v7914
        %v7923 = vunpack.c.l.b16 %v7915
        %v7924 = vunpack.c.l.b16 %v7916
        %v7925 = vunpack.c.h.b16 %v7913
        %v7926 = vunpack.c.h.b16 %v7914
        %v7927 = vunpack.c.h.b16 %v7915
        %v7928 = vunpack.c.h.b16 %v7916
        %v7929 = vpack.c.b16 %v7922, %v7921
        %v7930 = vpack.c.b16 %v7924, %v7923
        %v7931 = vpack.c.b16 %v7926, %v7925
        %v7932 = vpack.c.b16 %v7928, %v7927
        %7937 = vst [vmem:[#allocation3] sm:$0xff] %v7929
        %7938 = vst [vmem:[#allocation3 + $0x8] sm:$0xff] %v7930
        %7939 = vst [vmem:[#allocation3 + $0x10] sm:$0xff] %v7931
        %7940 = vst [vmem:[#allocation3 + $0x18] sm:$0xff] %v7932
        %v7941 = vld [vmem:[#allocation3] sm:$0xff]
        %v7942 = vld [vmem:[#allocation3 + $0x8] sm:$0xff]
        %v7943 = vld [vmem:[#allocation3 + $0x10] sm:$0xff]
        %v7944 = vld [vmem:[#allocation3 + $0x18] sm:$0xff]
        %v7945 = vld [vmem:[#allocation18] sm:$0xff]
        %v7946 = vld [vmem:[#allocation18 + $0x8] sm:$0xff]
        %v7947 = vld [vmem:[#allocation18 + $0x10] sm:$0xff]
        %v7948 = vld [vmem:[#allocation18 + $0x18] sm:$0xff]
        %v7949 = vld [vmem:[#allocation18 + $0x20] sm:$0xff]
        %v7950 = vld [vmem:[#allocation18 + $0x28] sm:$0xff]
        %v7951 = vld [vmem:[#allocation18 + $0x30] sm:$0xff]
        %v7952 = vld [vmem:[#allocation18 + $0x38] sm:$0xff]
        %v7953 = vld [vmem:[#allocation18 + $0x40] sm:$0xff]
        %v7954 = vld [vmem:[#allocation18 + $0x48] sm:$0xff]
        %v7955 = vld [vmem:[#allocation18 + $0x50] sm:$0xff]
        %v7956 = vld [vmem:[#allocation18 + $0x58] sm:$0xff]
        %v7957 = vld [vmem:[#allocation18 + $0x60] sm:$0xff]
        %v7958 = vld [vmem:[#allocation18 + $0x68] sm:$0xff]
        %v7959 = vld [vmem:[#allocation18 + $0x70] sm:$0xff]
        %v7960 = vld [vmem:[#allocation18 + $0x78] sm:$0xff]
        %v7961 = vld [vmem:[#allocation18 + $0x80] sm:$0xff]
        %v7962 = vld [vmem:[#allocation18 + $0x88] sm:$0xff]
        %v7963 = vld [vmem:[#allocation18 + $0x90] sm:$0xff]
        %v7964 = vld [vmem:[#allocation18 + $0x98] sm:$0xff]
        %v7965 = vld [vmem:[#allocation18 + $0xa0] sm:$0xff]
        %v7966 = vld [vmem:[#allocation18 + $0xa8] sm:$0xff]
        %v7967 = vld [vmem:[#allocation18 + $0xb0] sm:$0xff]
        %v7968 = vld [vmem:[#allocation18 + $0xb8] sm:$0xff]
        %v7969 = vld [vmem:[#allocation18 + $0xc0] sm:$0xff]
        %v7970 = vld [vmem:[#allocation18 + $0xc8] sm:$0xff]
        %v7971 = vld [vmem:[#allocation18 + $0xd0] sm:$0xff]
        %v7972 = vld [vmem:[#allocation18 + $0xd8] sm:$0xff]
        %v7973 = vld [vmem:[#allocation18 + $0xe0] sm:$0xff]
        %v7974 = vld [vmem:[#allocation18 + $0xe8] sm:$0xff]
        %v7975 = vld [vmem:[#allocation18 + $0xf0] sm:$0xff]
        %v7976 = vld [vmem:[#allocation18 + $0xf8] sm:$0xff]
        %v7977 = vld [vmem:[#allocation18 + $0x100] sm:$0xff]
        %v7978 = vld [vmem:[#allocation18 + $0x108] sm:$0xff]
        %v7979 = vld [vmem:[#allocation18 + $0x110] sm:$0xff]
        %v7980 = vld [vmem:[#allocation18 + $0x118] sm:$0xff]
        %v7981 = vld [vmem:[#allocation18 + $0x120] sm:$0xff]
        %v7982 = vld [vmem:[#allocation18 + $0x128] sm:$0xff]
        %v7983 = vld [vmem:[#allocation18 + $0x130] sm:$0xff]
        %v7984 = vld [vmem:[#allocation18 + $0x138] sm:$0xff]
        %v7985 = vld [vmem:[#allocation18 + $0x140] sm:$0xff]
        %v7986 = vld [vmem:[#allocation18 + $0x148] sm:$0xff]
        %v7987 = vld [vmem:[#allocation18 + $0x150] sm:$0xff]
        %v7988 = vld [vmem:[#allocation18 + $0x158] sm:$0xff]
        %v7989 = vld [vmem:[#allocation18 + $0x160] sm:$0xff]
        %v7990 = vld [vmem:[#allocation18 + $0x168] sm:$0xff]
        %v7991 = vld [vmem:[#allocation18 + $0x170] sm:$0xff]
        %v7992 = vld [vmem:[#allocation18 + $0x178] sm:$0xff]
        %v7993 = vld [vmem:[#allocation18 + $0x180] sm:$0xff]
        %v7994 = vld [vmem:[#allocation18 + $0x188] sm:$0xff]
        %v7995 = vld [vmem:[#allocation18 + $0x190] sm:$0xff]
        %v7996 = vld [vmem:[#allocation18 + $0x198] sm:$0xff]
        %v7997 = vld [vmem:[#allocation18 + $0x1a0] sm:$0xff]
        %v7998 = vld [vmem:[#allocation18 + $0x1a8] sm:$0xff]
        %v7999 = vld [vmem:[#allocation18 + $0x1b0] sm:$0xff]
        %v8000 = vld [vmem:[#allocation18 + $0x1b8] sm:$0xff]
        %v8001 = vld [vmem:[#allocation18 + $0x1c0] sm:$0xff]
        %v8002 = vld [vmem:[#allocation18 + $0x1c8] sm:$0xff]
        %v8003 = vld [vmem:[#allocation18 + $0x1d0] sm:$0xff]
        %v8004 = vld [vmem:[#allocation18 + $0x1d8] sm:$0xff]
        %v8005 = vld [vmem:[#allocation18 + $0x1e0] sm:$0xff]
        %v8006 = vld [vmem:[#allocation18 + $0x1e8] sm:$0xff]
        %v8007 = vld [vmem:[#allocation18 + $0x1f0] sm:$0xff]
        %v8008 = vld [vmem:[#allocation18 + $0x1f8] sm:$0xff]
        %v8009 = vld [vmem:[#allocation18 + $0x200] sm:$0xff]
        %v8010 = vld [vmem:[#allocation18 + $0x208] sm:$0xff]
        %v8011 = vld [vmem:[#allocation18 + $0x210] sm:$0xff]
        %v8012 = vld [vmem:[#allocation18 + $0x218] sm:$0xff]
        %v8013 = vld [vmem:[#allocation18 + $0x220] sm:$0xff]
        %v8014 = vld [vmem:[#allocation18 + $0x228] sm:$0xff]
        %v8015 = vld [vmem:[#allocation18 + $0x230] sm:$0xff]
        %v8016 = vld [vmem:[#allocation18 + $0x238] sm:$0xff]
        %v8017 = vld [vmem:[#allocation18 + $0x240] sm:$0xff]
        %v8018 = vld [vmem:[#allocation18 + $0x248] sm:$0xff]
        %v8019 = vld [vmem:[#allocation18 + $0x250] sm:$0xff]
        %v8020 = vld [vmem:[#allocation18 + $0x258] sm:$0xff]
        %v8021 = vld [vmem:[#allocation18 + $0x260] sm:$0xff]
        %v8022 = vld [vmem:[#allocation18 + $0x268] sm:$0xff]
        %v8023 = vld [vmem:[#allocation18 + $0x270] sm:$0xff]
        %v8024 = vld [vmem:[#allocation18 + $0x278] sm:$0xff]
        %v8025 = vld [vmem:[#allocation18 + $0x280] sm:$0xff]
        %v8026 = vld [vmem:[#allocation18 + $0x288] sm:$0xff]
        %v8027 = vld [vmem:[#allocation18 + $0x290] sm:$0xff]
        %v8028 = vld [vmem:[#allocation18 + $0x298] sm:$0xff]
        %v8029 = vld [vmem:[#allocation18 + $0x2a0] sm:$0xff]
        %v8030 = vld [vmem:[#allocation18 + $0x2a8] sm:$0xff]
        %v8031 = vld [vmem:[#allocation18 + $0x2b0] sm:$0xff]
        %v8032 = vld [vmem:[#allocation18 + $0x2b8] sm:$0xff]
        %v8033 = vld [vmem:[#allocation18 + $0x2c0] sm:$0xff]
        %v8034 = vld [vmem:[#allocation18 + $0x2c8] sm:$0xff]
        %v8035 = vld [vmem:[#allocation18 + $0x2d0] sm:$0xff]
        %v8036 = vld [vmem:[#allocation18 + $0x2d8] sm:$0xff]
        %v8037 = vld [vmem:[#allocation18 + $0x2e0] sm:$0xff]
        %v8038 = vld [vmem:[#allocation18 + $0x2e8] sm:$0xff]
        %v8039 = vld [vmem:[#allocation18 + $0x2f0] sm:$0xff]
        %v8040 = vld [vmem:[#allocation18 + $0x2f8] sm:$0xff]
        %v8041 = vld [vmem:[#allocation18 + $0x300] sm:$0xff]
        %v8042 = vld [vmem:[#allocation18 + $0x308] sm:$0xff]
        %v8043 = vld [vmem:[#allocation18 + $0x310] sm:$0xff]
        %v8044 = vld [vmem:[#allocation18 + $0x318] sm:$0xff]
        %v8045 = vld [vmem:[#allocation18 + $0x320] sm:$0xff]
        %v8046 = vld [vmem:[#allocation18 + $0x328] sm:$0xff]
        %v8047 = vld [vmem:[#allocation18 + $0x330] sm:$0xff]
        %v8048 = vld [vmem:[#allocation18 + $0x338] sm:$0xff]
        %v8049 = vld [vmem:[#allocation18 + $0x340] sm:$0xff]
        %v8050 = vld [vmem:[#allocation18 + $0x348] sm:$0xff]
        %v8051 = vld [vmem:[#allocation18 + $0x350] sm:$0xff]
        %v8052 = vld [vmem:[#allocation18 + $0x358] sm:$0xff]
        %v8053 = vld [vmem:[#allocation18 + $0x360] sm:$0xff]
        %v8054 = vld [vmem:[#allocation18 + $0x368] sm:$0xff]
        %v8055 = vld [vmem:[#allocation18 + $0x370] sm:$0xff]
        %v8056 = vld [vmem:[#allocation18 + $0x378] sm:$0xff]
        %v8057 = vld [vmem:[#allocation18 + $0x380] sm:$0xff]
        %v8058 = vld [vmem:[#allocation18 + $0x388] sm:$0xff]
        %v8059 = vld [vmem:[#allocation18 + $0x390] sm:$0xff]
        %v8060 = vld [vmem:[#allocation18 + $0x398] sm:$0xff]
        %v8061 = vld [vmem:[#allocation18 + $0x3a0] sm:$0xff]
        %v8062 = vld [vmem:[#allocation18 + $0x3a8] sm:$0xff]
        %v8063 = vld [vmem:[#allocation18 + $0x3b0] sm:$0xff]
        %v8064 = vld [vmem:[#allocation18 + $0x3b8] sm:$0xff]
        %v8065 = vld [vmem:[#allocation18 + $0x3c0] sm:$0xff]
        %v8066 = vld [vmem:[#allocation18 + $0x3c8] sm:$0xff]
        %v8067 = vld [vmem:[#allocation18 + $0x3d0] sm:$0xff]
        %v8068 = vld [vmem:[#allocation18 + $0x3d8] sm:$0xff]
        %v8069 = vld [vmem:[#allocation18 + $0x3e0] sm:$0xff]
        %v8070 = vld [vmem:[#allocation18 + $0x3e8] sm:$0xff]
        %v8071 = vld [vmem:[#allocation18 + $0x3f0] sm:$0xff]
        %v8072 = vld [vmem:[#allocation18 + $0x3f8] sm:$0xff]
        %v8073 = vld [vmem:[#allocation19] sm:$0xf]
        %v8075 = vlaneseq
        %v8076 = vshrl.u32 %v8075, 7
        %v8077 = vsub.s32 0, %v8076
        %v8078 = vrot.slane %v8073, %v8077
        %v8079 = vlaneseq
        %v8080 = vshrl.u32 %v8079, 7
        %v8081 = vsub.s32 1, %v8080
        %v8082 = vrot.slane %v8073, %v8081
        %v8083 = vlaneseq
        %v8084 = vshrl.u32 %v8083, 7
        %v8085 = vsub.s32 2, %v8084
        %v8086 = vrot.slane %v8073, %v8085
        %v8087 = vlaneseq
        %v8088 = vshrl.u32 %v8087, 7
        %v8089 = vsub.s32 3, %v8088
        %v8090 = vrot.slane %v8073, %v8089
        %v8099 = vunpack.c.l.b16 %v7941
        %v8100 = vunpack.c.h.b16 %v7941
        %v8101 = vunpack.c.l.b16 %v7942
        %v8102 = vunpack.c.h.b16 %v7942
        %v8103 = vunpack.c.l.b16 %v7943
        %v8104 = vunpack.c.h.b16 %v7943
        %v8105 = vunpack.c.l.b16 %v7944
        %v8106 = vunpack.c.h.b16 %v7944
        %v8107 = vpack.c.b16 %v8103, %v8099
        %v8108 = vpack.c.b16 %v8104, %v8100
        %v8109 = vpack.c.b16 %v8105, %v8101
        %v8110 = vpack.c.b16 %v8106, %v8102
        %v8243 = vunpack.c.l.b16 %v7945
        %v8244 = vunpack.c.h.b16 %v7945
        %v8245 = vunpack.c.l.b16 %v7946
        %v8246 = vunpack.c.h.b16 %v7946
        %v8247 = vunpack.c.l.b16 %v7947
        %v8248 = vunpack.c.h.b16 %v7947
        %v8249 = vunpack.c.l.b16 %v7948
        %v8250 = vunpack.c.h.b16 %v7948
        %v8251 = vunpack.c.l.b16 %v7949
        %v8252 = vunpack.c.h.b16 %v7949
        %v8253 = vunpack.c.l.b16 %v7950
        %v8254 = vunpack.c.h.b16 %v7950
        %v8255 = vunpack.c.l.b16 %v7951
        %v8256 = vunpack.c.h.b16 %v7951
        %v8257 = vunpack.c.l.b16 %v7952
        %v8258 = vunpack.c.h.b16 %v7952
        %v8259 = vunpack.c.l.b16 %v7953
        %v8260 = vunpack.c.h.b16 %v7953
        %v8261 = vunpack.c.l.b16 %v7954
        %v8262 = vunpack.c.h.b16 %v7954
        %v8263 = vunpack.c.l.b16 %v7955
        %v8264 = vunpack.c.h.b16 %v7955
        %v8265 = vunpack.c.l.b16 %v7956
        %v8266 = vunpack.c.h.b16 %v7956
        %v8267 = vunpack.c.l.b16 %v7957
        %v8268 = vunpack.c.h.b16 %v7957
        %v8269 = vunpack.c.l.b16 %v7958
        %v8270 = vunpack.c.h.b16 %v7958
        %v8271 = vunpack.c.l.b16 %v7959
        %v8272 = vunpack.c.h.b16 %v7959
        %v8273 = vunpack.c.l.b16 %v7960
        %v8274 = vunpack.c.h.b16 %v7960
        %v8275 = vunpack.c.l.b16 %v7961
        %v8276 = vunpack.c.h.b16 %v7961
        %v8277 = vunpack.c.l.b16 %v7962
        %v8278 = vunpack.c.h.b16 %v7962
        %v8279 = vunpack.c.l.b16 %v7963
        %v8280 = vunpack.c.h.b16 %v7963
        %v8281 = vunpack.c.l.b16 %v7964
        %v8282 = vunpack.c.h.b16 %v7964
        %v8283 = vunpack.c.l.b16 %v7965
        %v8284 = vunpack.c.h.b16 %v7965
        %v8285 = vunpack.c.l.b16 %v7966
        %v8286 = vunpack.c.h.b16 %v7966
        %v8287 = vunpack.c.l.b16 %v7967
        %v8288 = vunpack.c.h.b16 %v7967
        %v8289 = vunpack.c.l.b16 %v7968
        %v8290 = vunpack.c.h.b16 %v7968
        %v8291 = vunpack.c.l.b16 %v7969
        %v8292 = vunpack.c.h.b16 %v7969
        %v8293 = vunpack.c.l.b16 %v7970
        %v8294 = vunpack.c.h.b16 %v7970
        %v8295 = vunpack.c.l.b16 %v7971
        %v8296 = vunpack.c.h.b16 %v7971
        %v8297 = vunpack.c.l.b16 %v7972
        %v8298 = vunpack.c.h.b16 %v7972
        %v8299 = vunpack.c.l.b16 %v7973
        %v8300 = vunpack.c.h.b16 %v7973
        %v8301 = vunpack.c.l.b16 %v7974
        %v8302 = vunpack.c.h.b16 %v7974
        %v8303 = vunpack.c.l.b16 %v7975
        %v8304 = vunpack.c.h.b16 %v7975
        %v8305 = vunpack.c.l.b16 %v7976
        %v8306 = vunpack.c.h.b16 %v7976
        %v8307 = vunpack.c.l.b16 %v7977
        %v8308 = vunpack.c.h.b16 %v7977
        %v8309 = vunpack.c.l.b16 %v7978
        %v8310 = vunpack.c.h.b16 %v7978
        %v8311 = vunpack.c.l.b16 %v7979
        %v8312 = vunpack.c.h.b16 %v7979
        %v8313 = vunpack.c.l.b16 %v7980
        %v8314 = vunpack.c.h.b16 %v7980
        %v8315 = vunpack.c.l.b16 %v7981
        %v8316 = vunpack.c.h.b16 %v7981
        %v8317 = vunpack.c.l.b16 %v7982
        %v8318 = vunpack.c.h.b16 %v7982
        %v8319 = vunpack.c.l.b16 %v7983
        %v8320 = vunpack.c.h.b16 %v7983
        %v8321 = vunpack.c.l.b16 %v7984
        %v8322 = vunpack.c.h.b16 %v7984
        %v8323 = vunpack.c.l.b16 %v7985
        %v8324 = vunpack.c.h.b16 %v7985
        %v8325 = vunpack.c.l.b16 %v7986
        %v8326 = vunpack.c.h.b16 %v7986
        %v8327 = vunpack.c.l.b16 %v7987
        %v8328 = vunpack.c.h.b16 %v7987
        %v8329 = vunpack.c.l.b16 %v7988
        %v8330 = vunpack.c.h.b16 %v7988
        %v8331 = vunpack.c.l.b16 %v7989
        %v8332 = vunpack.c.h.b16 %v7989
        %v8333 = vunpack.c.l.b16 %v7990
        %v8334 = vunpack.c.h.b16 %v7990
        %v8335 = vunpack.c.l.b16 %v7991
        %v8336 = vunpack.c.h.b16 %v7991
        %v8337 = vunpack.c.l.b16 %v7992
        %v8338 = vunpack.c.h.b16 %v7992
        %v8339 = vunpack.c.l.b16 %v7993
        %v8340 = vunpack.c.h.b16 %v7993
        %v8341 = vunpack.c.l.b16 %v7994
        %v8342 = vunpack.c.h.b16 %v7994
        %v8343 = vunpack.c.l.b16 %v7995
        %v8344 = vunpack.c.h.b16 %v7995
        %v8345 = vunpack.c.l.b16 %v7996
        %v8346 = vunpack.c.h.b16 %v7996
        %v8347 = vunpack.c.l.b16 %v7997
        %v8348 = vunpack.c.h.b16 %v7997
        %v8349 = vunpack.c.l.b16 %v7998
        %v8350 = vunpack.c.h.b16 %v7998
        %v8351 = vunpack.c.l.b16 %v7999
        %v8352 = vunpack.c.h.b16 %v7999
        %v8353 = vunpack.c.l.b16 %v8000
        %v8354 = vunpack.c.h.b16 %v8000
        %v8355 = vunpack.c.l.b16 %v8001
        %v8356 = vunpack.c.h.b16 %v8001
        %v8357 = vunpack.c.l.b16 %v8002
        %v8358 = vunpack.c.h.b16 %v8002
        %v8359 = vunpack.c.l.b16 %v8003
        %v8360 = vunpack.c.h.b16 %v8003
        %v8361 = vunpack.c.l.b16 %v8004
        %v8362 = vunpack.c.h.b16 %v8004
        %v8363 = vunpack.c.l.b16 %v8005
        %v8364 = vunpack.c.h.b16 %v8005
        %v8365 = vunpack.c.l.b16 %v8006
        %v8366 = vunpack.c.h.b16 %v8006
        %v8367 = vunpack.c.l.b16 %v8007
        %v8368 = vunpack.c.h.b16 %v8007
        %v8369 = vunpack.c.l.b16 %v8008
        %v8370 = vunpack.c.h.b16 %v8008
        %v8371 = vunpack.c.l.b16 %v8009
        %v8372 = vunpack.c.h.b16 %v8009
        %v8373 = vunpack.c.l.b16 %v8010
        %v8374 = vunpack.c.h.b16 %v8010
        %v8375 = vunpack.c.l.b16 %v8011
        %v8376 = vunpack.c.h.b16 %v8011
        %v8377 = vunpack.c.l.b16 %v8012
        %v8378 = vunpack.c.h.b16 %v8012
        %v8379 = vunpack.c.l.b16 %v8013
        %v8380 = vunpack.c.h.b16 %v8013
        %v8381 = vunpack.c.l.b16 %v8014
        %v8382 = vunpack.c.h.b16 %v8014
        %v8383 = vunpack.c.l.b16 %v8015
        %v8384 = vunpack.c.h.b16 %v8015
        %v8385 = vunpack.c.l.b16 %v8016
        %v8386 = vunpack.c.h.b16 %v8016
        %v8387 = vunpack.c.l.b16 %v8017
        %v8388 = vunpack.c.h.b16 %v8017
        %v8389 = vunpack.c.l.b16 %v8018
        %v8390 = vunpack.c.h.b16 %v8018
        %v8391 = vunpack.c.l.b16 %v8019
        %v8392 = vunpack.c.h.b16 %v8019
        %v8393 = vunpack.c.l.b16 %v8020
        %v8394 = vunpack.c.h.b16 %v8020
        %v8395 = vunpack.c.l.b16 %v8021
        %v8396 = vunpack.c.h.b16 %v8021
        %v8397 = vunpack.c.l.b16 %v8022
        %v8398 = vunpack.c.h.b16 %v8022
        %v8399 = vunpack.c.l.b16 %v8023
        %v8400 = vunpack.c.h.b16 %v8023
        %v8401 = vunpack.c.l.b16 %v8024
        %v8402 = vunpack.c.h.b16 %v8024
        %v8403 = vunpack.c.l.b16 %v8025
        %v8404 = vunpack.c.h.b16 %v8025
        %v8405 = vunpack.c.l.b16 %v8026
        %v8406 = vunpack.c.h.b16 %v8026
        %v8407 = vunpack.c.l.b16 %v8027
        %v8408 = vunpack.c.h.b16 %v8027
        %v8409 = vunpack.c.l.b16 %v8028
        %v8410 = vunpack.c.h.b16 %v8028
        %v8411 = vunpack.c.l.b16 %v8029
        %v8412 = vunpack.c.h.b16 %v8029
        %v8413 = vunpack.c.l.b16 %v8030
        %v8414 = vunpack.c.h.b16 %v8030
        %v8415 = vunpack.c.l.b16 %v8031
        %v8416 = vunpack.c.h.b16 %v8031
        %v8417 = vunpack.c.l.b16 %v8032
        %v8418 = vunpack.c.h.b16 %v8032
        %v8419 = vunpack.c.l.b16 %v8033
        %v8420 = vunpack.c.h.b16 %v8033
        %v8421 = vunpack.c.l.b16 %v8034
        %v8422 = vunpack.c.h.b16 %v8034
        %v8423 = vunpack.c.l.b16 %v8035
        %v8424 = vunpack.c.h.b16 %v8035
        %v8425 = vunpack.c.l.b16 %v8036
        %v8426 = vunpack.c.h.b16 %v8036
        %v8427 = vunpack.c.l.b16 %v8037
        %v8428 = vunpack.c.h.b16 %v8037
        %v8429 = vunpack.c.l.b16 %v8038
        %v8430 = vunpack.c.h.b16 %v8038
        %v8431 = vunpack.c.l.b16 %v8039
        %v8432 = vunpack.c.h.b16 %v8039
        %v8433 = vunpack.c.l.b16 %v8040
        %v8434 = vunpack.c.h.b16 %v8040
        %v8435 = vunpack.c.l.b16 %v8041
        %v8436 = vunpack.c.h.b16 %v8041
        %v8437 = vunpack.c.l.b16 %v8042
        %v8438 = vunpack.c.h.b16 %v8042
        %v8439 = vunpack.c.l.b16 %v8043
        %v8440 = vunpack.c.h.b16 %v8043
        %v8441 = vunpack.c.l.b16 %v8044
        %v8442 = vunpack.c.h.b16 %v8044
        %v8443 = vunpack.c.l.b16 %v8045
        %v8444 = vunpack.c.h.b16 %v8045
        %v8445 = vunpack.c.l.b16 %v8046
        %v8446 = vunpack.c.h.b16 %v8046
        %v8447 = vunpack.c.l.b16 %v8047
        %v8448 = vunpack.c.h.b16 %v8047
        %v8449 = vunpack.c.l.b16 %v8048
        %v8450 = vunpack.c.h.b16 %v8048
        %v8451 = vunpack.c.l.b16 %v8049
        %v8452 = vunpack.c.h.b16 %v8049
        %v8453 = vunpack.c.l.b16 %v8050
        %v8454 = vunpack.c.h.b16 %v8050
        %v8455 = vunpack.c.l.b16 %v8051
        %v8456 = vunpack.c.h.b16 %v8051
        %v8457 = vunpack.c.l.b16 %v8052
        %v8458 = vunpack.c.h.b16 %v8052
        %v8459 = vunpack.c.l.b16 %v8053
        %v8460 = vunpack.c.h.b16 %v8053
        %v8461 = vunpack.c.l.b16 %v8054
        %v8462 = vunpack.c.h.b16 %v8054
        %v8463 = vunpack.c.l.b16 %v8055
        %v8464 = vunpack.c.h.b16 %v8055
        %v8465 = vunpack.c.l.b16 %v8056
        %v8466 = vunpack.c.h.b16 %v8056
        %v8467 = vunpack.c.l.b16 %v8057
        %v8468 = vunpack.c.h.b16 %v8057
        %v8469 = vunpack.c.l.b16 %v8058
        %v8470 = vunpack.c.h.b16 %v8058
        %v8471 = vunpack.c.l.b16 %v8059
        %v8472 = vunpack.c.h.b16 %v8059
        %v8473 = vunpack.c.l.b16 %v8060
        %v8474 = vunpack.c.h.b16 %v8060
        %v8475 = vunpack.c.l.b16 %v8061
        %v8476 = vunpack.c.h.b16 %v8061
        %v8477 = vunpack.c.l.b16 %v8062
        %v8478 = vunpack.c.h.b16 %v8062
        %v8479 = vunpack.c.l.b16 %v8063
        %v8480 = vunpack.c.h.b16 %v8063
        %v8481 = vunpack.c.l.b16 %v8064
        %v8482 = vunpack.c.h.b16 %v8064
        %v8483 = vunpack.c.l.b16 %v8065
        %v8484 = vunpack.c.h.b16 %v8065
        %v8485 = vunpack.c.l.b16 %v8066
        %v8486 = vunpack.c.h.b16 %v8066
        %v8487 = vunpack.c.l.b16 %v8067
        %v8488 = vunpack.c.h.b16 %v8067
        %v8489 = vunpack.c.l.b16 %v8068
        %v8490 = vunpack.c.h.b16 %v8068
        %v8491 = vunpack.c.l.b16 %v8069
        %v8492 = vunpack.c.h.b16 %v8069
        %v8493 = vunpack.c.l.b16 %v8070
        %v8494 = vunpack.c.h.b16 %v8070
        %v8495 = vunpack.c.l.b16 %v8071
        %v8496 = vunpack.c.h.b16 %v8071
        %v8497 = vunpack.c.l.b16 %v8072
        %v8498 = vunpack.c.h.b16 %v8072
        %v8499 = vpack.c.b16 %v8247, %v8243
        %v8500 = vpack.c.b16 %v8248, %v8244
        %v8501 = vpack.c.b16 %v8249, %v8245
        %v8502 = vpack.c.b16 %v8250, %v8246
        %v8503 = vpack.c.b16 %v8255, %v8251
        %v8504 = vpack.c.b16 %v8256, %v8252
        %v8505 = vpack.c.b16 %v8257, %v8253
        %v8506 = vpack.c.b16 %v8258, %v8254
        %v8507 = vpack.c.b16 %v8263, %v8259
        %v8508 = vpack.c.b16 %v8264, %v8260
        %v8509 = vpack.c.b16 %v8265, %v8261
        %v8510 = vpack.c.b16 %v8266, %v8262
        %v8511 = vpack.c.b16 %v8271, %v8267
        %v8512 = vpack.c.b16 %v8272, %v8268
        %v8513 = vpack.c.b16 %v8273, %v8269
        %v8514 = vpack.c.b16 %v8274, %v8270
        %v8515 = vpack.c.b16 %v8279, %v8275
        %v8516 = vpack.c.b16 %v8280, %v8276
        %v8517 = vpack.c.b16 %v8281, %v8277
        %v8518 = vpack.c.b16 %v8282, %v8278
        %v8519 = vpack.c.b16 %v8287, %v8283
        %v8520 = vpack.c.b16 %v8288, %v8284
        %v8521 = vpack.c.b16 %v8289, %v8285
        %v8522 = vpack.c.b16 %v8290, %v8286
        %v8523 = vpack.c.b16 %v8295, %v8291
        %v8524 = vpack.c.b16 %v8296, %v8292
        %v8525 = vpack.c.b16 %v8297, %v8293
        %v8526 = vpack.c.b16 %v8298, %v8294
        %v8527 = vpack.c.b16 %v8303, %v8299
        %v8528 = vpack.c.b16 %v8304, %v8300
        %v8529 = vpack.c.b16 %v8305, %v8301
        %v8530 = vpack.c.b16 %v8306, %v8302
        %v8531 = vpack.c.b16 %v8311, %v8307
        %v8532 = vpack.c.b16 %v8312, %v8308
        %v8533 = vpack.c.b16 %v8313, %v8309
        %v8534 = vpack.c.b16 %v8314, %v8310
        %v8535 = vpack.c.b16 %v8319, %v8315
        %v8536 = vpack.c.b16 %v8320, %v8316
        %v8537 = vpack.c.b16 %v8321, %v8317
        %v8538 = vpack.c.b16 %v8322, %v8318
        %v8539 = vpack.c.b16 %v8327, %v8323
        %v8540 = vpack.c.b16 %v8328, %v8324
        %v8541 = vpack.c.b16 %v8329, %v8325
        %v8542 = vpack.c.b16 %v8330, %v8326
        %v8543 = vpack.c.b16 %v8335, %v8331
        %v8544 = vpack.c.b16 %v8336, %v8332
        %v8545 = vpack.c.b16 %v8337, %v8333
        %v8546 = vpack.c.b16 %v8338, %v8334
        %v8547 = vpack.c.b16 %v8343, %v8339
        %v8548 = vpack.c.b16 %v8344, %v8340
        %v8549 = vpack.c.b16 %v8345, %v8341
        %v8550 = vpack.c.b16 %v8346, %v8342
        %v8551 = vpack.c.b16 %v8351, %v8347
        %v8552 = vpack.c.b16 %v8352, %v8348
        %v8553 = vpack.c.b16 %v8353, %v8349
        %v8554 = vpack.c.b16 %v8354, %v8350
        %v8555 = vpack.c.b16 %v8359, %v8355
        %v8556 = vpack.c.b16 %v8360, %v8356
        %v8557 = vpack.c.b16 %v8361, %v8357
        %v8558 = vpack.c.b16 %v8362, %v8358
        %v8559 = vpack.c.b16 %v8367, %v8363
        %v8560 = vpack.c.b16 %v8368, %v8364
        %v8561 = vpack.c.b16 %v8369, %v8365
        %v8562 = vpack.c.b16 %v8370, %v8366
        %v8563 = vpack.c.b16 %v8375, %v8371
        %v8564 = vpack.c.b16 %v8376, %v8372
        %v8565 = vpack.c.b16 %v8377, %v8373
        %v8566 = vpack.c.b16 %v8378, %v8374
        %v8567 = vpack.c.b16 %v8383, %v8379
        %v8568 = vpack.c.b16 %v8384, %v8380
        %v8569 = vpack.c.b16 %v8385, %v8381
        %v8570 = vpack.c.b16 %v8386, %v8382
        %v8571 = vpack.c.b16 %v8391, %v8387
        %v8572 = vpack.c.b16 %v8392, %v8388
        %v8573 = vpack.c.b16 %v8393, %v8389
        %v8574 = vpack.c.b16 %v8394, %v8390
        %v8575 = vpack.c.b16 %v8399, %v8395
        %v8576 = vpack.c.b16 %v8400, %v8396
        %v8577 = vpack.c.b16 %v8401, %v8397
        %v8578 = vpack.c.b16 %v8402, %v8398
        %v8579 = vpack.c.b16 %v8407, %v8403
        %v8580 = vpack.c.b16 %v8408, %v8404
        %v8581 = vpack.c.b16 %v8409, %v8405
        %v8582 = vpack.c.b16 %v8410, %v8406
        %v8583 = vpack.c.b16 %v8415, %v8411
        %v8584 = vpack.c.b16 %v8416, %v8412
        %v8585 = vpack.c.b16 %v8417, %v8413
        %v8586 = vpack.c.b16 %v8418, %v8414
        %v8587 = vpack.c.b16 %v8423, %v8419
        %v8588 = vpack.c.b16 %v8424, %v8420
        %v8589 = vpack.c.b16 %v8425, %v8421
        %v8590 = vpack.c.b16 %v8426, %v8422
        %v8591 = vpack.c.b16 %v8431, %v8427
        %v8592 = vpack.c.b16 %v8432, %v8428
        %v8593 = vpack.c.b16 %v8433, %v8429
        %v8594 = vpack.c.b16 %v8434, %v8430
        %v8595 = vpack.c.b16 %v8439, %v8435
        %v8596 = vpack.c.b16 %v8440, %v8436
        %v8597 = vpack.c.b16 %v8441, %v8437
        %v8598 = vpack.c.b16 %v8442, %v8438
        %v8599 = vpack.c.b16 %v8447, %v8443
        %v8600 = vpack.c.b16 %v8448, %v8444
        %v8601 = vpack.c.b16 %v8449, %v8445
        %v8602 = vpack.c.b16 %v8450, %v8446
        %v8603 = vpack.c.b16 %v8455, %v8451
        %v8604 = vpack.c.b16 %v8456, %v8452
        %v8605 = vpack.c.b16 %v8457, %v8453
        %v8606 = vpack.c.b16 %v8458, %v8454
        %v8607 = vpack.c.b16 %v8463, %v8459
        %v8608 = vpack.c.b16 %v8464, %v8460
        %v8609 = vpack.c.b16 %v8465, %v8461
        %v8610 = vpack.c.b16 %v8466, %v8462
        %v8611 = vpack.c.b16 %v8471, %v8467
        %v8612 = vpack.c.b16 %v8472, %v8468
        %v8613 = vpack.c.b16 %v8473, %v8469
        %v8614 = vpack.c.b16 %v8474, %v8470
        %v8615 = vpack.c.b16 %v8479, %v8475
        %v8616 = vpack.c.b16 %v8480, %v8476
        %v8617 = vpack.c.b16 %v8481, %v8477
        %v8618 = vpack.c.b16 %v8482, %v8478
        %v8619 = vpack.c.b16 %v8487, %v8483
        %v8620 = vpack.c.b16 %v8488, %v8484
        %v8621 = vpack.c.b16 %v8489, %v8485
        %v8622 = vpack.c.b16 %v8490, %v8486
        %v8623 = vpack.c.b16 %v8495, %v8491
        %v8624 = vpack.c.b16 %v8496, %v8492
        %v8625 = vpack.c.b16 %v8497, %v8493
        %v8626 = vpack.c.b16 %v8498, %v8494
        %8755 = vmatprep.subr.bf16.mxu0 %v8500
        %8756 = vmatpush1.bf16.msra.mxu0 %v8499
        %8757 = vmatprep.subr.bf16.mxu0 %v8504
        %8758 = vmatpush1.bf16.msra.mxu0 %v8503
        %8759 = vmatprep.subr.bf16.mxu0 %v8508
        %8760 = vmatpush1.bf16.msra.mxu0 %v8507
        %8761 = vmatprep.subr.bf16.mxu0 %v8512
        %8762 = vmatpush1.bf16.msra.mxu0 %v8511
        %8763 = vmatprep.subr.bf16.mxu0 %v8516
        %8764 = vmatpush1.bf16.msra.mxu0 %v8515
        %8765 = vmatprep.subr.bf16.mxu0 %v8520
        %8766 = vmatpush1.bf16.msra.mxu0 %v8519
        %8767 = vmatprep.subr.bf16.mxu0 %v8524
        %8768 = vmatpush1.bf16.msra.mxu0 %v8523
        %8769 = vmatprep.subr.bf16.mxu0 %v8528
        %8770 = vmatpush1.bf16.msra.mxu0 %v8527
        %8771 = vmatprep.subr.bf16.mxu0 %v8532
        %8772 = vmatpush1.bf16.msra.mxu0 %v8531
        %8773 = vmatprep.subr.bf16.mxu0 %v8536
        %8774 = vmatpush1.bf16.msra.mxu0 %v8535
        %8775 = vmatprep.subr.bf16.mxu0 %v8540
        %8776 = vmatpush1.bf16.msra.mxu0 %v8539
        %8777 = vmatprep.subr.bf16.mxu0 %v8544
        %8778 = vmatpush1.bf16.msra.mxu0 %v8543
        %8779 = vmatprep.subr.bf16.mxu0 %v8548
        %8780 = vmatpush1.bf16.msra.mxu0 %v8547
        %8781 = vmatprep.subr.bf16.mxu0 %v8552
        %8782 = vmatpush1.bf16.msra.mxu0 %v8551
        %8783 = vmatprep.subr.bf16.mxu0 %v8556
        %8784 = vmatpush1.bf16.msra.mxu0 %v8555
        %8785 = vmatprep.subr.bf16.mxu0 %v8560
        %8786 = vmatpush1.bf16.msra.mxu0 %v8559
        %8787 = vmatprep.mubr.bf16.mxu0 %v8108
        %8788 = vmatmul.mubr.bf16.gmra.mrb[0].mxu0 %v8107
        %v8789 = vpop.f32.mrb[0].mxu0
        %v8790 = vadd.f32 %v8078, %v8789
        %v8791 = vpop.f32.mrb[0].mxu0
        %v8792 = vadd.f32 %v8082, %v8791
        %v8793 = vpop.f32.mrb[0].mxu0
        %v8794 = vadd.f32 %v8078, %v8793
        %v8795 = vpop.f32.mrb[0].mxu0
        %v8796 = vadd.f32 %v8082, %v8795
        %8797 = vdwg.mxu0
        %8798 = vmatprep.subr.bf16.mxu0 %v8564
        %8799 = vmatpush1.bf16.msra.mxu0 %v8563
        %8800 = vmatprep.subr.bf16.mxu0 %v8568
        %8801 = vmatpush1.bf16.msra.mxu0 %v8567
        %8802 = vmatprep.subr.bf16.mxu0 %v8572
        %8803 = vmatpush1.bf16.msra.mxu0 %v8571
        %8804 = vmatprep.subr.bf16.mxu0 %v8576
        %8805 = vmatpush1.bf16.msra.mxu0 %v8575
        %8806 = vmatprep.subr.bf16.mxu0 %v8580
        %8807 = vmatpush1.bf16.msra.mxu0 %v8579
        %8808 = vmatprep.subr.bf16.mxu0 %v8584
        %8809 = vmatpush1.bf16.msra.mxu0 %v8583
        %8810 = vmatprep.subr.bf16.mxu0 %v8588
        %8811 = vmatpush1.bf16.msra.mxu0 %v8587
        %8812 = vmatprep.subr.bf16.mxu0 %v8592
        %8813 = vmatpush1.bf16.msra.mxu0 %v8591
        %8814 = vmatprep.subr.bf16.mxu0 %v8596
        %8815 = vmatpush1.bf16.msra.mxu0 %v8595
        %8816 = vmatprep.subr.bf16.mxu0 %v8600
        %8817 = vmatpush1.bf16.msra.mxu0 %v8599
        %8818 = vmatprep.subr.bf16.mxu0 %v8604
        %8819 = vmatpush1.bf16.msra.mxu0 %v8603
        %8820 = vmatprep.subr.bf16.mxu0 %v8608
        %8821 = vmatpush1.bf16.msra.mxu0 %v8607
        %8822 = vmatprep.subr.bf16.mxu0 %v8612
        %8823 = vmatpush1.bf16.msra.mxu0 %v8611
        %8824 = vmatprep.subr.bf16.mxu0 %v8616
        %8825 = vmatpush1.bf16.msra.mxu0 %v8615
        %8826 = vmatprep.subr.bf16.mxu0 %v8620
        %8827 = vmatpush1.bf16.msra.mxu0 %v8619
        %8828 = vmatprep.subr.bf16.mxu0 %v8624
        %8829 = vmatpush1.bf16.msra.mxu0 %v8623
        %8830 = vmatprep.mubr.bf16.mxu0 %v8110
        %8831 = vmatmul.mubr.bf16.gmra.mrb[0].mxu0 %v8109
        %v8832 = vpop.f32.mrb[0].mxu0
        %v8833 = vadd.f32 %v8790, %v8832
        %v8834 = vpop.f32.mrb[0].mxu0
        %v8835 = vadd.f32 %v8792, %v8834
        %v8836 = vpop.f32.mrb[0].mxu0
        %v8837 = vadd.f32 %v8794, %v8836
        %v8838 = vpop.f32.mrb[0].mxu0
        %v8839 = vadd.f32 %v8796, %v8838
        %8840 = vdwg.mxu0
        %8841 = vmatprep.subr.bf16.mxu0 %v8502
        %8842 = vmatpush1.bf16.msra.mxu0 %v8501
        %8843 = vmatprep.subr.bf16.mxu0 %v8506
        %8844 = vmatpush1.bf16.msra.mxu0 %v8505
        %8845 = vmatprep.subr.bf16.mxu0 %v8510
        %8846 = vmatpush1.bf16.msra.mxu0 %v8509
        %8847 = vmatprep.subr.bf16.mxu0 %v8514
        %8848 = vmatpush1.bf16.msra.mxu0 %v8513
        %8849 = vmatprep.subr.bf16.mxu0 %v8518
        %8850 = vmatpush1.bf16.msra.mxu0 %v8517
        %8851 = vmatprep.subr.bf16.mxu0 %v8522
        %8852 = vmatpush1.bf16.msra.mxu0 %v8521
        %8853 = vmatprep.subr.bf16.mxu0 %v8526
        %8854 = vmatpush1.bf16.msra.mxu0 %v8525
        %8855 = vmatprep.subr.bf16.mxu0 %v8530
        %8856 = vmatpush1.bf16.msra.mxu0 %v8529
        %8857 = vmatprep.subr.bf16.mxu0 %v8534
        %8858 = vmatpush1.bf16.msra.mxu0 %v8533
        %8859 = vmatprep.subr.bf16.mxu0 %v8538
        %8860 = vmatpush1.bf16.msra.mxu0 %v8537
        %8861 = vmatprep.subr.bf16.mxu0 %v8542
        %8862 = vmatpush1.bf16.msra.mxu0 %v8541
        %8863 = vmatprep.subr.bf16.mxu0 %v8546
        %8864 = vmatpush1.bf16.msra.mxu0 %v8545
        %8865 = vmatprep.subr.bf16.mxu0 %v8550
        %8866 = vmatpush1.bf16.msra.mxu0 %v8549
        %8867 = vmatprep.subr.bf16.mxu0 %v8554
        %8868 = vmatpush1.bf16.msra.mxu0 %v8553
        %8869 = vmatprep.subr.bf16.mxu0 %v8558
        %8870 = vmatpush1.bf16.msra.mxu0 %v8557
        %8871 = vmatprep.subr.bf16.mxu0 %v8562
        %8872 = vmatpush1.bf16.msra.mxu0 %v8561
        %8873 = vmatprep.mubr.bf16.mxu0 %v8108
        %8874 = vmatmul.mubr.bf16.gmra.mrb[0].mxu0 %v8107
        %v8875 = vpop.f32.mrb[0].mxu0
        %v8876 = vadd.f32 %v8086, %v8875
        %v8877 = vpop.f32.mrb[0].mxu0
        %v8878 = vadd.f32 %v8090, %v8877
        %v8879 = vpop.f32.mrb[0].mxu0
        %v8880 = vadd.f32 %v8086, %v8879
        %v8881 = vpop.f32.mrb[0].mxu0
        %v8882 = vadd.f32 %v8090, %v8881
        %8883 = vdwg.mxu0
        %8884 = vmatprep.subr.bf16.mxu0 %v8566
        %8885 = vmatpush1.bf16.msra.mxu0 %v8565
        %8886 = vmatprep.subr.bf16.mxu0 %v8570
        %8887 = vmatpush1.bf16.msra.mxu0 %v8569
        %8888 = vmatprep.subr.bf16.mxu0 %v8574
        %8889 = vmatpush1.bf16.msra.mxu0 %v8573
        %8890 = vmatprep.subr.bf16.mxu0 %v8578
        %8891 = vmatpush1.bf16.msra.mxu0 %v8577
        %8892 = vmatprep.subr.bf16.mxu0 %v8582
        %8893 = vmatpush1.bf16.msra.mxu0 %v8581
        %8894 = vmatprep.subr.bf16.mxu0 %v8586
        %8895 = vmatpush1.bf16.msra.mxu0 %v8585
        %8896 = vmatprep.subr.bf16.mxu0 %v8590
        %8897 = vmatpush1.bf16.msra.mxu0 %v8589
        %8898 = vmatprep.subr.bf16.mxu0 %v8594
        %8899 = vmatpush1.bf16.msra.mxu0 %v8593
        %8900 = vmatprep.subr.bf16.mxu0 %v8598
        %8901 = vmatpush1.bf16.msra.mxu0 %v8597
        %8902 = vmatprep.subr.bf16.mxu0 %v8602
        %8903 = vmatpush1.bf16.msra.mxu0 %v8601
        %8904 = vmatprep.subr.bf16.mxu0 %v8606
        %8905 = vmatpush1.bf16.msra.mxu0 %v8605
        %8906 = vmatprep.subr.bf16.mxu0 %v8610
        %8907 = vmatpush1.bf16.msra.mxu0 %v8609
        %8908 = vmatprep.subr.bf16.mxu0 %v8614
        %8909 = vmatpush1.bf16.msra.mxu0 %v8613
        %8910 = vmatprep.subr.bf16.mxu0 %v8618
        %8911 = vmatpush1.bf16.msra.mxu0 %v8617
        %8912 = vmatprep.subr.bf16.mxu0 %v8622
        %8913 = vmatpush1.bf16.msra.mxu0 %v8621
        %8914 = vmatprep.subr.bf16.mxu0 %v8626
        %8915 = vmatpush1.bf16.msra.mxu0 %v8625
        %8916 = vmatprep.mubr.bf16.mxu0 %v8110
        %8917 = vmatmul.mubr.bf16.gmra.mrb[0].mxu0 %v8109
        %v8918 = vpop.f32.mrb[0].mxu0
        %v8919 = vadd.f32 %v8876, %v8918
        %v8920 = vpop.f32.mrb[0].mxu0
        %v8921 = vadd.f32 %v8878, %v8920
        %v8922 = vpop.f32.mrb[0].mxu0
        %v8923 = vadd.f32 %v8880, %v8922
        %v8924 = vpop.f32.mrb[0].mxu0
        %v8925 = vadd.f32 %v8882, %v8924
        %8926 = vdwg.mxu0
        %v8927 = vmax.f32 %v8833, 0.0
        %v8928 = vmax.f32 %v8835, 0.0
        %v8929 = vmax.f32 %v8919, 0.0
        %v8930 = vmax.f32 %v8921, 0.0
        %v8931 = vmax.f32 %v8837, 0.0
        %v8932 = vmax.f32 %v8839, 0.0
        %v8933 = vmax.f32 %v8923, 0.0
        %v8934 = vmax.f32 %v8925, 0.0
        %v8935 = vpack.c.bf16 %v8931, %v8927
        %v8936 = vpack.c.bf16 %v8932, %v8928
        %v8937 = vpack.c.bf16 %v8933, %v8929
        %v8938 = vpack.c.bf16 %v8934, %v8930
        %v8943 = vunpack.c.l.b16 %v8935
        %v8944 = vunpack.c.l.b16 %v8936
        %v8945 = vunpack.c.l.b16 %v8937
        %v8946 = vunpack.c.l.b16 %v8938
        %v8947 = vunpack.c.h.b16 %v8935
        %v8948 = vunpack.c.h.b16 %v8936
        %v8949 = vunpack.c.h.b16 %v8937
        %v8950 = vunpack.c.h.b16 %v8938
        %v8951 = vpack.c.b16 %v8944, %v8943
        %v8952 = vpack.c.b16 %v8946, %v8945
        %v8953 = vpack.c.b16 %v8948, %v8947
        %v8954 = vpack.c.b16 %v8950, %v8949
        %8959 = vst [vmem:[#allocation2] sm:$0xff] %v8951
        %8960 = vst [vmem:[#allocation2 + $0x8] sm:$0xff] %v8952
        %8961 = vst [vmem:[#allocation2 + $0x10] sm:$0xff] %v8953
        %8962 = vst [vmem:[#allocation2 + $0x18] sm:$0xff] %v8954
        %v8963 = vld [vmem:[#allocation2] sm:$0xff]
        %v8964 = vld [vmem:[#allocation2 + $0x8] sm:$0xff]
        %v8965 = vld [vmem:[#allocation2 + $0x10] sm:$0xff]
        %v8966 = vld [vmem:[#allocation2 + $0x18] sm:$0xff]
        %v8967 = vunpack.c.l.bf16 %v8963
        %v8968 = vunpack.c.h.bf16 %v8963
        %v8969 = vunpack.c.l.bf16 %v8964
        %v8970 = vunpack.c.h.bf16 %v8964
        %v8971 = vunpack.c.l.bf16 %v8965
        %v8972 = vunpack.c.h.bf16 %v8965
        %v8973 = vunpack.c.l.bf16 %v8966
        %v8974 = vunpack.c.h.bf16 %v8966
        %v8975 = vadd.f32 %v8967, %v8971
        %v8976 = vrot.slane %v8975, 4
        %v8977 = vadd.f32 %v8975, %v8976
        %v8978 = vrot.slane %v8977, 2
        %v8979 = vadd.f32 %v8977, %v8978
        %v8980 = vrot.slane %v8979, 1
        %v8981 = vadd.f32 %v8979, %v8980
        %v8982 = vadd.f32 %v8968, %v8972
        %v8983 = vrot.slane %v8982, 4
        %v8984 = vadd.f32 %v8982, %v8983
        %v8985 = vrot.slane %v8984, 2
        %v8986 = vadd.f32 %v8984, %v8985
        %v8987 = vrot.slane %v8986, 1
        %v8988 = vadd.f32 %v8986, %v8987
        %v8989 = vadd.f32 %v8969, %v8973
        %v8990 = vrot.slane %v8989, 4
        %v8991 = vadd.f32 %v8989, %v8990
        %v8992 = vrot.slane %v8991, 2
        %v8993 = vadd.f32 %v8991, %v8992
        %v8994 = vrot.slane %v8993, 1
        %v8995 = vadd.f32 %v8993, %v8994
        %v8996 = vadd.f32 %v8970, %v8974
        %v8997 = vrot.slane %v8996, 4
        %v8998 = vadd.f32 %v8996, %v8997
        %v8999 = vrot.slane %v8998, 2
        %v9000 = vadd.f32 %v8998, %v8999
        %v9001 = vrot.slane %v9000, 1
        %v9002 = vadd.f32 %v9000, %v9001
        %v9003 = vmul.f32 %v8981, 0.0625
        %v9004 = vmul.f32 %v8988, 0.0625
        %v9005 = vmul.f32 %v8995, 0.0625
        %v9006 = vmul.f32 %v9002, 0.0625
        %v9007 = vsub.f32 %v8967, %v9003
        %v9008 = vsub.f32 %v8968, %v9004
        %v9009 = vsub.f32 %v8969, %v9005
        %v9010 = vsub.f32 %v8970, %v9006
        %v9011 = vsub.f32 %v8971, %v9003
        %v9012 = vsub.f32 %v8972, %v9004
        %v9013 = vsub.f32 %v8973, %v9005
        %v9014 = vsub.f32 %v8974, %v9006
        %v9015 = vmul.f32 %v9007, %v9007
        %v9016 = vmul.f32 %v9008, %v9008
        %v9017 = vmul.f32 %v9009, %v9009
        %v9018 = vmul.f32 %v9010, %v9010
        %v9019 = vmul.f32 %v9011, %v9011
        %v9020 = vmul.f32 %v9012, %v9012
        %v9021 = vmul.f32 %v9013, %v9013
        %v9022 = vmul.f32 %v9014, %v9014
        %v9023 = vadd.f32 %v9015, %v9019
        %v9024 = vrot.slane %v9023, 4
        %v9025 = vadd.f32 %v9023, %v9024
        %v9026 = vrot.slane %v9025, 2
        %v9027 = vadd.f32 %v9025, %v9026
        %v9028 = vrot.slane %v9027, 1
        %v9029 = vadd.f32 %v9027, %v9028
        %v9030 = vadd.f32 %v9016, %v9020
        %v9031 = vrot.slane %v9030, 4
        %v9032 = vadd.f32 %v9030, %v9031
        %v9033 = vrot.slane %v9032, 2
        %v9034 = vadd.f32 %v9032, %v9033
        %v9035 = vrot.slane %v9034, 1
        %v9036 = vadd.f32 %v9034, %v9035
        %v9037 = vadd.f32 %v9017, %v9021
        %v9038 = vrot.slane %v9037, 4
        %v9039 = vadd.f32 %v9037, %v9038
        %v9040 = vrot.slane %v9039, 2
        %v9041 = vadd.f32 %v9039, %v9040
        %v9042 = vrot.slane %v9041, 1
        %v9043 = vadd.f32 %v9041, %v9042
        %v9044 = vadd.f32 %v9018, %v9022
        %v9045 = vrot.slane %v9044, 4
        %v9046 = vadd.f32 %v9044, %v9045
        %v9047 = vrot.slane %v9046, 2
        %v9048 = vadd.f32 %v9046, %v9047
        %v9049 = vrot.slane %v9048, 1
        %v9050 = vadd.f32 %v9048, %v9049
        %v9051 = vmul.f32 %v9029, 0.06666667
        %v9052 = vmul.f32 %v9036, 0.06666667
        %v9053 = vmul.f32 %v9043, 0.06666667
        %v9054 = vmul.f32 %v9050, 0.06666667
        %v9055 = vpack.c.bf16 %v9003, %v9003
        %v9056 = vpack.c.bf16 %v9004, %v9004
        %v9057 = vpack.c.bf16 %v9005, %v9005
        %v9058 = vpack.c.bf16 %v9006, %v9006
        %v9059 = vld [vmem:[#allocation21] sm:$0xff]
        %v9060 = vld [vmem:[#allocation21 + $0x8] sm:$0xff]
        %v9061 = vld [vmem:[#allocation21 + $0x10] sm:$0xff]
        %v9062 = vld [vmem:[#allocation21 + $0x18] sm:$0xff]
        %v9063 = vld [vmem:[#allocation21 + $0x20] sm:$0xff]
        %v9064 = vld [vmem:[#allocation21 + $0x28] sm:$0xff]
        %v9065 = vld [vmem:[#allocation21 + $0x30] sm:$0xff]
        %v9066 = vld [vmem:[#allocation21 + $0x38] sm:$0xff]
        %v9067 = vld [vmem:[#allocation21 + $0x40] sm:$0xff]
        %v9068 = vld [vmem:[#allocation21 + $0x48] sm:$0xff]
        %v9069 = vld [vmem:[#allocation21 + $0x50] sm:$0xff]
        %v9070 = vld [vmem:[#allocation21 + $0x58] sm:$0xff]
        %v9071 = vld [vmem:[#allocation21 + $0x60] sm:$0xff]
        %v9072 = vld [vmem:[#allocation21 + $0x68] sm:$0xff]
        %v9073 = vld [vmem:[#allocation21 + $0x70] sm:$0xff]
        %v9074 = vld [vmem:[#allocation21 + $0x78] sm:$0xff]
        %v9075 = vld [vmem:[#allocation21 + $0x80] sm:$0xff]
        %v9076 = vld [vmem:[#allocation21 + $0x88] sm:$0xff]
        %v9077 = vld [vmem:[#allocation21 + $0x90] sm:$0xff]
        %v9078 = vld [vmem:[#allocation21 + $0x98] sm:$0xff]
        %v9079 = vld [vmem:[#allocation21 + $0xa0] sm:$0xff]
        %v9080 = vld [vmem:[#allocation21 + $0xa8] sm:$0xff]
        %v9081 = vld [vmem:[#allocation21 + $0xb0] sm:$0xff]
        %v9082 = vld [vmem:[#allocation21 + $0xb8] sm:$0xff]
        %v9083 = vld [vmem:[#allocation21 + $0xc0] sm:$0xff]
        %v9084 = vld [vmem:[#allocation21 + $0xc8] sm:$0xff]
        %v9085 = vld [vmem:[#allocation21 + $0xd0] sm:$0xff]
        %v9086 = vld [vmem:[#allocation21 + $0xd8] sm:$0xff]
        %v9087 = vld [vmem:[#allocation21 + $0xe0] sm:$0xff]
        %v9088 = vld [vmem:[#allocation21 + $0xe8] sm:$0xff]
        %v9089 = vld [vmem:[#allocation21 + $0xf0] sm:$0xff]
        %v9090 = vld [vmem:[#allocation21 + $0xf8] sm:$0xff]
        %v9091 = vld [vmem:[#allocation21 + $0x100] sm:$0xff]
        %v9092 = vld [vmem:[#allocation21 + $0x108] sm:$0xff]
        %v9093 = vld [vmem:[#allocation21 + $0x110] sm:$0xff]
        %v9094 = vld [vmem:[#allocation21 + $0x118] sm:$0xff]
        %v9095 = vld [vmem:[#allocation21 + $0x120] sm:$0xff]
        %v9096 = vld [vmem:[#allocation21 + $0x128] sm:$0xff]
        %v9097 = vld [vmem:[#allocation21 + $0x130] sm:$0xff]
        %v9098 = vld [vmem:[#allocation21 + $0x138] sm:$0xff]
        %v9099 = vld [vmem:[#allocation21 + $0x140] sm:$0xff]
        %v9100 = vld [vmem:[#allocation21 + $0x148] sm:$0xff]
        %v9101 = vld [vmem:[#allocation21 + $0x150] sm:$0xff]
        %v9102 = vld [vmem:[#allocation21 + $0x158] sm:$0xff]
        %v9103 = vld [vmem:[#allocation21 + $0x160] sm:$0xff]
        %v9104 = vld [vmem:[#allocation21 + $0x168] sm:$0xff]
        %v9105 = vld [vmem:[#allocation21 + $0x170] sm:$0xff]
        %v9106 = vld [vmem:[#allocation21 + $0x178] sm:$0xff]
        %v9107 = vld [vmem:[#allocation21 + $0x180] sm:$0xff]
        %v9108 = vld [vmem:[#allocation21 + $0x188] sm:$0xff]
        %v9109 = vld [vmem:[#allocation21 + $0x190] sm:$0xff]
        %v9110 = vld [vmem:[#allocation21 + $0x198] sm:$0xff]
        %v9111 = vld [vmem:[#allocation21 + $0x1a0] sm:$0xff]
        %v9112 = vld [vmem:[#allocation21 + $0x1a8] sm:$0xff]
        %v9113 = vld [vmem:[#allocation21 + $0x1b0] sm:$0xff]
        %v9114 = vld [vmem:[#allocation21 + $0x1b8] sm:$0xff]
        %v9115 = vld [vmem:[#allocation21 + $0x1c0] sm:$0xff]
        %v9116 = vld [vmem:[#allocation21 + $0x1c8] sm:$0xff]
        %v9117 = vld [vmem:[#allocation21 + $0x1d0] sm:$0xff]
        %v9118 = vld [vmem:[#allocation21 + $0x1d8] sm:$0xff]
        %v9119 = vld [vmem:[#allocation21 + $0x1e0] sm:$0xff]
        %v9120 = vld [vmem:[#allocation21 + $0x1e8] sm:$0xff]
        %v9121 = vld [vmem:[#allocation21 + $0x1f0] sm:$0xff]
        %v9122 = vld [vmem:[#allocation21 + $0x1f8] sm:$0xff]
        %v9123 = vld [vmem:[#allocation21 + $0x200] sm:$0xff]
        %v9124 = vld [vmem:[#allocation21 + $0x208] sm:$0xff]
        %v9125 = vld [vmem:[#allocation21 + $0x210] sm:$0xff]
        %v9126 = vld [vmem:[#allocation21 + $0x218] sm:$0xff]
        %v9127 = vld [vmem:[#allocation21 + $0x220] sm:$0xff]
        %v9128 = vld [vmem:[#allocation21 + $0x228] sm:$0xff]
        %v9129 = vld [vmem:[#allocation21 + $0x230] sm:$0xff]
        %v9130 = vld [vmem:[#allocation21 + $0x238] sm:$0xff]
        %v9131 = vld [vmem:[#allocation21 + $0x240] sm:$0xff]
        %v9132 = vld [vmem:[#allocation21 + $0x248] sm:$0xff]
        %v9133 = vld [vmem:[#allocation21 + $0x250] sm:$0xff]
        %v9134 = vld [vmem:[#allocation21 + $0x258] sm:$0xff]
        %v9135 = vld [vmem:[#allocation21 + $0x260] sm:$0xff]
        %v9136 = vld [vmem:[#allocation21 + $0x268] sm:$0xff]
        %v9137 = vld [vmem:[#allocation21 + $0x270] sm:$0xff]
        %v9138 = vld [vmem:[#allocation21 + $0x278] sm:$0xff]
        %v9139 = vld [vmem:[#allocation21 + $0x280] sm:$0xff]
        %v9140 = vld [vmem:[#allocation21 + $0x288] sm:$0xff]
        %v9141 = vld [vmem:[#allocation21 + $0x290] sm:$0xff]
        %v9142 = vld [vmem:[#allocation21 + $0x298] sm:$0xff]
        %v9143 = vld [vmem:[#allocation21 + $0x2a0] sm:$0xff]
        %v9144 = vld [vmem:[#allocation21 + $0x2a8] sm:$0xff]
        %v9145 = vld [vmem:[#allocation21 + $0x2b0] sm:$0xff]
        %v9146 = vld [vmem:[#allocation21 + $0x2b8] sm:$0xff]
        %v9147 = vld [vmem:[#allocation21 + $0x2c0] sm:$0xff]
        %v9148 = vld [vmem:[#allocation21 + $0x2c8] sm:$0xff]
        %v9149 = vld [vmem:[#allocation21 + $0x2d0] sm:$0xff]
        %v9150 = vld [vmem:[#allocation21 + $0x2d8] sm:$0xff]
        %v9151 = vld [vmem:[#allocation21 + $0x2e0] sm:$0xff]
        %v9152 = vld [vmem:[#allocation21 + $0x2e8] sm:$0xff]
        %v9153 = vld [vmem:[#allocation21 + $0x2f0] sm:$0xff]
        %v9154 = vld [vmem:[#allocation21 + $0x2f8] sm:$0xff]
        %v9155 = vld [vmem:[#allocation21 + $0x300] sm:$0xff]
        %v9156 = vld [vmem:[#allocation21 + $0x308] sm:$0xff]
        %v9157 = vld [vmem:[#allocation21 + $0x310] sm:$0xff]
        %v9158 = vld [vmem:[#allocation21 + $0x318] sm:$0xff]
        %v9159 = vld [vmem:[#allocation21 + $0x320] sm:$0xff]
        %v9160 = vld [vmem:[#allocation21 + $0x328] sm:$0xff]
        %v9161 = vld [vmem:[#allocation21 + $0x330] sm:$0xff]
        %v9162 = vld [vmem:[#allocation21 + $0x338] sm:$0xff]
        %v9163 = vld [vmem:[#allocation21 + $0x340] sm:$0xff]
        %v9164 = vld [vmem:[#allocation21 + $0x348] sm:$0xff]
        %v9165 = vld [vmem:[#allocation21 + $0x350] sm:$0xff]
        %v9166 = vld [vmem:[#allocation21 + $0x358] sm:$0xff]
        %v9167 = vld [vmem:[#allocation21 + $0x360] sm:$0xff]
        %v9168 = vld [vmem:[#allocation21 + $0x368] sm:$0xff]
        %v9169 = vld [vmem:[#allocation21 + $0x370] sm:$0xff]
        %v9170 = vld [vmem:[#allocation21 + $0x378] sm:$0xff]
        %v9171 = vld [vmem:[#allocation21 + $0x380] sm:$0xff]
        %v9172 = vld [vmem:[#allocation21 + $0x388] sm:$0xff]
        %v9173 = vld [vmem:[#allocation21 + $0x390] sm:$0xff]
        %v9174 = vld [vmem:[#allocation21 + $0x398] sm:$0xff]
        %v9175 = vld [vmem:[#allocation21 + $0x3a0] sm:$0xff]
        %v9176 = vld [vmem:[#allocation21 + $0x3a8] sm:$0xff]
        %v9177 = vld [vmem:[#allocation21 + $0x3b0] sm:$0xff]
        %v9178 = vld [vmem:[#allocation21 + $0x3b8] sm:$0xff]
        %v9179 = vld [vmem:[#allocation21 + $0x3c0] sm:$0xff]
        %v9180 = vld [vmem:[#allocation21 + $0x3c8] sm:$0xff]
        %v9181 = vld [vmem:[#allocation21 + $0x3d0] sm:$0xff]
        %v9182 = vld [vmem:[#allocation21 + $0x3d8] sm:$0xff]
        %v9183 = vld [vmem:[#allocation21 + $0x3e0] sm:$0xff]
        %v9184 = vld [vmem:[#allocation21 + $0x3e8] sm:$0xff]
        %v9185 = vld [vmem:[#allocation21 + $0x3f0] sm:$0xff]
        %v9186 = vld [vmem:[#allocation21 + $0x3f8] sm:$0xff]
        %v9187 = vpack.c.bf16 %v9051, %v9051
        %v9188 = vpack.c.bf16 %v9052, %v9052
        %v9189 = vpack.c.bf16 %v9053, %v9053
        %v9190 = vpack.c.bf16 %v9054, %v9054
        %v9191 = vld [vmem:[#allocation22] sm:$0xff]
        %v9192 = vld [vmem:[#allocation22 + $0x8] sm:$0xff]
        %v9193 = vld [vmem:[#allocation22 + $0x10] sm:$0xff]
        %v9194 = vld [vmem:[#allocation22 + $0x18] sm:$0xff]
        %v9195 = vld [vmem:[#allocation22 + $0x20] sm:$0xff]
        %v9196 = vld [vmem:[#allocation22 + $0x28] sm:$0xff]
        %v9197 = vld [vmem:[#allocation22 + $0x30] sm:$0xff]
        %v9198 = vld [vmem:[#allocation22 + $0x38] sm:$0xff]
        %v9199 = vld [vmem:[#allocation22 + $0x40] sm:$0xff]
        %v9200 = vld [vmem:[#allocation22 + $0x48] sm:$0xff]
        %v9201 = vld [vmem:[#allocation22 + $0x50] sm:$0xff]
        %v9202 = vld [vmem:[#allocation22 + $0x58] sm:$0xff]
        %v9203 = vld [vmem:[#allocation22 + $0x60] sm:$0xff]
        %v9204 = vld [vmem:[#allocation22 + $0x68] sm:$0xff]
        %v9205 = vld [vmem:[#allocation22 + $0x70] sm:$0xff]
        %v9206 = vld [vmem:[#allocation22 + $0x78] sm:$0xff]
        %v9207 = vld [vmem:[#allocation22 + $0x80] sm:$0xff]
        %v9208 = vld [vmem:[#allocation22 + $0x88] sm:$0xff]
        %v9209 = vld [vmem:[#allocation22 + $0x90] sm:$0xff]
        %v9210 = vld [vmem:[#allocation22 + $0x98] sm:$0xff]
        %v9211 = vld [vmem:[#allocation22 + $0xa0] sm:$0xff]
        %v9212 = vld [vmem:[#allocation22 + $0xa8] sm:$0xff]
        %v9213 = vld [vmem:[#allocation22 + $0xb0] sm:$0xff]
        %v9214 = vld [vmem:[#allocation22 + $0xb8] sm:$0xff]
        %v9215 = vld [vmem:[#allocation22 + $0xc0] sm:$0xff]
        %v9216 = vld [vmem:[#allocation22 + $0xc8] sm:$0xff]
        %v9217 = vld [vmem:[#allocation22 + $0xd0] sm:$0xff]
        %v9218 = vld [vmem:[#allocation22 + $0xd8] sm:$0xff]
        %v9219 = vld [vmem:[#allocation22 + $0xe0] sm:$0xff]
        %v9220 = vld [vmem:[#allocation22 + $0xe8] sm:$0xff]
        %v9221 = vld [vmem:[#allocation22 + $0xf0] sm:$0xff]
        %v9222 = vld [vmem:[#allocation22 + $0xf8] sm:$0xff]
        %v9223 = vld [vmem:[#allocation22 + $0x100] sm:$0xff]
        %v9224 = vld [vmem:[#allocation22 + $0x108] sm:$0xff]
        %v9225 = vld [vmem:[#allocation22 + $0x110] sm:$0xff]
        %v9226 = vld [vmem:[#allocation22 + $0x118] sm:$0xff]
        %v9227 = vld [vmem:[#allocation22 + $0x120] sm:$0xff]
        %v9228 = vld [vmem:[#allocation22 + $0x128] sm:$0xff]
        %v9229 = vld [vmem:[#allocation22 + $0x130] sm:$0xff]
        %v9230 = vld [vmem:[#allocation22 + $0x138] sm:$0xff]
        %v9231 = vld [vmem:[#allocation22 + $0x140] sm:$0xff]
        %v9232 = vld [vmem:[#allocation22 + $0x148] sm:$0xff]
        %v9233 = vld [vmem:[#allocation22 + $0x150] sm:$0xff]
        %v9234 = vld [vmem:[#allocation22 + $0x158] sm:$0xff]
        %v9235 = vld [vmem:[#allocation22 + $0x160] sm:$0xff]
        %v9236 = vld [vmem:[#allocation22 + $0x168] sm:$0xff]
        %v9237 = vld [vmem:[#allocation22 + $0x170] sm:$0xff]
        %v9238 = vld [vmem:[#allocation22 + $0x178] sm:$0xff]
        %v9239 = vld [vmem:[#allocation22 + $0x180] sm:$0xff]
        %v9240 = vld [vmem:[#allocation22 + $0x188] sm:$0xff]
        %v9241 = vld [vmem:[#allocation22 + $0x190] sm:$0xff]
        %v9242 = vld [vmem:[#allocation22 + $0x198] sm:$0xff]
        %v9243 = vld [vmem:[#allocation22 + $0x1a0] sm:$0xff]
        %v9244 = vld [vmem:[#allocation22 + $0x1a8] sm:$0xff]
        %v9245 = vld [vmem:[#allocation22 + $0x1b0] sm:$0xff]
        %v9246 = vld [vmem:[#allocation22 + $0x1b8] sm:$0xff]
        %v9247 = vld [vmem:[#allocation22 + $0x1c0] sm:$0xff]
        %v9248 = vld [vmem:[#allocation22 + $0x1c8] sm:$0xff]
        %v9249 = vld [vmem:[#allocation22 + $0x1d0] sm:$0xff]
        %v9250 = vld [vmem:[#allocation22 + $0x1d8] sm:$0xff]
        %v9251 = vld [vmem:[#allocation22 + $0x1e0] sm:$0xff]
        %v9252 = vld [vmem:[#allocation22 + $0x1e8] sm:$0xff]
        %v9253 = vld [vmem:[#allocation22 + $0x1f0] sm:$0xff]
        %v9254 = vld [vmem:[#allocation22 + $0x1f8] sm:$0xff]
        %v9255 = vld [vmem:[#allocation22 + $0x200] sm:$0xff]
        %v9256 = vld [vmem:[#allocation22 + $0x208] sm:$0xff]
        %v9257 = vld [vmem:[#allocation22 + $0x210] sm:$0xff]
        %v9258 = vld [vmem:[#allocation22 + $0x218] sm:$0xff]
        %v9259 = vld [vmem:[#allocation22 + $0x220] sm:$0xff]
        %v9260 = vld [vmem:[#allocation22 + $0x228] sm:$0xff]
        %v9261 = vld [vmem:[#allocation22 + $0x230] sm:$0xff]
        %v9262 = vld [vmem:[#allocation22 + $0x238] sm:$0xff]
        %v9263 = vld [vmem:[#allocation22 + $0x240] sm:$0xff]
        %v9264 = vld [vmem:[#allocation22 + $0x248] sm:$0xff]
        %v9265 = vld [vmem:[#allocation22 + $0x250] sm:$0xff]
        %v9266 = vld [vmem:[#allocation22 + $0x258] sm:$0xff]
        %v9267 = vld [vmem:[#allocation22 + $0x260] sm:$0xff]
        %v9268 = vld [vmem:[#allocation22 + $0x268] sm:$0xff]
        %v9269 = vld [vmem:[#allocation22 + $0x270] sm:$0xff]
        %v9270 = vld [vmem:[#allocation22 + $0x278] sm:$0xff]
        %v9271 = vld [vmem:[#allocation22 + $0x280] sm:$0xff]
        %v9272 = vld [vmem:[#allocation22 + $0x288] sm:$0xff]
        %v9273 = vld [vmem:[#allocation22 + $0x290] sm:$0xff]
        %v9274 = vld [vmem:[#allocation22 + $0x298] sm:$0xff]
        %v9275 = vld [vmem:[#allocation22 + $0x2a0] sm:$0xff]
        %v9276 = vld [vmem:[#allocation22 + $0x2a8] sm:$0xff]
        %v9277 = vld [vmem:[#allocation22 + $0x2b0] sm:$0xff]
        %v9278 = vld [vmem:[#allocation22 + $0x2b8] sm:$0xff]
        %v9279 = vld [vmem:[#allocation22 + $0x2c0] sm:$0xff]
        %v9280 = vld [vmem:[#allocation22 + $0x2c8] sm:$0xff]
        %v9281 = vld [vmem:[#allocation22 + $0x2d0] sm:$0xff]
        %v9282 = vld [vmem:[#allocation22 + $0x2d8] sm:$0xff]
        %v9283 = vld [vmem:[#allocation22 + $0x2e0] sm:$0xff]
        %v9284 = vld [vmem:[#allocation22 + $0x2e8] sm:$0xff]
        %v9285 = vld [vmem:[#allocation22 + $0x2f0] sm:$0xff]
        %v9286 = vld [vmem:[#allocation22 + $0x2f8] sm:$0xff]
        %v9287 = vld [vmem:[#allocation22 + $0x300] sm:$0xff]
        %v9288 = vld [vmem:[#allocation22 + $0x308] sm:$0xff]
        %v9289 = vld [vmem:[#allocation22 + $0x310] sm:$0xff]
        %v9290 = vld [vmem:[#allocation22 + $0x318] sm:$0xff]
        %v9291 = vld [vmem:[#allocation22 + $0x320] sm:$0xff]
        %v9292 = vld [vmem:[#allocation22 + $0x328] sm:$0xff]
        %v9293 = vld [vmem:[#allocation22 + $0x330] sm:$0xff]
        %v9294 = vld [vmem:[#allocation22 + $0x338] sm:$0xff]
        %v9295 = vld [vmem:[#allocation22 + $0x340] sm:$0xff]
        %v9296 = vld [vmem:[#allocation22 + $0x348] sm:$0xff]
        %v9297 = vld [vmem:[#allocation22 + $0x350] sm:$0xff]
        %v9298 = vld [vmem:[#allocation22 + $0x358] sm:$0xff]
        %v9299 = vld [vmem:[#allocation22 + $0x360] sm:$0xff]
        %v9300 = vld [vmem:[#allocation22 + $0x368] sm:$0xff]
        %v9301 = vld [vmem:[#allocation22 + $0x370] sm:$0xff]
        %v9302 = vld [vmem:[#allocation22 + $0x378] sm:$0xff]
        %v9303 = vld [vmem:[#allocation22 + $0x380] sm:$0xff]
        %v9304 = vld [vmem:[#allocation22 + $0x388] sm:$0xff]
        %v9305 = vld [vmem:[#allocation22 + $0x390] sm:$0xff]
        %v9306 = vld [vmem:[#allocation22 + $0x398] sm:$0xff]
        %v9307 = vld [vmem:[#allocation22 + $0x3a0] sm:$0xff]
        %v9308 = vld [vmem:[#allocation22 + $0x3a8] sm:$0xff]
        %v9309 = vld [vmem:[#allocation22 + $0x3b0] sm:$0xff]
        %v9310 = vld [vmem:[#allocation22 + $0x3b8] sm:$0xff]
        %v9311 = vld [vmem:[#allocation22 + $0x3c0] sm:$0xff]
        %v9312 = vld [vmem:[#allocation22 + $0x3c8] sm:$0xff]
        %v9313 = vld [vmem:[#allocation22 + $0x3d0] sm:$0xff]
        %v9314 = vld [vmem:[#allocation22 + $0x3d8] sm:$0xff]
        %v9315 = vld [vmem:[#allocation22 + $0x3e0] sm:$0xff]
        %v9316 = vld [vmem:[#allocation22 + $0x3e8] sm:$0xff]
        %v9317 = vld [vmem:[#allocation22 + $0x3f0] sm:$0xff]
        %v9318 = vld [vmem:[#allocation22 + $0x3f8] sm:$0xff]
        %v9447 = vunpack.c.l.b16 %v9191
        %v9448 = vunpack.c.h.b16 %v9191
        %v9449 = vunpack.c.l.b16 %v9192
        %v9450 = vunpack.c.h.b16 %v9192
        %v9451 = vunpack.c.l.b16 %v9193
        %v9452 = vunpack.c.h.b16 %v9193
        %v9453 = vunpack.c.l.b16 %v9194
        %v9454 = vunpack.c.h.b16 %v9194
        %v9455 = vunpack.c.l.b16 %v9195
        %v9456 = vunpack.c.h.b16 %v9195
        %v9457 = vunpack.c.l.b16 %v9196
        %v9458 = vunpack.c.h.b16 %v9196
        %v9459 = vunpack.c.l.b16 %v9197
        %v9460 = vunpack.c.h.b16 %v9197
        %v9461 = vunpack.c.l.b16 %v9198
        %v9462 = vunpack.c.h.b16 %v9198
        %v9463 = vunpack.c.l.b16 %v9199
        %v9464 = vunpack.c.h.b16 %v9199
        %v9465 = vunpack.c.l.b16 %v9200
        %v9466 = vunpack.c.h.b16 %v9200
        %v9467 = vunpack.c.l.b16 %v9201
        %v9468 = vunpack.c.h.b16 %v9201
        %v9469 = vunpack.c.l.b16 %v9202
        %v9470 = vunpack.c.h.b16 %v9202
        %v9471 = vunpack.c.l.b16 %v9203
        %v9472 = vunpack.c.h.b16 %v9203
        %v9473 = vunpack.c.l.b16 %v9204
        %v9474 = vunpack.c.h.b16 %v9204
        %v9475 = vunpack.c.l.b16 %v9205
        %v9476 = vunpack.c.h.b16 %v9205
        %v9477 = vunpack.c.l.b16 %v9206
        %v9478 = vunpack.c.h.b16 %v9206
        %v9479 = vunpack.c.l.b16 %v9207
        %v9480 = vunpack.c.h.b16 %v9207
        %v9481 = vunpack.c.l.b16 %v9208
        %v9482 = vunpack.c.h.b16 %v9208
        %v9483 = vunpack.c.l.b16 %v9209
        %v9484 = vunpack.c.h.b16 %v9209
        %v9485 = vunpack.c.l.b16 %v9210
        %v9486 = vunpack.c.h.b16 %v9210
        %v9487 = vunpack.c.l.b16 %v9211
        %v9488 = vunpack.c.h.b16 %v9211
        %v9489 = vunpack.c.l.b16 %v9212
        %v9490 = vunpack.c.h.b16 %v9212
        %v9491 = vunpack.c.l.b16 %v9213
        %v9492 = vunpack.c.h.b16 %v9213
        %v9493 = vunpack.c.l.b16 %v9214
        %v9494 = vunpack.c.h.b16 %v9214
        %v9495 = vunpack.c.l.b16 %v9215
        %v9496 = vunpack.c.h.b16 %v9215
        %v9497 = vunpack.c.l.b16 %v9216
        %v9498 = vunpack.c.h.b16 %v9216
        %v9499 = vunpack.c.l.b16 %v9217
        %v9500 = vunpack.c.h.b16 %v9217
        %v9501 = vunpack.c.l.b16 %v9218
        %v9502 = vunpack.c.h.b16 %v9218
        %v9503 = vunpack.c.l.b16 %v9219
        %v9504 = vunpack.c.h.b16 %v9219
        %v9505 = vunpack.c.l.b16 %v9220
        %v9506 = vunpack.c.h.b16 %v9220
        %v9507 = vunpack.c.l.b16 %v9221
        %v9508 = vunpack.c.h.b16 %v9221
        %v9509 = vunpack.c.l.b16 %v9222
        %v9510 = vunpack.c.h.b16 %v9222
        %v9511 = vunpack.c.l.b16 %v9223
        %v9512 = vunpack.c.h.b16 %v9223
        %v9513 = vunpack.c.l.b16 %v9224
        %v9514 = vunpack.c.h.b16 %v9224
        %v9515 = vunpack.c.l.b16 %v9225
        %v9516 = vunpack.c.h.b16 %v9225
        %v9517 = vunpack.c.l.b16 %v9226
        %v9518 = vunpack.c.h.b16 %v9226
        %v9519 = vunpack.c.l.b16 %v9227
        %v9520 = vunpack.c.h.b16 %v9227
        %v9521 = vunpack.c.l.b16 %v9228
        %v9522 = vunpack.c.h.b16 %v9228
        %v9523 = vunpack.c.l.b16 %v9229
        %v9524 = vunpack.c.h.b16 %v9229
        %v9525 = vunpack.c.l.b16 %v9230
        %v9526 = vunpack.c.h.b16 %v9230
        %v9527 = vunpack.c.l.b16 %v9231
        %v9528 = vunpack.c.h.b16 %v9231
        %v9529 = vunpack.c.l.b16 %v9232
        %v9530 = vunpack.c.h.b16 %v9232
        %v9531 = vunpack.c.l.b16 %v9233
        %v9532 = vunpack.c.h.b16 %v9233
        %v9533 = vunpack.c.l.b16 %v9234
        %v9534 = vunpack.c.h.b16 %v9234
        %v9535 = vunpack.c.l.b16 %v9235
        %v9536 = vunpack.c.h.b16 %v9235
        %v9537 = vunpack.c.l.b16 %v9236
        %v9538 = vunpack.c.h.b16 %v9236
        %v9539 = vunpack.c.l.b16 %v9237
        %v9540 = vunpack.c.h.b16 %v9237
        %v9541 = vunpack.c.l.b16 %v9238
        %v9542 = vunpack.c.h.b16 %v9238
        %v9543 = vunpack.c.l.b16 %v9239
        %v9544 = vunpack.c.h.b16 %v9239
        %v9545 = vunpack.c.l.b16 %v9240
        %v9546 = vunpack.c.h.b16 %v9240
        %v9547 = vunpack.c.l.b16 %v9241
        %v9548 = vunpack.c.h.b16 %v9241
        %v9549 = vunpack.c.l.b16 %v9242
        %v9550 = vunpack.c.h.b16 %v9242
        %v9551 = vunpack.c.l.b16 %v9243
        %v9552 = vunpack.c.h.b16 %v9243
        %v9553 = vunpack.c.l.b16 %v9244
        %v9554 = vunpack.c.h.b16 %v9244
        %v9555 = vunpack.c.l.b16 %v9245
        %v9556 = vunpack.c.h.b16 %v9245
        %v9557 = vunpack.c.l.b16 %v9246
        %v9558 = vunpack.c.h.b16 %v9246
        %v9559 = vunpack.c.l.b16 %v9247
        %v9560 = vunpack.c.h.b16 %v9247
        %v9561 = vunpack.c.l.b16 %v9248
        %v9562 = vunpack.c.h.b16 %v9248
        %v9563 = vunpack.c.l.b16 %v9249
        %v9564 = vunpack.c.h.b16 %v9249
        %v9565 = vunpack.c.l.b16 %v9250
        %v9566 = vunpack.c.h.b16 %v9250
        %v9567 = vunpack.c.l.b16 %v9251
        %v9568 = vunpack.c.h.b16 %v9251
        %v9569 = vunpack.c.l.b16 %v9252
        %v9570 = vunpack.c.h.b16 %v9252
        %v9571 = vunpack.c.l.b16 %v9253
        %v9572 = vunpack.c.h.b16 %v9253
        %v9573 = vunpack.c.l.b16 %v9254
        %v9574 = vunpack.c.h.b16 %v9254
        %v9575 = vunpack.c.l.b16 %v9255
        %v9576 = vunpack.c.h.b16 %v9255
        %v9577 = vunpack.c.l.b16 %v9256
        %v9578 = vunpack.c.h.b16 %v9256
        %v9579 = vunpack.c.l.b16 %v9257
        %v9580 = vunpack.c.h.b16 %v9257
        %v9581 = vunpack.c.l.b16 %v9258
        %v9582 = vunpack.c.h.b16 %v9258
        %v9583 = vunpack.c.l.b16 %v9259
        %v9584 = vunpack.c.h.b16 %v9259
        %v9585 = vunpack.c.l.b16 %v9260
        %v9586 = vunpack.c.h.b16 %v9260
        %v9587 = vunpack.c.l.b16 %v9261
        %v9588 = vunpack.c.h.b16 %v9261
        %v9589 = vunpack.c.l.b16 %v9262
        %v9590 = vunpack.c.h.b16 %v9262
        %v9591 = vunpack.c.l.b16 %v9263
        %v9592 = vunpack.c.h.b16 %v9263
        %v9593 = vunpack.c.l.b16 %v9264
        %v9594 = vunpack.c.h.b16 %v9264
        %v9595 = vunpack.c.l.b16 %v9265
        %v9596 = vunpack.c.h.b16 %v9265
        %v9597 = vunpack.c.l.b16 %v9266
        %v9598 = vunpack.c.h.b16 %v9266
        %v9599 = vunpack.c.l.b16 %v9267
        %v9600 = vunpack.c.h.b16 %v9267
        %v9601 = vunpack.c.l.b16 %v9268
        %v9602 = vunpack.c.h.b16 %v9268
        %v9603 = vunpack.c.l.b16 %v9269
        %v9604 = vunpack.c.h.b16 %v9269
        %v9605 = vunpack.c.l.b16 %v9270
        %v9606 = vunpack.c.h.b16 %v9270
        %v9607 = vunpack.c.l.b16 %v9271
        %v9608 = vunpack.c.h.b16 %v9271
        %v9609 = vunpack.c.l.b16 %v9272
        %v9610 = vunpack.c.h.b16 %v9272
        %v9611 = vunpack.c.l.b16 %v9273
        %v9612 = vunpack.c.h.b16 %v9273
        %v9613 = vunpack.c.l.b16 %v9274
        %v9614 = vunpack.c.h.b16 %v9274
        %v9615 = vunpack.c.l.b16 %v9275
        %v9616 = vunpack.c.h.b16 %v9275
        %v9617 = vunpack.c.l.b16 %v9276
        %v9618 = vunpack.c.h.b16 %v9276
        %v9619 = vunpack.c.l.b16 %v9277
        %v9620 = vunpack.c.h.b16 %v9277
        %v9621 = vunpack.c.l.b16 %v9278
        %v9622 = vunpack.c.h.b16 %v9278
        %v9623 = vunpack.c.l.b16 %v9279
        %v9624 = vunpack.c.h.b16 %v9279
        %v9625 = vunpack.c.l.b16 %v9280
        %v9626 = vunpack.c.h.b16 %v9280
        %v9627 = vunpack.c.l.b16 %v9281
        %v9628 = vunpack.c.h.b16 %v9281
        %v9629 = vunpack.c.l.b16 %v9282
        %v9630 = vunpack.c.h.b16 %v9282
        %v9631 = vunpack.c.l.b16 %v9283
        %v9632 = vunpack.c.h.b16 %v9283
        %v9633 = vunpack.c.l.b16 %v9284
        %v9634 = vunpack.c.h.b16 %v9284
        %v9635 = vunpack.c.l.b16 %v9285
        %v9636 = vunpack.c.h.b16 %v9285
        %v9637 = vunpack.c.l.b16 %v9286
        %v9638 = vunpack.c.h.b16 %v9286
        %v9639 = vunpack.c.l.b16 %v9287
        %v9640 = vunpack.c.h.b16 %v9287
        %v9641 = vunpack.c.l.b16 %v9288
        %v9642 = vunpack.c.h.b16 %v9288
        %v9643 = vunpack.c.l.b16 %v9289
        %v9644 = vunpack.c.h.b16 %v9289
        %v9645 = vunpack.c.l.b16 %v9290
        %v9646 = vunpack.c.h.b16 %v9290
        %v9647 = vunpack.c.l.b16 %v9291
        %v9648 = vunpack.c.h.b16 %v9291
        %v9649 = vunpack.c.l.b16 %v9292
        %v9650 = vunpack.c.h.b16 %v9292
        %v9651 = vunpack.c.l.b16 %v9293
        %v9652 = vunpack.c.h.b16 %v9293
        %v9653 = vunpack.c.l.b16 %v9294
        %v9654 = vunpack.c.h.b16 %v9294
        %v9655 = vunpack.c.l.b16 %v9295
        %v9656 = vunpack.c.h.b16 %v9295
        %v9657 = vunpack.c.l.b16 %v9296
        %v9658 = vunpack.c.h.b16 %v9296
        %v9659 = vunpack.c.l.b16 %v9297
        %v9660 = vunpack.c.h.b16 %v9297
        %v9661 = vunpack.c.l.b16 %v9298
        %v9662 = vunpack.c.h.b16 %v9298
        %v9663 = vunpack.c.l.b16 %v9299
        %v9664 = vunpack.c.h.b16 %v9299
        %v9665 = vunpack.c.l.b16 %v9300
        %v9666 = vunpack.c.h.b16 %v9300
        %v9667 = vunpack.c.l.b16 %v9301
        %v9668 = vunpack.c.h.b16 %v9301
        %v9669 = vunpack.c.l.b16 %v9302
        %v9670 = vunpack.c.h.b16 %v9302
        %v9671 = vunpack.c.l.b16 %v9303
        %v9672 = vunpack.c.h.b16 %v9303
        %v9673 = vunpack.c.l.b16 %v9304
        %v9674 = vunpack.c.h.b16 %v9304
        %v9675 = vunpack.c.l.b16 %v9305
        %v9676 = vunpack.c.h.b16 %v9305
        %v9677 = vunpack.c.l.b16 %v9306
        %v9678 = vunpack.c.h.b16 %v9306
        %v9679 = vunpack.c.l.b16 %v9307
        %v9680 = vunpack.c.h.b16 %v9307
        %v9681 = vunpack.c.l.b16 %v9308
        %v9682 = vunpack.c.h.b16 %v9308
        %v9683 = vunpack.c.l.b16 %v9309
        %v9684 = vunpack.c.h.b16 %v9309
        %v9685 = vunpack.c.l.b16 %v9310
        %v9686 = vunpack.c.h.b16 %v9310
        %v9687 = vunpack.c.l.b16 %v9311
        %v9688 = vunpack.c.h.b16 %v9311
        %v9689 = vunpack.c.l.b16 %v9312
        %v9690 = vunpack.c.h.b16 %v9312
        %v9691 = vunpack.c.l.b16 %v9313
        %v9692 = vunpack.c.h.b16 %v9313
        %v9693 = vunpack.c.l.b16 %v9314
        %v9694 = vunpack.c.h.b16 %v9314
        %v9695 = vunpack.c.l.b16 %v9315
        %v9696 = vunpack.c.h.b16 %v9315
        %v9697 = vunpack.c.l.b16 %v9316
        %v9698 = vunpack.c.h.b16 %v9316
        %v9699 = vunpack.c.l.b16 %v9317
        %v9700 = vunpack.c.h.b16 %v9317
        %v9701 = vunpack.c.l.b16 %v9318
        %v9702 = vunpack.c.h.b16 %v9318
        %v9703 = vpack.c.b16 %v9451, %v9447
        %v9704 = vpack.c.b16 %v9452, %v9448
        %v9705 = vpack.c.b16 %v9453, %v9449
        %v9706 = vpack.c.b16 %v9454, %v9450
        %v9707 = vpack.c.b16 %v9459, %v9455
        %v9708 = vpack.c.b16 %v9460, %v9456
        %v9709 = vpack.c.b16 %v9461, %v9457
        %v9710 = vpack.c.b16 %v9462, %v9458
        %v9711 = vpack.c.b16 %v9467, %v9463
        %v9712 = vpack.c.b16 %v9468, %v9464
        %v9713 = vpack.c.b16 %v9469, %v9465
        %v9714 = vpack.c.b16 %v9470, %v9466
        %v9715 = vpack.c.b16 %v9475, %v9471
        %v9716 = vpack.c.b16 %v9476, %v9472
        %v9717 = vpack.c.b16 %v9477, %v9473
        %v9718 = vpack.c.b16 %v9478, %v9474
        %v9719 = vpack.c.b16 %v9483, %v9479
        %v9720 = vpack.c.b16 %v9484, %v9480
        %v9721 = vpack.c.b16 %v9485, %v9481
        %v9722 = vpack.c.b16 %v9486, %v9482
        %v9723 = vpack.c.b16 %v9491, %v9487
        %v9724 = vpack.c.b16 %v9492, %v9488
        %v9725 = vpack.c.b16 %v9493, %v9489
        %v9726 = vpack.c.b16 %v9494, %v9490
        %v9727 = vpack.c.b16 %v9499, %v9495
        %v9728 = vpack.c.b16 %v9500, %v9496
        %v9729 = vpack.c.b16 %v9501, %v9497
        %v9730 = vpack.c.b16 %v9502, %v9498
        %v9731 = vpack.c.b16 %v9507, %v9503
        %v9732 = vpack.c.b16 %v9508, %v9504
        %v9733 = vpack.c.b16 %v9509, %v9505
        %v9734 = vpack.c.b16 %v9510, %v9506
        %v9735 = vpack.c.b16 %v9515, %v9511
        %v9736 = vpack.c.b16 %v9516, %v9512
        %v9737 = vpack.c.b16 %v9517, %v9513
        %v9738 = vpack.c.b16 %v9518, %v9514
        %v9739 = vpack.c.b16 %v9523, %v9519
        %v9740 = vpack.c.b16 %v9524, %v9520
        %v9741 = vpack.c.b16 %v9525, %v9521
        %v9742 = vpack.c.b16 %v9526, %v9522
        %v9743 = vpack.c.b16 %v9531, %v9527
        %v9744 = vpack.c.b16 %v9532, %v9528
        %v9745 = vpack.c.b16 %v9533, %v9529
        %v9746 = vpack.c.b16 %v9534, %v9530
        %v9747 = vpack.c.b16 %v9539, %v9535
        %v9748 = vpack.c.b16 %v9540, %v9536
        %v9749 = vpack.c.b16 %v9541, %v9537
        %v9750 = vpack.c.b16 %v9542, %v9538
        %v9751 = vpack.c.b16 %v9547, %v9543
        %v9752 = vpack.c.b16 %v9548, %v9544
        %v9753 = vpack.c.b16 %v9549, %v9545
        %v9754 = vpack.c.b16 %v9550, %v9546
        %v9755 = vpack.c.b16 %v9555, %v9551
        %v9756 = vpack.c.b16 %v9556, %v9552
        %v9757 = vpack.c.b16 %v9557, %v9553
        %v9758 = vpack.c.b16 %v9558, %v9554
        %v9759 = vpack.c.b16 %v9563, %v9559
        %v9760 = vpack.c.b16 %v9564, %v9560
        %v9761 = vpack.c.b16 %v9565, %v9561
        %v9762 = vpack.c.b16 %v9566, %v9562
        %v9763 = vpack.c.b16 %v9571, %v9567
        %v9764 = vpack.c.b16 %v9572, %v9568
        %v9765 = vpack.c.b16 %v9573, %v9569
        %v9766 = vpack.c.b16 %v9574, %v9570
        %v9767 = vpack.c.b16 %v9579, %v9575
        %v9768 = vpack.c.b16 %v9580, %v9576
        %v9769 = vpack.c.b16 %v9581, %v9577
        %v9770 = vpack.c.b16 %v9582, %v9578
        %v9771 = vpack.c.b16 %v9587, %v9583
        %v9772 = vpack.c.b16 %v9588, %v9584
        %v9773 = vpack.c.b16 %v9589, %v9585
        %v9774 = vpack.c.b16 %v9590, %v9586
        %v9775 = vpack.c.b16 %v9595, %v9591
        %v9776 = vpack.c.b16 %v9596, %v9592
        %v9777 = vpack.c.b16 %v9597, %v9593
        %v9778 = vpack.c.b16 %v9598, %v9594
        %v9779 = vpack.c.b16 %v9603, %v9599
        %v9780 = vpack.c.b16 %v9604, %v9600
        %v9781 = vpack.c.b16 %v9605, %v9601
        %v9782 = vpack.c.b16 %v9606, %v9602
        %v9783 = vpack.c.b16 %v9611, %v9607
        %v9784 = vpack.c.b16 %v9612, %v9608
        %v9785 = vpack.c.b16 %v9613, %v9609
        %v9786 = vpack.c.b16 %v9614, %v9610
        %v9787 = vpack.c.b16 %v9619, %v9615
        %v9788 = vpack.c.b16 %v9620, %v9616
        %v9789 = vpack.c.b16 %v9621, %v9617
        %v9790 = vpack.c.b16 %v9622, %v9618
        %v9791 = vpack.c.b16 %v9627, %v9623
        %v9792 = vpack.c.b16 %v9628, %v9624
        %v9793 = vpack.c.b16 %v9629, %v9625
        %v9794 = vpack.c.b16 %v9630, %v9626
        %v9795 = vpack.c.b16 %v9635, %v9631
        %v9796 = vpack.c.b16 %v9636, %v9632
        %v9797 = vpack.c.b16 %v9637, %v9633
        %v9798 = vpack.c.b16 %v9638, %v9634
        %v9799 = vpack.c.b16 %v9643, %v9639
        %v9800 = vpack.c.b16 %v9644, %v9640
        %v9801 = vpack.c.b16 %v9645, %v9641
        %v9802 = vpack.c.b16 %v9646, %v9642
        %v9803 = vpack.c.b16 %v9651, %v9647
        %v9804 = vpack.c.b16 %v9652, %v9648
        %v9805 = vpack.c.b16 %v9653, %v9649
        %v9806 = vpack.c.b16 %v9654, %v9650
        %v9807 = vpack.c.b16 %v9659, %v9655
        %v9808 = vpack.c.b16 %v9660, %v9656
        %v9809 = vpack.c.b16 %v9661, %v9657
        %v9810 = vpack.c.b16 %v9662, %v9658
        %v9811 = vpack.c.b16 %v9667, %v9663
        %v9812 = vpack.c.b16 %v9668, %v9664
        %v9813 = vpack.c.b16 %v9669, %v9665
        %v9814 = vpack.c.b16 %v9670, %v9666
        %v9815 = vpack.c.b16 %v9675, %v9671
        %v9816 = vpack.c.b16 %v9676, %v9672
        %v9817 = vpack.c.b16 %v9677, %v9673
        %v9818 = vpack.c.b16 %v9678, %v9674
        %v9819 = vpack.c.b16 %v9683, %v9679
        %v9820 = vpack.c.b16 %v9684, %v9680
        %v9821 = vpack.c.b16 %v9685, %v9681
        %v9822 = vpack.c.b16 %v9686, %v9682
        %v9823 = vpack.c.b16 %v9691, %v9687
        %v9824 = vpack.c.b16 %v9692, %v9688
        %v9825 = vpack.c.b16 %v9693, %v9689
        %v9826 = vpack.c.b16 %v9694, %v9690
        %v9827 = vpack.c.b16 %v9699, %v9695
        %v9828 = vpack.c.b16 %v9700, %v9696
        %v9829 = vpack.c.b16 %v9701, %v9697
        %v9830 = vpack.c.b16 %v9702, %v9698
        %9959 = vmatprep.subr.bf16.mxu0 %v9704
        %9960 = vmatpush1.bf16.msra.mxu0 %v9703
        %9961 = vmatprep.subr.bf16.mxu0 %v9708
        %9962 = vmatpush1.bf16.msra.mxu0 %v9707
        %9963 = vmatprep.subr.bf16.mxu0 %v9712
        %9964 = vmatpush1.bf16.msra.mxu0 %v9711
        %9965 = vmatprep.subr.bf16.mxu0 %v9716
        %9966 = vmatpush1.bf16.msra.mxu0 %v9715
        %9967 = vmatprep.subr.bf16.mxu0 %v9720
        %9968 = vmatpush1.bf16.msra.mxu0 %v9719
        %9969 = vmatprep.subr.bf16.mxu0 %v9724
        %9970 = vmatpush1.bf16.msra.mxu0 %v9723
        %9971 = vmatprep.subr.bf16.mxu0 %v9728
        %9972 = vmatpush1.bf16.msra.mxu0 %v9727
        %9973 = vmatprep.subr.bf16.mxu0 %v9732
        %9974 = vmatpush1.bf16.msra.mxu0 %v9731
        %9975 = vmatprep.subr.bf16.mxu0 %v9736
        %9976 = vmatpush1.bf16.msra.mxu0 %v9735
        %9977 = vmatprep.subr.bf16.mxu0 %v9740
        %9978 = vmatpush1.bf16.msra.mxu0 %v9739
        %9979 = vmatprep.subr.bf16.mxu0 %v9744
        %9980 = vmatpush1.bf16.msra.mxu0 %v9743
        %9981 = vmatprep.subr.bf16.mxu0 %v9748
        %9982 = vmatpush1.bf16.msra.mxu0 %v9747
        %9983 = vmatprep.subr.bf16.mxu0 %v9752
        %9984 = vmatpush1.bf16.msra.mxu0 %v9751
        %9985 = vmatprep.subr.bf16.mxu0 %v9756
        %9986 = vmatpush1.bf16.msra.mxu0 %v9755
        %9987 = vmatprep.subr.bf16.mxu0 %v9760
        %9988 = vmatpush1.bf16.msra.mxu0 %v9759
        %9989 = vmatprep.subr.bf16.mxu0 %v9764
        %9990 = vmatpush1.bf16.msra.mxu0 %v9763
        %9991 = vmatprep.mubr.bf16.mxu0 %v9188
        %9992 = vmatmul.mubr.bf16.gmra.mrb[0].mxu0 %v9187
        %v9993 = vpop.f32.mrb[0].mxu0
        %v9994 = vadd.f32 0.0, %v9993
        %v9995 = vpop.f32.mrb[0].mxu0
        %v9996 = vadd.f32 0.0, %v9995
        %v9997 = vpop.f32.mrb[0].mxu0
        %v9998 = vpop.f32.mrb[0].mxu0
        %9999 = vdwg.mxu0
        %10000 = vmatprep.subr.bf16.mxu0 %v9768
        %10001 = vmatpush1.bf16.msra.mxu0 %v9767
        %10002 = vmatprep.subr.bf16.mxu0 %v9772
        %10003 = vmatpush1.bf16.msra.mxu0 %v9771
        %10004 = vmatprep.subr.bf16.mxu0 %v9776
        %10005 = vmatpush1.bf16.msra.mxu0 %v9775
        %10006 = vmatprep.subr.bf16.mxu0 %v9780
        %10007 = vmatpush1.bf16.msra.mxu0 %v9779
        %10008 = vmatprep.subr.bf16.mxu0 %v9784
        %10009 = vmatpush1.bf16.msra.mxu0 %v9783
        %10010 = vmatprep.subr.bf16.mxu0 %v9788
        %10011 = vmatpush1.bf16.msra.mxu0 %v9787
        %10012 = vmatprep.subr.bf16.mxu0 %v9792
        %10013 = vmatpush1.bf16.msra.mxu0 %v9791
        %10014 = vmatprep.subr.bf16.mxu0 %v9796
        %10015 = vmatpush1.bf16.msra.mxu0 %v9795
        %10016 = vmatprep.subr.bf16.mxu0 %v9800
        %10017 = vmatpush1.bf16.msra.mxu0 %v9799
        %10018 = vmatprep.subr.bf16.mxu0 %v9804
        %10019 = vmatpush1.bf16.msra.mxu0 %v9803
        %10020 = vmatprep.subr.bf16.mxu0 %v9808
        %10021 = vmatpush1.bf16.msra.mxu0 %v9807
        %10022 = vmatprep.subr.bf16.mxu0 %v9812
        %10023 = vmatpush1.bf16.msra.mxu0 %v9811
        %10024 = vmatprep.subr.bf16.mxu0 %v9816
        %10025 = vmatpush1.bf16.msra.mxu0 %v9815
        %10026 = vmatprep.subr.bf16.mxu0 %v9820
        %10027 = vmatpush1.bf16.msra.mxu0 %v9819
        %10028 = vmatprep.subr.bf16.mxu0 %v9824
        %10029 = vmatpush1.bf16.msra.mxu0 %v9823
        %10030 = vmatprep.subr.bf16.mxu0 %v9828
        %10031 = vmatpush1.bf16.msra.mxu0 %v9827
        %10032 = vmatprep.mubr.bf16.mxu0 %v9190
        %10033 = vmatmul.mubr.bf16.gmra.mrb[0].mxu0 %v9189
        %v10034 = vpop.f32.mrb[0].mxu0
        %v10035 = vadd.f32 %v9994, %v10034
        %v10036 = vpop.f32.mrb[0].mxu0
        %v10037 = vadd.f32 %v9996, %v10036
        %v10038 = vpop.f32.mrb[0].mxu0
        %v10039 = vpop.f32.mrb[0].mxu0
        %10040 = vdwg.mxu0
        %10041 = vmatprep.subr.bf16.mxu0 %v9706
        %10042 = vmatpush1.bf16.msra.mxu0 %v9705
        %10043 = vmatprep.subr.bf16.mxu0 %v9710
        %10044 = vmatpush1.bf16.msra.mxu0 %v9709
        %10045 = vmatprep.subr.bf16.mxu0 %v9714
        %10046 = vmatpush1.bf16.msra.mxu0 %v9713
        %10047 = vmatprep.subr.bf16.mxu0 %v9718
        %10048 = vmatpush1.bf16.msra.mxu0 %v9717
        %10049 = vmatprep.subr.bf16.mxu0 %v9722
        %10050 = vmatpush1.bf16.msra.mxu0 %v9721
        %10051 = vmatprep.subr.bf16.mxu0 %v9726
        %10052 = vmatpush1.bf16.msra.mxu0 %v9725
        %10053 = vmatprep.subr.bf16.mxu0 %v9730
        %10054 = vmatpush1.bf16.msra.mxu0 %v9729
        %10055 = vmatprep.subr.bf16.mxu0 %v9734
        %10056 = vmatpush1.bf16.msra.mxu0 %v9733
        %10057 = vmatprep.subr.bf16.mxu0 %v9738
        %10058 = vmatpush1.bf16.msra.mxu0 %v9737
        %10059 = vmatprep.subr.bf16.mxu0 %v9742
        %10060 = vmatpush1.bf16.msra.mxu0 %v9741
        %10061 = vmatprep.subr.bf16.mxu0 %v9746
        %10062 = vmatpush1.bf16.msra.mxu0 %v9745
        %10063 = vmatprep.subr.bf16.mxu0 %v9750
        %10064 = vmatpush1.bf16.msra.mxu0 %v9749
        %10065 = vmatprep.subr.bf16.mxu0 %v9754
        %10066 = vmatpush1.bf16.msra.mxu0 %v9753
        %10067 = vmatprep.subr.bf16.mxu0 %v9758
        %10068 = vmatpush1.bf16.msra.mxu0 %v9757
        %10069 = vmatprep.subr.bf16.mxu0 %v9762
        %10070 = vmatpush1.bf16.msra.mxu0 %v9761
        %10071 = vmatprep.subr.bf16.mxu0 %v9766
        %10072 = vmatpush1.bf16.msra.mxu0 %v9765
        %10073 = vmatprep.mubr.bf16.mxu0 %v9188
        %10074 = vmatmul.mubr.bf16.gmra.mrb[0].mxu0 %v9187
        %v10075 = vpop.f32.mrb[0].mxu0
        %v10076 = vadd.f32 0.0, %v10075
        %v10077 = vpop.f32.mrb[0].mxu0
        %v10078 = vadd.f32 0.0, %v10077
        %v10079 = vpop.f32.mrb[0].mxu0
        %v10080 = vpop.f32.mrb[0].mxu0
        %10081 = vdwg.mxu0
        %10082 = vmatprep.subr.bf16.mxu0 %v9770
        %10083 = vmatpush1.bf16.msra.mxu0 %v9769
        %10084 = vmatprep.subr.bf16.mxu0 %v9774
        %10085 = vmatpush1.bf16.msra.mxu0 %v9773
        %10086 = vmatprep.subr.bf16.mxu0 %v9778
        %10087 = vmatpush1.bf16.msra.mxu0 %v9777
        %10088 = vmatprep.subr.bf16.mxu0 %v9782
        %10089 = vmatpush1.bf16.msra.mxu0 %v9781
        %10090 = vmatprep.subr.bf16.mxu0 %v9786
        %10091 = vmatpush1.bf16.msra.mxu0 %v9785
        %10092 = vmatprep.subr.bf16.mxu0 %v9790
        %10093 = vmatpush1.bf16.msra.mxu0 %v9789
        %10094 = vmatprep.subr.bf16.mxu0 %v9794
        %10095 = vmatpush1.bf16.msra.mxu0 %v9793
        %10096 = vmatprep.subr.bf16.mxu0 %v9798
        %10097 = vmatpush1.bf16.msra.mxu0 %v9797
        %10098 = vmatprep.subr.bf16.mxu0 %v9802
        %10099 = vmatpush1.bf16.msra.mxu0 %v9801
        %10100 = vmatprep.subr.bf16.mxu0 %v9806
        %10101 = vmatpush1.bf16.msra.mxu0 %v9805
        %10102 = vmatprep.subr.bf16.mxu0 %v9810
        %10103 = vmatpush1.bf16.msra.mxu0 %v9809
        %10104 = vmatprep.subr.bf16.mxu0 %v9814
        %10105 = vmatpush1.bf16.msra.mxu0 %v9813
        %10106 = vmatprep.subr.bf16.mxu0 %v9818
        %10107 = vmatpush1.bf16.msra.mxu0 %v9817
        %10108 = vmatprep.subr.bf16.mxu0 %v9822
        %10109 = vmatpush1.bf16.msra.mxu0 %v9821
        %10110 = vmatprep.subr.bf16.mxu0 %v9826
        %10111 = vmatpush1.bf16.msra.mxu0 %v9825
        %10112 = vmatprep.subr.bf16.mxu0 %v9830
        %10113 = vmatpush1.bf16.msra.mxu0 %v9829
        %10114 = vmatprep.mubr.bf16.mxu0 %v9190
        %10115 = vmatmul.mubr.bf16.gmra.mrb[0].mxu0 %v9189
        %v10116 = vpop.f32.mrb[0].mxu0
        %v10117 = vadd.f32 %v10076, %v10116
        %v10118 = vpop.f32.mrb[0].mxu0
        %v10119 = vadd.f32 %v10078, %v10118
        %v10120 = vpop.f32.mrb[0].mxu0
        %v10121 = vpop.f32.mrb[0].mxu0
        %10122 = vdwg.mxu0
        %v10251 = vunpack.c.l.b16 %v9059
        %v10252 = vunpack.c.h.b16 %v9059
        %v10253 = vunpack.c.l.b16 %v9060
        %v10254 = vunpack.c.h.b16 %v9060
        %v10255 = vunpack.c.l.b16 %v9061
        %v10256 = vunpack.c.h.b16 %v9061
        %v10257 = vunpack.c.l.b16 %v9062
        %v10258 = vunpack.c.h.b16 %v9062
        %v10259 = vunpack.c.l.b16 %v9063
        %v10260 = vunpack.c.h.b16 %v9063
        %v10261 = vunpack.c.l.b16 %v9064
        %v10262 = vunpack.c.h.b16 %v9064
        %v10263 = vunpack.c.l.b16 %v9065
        %v10264 = vunpack.c.h.b16 %v9065
        %v10265 = vunpack.c.l.b16 %v9066
        %v10266 = vunpack.c.h.b16 %v9066
        %v10267 = vunpack.c.l.b16 %v9067
        %v10268 = vunpack.c.h.b16 %v9067
        %v10269 = vunpack.c.l.b16 %v9068
        %v10270 = vunpack.c.h.b16 %v9068
        %v10271 = vunpack.c.l.b16 %v9069
        %v10272 = vunpack.c.h.b16 %v9069
        %v10273 = vunpack.c.l.b16 %v9070
        %v10274 = vunpack.c.h.b16 %v9070
        %v10275 = vunpack.c.l.b16 %v9071
        %v10276 = vunpack.c.h.b16 %v9071
        %v10277 = vunpack.c.l.b16 %v9072
        %v10278 = vunpack.c.h.b16 %v9072
        %v10279 = vunpack.c.l.b16 %v9073
        %v10280 = vunpack.c.h.b16 %v9073
        %v10281 = vunpack.c.l.b16 %v9074
        %v10282 = vunpack.c.h.b16 %v9074
        %v10283 = vunpack.c.l.b16 %v9075
        %v10284 = vunpack.c.h.b16 %v9075
        %v10285 = vunpack.c.l.b16 %v9076
        %v10286 = vunpack.c.h.b16 %v9076
        %v10287 = vunpack.c.l.b16 %v9077
        %v10288 = vunpack.c.h.b16 %v9077
        %v10289 = vunpack.c.l.b16 %v9078
        %v10290 = vunpack.c.h.b16 %v9078
        %v10291 = vunpack.c.l.b16 %v9079
        %v10292 = vunpack.c.h.b16 %v9079
        %v10293 = vunpack.c.l.b16 %v9080
        %v10294 = vunpack.c.h.b16 %v9080
        %v10295 = vunpack.c.l.b16 %v9081
        %v10296 = vunpack.c.h.b16 %v9081
        %v10297 = vunpack.c.l.b16 %v9082
        %v10298 = vunpack.c.h.b16 %v9082
        %v10299 = vunpack.c.l.b16 %v9083
        %v10300 = vunpack.c.h.b16 %v9083
        %v10301 = vunpack.c.l.b16 %v9084
        %v10302 = vunpack.c.h.b16 %v9084
        %v10303 = vunpack.c.l.b16 %v9085
        %v10304 = vunpack.c.h.b16 %v9085
        %v10305 = vunpack.c.l.b16 %v9086
        %v10306 = vunpack.c.h.b16 %v9086
        %v10307 = vunpack.c.l.b16 %v9087
        %v10308 = vunpack.c.h.b16 %v9087
        %v10309 = vunpack.c.l.b16 %v9088
        %v10310 = vunpack.c.h.b16 %v9088
        %v10311 = vunpack.c.l.b16 %v9089
        %v10312 = vunpack.c.h.b16 %v9089
        %v10313 = vunpack.c.l.b16 %v9090
        %v10314 = vunpack.c.h.b16 %v9090
        %v10315 = vunpack.c.l.b16 %v9091
        %v10316 = vunpack.c.h.b16 %v9091
        %v10317 = vunpack.c.l.b16 %v9092
        %v10318 = vunpack.c.h.b16 %v9092
        %v10319 = vunpack.c.l.b16 %v9093
        %v10320 = vunpack.c.h.b16 %v9093
        %v10321 = vunpack.c.l.b16 %v9094
        %v10322 = vunpack.c.h.b16 %v9094
        %v10323 = vunpack.c.l.b16 %v9095
        %v10324 = vunpack.c.h.b16 %v9095
        %v10325 = vunpack.c.l.b16 %v9096
        %v10326 = vunpack.c.h.b16 %v9096
        %v10327 = vunpack.c.l.b16 %v9097
        %v10328 = vunpack.c.h.b16 %v9097
        %v10329 = vunpack.c.l.b16 %v9098
        %v10330 = vunpack.c.h.b16 %v9098
        %v10331 = vunpack.c.l.b16 %v9099
        %v10332 = vunpack.c.h.b16 %v9099
        %v10333 = vunpack.c.l.b16 %v9100
        %v10334 = vunpack.c.h.b16 %v9100
        %v10335 = vunpack.c.l.b16 %v9101
        %v10336 = vunpack.c.h.b16 %v9101
        %v10337 = vunpack.c.l.b16 %v9102
        %v10338 = vunpack.c.h.b16 %v9102
        %v10339 = vunpack.c.l.b16 %v9103
        %v10340 = vunpack.c.h.b16 %v9103
        %v10341 = vunpack.c.l.b16 %v9104
        %v10342 = vunpack.c.h.b16 %v9104
        %v10343 = vunpack.c.l.b16 %v9105
        %v10344 = vunpack.c.h.b16 %v9105
        %v10345 = vunpack.c.l.b16 %v9106
        %v10346 = vunpack.c.h.b16 %v9106
        %v10347 = vunpack.c.l.b16 %v9107
        %v10348 = vunpack.c.h.b16 %v9107
        %v10349 = vunpack.c.l.b16 %v9108
        %v10350 = vunpack.c.h.b16 %v9108
        %v10351 = vunpack.c.l.b16 %v9109
        %v10352 = vunpack.c.h.b16 %v9109
        %v10353 = vunpack.c.l.b16 %v9110
        %v10354 = vunpack.c.h.b16 %v9110
        %v10355 = vunpack.c.l.b16 %v9111
        %v10356 = vunpack.c.h.b16 %v9111
        %v10357 = vunpack.c.l.b16 %v9112
        %v10358 = vunpack.c.h.b16 %v9112
        %v10359 = vunpack.c.l.b16 %v9113
        %v10360 = vunpack.c.h.b16 %v9113
        %v10361 = vunpack.c.l.b16 %v9114
        %v10362 = vunpack.c.h.b16 %v9114
        %v10363 = vunpack.c.l.b16 %v9115
        %v10364 = vunpack.c.h.b16 %v9115
        %v10365 = vunpack.c.l.b16 %v9116
        %v10366 = vunpack.c.h.b16 %v9116
        %v10367 = vunpack.c.l.b16 %v9117
        %v10368 = vunpack.c.h.b16 %v9117
        %v10369 = vunpack.c.l.b16 %v9118
        %v10370 = vunpack.c.h.b16 %v9118
        %v10371 = vunpack.c.l.b16 %v9119
        %v10372 = vunpack.c.h.b16 %v9119
        %v10373 = vunpack.c.l.b16 %v9120
        %v10374 = vunpack.c.h.b16 %v9120
        %v10375 = vunpack.c.l.b16 %v9121
        %v10376 = vunpack.c.h.b16 %v9121
        %v10377 = vunpack.c.l.b16 %v9122
        %v10378 = vunpack.c.h.b16 %v9122
        %v10379 = vunpack.c.l.b16 %v9123
        %v10380 = vunpack.c.h.b16 %v9123
        %v10381 = vunpack.c.l.b16 %v9124
        %v10382 = vunpack.c.h.b16 %v9124
        %v10383 = vunpack.c.l.b16 %v9125
        %v10384 = vunpack.c.h.b16 %v9125
        %v10385 = vunpack.c.l.b16 %v9126
        %v10386 = vunpack.c.h.b16 %v9126
        %v10387 = vunpack.c.l.b16 %v9127
        %v10388 = vunpack.c.h.b16 %v9127
        %v10389 = vunpack.c.l.b16 %v9128
        %v10390 = vunpack.c.h.b16 %v9128
        %v10391 = vunpack.c.l.b16 %v9129
        %v10392 = vunpack.c.h.b16 %v9129
        %v10393 = vunpack.c.l.b16 %v9130
        %v10394 = vunpack.c.h.b16 %v9130
        %v10395 = vunpack.c.l.b16 %v9131
        %v10396 = vunpack.c.h.b16 %v9131
        %v10397 = vunpack.c.l.b16 %v9132
        %v10398 = vunpack.c.h.b16 %v9132
        %v10399 = vunpack.c.l.b16 %v9133
        %v10400 = vunpack.c.h.b16 %v9133
        %v10401 = vunpack.c.l.b16 %v9134
        %v10402 = vunpack.c.h.b16 %v9134
        %v10403 = vunpack.c.l.b16 %v9135
        %v10404 = vunpack.c.h.b16 %v9135
        %v10405 = vunpack.c.l.b16 %v9136
        %v10406 = vunpack.c.h.b16 %v9136
        %v10407 = vunpack.c.l.b16 %v9137
        %v10408 = vunpack.c.h.b16 %v9137
        %v10409 = vunpack.c.l.b16 %v9138
        %v10410 = vunpack.c.h.b16 %v9138
        %v10411 = vunpack.c.l.b16 %v9139
        %v10412 = vunpack.c.h.b16 %v9139
        %v10413 = vunpack.c.l.b16 %v9140
        %v10414 = vunpack.c.h.b16 %v9140
        %v10415 = vunpack.c.l.b16 %v9141
        %v10416 = vunpack.c.h.b16 %v9141
        %v10417 = vunpack.c.l.b16 %v9142
        %v10418 = vunpack.c.h.b16 %v9142
        %v10419 = vunpack.c.l.b16 %v9143
        %v10420 = vunpack.c.h.b16 %v9143
        %v10421 = vunpack.c.l.b16 %v9144
        %v10422 = vunpack.c.h.b16 %v9144
        %v10423 = vunpack.c.l.b16 %v9145
        %v10424 = vunpack.c.h.b16 %v9145
        %v10425 = vunpack.c.l.b16 %v9146
        %v10426 = vunpack.c.h.b16 %v9146
        %v10427 = vunpack.c.l.b16 %v9147
        %v10428 = vunpack.c.h.b16 %v9147
        %v10429 = vunpack.c.l.b16 %v9148
        %v10430 = vunpack.c.h.b16 %v9148
        %v10431 = vunpack.c.l.b16 %v9149
        %v10432 = vunpack.c.h.b16 %v9149
        %v10433 = vunpack.c.l.b16 %v9150
        %v10434 = vunpack.c.h.b16 %v9150
        %v10435 = vunpack.c.l.b16 %v9151
        %v10436 = vunpack.c.h.b16 %v9151
        %v10437 = vunpack.c.l.b16 %v9152
        %v10438 = vunpack.c.h.b16 %v9152
        %v10439 = vunpack.c.l.b16 %v9153
        %v10440 = vunpack.c.h.b16 %v9153
        %v10441 = vunpack.c.l.b16 %v9154
        %v10442 = vunpack.c.h.b16 %v9154
        %v10443 = vunpack.c.l.b16 %v9155
        %v10444 = vunpack.c.h.b16 %v9155
        %v10445 = vunpack.c.l.b16 %v9156
        %v10446 = vunpack.c.h.b16 %v9156
        %v10447 = vunpack.c.l.b16 %v9157
        %v10448 = vunpack.c.h.b16 %v9157
        %v10449 = vunpack.c.l.b16 %v9158
        %v10450 = vunpack.c.h.b16 %v9158
        %v10451 = vunpack.c.l.b16 %v9159
        %v10452 = vunpack.c.h.b16 %v9159
        %v10453 = vunpack.c.l.b16 %v9160
        %v10454 = vunpack.c.h.b16 %v9160
        %v10455 = vunpack.c.l.b16 %v9161
        %v10456 = vunpack.c.h.b16 %v9161
        %v10457 = vunpack.c.l.b16 %v9162
        %v10458 = vunpack.c.h.b16 %v9162
        %v10459 = vunpack.c.l.b16 %v9163
        %v10460 = vunpack.c.h.b16 %v9163
        %v10461 = vunpack.c.l.b16 %v9164
        %v10462 = vunpack.c.h.b16 %v9164
        %v10463 = vunpack.c.l.b16 %v9165
        %v10464 = vunpack.c.h.b16 %v9165
        %v10465 = vunpack.c.l.b16 %v9166
        %v10466 = vunpack.c.h.b16 %v9166
        %v10467 = vunpack.c.l.b16 %v9167
        %v10468 = vunpack.c.h.b16 %v9167
        %v10469 = vunpack.c.l.b16 %v9168
        %v10470 = vunpack.c.h.b16 %v9168
        %v10471 = vunpack.c.l.b16 %v9169
        %v10472 = vunpack.c.h.b16 %v9169
        %v10473 = vunpack.c.l.b16 %v9170
        %v10474 = vunpack.c.h.b16 %v9170
        %v10475 = vunpack.c.l.b16 %v9171
        %v10476 = vunpack.c.h.b16 %v9171
        %v10477 = vunpack.c.l.b16 %v9172
        %v10478 = vunpack.c.h.b16 %v9172
        %v10479 = vunpack.c.l.b16 %v9173
        %v10480 = vunpack.c.h.b16 %v9173
        %v10481 = vunpack.c.l.b16 %v9174
        %v10482 = vunpack.c.h.b16 %v9174
        %v10483 = vunpack.c.l.b16 %v9175
        %v10484 = vunpack.c.h.b16 %v9175
        %v10485 = vunpack.c.l.b16 %v9176
        %v10486 = vunpack.c.h.b16 %v9176
        %v10487 = vunpack.c.l.b16 %v9177
        %v10488 = vunpack.c.h.b16 %v9177
        %v10489 = vunpack.c.l.b16 %v9178
        %v10490 = vunpack.c.h.b16 %v9178
        %v10491 = vunpack.c.l.b16 %v9179
        %v10492 = vunpack.c.h.b16 %v9179
        %v10493 = vunpack.c.l.b16 %v9180
        %v10494 = vunpack.c.h.b16 %v9180
        %v10495 = vunpack.c.l.b16 %v9181
        %v10496 = vunpack.c.h.b16 %v9181
        %v10497 = vunpack.c.l.b16 %v9182
        %v10498 = vunpack.c.h.b16 %v9182
        %v10499 = vunpack.c.l.b16 %v9183
        %v10500 = vunpack.c.h.b16 %v9183
        %v10501 = vunpack.c.l.b16 %v9184
        %v10502 = vunpack.c.h.b16 %v9184
        %v10503 = vunpack.c.l.b16 %v9185
        %v10504 = vunpack.c.h.b16 %v9185
        %v10505 = vunpack.c.l.b16 %v9186
        %v10506 = vunpack.c.h.b16 %v9186
        %v10507 = vpack.c.b16 %v10255, %v10251
        %v10508 = vpack.c.b16 %v10256, %v10252
        %v10509 = vpack.c.b16 %v10257, %v10253
        %v10510 = vpack.c.b16 %v10258, %v10254
        %v10511 = vpack.c.b16 %v10263, %v10259
        %v10512 = vpack.c.b16 %v10264, %v10260
        %v10513 = vpack.c.b16 %v10265, %v10261
        %v10514 = vpack.c.b16 %v10266, %v10262
        %v10515 = vpack.c.b16 %v10271, %v10267
        %v10516 = vpack.c.b16 %v10272, %v10268
        %v10517 = vpack.c.b16 %v10273, %v10269
        %v10518 = vpack.c.b16 %v10274, %v10270
        %v10519 = vpack.c.b16 %v10279, %v10275
        %v10520 = vpack.c.b16 %v10280, %v10276
        %v10521 = vpack.c.b16 %v10281, %v10277
        %v10522 = vpack.c.b16 %v10282, %v10278
        %v10523 = vpack.c.b16 %v10287, %v10283
        %v10524 = vpack.c.b16 %v10288, %v10284
        %v10525 = vpack.c.b16 %v10289, %v10285
        %v10526 = vpack.c.b16 %v10290, %v10286
        %v10527 = vpack.c.b16 %v10295, %v10291
        %v10528 = vpack.c.b16 %v10296, %v10292
        %v10529 = vpack.c.b16 %v10297, %v10293
        %v10530 = vpack.c.b16 %v10298, %v10294
        %v10531 = vpack.c.b16 %v10303, %v10299
        %v10532 = vpack.c.b16 %v10304, %v10300
        %v10533 = vpack.c.b16 %v10305, %v10301
        %v10534 = vpack.c.b16 %v10306, %v10302
        %v10535 = vpack.c.b16 %v10311, %v10307
        %v10536 = vpack.c.b16 %v10312, %v10308
        %v10537 = vpack.c.b16 %v10313, %v10309
        %v10538 = vpack.c.b16 %v10314, %v10310
        %v10539 = vpack.c.b16 %v10319, %v10315
        %v10540 = vpack.c.b16 %v10320, %v10316
        %v10541 = vpack.c.b16 %v10321, %v10317
        %v10542 = vpack.c.b16 %v10322, %v10318
        %v10543 = vpack.c.b16 %v10327, %v10323
        %v10544 = vpack.c.b16 %v10328, %v10324
        %v10545 = vpack.c.b16 %v10329, %v10325
        %v10546 = vpack.c.b16 %v10330, %v10326
        %v10547 = vpack.c.b16 %v10335, %v10331
        %v10548 = vpack.c.b16 %v10336, %v10332
        %v10549 = vpack.c.b16 %v10337, %v10333
        %v10550 = vpack.c.b16 %v10338, %v10334
        %v10551 = vpack.c.b16 %v10343, %v10339
        %v10552 = vpack.c.b16 %v10344, %v10340
        %v10553 = vpack.c.b16 %v10345, %v10341
        %v10554 = vpack.c.b16 %v10346, %v10342
        %v10555 = vpack.c.b16 %v10351, %v10347
        %v10556 = vpack.c.b16 %v10352, %v10348
        %v10557 = vpack.c.b16 %v10353, %v10349
        %v10558 = vpack.c.b16 %v10354, %v10350
        %v10559 = vpack.c.b16 %v10359, %v10355
        %v10560 = vpack.c.b16 %v10360, %v10356
        %v10561 = vpack.c.b16 %v10361, %v10357
        %v10562 = vpack.c.b16 %v10362, %v10358
        %v10563 = vpack.c.b16 %v10367, %v10363
        %v10564 = vpack.c.b16 %v10368, %v10364
        %v10565 = vpack.c.b16 %v10369, %v10365
        %v10566 = vpack.c.b16 %v10370, %v10366
        %v10567 = vpack.c.b16 %v10375, %v10371
        %v10568 = vpack.c.b16 %v10376, %v10372
        %v10569 = vpack.c.b16 %v10377, %v10373
        %v10570 = vpack.c.b16 %v10378, %v10374
        %v10571 = vpack.c.b16 %v10383, %v10379
        %v10572 = vpack.c.b16 %v10384, %v10380
        %v10573 = vpack.c.b16 %v10385, %v10381
        %v10574 = vpack.c.b16 %v10386, %v10382
        %v10575 = vpack.c.b16 %v10391, %v10387
        %v10576 = vpack.c.b16 %v10392, %v10388
        %v10577 = vpack.c.b16 %v10393, %v10389
        %v10578 = vpack.c.b16 %v10394, %v10390
        %v10579 = vpack.c.b16 %v10399, %v10395
        %v10580 = vpack.c.b16 %v10400, %v10396
        %v10581 = vpack.c.b16 %v10401, %v10397
        %v10582 = vpack.c.b16 %v10402, %v10398
        %v10583 = vpack.c.b16 %v10407, %v10403
        %v10584 = vpack.c.b16 %v10408, %v10404
        %v10585 = vpack.c.b16 %v10409, %v10405
        %v10586 = vpack.c.b16 %v10410, %v10406
        %v10587 = vpack.c.b16 %v10415, %v10411
        %v10588 = vpack.c.b16 %v10416, %v10412
        %v10589 = vpack.c.b16 %v10417, %v10413
        %v10590 = vpack.c.b16 %v10418, %v10414
        %v10591 = vpack.c.b16 %v10423, %v10419
        %v10592 = vpack.c.b16 %v10424, %v10420
        %v10593 = vpack.c.b16 %v10425, %v10421
        %v10594 = vpack.c.b16 %v10426, %v10422
        %v10595 = vpack.c.b16 %v10431, %v10427
        %v10596 = vpack.c.b16 %v10432, %v10428
        %v10597 = vpack.c.b16 %v10433, %v10429
        %v10598 = vpack.c.b16 %v10434, %v10430
        %v10599 = vpack.c.b16 %v10439, %v10435
        %v10600 = vpack.c.b16 %v10440, %v10436
        %v10601 = vpack.c.b16 %v10441, %v10437
        %v10602 = vpack.c.b16 %v10442, %v10438
        %v10603 = vpack.c.b16 %v10447, %v10443
        %v10604 = vpack.c.b16 %v10448, %v10444
        %v10605 = vpack.c.b16 %v10449, %v10445
        %v10606 = vpack.c.b16 %v10450, %v10446
        %v10607 = vpack.c.b16 %v10455, %v10451
        %v10608 = vpack.c.b16 %v10456, %v10452
        %v10609 = vpack.c.b16 %v10457, %v10453
        %v10610 = vpack.c.b16 %v10458, %v10454
        %v10611 = vpack.c.b16 %v10463, %v10459
        %v10612 = vpack.c.b16 %v10464, %v10460
        %v10613 = vpack.c.b16 %v10465, %v10461
        %v10614 = vpack.c.b16 %v10466, %v10462
        %v10615 = vpack.c.b16 %v10471, %v10467
        %v10616 = vpack.c.b16 %v10472, %v10468
        %v10617 = vpack.c.b16 %v10473, %v10469
        %v10618 = vpack.c.b16 %v10474, %v10470
        %v10619 = vpack.c.b16 %v10479, %v10475
        %v10620 = vpack.c.b16 %v10480, %v10476
        %v10621 = vpack.c.b16 %v10481, %v10477
        %v10622 = vpack.c.b16 %v10482, %v10478
        %v10623 = vpack.c.b16 %v10487, %v10483
        %v10624 = vpack.c.b16 %v10488, %v10484
        %v10625 = vpack.c.b16 %v10489, %v10485
        %v10626 = vpack.c.b16 %v10490, %v10486
        %v10627 = vpack.c.b16 %v10495, %v10491
        %v10628 = vpack.c.b16 %v10496, %v10492
        %v10629 = vpack.c.b16 %v10497, %v10493
        %v10630 = vpack.c.b16 %v10498, %v10494
        %v10631 = vpack.c.b16 %v10503, %v10499
        %v10632 = vpack.c.b16 %v10504, %v10500
        %v10633 = vpack.c.b16 %v10505, %v10501
        %v10634 = vpack.c.b16 %v10506, %v10502
        %10763 = vmatprep.subr.bf16.mxu0 %v10508
        %10764 = vmatpush1.bf16.msra.mxu0 %v10507
        %10765 = vmatprep.subr.bf16.mxu0 %v10512
        %10766 = vmatpush1.bf16.msra.mxu0 %v10511
        %10767 = vmatprep.subr.bf16.mxu0 %v10516
        %10768 = vmatpush1.bf16.msra.mxu0 %v10515
        %10769 = vmatprep.subr.bf16.mxu0 %v10520
        %10770 = vmatpush1.bf16.msra.mxu0 %v10519
        %10771 = vmatprep.subr.bf16.mxu0 %v10524
        %10772 = vmatpush1.bf16.msra.mxu0 %v10523
        %10773 = vmatprep.subr.bf16.mxu0 %v10528
        %10774 = vmatpush1.bf16.msra.mxu0 %v10527
        %10775 = vmatprep.subr.bf16.mxu0 %v10532
        %10776 = vmatpush1.bf16.msra.mxu0 %v10531
        %10777 = vmatprep.subr.bf16.mxu0 %v10536
        %10778 = vmatpush1.bf16.msra.mxu0 %v10535
        %10779 = vmatprep.subr.bf16.mxu0 %v10540
        %10780 = vmatpush1.bf16.msra.mxu0 %v10539
        %10781 = vmatprep.subr.bf16.mxu0 %v10544
        %10782 = vmatpush1.bf16.msra.mxu0 %v10543
        %10783 = vmatprep.subr.bf16.mxu0 %v10548
        %10784 = vmatpush1.bf16.msra.mxu0 %v10547
        %10785 = vmatprep.subr.bf16.mxu0 %v10552
        %10786 = vmatpush1.bf16.msra.mxu0 %v10551
        %10787 = vmatprep.subr.bf16.mxu0 %v10556
        %10788 = vmatpush1.bf16.msra.mxu0 %v10555
        %10789 = vmatprep.subr.bf16.mxu0 %v10560
        %10790 = vmatpush1.bf16.msra.mxu0 %v10559
        %10791 = vmatprep.subr.bf16.mxu0 %v10564
        %10792 = vmatpush1.bf16.msra.mxu0 %v10563
        %10793 = vmatprep.subr.bf16.mxu0 %v10568
        %10794 = vmatpush1.bf16.msra.mxu0 %v10567
        %10795 = vmatprep.mubr.bf16.mxu0 %v9056
        %10796 = vmatmul.mubr.bf16.gmra.mrb[0].mxu0 %v9055
        %v10797 = vpop.f32.mrb[0].mxu0
        %v10798 = vadd.f32 %v10035, %v10797
        %v10799 = vpop.f32.mrb[0].mxu0
        %v10800 = vadd.f32 %v10037, %v10799
        %v10801 = vpop.f32.mrb[0].mxu0
        %v10802 = vpop.f32.mrb[0].mxu0
        %10803 = vdwg.mxu0
        %10804 = vmatprep.subr.bf16.mxu0 %v10572
        %10805 = vmatpush1.bf16.msra.mxu0 %v10571
        %10806 = vmatprep.subr.bf16.mxu0 %v10576
        %10807 = vmatpush1.bf16.msra.mxu0 %v10575
        %10808 = vmatprep.subr.bf16.mxu0 %v10580
        %10809 = vmatpush1.bf16.msra.mxu0 %v10579
        %10810 = vmatprep.subr.bf16.mxu0 %v10584
        %10811 = vmatpush1.bf16.msra.mxu0 %v10583
        %10812 = vmatprep.subr.bf16.mxu0 %v10588
        %10813 = vmatpush1.bf16.msra.mxu0 %v10587
        %10814 = vmatprep.subr.bf16.mxu0 %v10592
        %10815 = vmatpush1.bf16.msra.mxu0 %v10591
        %10816 = vmatprep.subr.bf16.mxu0 %v10596
        %10817 = vmatpush1.bf16.msra.mxu0 %v10595
        %10818 = vmatprep.subr.bf16.mxu0 %v10600
        %10819 = vmatpush1.bf16.msra.mxu0 %v10599
        %10820 = vmatprep.subr.bf16.mxu0 %v10604
        %10821 = vmatpush1.bf16.msra.mxu0 %v10603
        %10822 = vmatprep.subr.bf16.mxu0 %v10608
        %10823 = vmatpush1.bf16.msra.mxu0 %v10607
        %10824 = vmatprep.subr.bf16.mxu0 %v10612
        %10825 = vmatpush1.bf16.msra.mxu0 %v10611
        %10826 = vmatprep.subr.bf16.mxu0 %v10616
        %10827 = vmatpush1.bf16.msra.mxu0 %v10615
        %10828 = vmatprep.subr.bf16.mxu0 %v10620
        %10829 = vmatpush1.bf16.msra.mxu0 %v10619
        %10830 = vmatprep.subr.bf16.mxu0 %v10624
        %10831 = vmatpush1.bf16.msra.mxu0 %v10623
        %10832 = vmatprep.subr.bf16.mxu0 %v10628
        %10833 = vmatpush1.bf16.msra.mxu0 %v10627
        %10834 = vmatprep.subr.bf16.mxu0 %v10632
        %10835 = vmatpush1.bf16.msra.mxu0 %v10631
        %10836 = vmatprep.mubr.bf16.mxu0 %v9058
        %10837 = vmatmul.mubr.bf16.gmra.mrb[0].mxu0 %v9057
        %v10838 = vpop.f32.mrb[0].mxu0
        %v10839 = vadd.f32 %v10798, %v10838
        %v10840 = vpop.f32.mrb[0].mxu0
        %v10841 = vadd.f32 %v10800, %v10840
        %v10842 = vpop.f32.mrb[0].mxu0
        %v10843 = vpop.f32.mrb[0].mxu0
        %10844 = vdwg.mxu0
        %10845 = vmatprep.subr.bf16.mxu0 %v10510
        %10846 = vmatpush1.bf16.msra.mxu0 %v10509
        %10847 = vmatprep.subr.bf16.mxu0 %v10514
        %10848 = vmatpush1.bf16.msra.mxu0 %v10513
        %10849 = vmatprep.subr.bf16.mxu0 %v10518
        %10850 = vmatpush1.bf16.msra.mxu0 %v10517
        %10851 = vmatprep.subr.bf16.mxu0 %v10522
        %10852 = vmatpush1.bf16.msra.mxu0 %v10521
        %10853 = vmatprep.subr.bf16.mxu0 %v10526
        %10854 = vmatpush1.bf16.msra.mxu0 %v10525
        %10855 = vmatprep.subr.bf16.mxu0 %v10530
        %10856 = vmatpush1.bf16.msra.mxu0 %v10529
        %10857 = vmatprep.subr.bf16.mxu0 %v10534
        %10858 = vmatpush1.bf16.msra.mxu0 %v10533
        %10859 = vmatprep.subr.bf16.mxu0 %v10538
        %10860 = vmatpush1.bf16.msra.mxu0 %v10537
        %10861 = vmatprep.subr.bf16.mxu0 %v10542
        %10862 = vmatpush1.bf16.msra.mxu0 %v10541
        %10863 = vmatprep.subr.bf16.mxu0 %v10546
        %10864 = vmatpush1.bf16.msra.mxu0 %v10545
        %10865 = vmatprep.subr.bf16.mxu0 %v10550
        %10866 = vmatpush1.bf16.msra.mxu0 %v10549
        %10867 = vmatprep.subr.bf16.mxu0 %v10554
        %10868 = vmatpush1.bf16.msra.mxu0 %v10553
        %10869 = vmatprep.subr.bf16.mxu0 %v10558
        %10870 = vmatpush1.bf16.msra.mxu0 %v10557
        %10871 = vmatprep.subr.bf16.mxu0 %v10562
        %10872 = vmatpush1.bf16.msra.mxu0 %v10561
        %10873 = vmatprep.subr.bf16.mxu0 %v10566
        %10874 = vmatpush1.bf16.msra.mxu0 %v10565
        %10875 = vmatprep.subr.bf16.mxu0 %v10570
        %10876 = vmatpush1.bf16.msra.mxu0 %v10569
        %10877 = vmatprep.mubr.bf16.mxu0 %v9056
        %10878 = vmatmul.mubr.bf16.gmra.mrb[0].mxu0 %v9055
        %v10879 = vpop.f32.mrb[0].mxu0
        %v10880 = vadd.f32 %v10117, %v10879
        %v10881 = vpop.f32.mrb[0].mxu0
        %v10882 = vadd.f32 %v10119, %v10881
        %v10883 = vpop.f32.mrb[0].mxu0
        %v10884 = vpop.f32.mrb[0].mxu0
        %10885 = vdwg.mxu0
        %10886 = vmatprep.subr.bf16.mxu0 %v10574
        %10887 = vmatpush1.bf16.msra.mxu0 %v10573
        %10888 = vmatprep.subr.bf16.mxu0 %v10578
        %10889 = vmatpush1.bf16.msra.mxu0 %v10577
        %10890 = vmatprep.subr.bf16.mxu0 %v10582
        %10891 = vmatpush1.bf16.msra.mxu0 %v10581
        %10892 = vmatprep.subr.bf16.mxu0 %v10586
        %10893 = vmatpush1.bf16.msra.mxu0 %v10585
        %10894 = vmatprep.subr.bf16.mxu0 %v10590
        %10895 = vmatpush1.bf16.msra.mxu0 %v10589
        %10896 = vmatprep.subr.bf16.mxu0 %v10594
        %10897 = vmatpush1.bf16.msra.mxu0 %v10593
        %10898 = vmatprep.subr.bf16.mxu0 %v10598
        %10899 = vmatpush1.bf16.msra.mxu0 %v10597
        %10900 = vmatprep.subr.bf16.mxu0 %v10602
        %10901 = vmatpush1.bf16.msra.mxu0 %v10601
        %10902 = vmatprep.subr.bf16.mxu0 %v10606
        %10903 = vmatpush1.bf16.msra.mxu0 %v10605
        %10904 = vmatprep.subr.bf16.mxu0 %v10610
        %10905 = vmatpush1.bf16.msra.mxu0 %v10609
        %10906 = vmatprep.subr.bf16.mxu0 %v10614
        %10907 = vmatpush1.bf16.msra.mxu0 %v10613
        %10908 = vmatprep.subr.bf16.mxu0 %v10618
        %10909 = vmatpush1.bf16.msra.mxu0 %v10617
        %10910 = vmatprep.subr.bf16.mxu0 %v10622
        %10911 = vmatpush1.bf16.msra.mxu0 %v10621
        %10912 = vmatprep.subr.bf16.mxu0 %v10626
        %10913 = vmatpush1.bf16.msra.mxu0 %v10625
        %10914 = vmatprep.subr.bf16.mxu0 %v10630
        %10915 = vmatpush1.bf16.msra.mxu0 %v10629
        %10916 = vmatprep.subr.bf16.mxu0 %v10634
        %10917 = vmatpush1.bf16.msra.mxu0 %v10633
        %10918 = vmatprep.mubr.bf16.mxu0 %v9058
        %10919 = vmatmul.mubr.bf16.gmra.mrb[0].mxu0 %v9057
        %v10920 = vpop.f32.mrb[0].mxu0
        %v10921 = vadd.f32 %v10880, %v10920
        %v10922 = vpop.f32.mrb[0].mxu0
        %v10923 = vadd.f32 %v10882, %v10922
        %v10924 = vpop.f32.mrb[0].mxu0
        %v10925 = vpop.f32.mrb[0].mxu0
        %10926 = vdwg.mxu0
        %v10927 = vld [vmem:[#allocation24] sm:$0xf]
        %v10929 = vlaneseq
        %v10930 = vshrl.u32 %v10929, 7
        %v10931 = vsub.s32 0, %v10930
        %v10932 = vrot.slane %v10927, %v10931
        %v10933 = vlaneseq
        %v10934 = vshrl.u32 %v10933, 7
        %v10935 = vsub.s32 1, %v10934
        %v10936 = vrot.slane %v10927, %v10935
        %v10937 = vlaneseq
        %v10938 = vshrl.u32 %v10937, 7
        %v10939 = vsub.s32 2, %v10938
        %v10940 = vrot.slane %v10927, %v10939
        %v10941 = vlaneseq
        %v10942 = vshrl.u32 %v10941, 7
        %v10943 = vsub.s32 3, %v10942
        %v10944 = vrot.slane %v10927, %v10943
        %v10949 = vadd.f32 %v10839, %v10932
        %v10950 = vadd.f32 %v10841, %v10936
        %v10951 = vadd.f32 %v10921, %v10940
        %v10952 = vadd.f32 %v10923, %v10944
        %v10953 = vpack.c.bf16 %v10949, %v10949
        %v10954 = vpack.c.bf16 %v10950, %v10950
        %v10955 = vpack.c.bf16 %v10951, %v10951
        %v10956 = vpack.c.bf16 %v10952, %v10952
        %v10957 = vld [vmem:[#allocation25] sm:$0xff]
        %v10958 = vld [vmem:[#allocation25 + $0x8] sm:$0xff]
        %v10959 = vld [vmem:[#allocation25 + $0x10] sm:$0xff]
        %v10960 = vld [vmem:[#allocation25 + $0x18] sm:$0xff]
        %v10961 = vld [vmem:[#allocation25 + $0x20] sm:$0xff]
        %v10962 = vld [vmem:[#allocation25 + $0x28] sm:$0xff]
        %v10963 = vld [vmem:[#allocation25 + $0x30] sm:$0xff]
        %v10964 = vld [vmem:[#allocation25 + $0x38] sm:$0xff]
        %v10965 = vld [vmem:[#allocation25 + $0x40] sm:$0xff]
        %v10966 = vld [vmem:[#allocation25 + $0x48] sm:$0xff]
        %v10967 = vld [vmem:[#allocation25 + $0x50] sm:$0xff]
        %v10968 = vld [vmem:[#allocation25 + $0x58] sm:$0xff]
        %v10969 = vld [vmem:[#allocation25 + $0x60] sm:$0xff]
        %v10970 = vld [vmem:[#allocation25 + $0x68] sm:$0xff]
        %v10971 = vld [vmem:[#allocation25 + $0x70] sm:$0xff]
        %v10972 = vld [vmem:[#allocation25 + $0x78] sm:$0xff]
        %v10973 = vld [vmem:[#allocation25 + $0x80] sm:$0xff]
        %v10974 = vld [vmem:[#allocation25 + $0x88] sm:$0xff]
        %v10975 = vld [vmem:[#allocation25 + $0x90] sm:$0xff]
        %v10976 = vld [vmem:[#allocation25 + $0x98] sm:$0xff]
        %v10977 = vld [vmem:[#allocation25 + $0xa0] sm:$0xff]
        %v10978 = vld [vmem:[#allocation25 + $0xa8] sm:$0xff]
        %v10979 = vld [vmem:[#allocation25 + $0xb0] sm:$0xff]
        %v10980 = vld [vmem:[#allocation25 + $0xb8] sm:$0xff]
        %v10981 = vld [vmem:[#allocation25 + $0xc0] sm:$0xff]
        %v10982 = vld [vmem:[#allocation25 + $0xc8] sm:$0xff]
        %v10983 = vld [vmem:[#allocation25 + $0xd0] sm:$0xff]
        %v10984 = vld [vmem:[#allocation25 + $0xd8] sm:$0xff]
        %v10985 = vld [vmem:[#allocation25 + $0xe0] sm:$0xff]
        %v10986 = vld [vmem:[#allocation25 + $0xe8] sm:$0xff]
        %v10987 = vld [vmem:[#allocation25 + $0xf0] sm:$0xff]
        %v10988 = vld [vmem:[#allocation25 + $0xf8] sm:$0xff]
        %v10989 = vld [vmem:[#allocation25 + $0x100] sm:$0xff]
        %v10990 = vld [vmem:[#allocation25 + $0x108] sm:$0xff]
        %v10991 = vld [vmem:[#allocation25 + $0x110] sm:$0xff]
        %v10992 = vld [vmem:[#allocation25 + $0x118] sm:$0xff]
        %v10993 = vld [vmem:[#allocation25 + $0x120] sm:$0xff]
        %v10994 = vld [vmem:[#allocation25 + $0x128] sm:$0xff]
        %v10995 = vld [vmem:[#allocation25 + $0x130] sm:$0xff]
        %v10996 = vld [vmem:[#allocation25 + $0x138] sm:$0xff]
        %v10997 = vld [vmem:[#allocation25 + $0x140] sm:$0xff]
        %v10998 = vld [vmem:[#allocation25 + $0x148] sm:$0xff]
        %v10999 = vld [vmem:[#allocation25 + $0x150] sm:$0xff]
        %v11000 = vld [vmem:[#allocation25 + $0x158] sm:$0xff]
        %v11001 = vld [vmem:[#allocation25 + $0x160] sm:$0xff]
        %v11002 = vld [vmem:[#allocation25 + $0x168] sm:$0xff]
        %v11003 = vld [vmem:[#allocation25 + $0x170] sm:$0xff]
        %v11004 = vld [vmem:[#allocation25 + $0x178] sm:$0xff]
        %v11005 = vld [vmem:[#allocation25 + $0x180] sm:$0xff]
        %v11006 = vld [vmem:[#allocation25 + $0x188] sm:$0xff]
        %v11007 = vld [vmem:[#allocation25 + $0x190] sm:$0xff]
        %v11008 = vld [vmem:[#allocation25 + $0x198] sm:$0xff]
        %v11009 = vld [vmem:[#allocation25 + $0x1a0] sm:$0xff]
        %v11010 = vld [vmem:[#allocation25 + $0x1a8] sm:$0xff]
        %v11011 = vld [vmem:[#allocation25 + $0x1b0] sm:$0xff]
        %v11012 = vld [vmem:[#allocation25 + $0x1b8] sm:$0xff]
        %v11013 = vld [vmem:[#allocation25 + $0x1c0] sm:$0xff]
        %v11014 = vld [vmem:[#allocation25 + $0x1c8] sm:$0xff]
        %v11015 = vld [vmem:[#allocation25 + $0x1d0] sm:$0xff]
        %v11016 = vld [vmem:[#allocation25 + $0x1d8] sm:$0xff]
        %v11017 = vld [vmem:[#allocation25 + $0x1e0] sm:$0xff]
        %v11018 = vld [vmem:[#allocation25 + $0x1e8] sm:$0xff]
        %v11019 = vld [vmem:[#allocation25 + $0x1f0] sm:$0xff]
        %v11020 = vld [vmem:[#allocation25 + $0x1f8] sm:$0xff]
        %v11021 = vld [vmem:[#allocation25 + $0x200] sm:$0xff]
        %v11022 = vld [vmem:[#allocation25 + $0x208] sm:$0xff]
        %v11023 = vld [vmem:[#allocation25 + $0x210] sm:$0xff]
        %v11024 = vld [vmem:[#allocation25 + $0x218] sm:$0xff]
        %v11025 = vld [vmem:[#allocation25 + $0x220] sm:$0xff]
        %v11026 = vld [vmem:[#allocation25 + $0x228] sm:$0xff]
        %v11027 = vld [vmem:[#allocation25 + $0x230] sm:$0xff]
        %v11028 = vld [vmem:[#allocation25 + $0x238] sm:$0xff]
        %v11029 = vld [vmem:[#allocation25 + $0x240] sm:$0xff]
        %v11030 = vld [vmem:[#allocation25 + $0x248] sm:$0xff]
        %v11031 = vld [vmem:[#allocation25 + $0x250] sm:$0xff]
        %v11032 = vld [vmem:[#allocation25 + $0x258] sm:$0xff]
        %v11033 = vld [vmem:[#allocation25 + $0x260] sm:$0xff]
        %v11034 = vld [vmem:[#allocation25 + $0x268] sm:$0xff]
        %v11035 = vld [vmem:[#allocation25 + $0x270] sm:$0xff]
        %v11036 = vld [vmem:[#allocation25 + $0x278] sm:$0xff]
        %v11037 = vld [vmem:[#allocation25 + $0x280] sm:$0xff]
        %v11038 = vld [vmem:[#allocation25 + $0x288] sm:$0xff]
        %v11039 = vld [vmem:[#allocation25 + $0x290] sm:$0xff]
        %v11040 = vld [vmem:[#allocation25 + $0x298] sm:$0xff]
        %v11041 = vld [vmem:[#allocation25 + $0x2a0] sm:$0xff]
        %v11042 = vld [vmem:[#allocation25 + $0x2a8] sm:$0xff]
        %v11043 = vld [vmem:[#allocation25 + $0x2b0] sm:$0xff]
        %v11044 = vld [vmem:[#allocation25 + $0x2b8] sm:$0xff]
        %v11045 = vld [vmem:[#allocation25 + $0x2c0] sm:$0xff]
        %v11046 = vld [vmem:[#allocation25 + $0x2c8] sm:$0xff]
        %v11047 = vld [vmem:[#allocation25 + $0x2d0] sm:$0xff]
        %v11048 = vld [vmem:[#allocation25 + $0x2d8] sm:$0xff]
        %v11049 = vld [vmem:[#allocation25 + $0x2e0] sm:$0xff]
        %v11050 = vld [vmem:[#allocation25 + $0x2e8] sm:$0xff]
        %v11051 = vld [vmem:[#allocation25 + $0x2f0] sm:$0xff]
        %v11052 = vld [vmem:[#allocation25 + $0x2f8] sm:$0xff]
        %v11053 = vld [vmem:[#allocation25 + $0x300] sm:$0xff]
        %v11054 = vld [vmem:[#allocation25 + $0x308] sm:$0xff]
        %v11055 = vld [vmem:[#allocation25 + $0x310] sm:$0xff]
        %v11056 = vld [vmem:[#allocation25 + $0x318] sm:$0xff]
        %v11057 = vld [vmem:[#allocation25 + $0x320] sm:$0xff]
        %v11058 = vld [vmem:[#allocation25 + $0x328] sm:$0xff]
        %v11059 = vld [vmem:[#allocation25 + $0x330] sm:$0xff]
        %v11060 = vld [vmem:[#allocation25 + $0x338] sm:$0xff]
        %v11061 = vld [vmem:[#allocation25 + $0x340] sm:$0xff]
        %v11062 = vld [vmem:[#allocation25 + $0x348] sm:$0xff]
        %v11063 = vld [vmem:[#allocation25 + $0x350] sm:$0xff]
        %v11064 = vld [vmem:[#allocation25 + $0x358] sm:$0xff]
        %v11065 = vld [vmem:[#allocation25 + $0x360] sm:$0xff]
        %v11066 = vld [vmem:[#allocation25 + $0x368] sm:$0xff]
        %v11067 = vld [vmem:[#allocation25 + $0x370] sm:$0xff]
        %v11068 = vld [vmem:[#allocation25 + $0x378] sm:$0xff]
        %v11069 = vld [vmem:[#allocation25 + $0x380] sm:$0xff]
        %v11070 = vld [vmem:[#allocation25 + $0x388] sm:$0xff]
        %v11071 = vld [vmem:[#allocation25 + $0x390] sm:$0xff]
        %v11072 = vld [vmem:[#allocation25 + $0x398] sm:$0xff]
        %v11073 = vld [vmem:[#allocation25 + $0x3a0] sm:$0xff]
        %v11074 = vld [vmem:[#allocation25 + $0x3a8] sm:$0xff]
        %v11075 = vld [vmem:[#allocation25 + $0x3b0] sm:$0xff]
        %v11076 = vld [vmem:[#allocation25 + $0x3b8] sm:$0xff]
        %v11077 = vld [vmem:[#allocation25 + $0x3c0] sm:$0xff]
        %v11078 = vld [vmem:[#allocation25 + $0x3c8] sm:$0xff]
        %v11079 = vld [vmem:[#allocation25 + $0x3d0] sm:$0xff]
        %v11080 = vld [vmem:[#allocation25 + $0x3d8] sm:$0xff]
        %v11081 = vld [vmem:[#allocation25 + $0x3e0] sm:$0xff]
        %v11082 = vld [vmem:[#allocation25 + $0x3e8] sm:$0xff]
        %v11083 = vld [vmem:[#allocation25 + $0x3f0] sm:$0xff]
        %v11084 = vld [vmem:[#allocation25 + $0x3f8] sm:$0xff]
        %v11085 = vld [vmem:[#allocation27] sm:$0xf]
        %v11214 = vunpack.c.l.b16 %v10957
        %v11215 = vunpack.c.h.b16 %v10957
        %v11216 = vunpack.c.l.b16 %v10958
        %v11217 = vunpack.c.h.b16 %v10958
        %v11218 = vunpack.c.l.b16 %v10959
        %v11219 = vunpack.c.h.b16 %v10959
        %v11220 = vunpack.c.l.b16 %v10960
        %v11221 = vunpack.c.h.b16 %v10960
        %v11222 = vunpack.c.l.b16 %v10961
        %v11223 = vunpack.c.h.b16 %v10961
        %v11224 = vunpack.c.l.b16 %v10962
        %v11225 = vunpack.c.h.b16 %v10962
        %v11226 = vunpack.c.l.b16 %v10963
        %v11227 = vunpack.c.h.b16 %v10963
        %v11228 = vunpack.c.l.b16 %v10964
        %v11229 = vunpack.c.h.b16 %v10964
        %v11230 = vunpack.c.l.b16 %v10965
        %v11231 = vunpack.c.h.b16 %v10965
        %v11232 = vunpack.c.l.b16 %v10966
        %v11233 = vunpack.c.h.b16 %v10966
        %v11234 = vunpack.c.l.b16 %v10967
        %v11235 = vunpack.c.h.b16 %v10967
        %v11236 = vunpack.c.l.b16 %v10968
        %v11237 = vunpack.c.h.b16 %v10968
        %v11238 = vunpack.c.l.b16 %v10969
        %v11239 = vunpack.c.h.b16 %v10969
        %v11240 = vunpack.c.l.b16 %v10970
        %v11241 = vunpack.c.h.b16 %v10970
        %v11242 = vunpack.c.l.b16 %v10971
        %v11243 = vunpack.c.h.b16 %v10971
        %v11244 = vunpack.c.l.b16 %v10972
        %v11245 = vunpack.c.h.b16 %v10972
        %v11246 = vunpack.c.l.b16 %v10973
        %v11247 = vunpack.c.h.b16 %v10973
        %v11248 = vunpack.c.l.b16 %v10974
        %v11249 = vunpack.c.h.b16 %v10974
        %v11250 = vunpack.c.l.b16 %v10975
        %v11251 = vunpack.c.h.b16 %v10975
        %v11252 = vunpack.c.l.b16 %v10976
        %v11253 = vunpack.c.h.b16 %v10976
        %v11254 = vunpack.c.l.b16 %v10977
        %v11255 = vunpack.c.h.b16 %v10977
        %v11256 = vunpack.c.l.b16 %v10978
        %v11257 = vunpack.c.h.b16 %v10978
        %v11258 = vunpack.c.l.b16 %v10979
        %v11259 = vunpack.c.h.b16 %v10979
        %v11260 = vunpack.c.l.b16 %v10980
        %v11261 = vunpack.c.h.b16 %v10980
        %v11262 = vunpack.c.l.b16 %v10981
        %v11263 = vunpack.c.h.b16 %v10981
        %v11264 = vunpack.c.l.b16 %v10982
        %v11265 = vunpack.c.h.b16 %v10982
        %v11266 = vunpack.c.l.b16 %v10983
        %v11267 = vunpack.c.h.b16 %v10983
        %v11268 = vunpack.c.l.b16 %v10984
        %v11269 = vunpack.c.h.b16 %v10984
        %v11270 = vunpack.c.l.b16 %v10985
        %v11271 = vunpack.c.h.b16 %v10985
        %v11272 = vunpack.c.l.b16 %v10986
        %v11273 = vunpack.c.h.b16 %v10986
        %v11274 = vunpack.c.l.b16 %v10987
        %v11275 = vunpack.c.h.b16 %v10987
        %v11276 = vunpack.c.l.b16 %v10988
        %v11277 = vunpack.c.h.b16 %v10988
        %v11278 = vunpack.c.l.b16 %v10989
        %v11279 = vunpack.c.h.b16 %v10989
        %v11280 = vunpack.c.l.b16 %v10990
        %v11281 = vunpack.c.h.b16 %v10990
        %v11282 = vunpack.c.l.b16 %v10991
        %v11283 = vunpack.c.h.b16 %v10991
        %v11284 = vunpack.c.l.b16 %v10992
        %v11285 = vunpack.c.h.b16 %v10992
        %v11286 = vunpack.c.l.b16 %v10993
        %v11287 = vunpack.c.h.b16 %v10993
        %v11288 = vunpack.c.l.b16 %v10994
        %v11289 = vunpack.c.h.b16 %v10994
        %v11290 = vunpack.c.l.b16 %v10995
        %v11291 = vunpack.c.h.b16 %v10995
        %v11292 = vunpack.c.l.b16 %v10996
        %v11293 = vunpack.c.h.b16 %v10996
        %v11294 = vunpack.c.l.b16 %v10997
        %v11295 = vunpack.c.h.b16 %v10997
        %v11296 = vunpack.c.l.b16 %v10998
        %v11297 = vunpack.c.h.b16 %v10998
        %v11298 = vunpack.c.l.b16 %v10999
        %v11299 = vunpack.c.h.b16 %v10999
        %v11300 = vunpack.c.l.b16 %v11000
        %v11301 = vunpack.c.h.b16 %v11000
        %v11302 = vunpack.c.l.b16 %v11001
        %v11303 = vunpack.c.h.b16 %v11001
        %v11304 = vunpack.c.l.b16 %v11002
        %v11305 = vunpack.c.h.b16 %v11002
        %v11306 = vunpack.c.l.b16 %v11003
        %v11307 = vunpack.c.h.b16 %v11003
        %v11308 = vunpack.c.l.b16 %v11004
        %v11309 = vunpack.c.h.b16 %v11004
        %v11310 = vunpack.c.l.b16 %v11005
        %v11311 = vunpack.c.h.b16 %v11005
        %v11312 = vunpack.c.l.b16 %v11006
        %v11313 = vunpack.c.h.b16 %v11006
        %v11314 = vunpack.c.l.b16 %v11007
        %v11315 = vunpack.c.h.b16 %v11007
        %v11316 = vunpack.c.l.b16 %v11008
        %v11317 = vunpack.c.h.b16 %v11008
        %v11318 = vunpack.c.l.b16 %v11009
        %v11319 = vunpack.c.h.b16 %v11009
        %v11320 = vunpack.c.l.b16 %v11010
        %v11321 = vunpack.c.h.b16 %v11010
        %v11322 = vunpack.c.l.b16 %v11011
        %v11323 = vunpack.c.h.b16 %v11011
        %v11324 = vunpack.c.l.b16 %v11012
        %v11325 = vunpack.c.h.b16 %v11012
        %v11326 = vunpack.c.l.b16 %v11013
        %v11327 = vunpack.c.h.b16 %v11013
        %v11328 = vunpack.c.l.b16 %v11014
        %v11329 = vunpack.c.h.b16 %v11014
        %v11330 = vunpack.c.l.b16 %v11015
        %v11331 = vunpack.c.h.b16 %v11015
        %v11332 = vunpack.c.l.b16 %v11016
        %v11333 = vunpack.c.h.b16 %v11016
        %v11334 = vunpack.c.l.b16 %v11017
        %v11335 = vunpack.c.h.b16 %v11017
        %v11336 = vunpack.c.l.b16 %v11018
        %v11337 = vunpack.c.h.b16 %v11018
        %v11338 = vunpack.c.l.b16 %v11019
        %v11339 = vunpack.c.h.b16 %v11019
        %v11340 = vunpack.c.l.b16 %v11020
        %v11341 = vunpack.c.h.b16 %v11020
        %v11342 = vunpack.c.l.b16 %v11021
        %v11343 = vunpack.c.h.b16 %v11021
        %v11344 = vunpack.c.l.b16 %v11022
        %v11345 = vunpack.c.h.b16 %v11022
        %v11346 = vunpack.c.l.b16 %v11023
        %v11347 = vunpack.c.h.b16 %v11023
        %v11348 = vunpack.c.l.b16 %v11024
        %v11349 = vunpack.c.h.b16 %v11024
        %v11350 = vunpack.c.l.b16 %v11025
        %v11351 = vunpack.c.h.b16 %v11025
        %v11352 = vunpack.c.l.b16 %v11026
        %v11353 = vunpack.c.h.b16 %v11026
        %v11354 = vunpack.c.l.b16 %v11027
        %v11355 = vunpack.c.h.b16 %v11027
        %v11356 = vunpack.c.l.b16 %v11028
        %v11357 = vunpack.c.h.b16 %v11028
        %v11358 = vunpack.c.l.b16 %v11029
        %v11359 = vunpack.c.h.b16 %v11029
        %v11360 = vunpack.c.l.b16 %v11030
        %v11361 = vunpack.c.h.b16 %v11030
        %v11362 = vunpack.c.l.b16 %v11031
        %v11363 = vunpack.c.h.b16 %v11031
        %v11364 = vunpack.c.l.b16 %v11032
        %v11365 = vunpack.c.h.b16 %v11032
        %v11366 = vunpack.c.l.b16 %v11033
        %v11367 = vunpack.c.h.b16 %v11033
        %v11368 = vunpack.c.l.b16 %v11034
        %v11369 = vunpack.c.h.b16 %v11034
        %v11370 = vunpack.c.l.b16 %v11035
        %v11371 = vunpack.c.h.b16 %v11035
        %v11372 = vunpack.c.l.b16 %v11036
        %v11373 = vunpack.c.h.b16 %v11036
        %v11374 = vunpack.c.l.b16 %v11037
        %v11375 = vunpack.c.h.b16 %v11037
        %v11376 = vunpack.c.l.b16 %v11038
        %v11377 = vunpack.c.h.b16 %v11038
        %v11378 = vunpack.c.l.b16 %v11039
        %v11379 = vunpack.c.h.b16 %v11039
        %v11380 = vunpack.c.l.b16 %v11040
        %v11381 = vunpack.c.h.b16 %v11040
        %v11382 = vunpack.c.l.b16 %v11041
        %v11383 = vunpack.c.h.b16 %v11041
        %v11384 = vunpack.c.l.b16 %v11042
        %v11385 = vunpack.c.h.b16 %v11042
        %v11386 = vunpack.c.l.b16 %v11043
        %v11387 = vunpack.c.h.b16 %v11043
        %v11388 = vunpack.c.l.b16 %v11044
        %v11389 = vunpack.c.h.b16 %v11044
        %v11390 = vunpack.c.l.b16 %v11045
        %v11391 = vunpack.c.h.b16 %v11045
        %v11392 = vunpack.c.l.b16 %v11046
        %v11393 = vunpack.c.h.b16 %v11046
        %v11394 = vunpack.c.l.b16 %v11047
        %v11395 = vunpack.c.h.b16 %v11047
        %v11396 = vunpack.c.l.b16 %v11048
        %v11397 = vunpack.c.h.b16 %v11048
        %v11398 = vunpack.c.l.b16 %v11049
        %v11399 = vunpack.c.h.b16 %v11049
        %v11400 = vunpack.c.l.b16 %v11050
        %v11401 = vunpack.c.h.b16 %v11050
        %v11402 = vunpack.c.l.b16 %v11051
        %v11403 = vunpack.c.h.b16 %v11051
        %v11404 = vunpack.c.l.b16 %v11052
        %v11405 = vunpack.c.h.b16 %v11052
        %v11406 = vunpack.c.l.b16 %v11053
        %v11407 = vunpack.c.h.b16 %v11053
        %v11408 = vunpack.c.l.b16 %v11054
        %v11409 = vunpack.c.h.b16 %v11054
        %v11410 = vunpack.c.l.b16 %v11055
        %v11411 = vunpack.c.h.b16 %v11055
        %v11412 = vunpack.c.l.b16 %v11056
        %v11413 = vunpack.c.h.b16 %v11056
        %v11414 = vunpack.c.l.b16 %v11057
        %v11415 = vunpack.c.h.b16 %v11057
        %v11416 = vunpack.c.l.b16 %v11058
        %v11417 = vunpack.c.h.b16 %v11058
        %v11418 = vunpack.c.l.b16 %v11059
        %v11419 = vunpack.c.h.b16 %v11059
        %v11420 = vunpack.c.l.b16 %v11060
        %v11421 = vunpack.c.h.b16 %v11060
        %v11422 = vunpack.c.l.b16 %v11061
        %v11423 = vunpack.c.h.b16 %v11061
        %v11424 = vunpack.c.l.b16 %v11062
        %v11425 = vunpack.c.h.b16 %v11062
        %v11426 = vunpack.c.l.b16 %v11063
        %v11427 = vunpack.c.h.b16 %v11063
        %v11428 = vunpack.c.l.b16 %v11064
        %v11429 = vunpack.c.h.b16 %v11064
        %v11430 = vunpack.c.l.b16 %v11065
        %v11431 = vunpack.c.h.b16 %v11065
        %v11432 = vunpack.c.l.b16 %v11066
        %v11433 = vunpack.c.h.b16 %v11066
        %v11434 = vunpack.c.l.b16 %v11067
        %v11435 = vunpack.c.h.b16 %v11067
        %v11436 = vunpack.c.l.b16 %v11068
        %v11437 = vunpack.c.h.b16 %v11068
        %v11438 = vunpack.c.l.b16 %v11069
        %v11439 = vunpack.c.h.b16 %v11069
        %v11440 = vunpack.c.l.b16 %v11070
        %v11441 = vunpack.c.h.b16 %v11070
        %v11442 = vunpack.c.l.b16 %v11071
        %v11443 = vunpack.c.h.b16 %v11071
        %v11444 = vunpack.c.l.b16 %v11072
        %v11445 = vunpack.c.h.b16 %v11072
        %v11446 = vunpack.c.l.b16 %v11073
        %v11447 = vunpack.c.h.b16 %v11073
        %v11448 = vunpack.c.l.b16 %v11074
        %v11449 = vunpack.c.h.b16 %v11074
        %v11450 = vunpack.c.l.b16 %v11075
        %v11451 = vunpack.c.h.b16 %v11075
        %v11452 = vunpack.c.l.b16 %v11076
        %v11453 = vunpack.c.h.b16 %v11076
        %v11454 = vunpack.c.l.b16 %v11077
        %v11455 = vunpack.c.h.b16 %v11077
        %v11456 = vunpack.c.l.b16 %v11078
        %v11457 = vunpack.c.h.b16 %v11078
        %v11458 = vunpack.c.l.b16 %v11079
        %v11459 = vunpack.c.h.b16 %v11079
        %v11460 = vunpack.c.l.b16 %v11080
        %v11461 = vunpack.c.h.b16 %v11080
        %v11462 = vunpack.c.l.b16 %v11081
        %v11463 = vunpack.c.h.b16 %v11081
        %v11464 = vunpack.c.l.b16 %v11082
        %v11465 = vunpack.c.h.b16 %v11082
        %v11466 = vunpack.c.l.b16 %v11083
        %v11467 = vunpack.c.h.b16 %v11083
        %v11468 = vunpack.c.l.b16 %v11084
        %v11469 = vunpack.c.h.b16 %v11084
        %v11470 = vpack.c.b16 %v11218, %v11214
        %v11471 = vpack.c.b16 %v11219, %v11215
        %v11472 = vpack.c.b16 %v11220, %v11216
        %v11473 = vpack.c.b16 %v11221, %v11217
        %v11474 = vpack.c.b16 %v11226, %v11222
        %v11475 = vpack.c.b16 %v11227, %v11223
        %v11476 = vpack.c.b16 %v11228, %v11224
        %v11477 = vpack.c.b16 %v11229, %v11225
        %v11478 = vpack.c.b16 %v11234, %v11230
        %v11479 = vpack.c.b16 %v11235, %v11231
        %v11480 = vpack.c.b16 %v11236, %v11232
        %v11481 = vpack.c.b16 %v11237, %v11233
        %v11482 = vpack.c.b16 %v11242, %v11238
        %v11483 = vpack.c.b16 %v11243, %v11239
        %v11484 = vpack.c.b16 %v11244, %v11240
        %v11485 = vpack.c.b16 %v11245, %v11241
        %v11486 = vpack.c.b16 %v11250, %v11246
        %v11487 = vpack.c.b16 %v11251, %v11247
        %v11488 = vpack.c.b16 %v11252, %v11248
        %v11489 = vpack.c.b16 %v11253, %v11249
        %v11490 = vpack.c.b16 %v11258, %v11254
        %v11491 = vpack.c.b16 %v11259, %v11255
        %v11492 = vpack.c.b16 %v11260, %v11256
        %v11493 = vpack.c.b16 %v11261, %v11257
        %v11494 = vpack.c.b16 %v11266, %v11262
        %v11495 = vpack.c.b16 %v11267, %v11263
        %v11496 = vpack.c.b16 %v11268, %v11264
        %v11497 = vpack.c.b16 %v11269, %v11265
        %v11498 = vpack.c.b16 %v11274, %v11270
        %v11499 = vpack.c.b16 %v11275, %v11271
        %v11500 = vpack.c.b16 %v11276, %v11272
        %v11501 = vpack.c.b16 %v11277, %v11273
        %v11502 = vpack.c.b16 %v11282, %v11278
        %v11503 = vpack.c.b16 %v11283, %v11279
        %v11504 = vpack.c.b16 %v11284, %v11280
        %v11505 = vpack.c.b16 %v11285, %v11281
        %v11506 = vpack.c.b16 %v11290, %v11286
        %v11507 = vpack.c.b16 %v11291, %v11287
        %v11508 = vpack.c.b16 %v11292, %v11288
        %v11509 = vpack.c.b16 %v11293, %v11289
        %v11510 = vpack.c.b16 %v11298, %v11294
        %v11511 = vpack.c.b16 %v11299, %v11295
        %v11512 = vpack.c.b16 %v11300, %v11296
        %v11513 = vpack.c.b16 %v11301, %v11297
        %v11514 = vpack.c.b16 %v11306, %v11302
        %v11515 = vpack.c.b16 %v11307, %v11303
        %v11516 = vpack.c.b16 %v11308, %v11304
        %v11517 = vpack.c.b16 %v11309, %v11305
        %v11518 = vpack.c.b16 %v11314, %v11310
        %v11519 = vpack.c.b16 %v11315, %v11311
        %v11520 = vpack.c.b16 %v11316, %v11312
        %v11521 = vpack.c.b16 %v11317, %v11313
        %v11522 = vpack.c.b16 %v11322, %v11318
        %v11523 = vpack.c.b16 %v11323, %v11319
        %v11524 = vpack.c.b16 %v11324, %v11320
        %v11525 = vpack.c.b16 %v11325, %v11321
        %v11526 = vpack.c.b16 %v11330, %v11326
        %v11527 = vpack.c.b16 %v11331, %v11327
        %v11528 = vpack.c.b16 %v11332, %v11328
        %v11529 = vpack.c.b16 %v11333, %v11329
        %v11530 = vpack.c.b16 %v11338, %v11334
        %v11531 = vpack.c.b16 %v11339, %v11335
        %v11532 = vpack.c.b16 %v11340, %v11336
        %v11533 = vpack.c.b16 %v11341, %v11337
        %v11534 = vpack.c.b16 %v11346, %v11342
        %v11535 = vpack.c.b16 %v11347, %v11343
        %v11536 = vpack.c.b16 %v11348, %v11344
        %v11537 = vpack.c.b16 %v11349, %v11345
        %v11538 = vpack.c.b16 %v11354, %v11350
        %v11539 = vpack.c.b16 %v11355, %v11351
        %v11540 = vpack.c.b16 %v11356, %v11352
        %v11541 = vpack.c.b16 %v11357, %v11353
        %v11542 = vpack.c.b16 %v11362, %v11358
        %v11543 = vpack.c.b16 %v11363, %v11359
        %v11544 = vpack.c.b16 %v11364, %v11360
        %v11545 = vpack.c.b16 %v11365, %v11361
        %v11546 = vpack.c.b16 %v11370, %v11366
        %v11547 = vpack.c.b16 %v11371, %v11367
        %v11548 = vpack.c.b16 %v11372, %v11368
        %v11549 = vpack.c.b16 %v11373, %v11369
        %v11550 = vpack.c.b16 %v11378, %v11374
        %v11551 = vpack.c.b16 %v11379, %v11375
        %v11552 = vpack.c.b16 %v11380, %v11376
        %v11553 = vpack.c.b16 %v11381, %v11377
        %v11554 = vpack.c.b16 %v11386, %v11382
        %v11555 = vpack.c.b16 %v11387, %v11383
        %v11556 = vpack.c.b16 %v11388, %v11384
        %v11557 = vpack.c.b16 %v11389, %v11385
        %v11558 = vpack.c.b16 %v11394, %v11390
        %v11559 = vpack.c.b16 %v11395, %v11391
        %v11560 = vpack.c.b16 %v11396, %v11392
        %v11561 = vpack.c.b16 %v11397, %v11393
        %v11562 = vpack.c.b16 %v11402, %v11398
        %v11563 = vpack.c.b16 %v11403, %v11399
        %v11564 = vpack.c.b16 %v11404, %v11400
        %v11565 = vpack.c.b16 %v11405, %v11401
        %v11566 = vpack.c.b16 %v11410, %v11406
        %v11567 = vpack.c.b16 %v11411, %v11407
        %v11568 = vpack.c.b16 %v11412, %v11408
        %v11569 = vpack.c.b16 %v11413, %v11409
        %v11570 = vpack.c.b16 %v11418, %v11414
        %v11571 = vpack.c.b16 %v11419, %v11415
        %v11572 = vpack.c.b16 %v11420, %v11416
        %v11573 = vpack.c.b16 %v11421, %v11417
        %v11574 = vpack.c.b16 %v11426, %v11422
        %v11575 = vpack.c.b16 %v11427, %v11423
        %v11576 = vpack.c.b16 %v11428, %v11424
        %v11577 = vpack.c.b16 %v11429, %v11425
        %v11578 = vpack.c.b16 %v11434, %v11430
        %v11579 = vpack.c.b16 %v11435, %v11431
        %v11580 = vpack.c.b16 %v11436, %v11432
        %v11581 = vpack.c.b16 %v11437, %v11433
        %v11582 = vpack.c.b16 %v11442, %v11438
        %v11583 = vpack.c.b16 %v11443, %v11439
        %v11584 = vpack.c.b16 %v11444, %v11440
        %v11585 = vpack.c.b16 %v11445, %v11441
        %v11586 = vpack.c.b16 %v11450, %v11446
        %v11587 = vpack.c.b16 %v11451, %v11447
        %v11588 = vpack.c.b16 %v11452, %v11448
        %v11589 = vpack.c.b16 %v11453, %v11449
        %v11590 = vpack.c.b16 %v11458, %v11454
        %v11591 = vpack.c.b16 %v11459, %v11455
        %v11592 = vpack.c.b16 %v11460, %v11456
        %v11593 = vpack.c.b16 %v11461, %v11457
        %v11594 = vpack.c.b16 %v11466, %v11462
        %v11595 = vpack.c.b16 %v11467, %v11463
        %v11596 = vpack.c.b16 %v11468, %v11464
        %v11597 = vpack.c.b16 %v11469, %v11465
        %v11727 = vlaneseq
        %v11728 = vshrl.u32 %v11727, 7
        %v11729 = vsub.s32 0, %v11728
        %v11730 = vrot.slane %v11085, %v11729
        %v11731 = vlaneseq
        %v11732 = vshrl.u32 %v11731, 7
        %v11733 = vsub.s32 1, %v11732
        %v11734 = vrot.slane %v11085, %v11733
        %v11735 = vlaneseq
        %v11736 = vshrl.u32 %v11735, 7
        %v11737 = vsub.s32 2, %v11736
        %v11738 = vrot.slane %v11085, %v11737
        %v11739 = vlaneseq
        %v11740 = vshrl.u32 %v11739, 7
        %v11741 = vsub.s32 3, %v11740
        %v11742 = vrot.slane %v11085, %v11741
        %11747 = vmatprep.subr.bf16.mxu0 %v11471
        %11748 = vmatpush1.bf16.msra.mxu0 %v11470
        %11749 = vmatprep.subr.bf16.mxu0 %v11475
        %11750 = vmatpush1.bf16.msra.mxu0 %v11474
        %11751 = vmatprep.subr.bf16.mxu0 %v11479
        %11752 = vmatpush1.bf16.msra.mxu0 %v11478
        %11753 = vmatprep.subr.bf16.mxu0 %v11483
        %11754 = vmatpush1.bf16.msra.mxu0 %v11482
        %11755 = vmatprep.subr.bf16.mxu0 %v11487
        %11756 = vmatpush1.bf16.msra.mxu0 %v11486
        %11757 = vmatprep.subr.bf16.mxu0 %v11491
        %11758 = vmatpush1.bf16.msra.mxu0 %v11490
        %11759 = vmatprep.subr.bf16.mxu0 %v11495
        %11760 = vmatpush1.bf16.msra.mxu0 %v11494
        %11761 = vmatprep.subr.bf16.mxu0 %v11499
        %11762 = vmatpush1.bf16.msra.mxu0 %v11498
        %11763 = vmatprep.subr.bf16.mxu0 %v11503
        %11764 = vmatpush1.bf16.msra.mxu0 %v11502
        %11765 = vmatprep.subr.bf16.mxu0 %v11507
        %11766 = vmatpush1.bf16.msra.mxu0 %v11506
        %11767 = vmatprep.subr.bf16.mxu0 %v11511
        %11768 = vmatpush1.bf16.msra.mxu0 %v11510
        %11769 = vmatprep.subr.bf16.mxu0 %v11515
        %11770 = vmatpush1.bf16.msra.mxu0 %v11514
        %11771 = vmatprep.subr.bf16.mxu0 %v11519
        %11772 = vmatpush1.bf16.msra.mxu0 %v11518
        %11773 = vmatprep.subr.bf16.mxu0 %v11523
        %11774 = vmatpush1.bf16.msra.mxu0 %v11522
        %11775 = vmatprep.subr.bf16.mxu0 %v11527
        %11776 = vmatpush1.bf16.msra.mxu0 %v11526
        %11777 = vmatprep.subr.bf16.mxu0 %v11531
        %11778 = vmatpush1.bf16.msra.mxu0 %v11530
        %11779 = vmatprep.mubr.bf16.mxu0 %v10954
        %11780 = vmatmul.mubr.bf16.gmra.mrb[0].mxu0 %v10953
        %v11781 = vpop.f32.mrb[0].mxu0
        %v11782 = vadd.f32 %v11730, %v11781
        %v11783 = vpop.f32.mrb[0].mxu0
        %v11784 = vadd.f32 %v11734, %v11783
        %v11785 = vpop.f32.mrb[0].mxu0
        %v11786 = vpop.f32.mrb[0].mxu0
        %11787 = vdwg.mxu0
        %11788 = vmatprep.subr.bf16.mxu0 %v11535
        %11789 = vmatpush1.bf16.msra.mxu0 %v11534
        %11790 = vmatprep.subr.bf16.mxu0 %v11539
        %11791 = vmatpush1.bf16.msra.mxu0 %v11538
        %11792 = vmatprep.subr.bf16.mxu0 %v11543
        %11793 = vmatpush1.bf16.msra.mxu0 %v11542
        %11794 = vmatprep.subr.bf16.mxu0 %v11547
        %11795 = vmatpush1.bf16.msra.mxu0 %v11546
        %11796 = vmatprep.subr.bf16.mxu0 %v11551
        %11797 = vmatpush1.bf16.msra.mxu0 %v11550
        %11798 = vmatprep.subr.bf16.mxu0 %v11555
        %11799 = vmatpush1.bf16.msra.mxu0 %v11554
        %11800 = vmatprep.subr.bf16.mxu0 %v11559
        %11801 = vmatpush1.bf16.msra.mxu0 %v11558
        %11802 = vmatprep.subr.bf16.mxu0 %v11563
        %11803 = vmatpush1.bf16.msra.mxu0 %v11562
        %11804 = vmatprep.subr.bf16.mxu0 %v11567
        %11805 = vmatpush1.bf16.msra.mxu0 %v11566
        %11806 = vmatprep.subr.bf16.mxu0 %v11571
        %11807 = vmatpush1.bf16.msra.mxu0 %v11570
        %11808 = vmatprep.subr.bf16.mxu0 %v11575
        %11809 = vmatpush1.bf16.msra.mxu0 %v11574
        %11810 = vmatprep.subr.bf16.mxu0 %v11579
        %11811 = vmatpush1.bf16.msra.mxu0 %v11578
        %11812 = vmatprep.subr.bf16.mxu0 %v11583
        %11813 = vmatpush1.bf16.msra.mxu0 %v11582
        %11814 = vmatprep.subr.bf16.mxu0 %v11587
        %11815 = vmatpush1.bf16.msra.mxu0 %v11586
        %11816 = vmatprep.subr.bf16.mxu0 %v11591
        %11817 = vmatpush1.bf16.msra.mxu0 %v11590
        %11818 = vmatprep.subr.bf16.mxu0 %v11595
        %11819 = vmatpush1.bf16.msra.mxu0 %v11594
        %11820 = vmatprep.mubr.bf16.mxu0 %v10956
        %11821 = vmatmul.mubr.bf16.gmra.mrb[0].mxu0 %v10955
        %v11822 = vpop.f32.mrb[0].mxu0
        %v11823 = vadd.f32 %v11782, %v11822
        %v11824 = vpop.f32.mrb[0].mxu0
        %v11825 = vadd.f32 %v11784, %v11824
        %v11826 = vpop.f32.mrb[0].mxu0
        %v11827 = vpop.f32.mrb[0].mxu0
        %11828 = vdwg.mxu0
        %11829 = vmatprep.subr.bf16.mxu0 %v11473
        %11830 = vmatpush1.bf16.msra.mxu0 %v11472
        %11831 = vmatprep.subr.bf16.mxu0 %v11477
        %11832 = vmatpush1.bf16.msra.mxu0 %v11476
        %11833 = vmatprep.subr.bf16.mxu0 %v11481
        %11834 = vmatpush1.bf16.msra.mxu0 %v11480
        %11835 = vmatprep.subr.bf16.mxu0 %v11485
        %11836 = vmatpush1.bf16.msra.mxu0 %v11484
        %11837 = vmatprep.subr.bf16.mxu0 %v11489
        %11838 = vmatpush1.bf16.msra.mxu0 %v11488
        %11839 = vmatprep.subr.bf16.mxu0 %v11493
        %11840 = vmatpush1.bf16.msra.mxu0 %v11492
        %11841 = vmatprep.subr.bf16.mxu0 %v11497
        %11842 = vmatpush1.bf16.msra.mxu0 %v11496
        %11843 = vmatprep.subr.bf16.mxu0 %v11501
        %11844 = vmatpush1.bf16.msra.mxu0 %v11500
        %11845 = vmatprep.subr.bf16.mxu0 %v11505
        %11846 = vmatpush1.bf16.msra.mxu0 %v11504
        %11847 = vmatprep.subr.bf16.mxu0 %v11509
        %11848 = vmatpush1.bf16.msra.mxu0 %v11508
        %11849 = vmatprep.subr.bf16.mxu0 %v11513
        %11850 = vmatpush1.bf16.msra.mxu0 %v11512
        %11851 = vmatprep.subr.bf16.mxu0 %v11517
        %11852 = vmatpush1.bf16.msra.mxu0 %v11516
        %11853 = vmatprep.subr.bf16.mxu0 %v11521
        %11854 = vmatpush1.bf16.msra.mxu0 %v11520
        %11855 = vmatprep.subr.bf16.mxu0 %v11525
        %11856 = vmatpush1.bf16.msra.mxu0 %v11524
        %11857 = vmatprep.subr.bf16.mxu0 %v11529
        %11858 = vmatpush1.bf16.msra.mxu0 %v11528
        %11859 = vmatprep.subr.bf16.mxu0 %v11533
        %11860 = vmatpush1.bf16.msra.mxu0 %v11532
        %11861 = vmatprep.mubr.bf16.mxu0 %v10954
        %11862 = vmatmul.mubr.bf16.gmra.mrb[0].mxu0 %v10953
        %v11863 = vpop.f32.mrb[0].mxu0
        %v11864 = vadd.f32 %v11738, %v11863
        %v11865 = vpop.f32.mrb[0].mxu0
        %v11866 = vadd.f32 %v11742, %v11865
        %v11867 = vpop.f32.mrb[0].mxu0
        %v11868 = vpop.f32.mrb[0].mxu0
        %11869 = vdwg.mxu0
        %11870 = vmatprep.subr.bf16.mxu0 %v11537
        %11871 = vmatpush1.bf16.msra.mxu0 %v11536
        %11872 = vmatprep.subr.bf16.mxu0 %v11541
        %11873 = vmatpush1.bf16.msra.mxu0 %v11540
        %11874 = vmatprep.subr.bf16.mxu0 %v11545
        %11875 = vmatpush1.bf16.msra.mxu0 %v11544
        %11876 = vmatprep.subr.bf16.mxu0 %v11549
        %11877 = vmatpush1.bf16.msra.mxu0 %v11548
        %11878 = vmatprep.subr.bf16.mxu0 %v11553
        %11879 = vmatpush1.bf16.msra.mxu0 %v11552
        %11880 = vmatprep.subr.bf16.mxu0 %v11557
        %11881 = vmatpush1.bf16.msra.mxu0 %v11556
        %11882 = vmatprep.subr.bf16.mxu0 %v11561
        %11883 = vmatpush1.bf16.msra.mxu0 %v11560
        %11884 = vmatprep.subr.bf16.mxu0 %v11565
        %11885 = vmatpush1.bf16.msra.mxu0 %v11564
        %11886 = vmatprep.subr.bf16.mxu0 %v11569
        %11887 = vmatpush1.bf16.msra.mxu0 %v11568
        %11888 = vmatprep.subr.bf16.mxu0 %v11573
        %11889 = vmatpush1.bf16.msra.mxu0 %v11572
        %11890 = vmatprep.subr.bf16.mxu0 %v11577
        %11891 = vmatpush1.bf16.msra.mxu0 %v11576
        %11892 = vmatprep.subr.bf16.mxu0 %v11581
        %11893 = vmatpush1.bf16.msra.mxu0 %v11580
        %11894 = vmatprep.subr.bf16.mxu0 %v11585
        %11895 = vmatpush1.bf16.msra.mxu0 %v11584
        %11896 = vmatprep.subr.bf16.mxu0 %v11589
        %11897 = vmatpush1.bf16.msra.mxu0 %v11588
        %11898 = vmatprep.subr.bf16.mxu0 %v11593
        %11899 = vmatpush1.bf16.msra.mxu0 %v11592
        %11900 = vmatprep.subr.bf16.mxu0 %v11597
        %11901 = vmatpush1.bf16.msra.mxu0 %v11596
        %11902 = vmatprep.mubr.bf16.mxu0 %v10956
        %11903 = vmatmul.mubr.bf16.gmra.mrb[0].mxu0 %v10955
        %v11904 = vpop.f32.mrb[0].mxu0
        %v11905 = vadd.f32 %v11864, %v11904
        %v11906 = vpop.f32.mrb[0].mxu0
        %v11907 = vadd.f32 %v11866, %v11906
        %v11908 = vpop.f32.mrb[0].mxu0
        %v11909 = vpop.f32.mrb[0].mxu0
        %11910 = vdwg.mxu0
        %v11911 = vpack.c.bf16 %v11823, %v11823
        %v11912 = vpack.c.bf16 %v11825, %v11825
        %v11913 = vpack.c.bf16 %v11905, %v11905
        %v11914 = vpack.c.bf16 %v11907, %v11907
        %v11915 = vld [vmem:[#allocation28] sm:$0xf]
        %v11916 = vld [vmem:[#allocation28 + $0x4] sm:$0xf]
        %v11917 = vld [vmem:[#allocation28 + $0x8] sm:$0xf]
        %v11918 = vld [vmem:[#allocation28 + $0xc] sm:$0xf]
        %v11919 = vld [vmem:[#allocation28 + $0x10] sm:$0xf]
        %v11920 = vld [vmem:[#allocation28 + $0x14] sm:$0xf]
        %v11921 = vld [vmem:[#allocation28 + $0x18] sm:$0xf]
        %v11922 = vld [vmem:[#allocation28 + $0x1c] sm:$0xf]
        %v11923 = vld [vmem:[#allocation28 + $0x20] sm:$0xf]
        %v11924 = vld [vmem:[#allocation28 + $0x24] sm:$0xf]
        %v11925 = vld [vmem:[#allocation28 + $0x28] sm:$0xf]
        %v11926 = vld [vmem:[#allocation28 + $0x2c] sm:$0xf]
        %v11927 = vld [vmem:[#allocation28 + $0x30] sm:$0xf]
        %v11928 = vld [vmem:[#allocation28 + $0x34] sm:$0xf]
        %v11929 = vld [vmem:[#allocation28 + $0x38] sm:$0xf]
        %v11930 = vld [vmem:[#allocation28 + $0x3c] sm:$0xf]
        %v11931 = vld [vmem:[#allocation28 + $0x40] sm:$0xf]
        %v11932 = vld [vmem:[#allocation28 + $0x44] sm:$0xf]
        %v11933 = vld [vmem:[#allocation28 + $0x48] sm:$0xf]
        %v11934 = vld [vmem:[#allocation28 + $0x4c] sm:$0xf]
        %v11935 = vld [vmem:[#allocation28 + $0x50] sm:$0xf]
        %v11936 = vld [vmem:[#allocation28 + $0x54] sm:$0xf]
        %v11937 = vld [vmem:[#allocation28 + $0x58] sm:$0xf]
        %v11938 = vld [vmem:[#allocation28 + $0x5c] sm:$0xf]
        %v11939 = vld [vmem:[#allocation28 + $0x60] sm:$0xf]
        %v11940 = vld [vmem:[#allocation28 + $0x64] sm:$0xf]
        %v11941 = vld [vmem:[#allocation28 + $0x68] sm:$0xf]
        %v11942 = vld [vmem:[#allocation28 + $0x6c] sm:$0xf]
        %v11943 = vld [vmem:[#allocation28 + $0x70] sm:$0xf]
        %v11944 = vld [vmem:[#allocation28 + $0x74] sm:$0xf]
        %v11945 = vld [vmem:[#allocation28 + $0x78] sm:$0xf]
        %v11946 = vld [vmem:[#allocation28 + $0x7c] sm:$0xf]
        %v11947 = vld [vmem:[#allocation28 + $0x80] sm:$0xf]
        %v11948 = vld [vmem:[#allocation28 + $0x84] sm:$0xf]
        %v11949 = vld [vmem:[#allocation28 + $0x88] sm:$0xf]
        %v11950 = vld [vmem:[#allocation28 + $0x8c] sm:$0xf]
        %v11951 = vld [vmem:[#allocation28 + $0x90] sm:$0xf]
        %v11952 = vld [vmem:[#allocation28 + $0x94] sm:$0xf]
        %v11953 = vld [vmem:[#allocation28 + $0x98] sm:$0xf]
        %v11954 = vld [vmem:[#allocation28 + $0x9c] sm:$0xf]
        %v11955 = vld [vmem:[#allocation28 + $0xa0] sm:$0xf]
        %v11956 = vld [vmem:[#allocation28 + $0xa4] sm:$0xf]
        %v11957 = vld [vmem:[#allocation28 + $0xa8] sm:$0xf]
        %v11958 = vld [vmem:[#allocation28 + $0xac] sm:$0xf]
        %v11959 = vld [vmem:[#allocation28 + $0xb0] sm:$0xf]
        %v11960 = vld [vmem:[#allocation28 + $0xb4] sm:$0xf]
        %v11961 = vld [vmem:[#allocation28 + $0xb8] sm:$0xf]
        %v11962 = vld [vmem:[#allocation28 + $0xbc] sm:$0xf]
        %v11963 = vld [vmem:[#allocation28 + $0xc0] sm:$0xf]
        %v11964 = vld [vmem:[#allocation28 + $0xc4] sm:$0xf]
        %v11965 = vld [vmem:[#allocation28 + $0xc8] sm:$0xf]
        %v11966 = vld [vmem:[#allocation28 + $0xcc] sm:$0xf]
        %v11967 = vld [vmem:[#allocation28 + $0xd0] sm:$0xf]
        %v11968 = vld [vmem:[#allocation28 + $0xd4] sm:$0xf]
        %v11969 = vld [vmem:[#allocation28 + $0xd8] sm:$0xf]
        %v11970 = vld [vmem:[#allocation28 + $0xdc] sm:$0xf]
        %v11971 = vld [vmem:[#allocation28 + $0xe0] sm:$0xf]
        %v11972 = vld [vmem:[#allocation28 + $0xe4] sm:$0xf]
        %v11973 = vld [vmem:[#allocation28 + $0xe8] sm:$0xf]
        %v11974 = vld [vmem:[#allocation28 + $0xec] sm:$0xf]
        %v11975 = vld [vmem:[#allocation28 + $0xf0] sm:$0xf]
        %v11976 = vld [vmem:[#allocation28 + $0xf4] sm:$0xf]
        %v11977 = vld [vmem:[#allocation28 + $0xf8] sm:$0xf]
        %v11978 = vld [vmem:[#allocation28 + $0xfc] sm:$0xf]
        %v11979 = vld [vmem:[#allocation30] sm:$0x1]
        %v12044 = vunpack.c.l.b16 %v11915
        %v12045 = vunpack.c.l.b16 %v11916
        %v12046 = vunpack.c.l.b16 %v11917
        %v12047 = vunpack.c.l.b16 %v11918
        %v12048 = vunpack.c.l.b16 %v11919
        %v12049 = vunpack.c.l.b16 %v11920
        %v12050 = vunpack.c.l.b16 %v11921
        %v12051 = vunpack.c.l.b16 %v11922
        %v12052 = vunpack.c.l.b16 %v11923
        %v12053 = vunpack.c.l.b16 %v11924
        %v12054 = vunpack.c.l.b16 %v11925
        %v12055 = vunpack.c.l.b16 %v11926
        %v12056 = vunpack.c.l.b16 %v11927
        %v12057 = vunpack.c.l.b16 %v11928
        %v12058 = vunpack.c.l.b16 %v11929
        %v12059 = vunpack.c.l.b16 %v11930
        %v12060 = vunpack.c.l.b16 %v11931
        %v12061 = vunpack.c.l.b16 %v11932
        %v12062 = vunpack.c.l.b16 %v11933
        %v12063 = vunpack.c.l.b16 %v11934
        %v12064 = vunpack.c.l.b16 %v11935
        %v12065 = vunpack.c.l.b16 %v11936
        %v12066 = vunpack.c.l.b16 %v11937
        %v12067 = vunpack.c.l.b16 %v11938
        %v12068 = vunpack.c.l.b16 %v11939
        %v12069 = vunpack.c.l.b16 %v11940
        %v12070 = vunpack.c.l.b16 %v11941
        %v12071 = vunpack.c.l.b16 %v11942
        %v12072 = vunpack.c.l.b16 %v11943
        %v12073 = vunpack.c.l.b16 %v11944
        %v12074 = vunpack.c.l.b16 %v11945
        %v12075 = vunpack.c.l.b16 %v11946
        %v12076 = vunpack.c.l.b16 %v11947
        %v12077 = vunpack.c.l.b16 %v11948
        %v12078 = vunpack.c.l.b16 %v11949
        %v12079 = vunpack.c.l.b16 %v11950
        %v12080 = vunpack.c.l.b16 %v11951
        %v12081 = vunpack.c.l.b16 %v11952
        %v12082 = vunpack.c.l.b16 %v11953
        %v12083 = vunpack.c.l.b16 %v11954
        %v12084 = vunpack.c.l.b16 %v11955
        %v12085 = vunpack.c.l.b16 %v11956
        %v12086 = vunpack.c.l.b16 %v11957
        %v12087 = vunpack.c.l.b16 %v11958
        %v12088 = vunpack.c.l.b16 %v11959
        %v12089 = vunpack.c.l.b16 %v11960
        %v12090 = vunpack.c.l.b16 %v11961
        %v12091 = vunpack.c.l.b16 %v11962
        %v12092 = vunpack.c.l.b16 %v11963
        %v12093 = vunpack.c.l.b16 %v11964
        %v12094 = vunpack.c.l.b16 %v11965
        %v12095 = vunpack.c.l.b16 %v11966
        %v12096 = vunpack.c.l.b16 %v11967
        %v12097 = vunpack.c.l.b16 %v11968
        %v12098 = vunpack.c.l.b16 %v11969
        %v12099 = vunpack.c.l.b16 %v11970
        %v12100 = vunpack.c.l.b16 %v11971
        %v12101 = vunpack.c.l.b16 %v11972
        %v12102 = vunpack.c.l.b16 %v11973
        %v12103 = vunpack.c.l.b16 %v11974
        %v12104 = vunpack.c.l.b16 %v11975
        %v12105 = vunpack.c.l.b16 %v11976
        %v12106 = vunpack.c.l.b16 %v11977
        %v12107 = vunpack.c.l.b16 %v11978
        %v12108 = vpack.c.b16 %v12045, %v12044
        %v12109 = vpack.c.b16 %v12047, %v12046
        %v12110 = vpack.c.b16 %v12049, %v12048
        %v12111 = vpack.c.b16 %v12051, %v12050
        %v12112 = vpack.c.b16 %v12053, %v12052
        %v12113 = vpack.c.b16 %v12055, %v12054
        %v12114 = vpack.c.b16 %v12057, %v12056
        %v12115 = vpack.c.b16 %v12059, %v12058
        %v12116 = vpack.c.b16 %v12061, %v12060
        %v12117 = vpack.c.b16 %v12063, %v12062
        %v12118 = vpack.c.b16 %v12065, %v12064
        %v12119 = vpack.c.b16 %v12067, %v12066
        %v12120 = vpack.c.b16 %v12069, %v12068
        %v12121 = vpack.c.b16 %v12071, %v12070
        %v12122 = vpack.c.b16 %v12073, %v12072
        %v12123 = vpack.c.b16 %v12075, %v12074
        %v12124 = vpack.c.b16 %v12077, %v12076
        %v12125 = vpack.c.b16 %v12079, %v12078
        %v12126 = vpack.c.b16 %v12081, %v12080
        %v12127 = vpack.c.b16 %v12083, %v12082
        %v12128 = vpack.c.b16 %v12085, %v12084
        %v12129 = vpack.c.b16 %v12087, %v12086
        %v12130 = vpack.c.b16 %v12089, %v12088
        %v12131 = vpack.c.b16 %v12091, %v12090
        %v12132 = vpack.c.b16 %v12093, %v12092
        %v12133 = vpack.c.b16 %v12095, %v12094
        %v12134 = vpack.c.b16 %v12097, %v12096
        %v12135 = vpack.c.b16 %v12099, %v12098
        %v12136 = vpack.c.b16 %v12101, %v12100
        %v12137 = vpack.c.b16 %v12103, %v12102
        %v12138 = vpack.c.b16 %v12105, %v12104
        %v12139 = vpack.c.b16 %v12107, %v12106
        %12172 = vmatprep.subr.bf16.mxu0 0
        %12173 = vmatpush1.bf16.msra.mxu0 %v12108
        %12174 = vmatprep.subr.bf16.mxu0 0
        %12175 = vmatpush1.bf16.msra.mxu0 %v12109
        %12176 = vmatprep.subr.bf16.mxu0 0
        %12177 = vmatpush1.bf16.msra.mxu0 %v12110
        %12178 = vmatprep.subr.bf16.mxu0 0
        %12179 = vmatpush1.bf16.msra.mxu0 %v12111
        %12180 = vmatprep.subr.bf16.mxu0 0
        %12181 = vmatpush1.bf16.msra.mxu0 %v12112
        %12182 = vmatprep.subr.bf16.mxu0 0
        %12183 = vmatpush1.bf16.msra.mxu0 %v12113
        %12184 = vmatprep.subr.bf16.mxu0 0
        %12185 = vmatpush1.bf16.msra.mxu0 %v12114
        %12186 = vmatprep.subr.bf16.mxu0 0
        %12187 = vmatpush1.bf16.msra.mxu0 %v12115
        %12188 = vmatprep.subr.bf16.mxu0 0
        %12189 = vmatpush1.bf16.msra.mxu0 %v12116
        %12190 = vmatprep.subr.bf16.mxu0 0
        %12191 = vmatpush1.bf16.msra.mxu0 %v12117
        %12192 = vmatprep.subr.bf16.mxu0 0
        %12193 = vmatpush1.bf16.msra.mxu0 %v12118
        %12194 = vmatprep.subr.bf16.mxu0 0
        %12195 = vmatpush1.bf16.msra.mxu0 %v12119
        %12196 = vmatprep.subr.bf16.mxu0 0
        %12197 = vmatpush1.bf16.msra.mxu0 %v12120
        %12198 = vmatprep.subr.bf16.mxu0 0
        %12199 = vmatpush1.bf16.msra.mxu0 %v12121
        %12200 = vmatprep.subr.bf16.mxu0 0
        %12201 = vmatpush1.bf16.msra.mxu0 %v12122
        %12202 = vmatprep.subr.bf16.mxu0 0
        %12203 = vmatpush1.bf16.msra.mxu0 %v12123
        %12204 = vmatprep.mubr.bf16.mxu0 %v11912
        %12205 = vmatmul.mubr.bf16.gmra.mrb[0].mxu0 %v11911
        %v12206 = vpop.f32.mrb[0].mxu0
        %v12207 = vadd.f32 %v11979, %v12206
        %v12208 = vpop.f32.mrb[0].mxu0
        %v12209 = vpop.f32.mrb[0].mxu0
        %v12210 = vpop.f32.mrb[0].mxu0
        %12211 = vdwg.mxu0
        %12212 = vmatprep.subr.bf16.mxu0 0
        %12213 = vmatpush1.bf16.msra.mxu0 %v12124
        %12214 = vmatprep.subr.bf16.mxu0 0
        %12215 = vmatpush1.bf16.msra.mxu0 %v12125
        %12216 = vmatprep.subr.bf16.mxu0 0
        %12217 = vmatpush1.bf16.msra.mxu0 %v12126
        %12218 = vmatprep.subr.bf16.mxu0 0
        %12219 = vmatpush1.bf16.msra.mxu0 %v12127
        %12220 = vmatprep.subr.bf16.mxu0 0
        %12221 = vmatpush1.bf16.msra.mxu0 %v12128
        %12222 = vmatprep.subr.bf16.mxu0 0
        %12223 = vmatpush1.bf16.msra.mxu0 %v12129
        %12224 = vmatprep.subr.bf16.mxu0 0
        %12225 = vmatpush1.bf16.msra.mxu0 %v12130
        %12226 = vmatprep.subr.bf16.mxu0 0
        %12227 = vmatpush1.bf16.msra.mxu0 %v12131
        %12228 = vmatprep.subr.bf16.mxu0 0
        %12229 = vmatpush1.bf16.msra.mxu0 %v12132
        %12230 = vmatprep.subr.bf16.mxu0 0
        %12231 = vmatpush1.bf16.msra.mxu0 %v12133
        %12232 = vmatprep.subr.bf16.mxu0 0
        %12233 = vmatpush1.bf16.msra.mxu0 %v12134
        %12234 = vmatprep.subr.bf16.mxu0 0
        %12235 = vmatpush1.bf16.msra.mxu0 %v12135
        %12236 = vmatprep.subr.bf16.mxu0 0
        %12237 = vmatpush1.bf16.msra.mxu0 %v12136
        %12238 = vmatprep.subr.bf16.mxu0 0
        %12239 = vmatpush1.bf16.msra.mxu0 %v12137
        %12240 = vmatprep.subr.bf16.mxu0 0
        %12241 = vmatpush1.bf16.msra.mxu0 %v12138
        %12242 = vmatprep.subr.bf16.mxu0 0
        %12243 = vmatpush1.bf16.msra.mxu0 %v12139
        %12244 = vmatprep.mubr.bf16.mxu0 %v11914
        %12245 = vmatmul.mubr.bf16.gmra.mrb[0].mxu0 %v11913
        %v12246 = vpop.f32.mrb[0].mxu0
        %v12247 = vadd.f32 %v12207, %v12246
        %v12248 = vpop.f32.mrb[0].mxu0
        %v12249 = vpop.f32.mrb[0].mxu0
        %v12250 = vpop.f32.mrb[0].mxu0
        %12251 = vdwg.mxu0
        %v12252 = vlaneseq
        %v12253 = vshrl.u32 %v12252, 7
        %v12254 = vsub.s32 0, %v12253
        %v12255 = vrot.slane %v12247, %v12254
        %12256 = vst [vmem:[%s799] sm:$0xff] %v12255
        %s12257 = sand.u32 %s432, 1
        %s12258 = scalar_lea.sflag [#allocation6], %s12257
        %s12259 = sand.u32 %s432, 1
        %s12260 = smul.addr %s12259, 8
        %s12261 = scalar_lea.vmem [#allocation31], %s12260
        // Predicated region
        $region161: #{tpu_custom_call.1} parent=91 // pred_check
          %p12262 = pneg %p442
        $region162: #{tpu_custom_call.1} parent=91 // pred_check_branch
          %12264 = sbr.rel (%p12262) target = $region164
        $region163: #{tpu_custom_call.1} parent=91 // pred_region
          %s12266 = ssub.s32 128, 128
          %12267 = vsyncadd %s12258, %s12266
          %s12268 = smul.addr %s41, 128
          %s12269 = scalar_lea.hbm %s18, %s12268
          %s12271 = sshll.u32 %s12261, 4
          %s12272 = int_to_ptr.vmem [resolvable:$true] %s12271
          %12274 = dma.vmem_to_hbm [thread:$0]  %s12272, 128, %s12269, %s12258
        $region164: #{tpu_custom_call.1} parent=91 // pred_fallthru
          _
      $region92: #{tpu_custom_call.1} parent=5 // pred_fallthru
        _
      %p12275 = scmp.le.s32.totalorder 2, %s36
      // Predicated region
      $region165: #{tpu_custom_call.1} parent=5 // pred_check
        %p12276 = pneg %p12275
      $region166: #{tpu_custom_call.1} parent=5 // pred_check_branch
        %12278 = sbr.rel (%p12276) target = $region168
      $region167: #{tpu_custom_call.1} parent=5 // pred_region
        %s12279 = ssub.s32 %s36, 2
        // Predicated region
        $region169: #{tpu_custom_call.1} parent=167 // pred_check
          %p12280 = pneg %p448
        $region170: #{tpu_custom_call.1} parent=167 // pred_check_branch
          %12282 = sbr.rel (%p12280) target = $region172
        $region171: #{tpu_custom_call.1} parent=167 // pred_region
          %s12283 = sand.u32 %s433, 1
          %s12284 = scalar_lea.sflag [#allocation6], %s12283
          %s12285 = sand.u32 %s433, 1
          %s12286 = smul.addr %s12285, 8
          %s12287 = scalar_lea.vmem [#allocation31], %s12286
          %12288 = dma.done %s12284, 128
        $region172: #{tpu_custom_call.1} parent=167 // pred_fallthru
          _
      $region168: #{tpu_custom_call.1} parent=5 // pred_fallthru
        _
    $region6: #{tpu_custom_call.1} parent=1 // loop_footer
      %s40 = sadd.s32 1, %s36
    $region7: #{tpu_custom_call.1} parent=1 // loop_footer_branch
      %35 = sbr.rel target = $region3
    $region8: #{tpu_custom_call.1} parent=1 // loop_exit
      _
    %12289 = vsyncpa [#allocation5], 1
    %s12290 = scalar_lea.sflag [#allocation5], 1
    %12291 = vsyncpa %s12290, 1
    %12292 = vsyncpa [#allocation8], 1
    %12293 = vsyncpa [#allocation11], 1
    %12294 = vsyncpa [#allocation14], 1
    %12295 = vsyncpa [#allocation17], 1
    %12296 = vsyncpa [#allocation20], 1
    %12297 = vsyncpa [#allocation23], 1
    %12298 = vsyncpa [#allocation26], 1
    %12299 = vsyncpa [#allocation29], 1
    %12300 = vsyncpa [#allocation6], 1
    %s12301 = scalar_lea.sflag [#allocation6], 1
    %12302 = vsyncpa %s12301, 1

</llo_original>
